<compile_context>
chip_gen: v7x
topology: tpu7x:2x2x1
jax: 0.10.0
libtpu: 0.0.40
codegen_flags: <defaults>
</compile_context>

<pallas_src>
import functools
import math

import jax
import jax.numpy as jnp
from jax import lax
from jax.experimental import pallas as pl
from jax.experimental.pallas import tpu as pltpu

EPS = 1e-5  # BatchNorm2d default eps


def _round_up(x, m):
    return ((x + m - 1) // m) * m


# ---------------------------------------------------------------------------
# Pallas kernels
# ---------------------------------------------------------------------------
def _conv_pool_bn_tanh_kernel(taps_ref, w_ref, s_ref, b_ref, o_ref):
    """Fused conv-as-matmul (4 pooling taps) -> max -> BN affine -> tanh.

    taps_ref: (4, K, tile_m)  stacked transposed im2col taps (lane dim = M)
    w_ref   : (C, K)          conv weight, patch-feature minor
    s_ref   : (C, 1)          BN scale  (gamma / sqrt(var + eps))
    b_ref   : (C, 1)          BN shift with the conv bias folded in
    o_ref   : (C, tile_m)     pooled activation (lane-dense store)
    """
    w = w_ref[...]
    y = jnp.dot(w, taps_ref[0], preferred_element_type=jnp.float32)
    for t in range(1, 4):
        y = jnp.maximum(
            y, jnp.dot(w, taps_ref[t], preferred_element_type=jnp.float32))
    o_ref[...] = jnp.tanh(y * s_ref[...] + b_ref[...]).astype(o_ref.dtype)


def conv_pool_bn_tanh(taps, w2d_t, scale, shift_b):
    """One fused conv block.  taps: (4, K, M); returns the pooled (C, M)."""
    _, K, M = taps.shape
    C, Kw = w2d_t.shape
    assert K == Kw
    # Lane-dense tiling of M: big blocks get two balanced 128-multiple tiles
    # (v7x's two TensorCores split evenly under "parallel"); small blocks run
    # as one full-M step (extra steps are pure overhead on single-TC v5e/v6e).
    if M <= 2048:
        tile_m = M
    else:
        tile_m = _round_up(pl.cdiv(M, 2), 128)
    grid = (pl.cdiv(M, tile_m),)

    def full(shape):
        return pl.BlockSpec(shape, lambda i: (0,) * len(shape))

    return pl.pallas_call(
        _conv_pool_bn_tanh_kernel,
        out_shape=jax.ShapeDtypeStruct((C, M), jnp.float32),
        grid=grid,
        in_specs=[pl.BlockSpec((4, K, tile_m), lambda i: (0, 0, i)),
                  full((C, K)), full((C, 1)), full((C, 1))],
        out_specs=pl.BlockSpec((C, tile_m), lambda i: (0, i)),
        compiler_params=pltpu.CompilerParams(
            dimension_semantics=("parallel",),
            vmem_limit_bytes=32 * 1024 * 1024),
    )(taps, w2d_t, scale.reshape(C, 1), shift_b.reshape(C, 1))


def _fc_head_kernel(x_ref, w1_ref, b1_ref, w2_ref, b2_ref, o_ref):
    """Fused Linear(2000,128)+Tanh [+Dropout as identity] + Linear(128,Apad)+Sigmoid."""
    h = jnp.tanh(jnp.dot(x_ref[...], w1_ref[...],
                         preferred_element_type=jnp.float32) + b1_ref[...])
    # TODO(synk): nn.Dropout(0.25) is stochastic; identity here (inference).
    y = jnp.dot(h, w2_ref[...], preferred_element_type=jnp.float32) + b2_ref[...]
    o_ref[...] = jax.nn.sigmoid(y).astype(o_ref.dtype)


def fc_head(x, w1, b1, w2p, b2p):
    """x: (B, F).  w2p / b2p are zero-padded to a 128-multiple action dim."""
    B, F = x.shape
    _, H = w1.shape
    _, Ap = w2p.shape

    def full(shape):
        return pl.BlockSpec(shape, lambda i: (0,) * len(shape))

    return pl.pallas_call(
        _fc_head_kernel,
        out_shape=jax.ShapeDtypeStruct((B, Ap), jnp.float32),
        grid=(1,),
        in_specs=[full((B, F)), full((F, H)), full((1, H)),
                  full((H, Ap)), full((1, Ap))],
        out_specs=full((B, Ap)),
        compiler_params=pltpu.CompilerParams(
            dimension_semantics=("arbitrary",),
            vmem_limit_bytes=32 * 1024 * 1024),
    )(x, w1, b1.reshape(1, H), w2p, b2p.reshape(1, Ap))


# ---------------------------------------------------------------------------
# JAX glue (transposed pooled-tap im2col, parameter setup, orchestration)
# ---------------------------------------------------------------------------
def pooled_im2col_taps_t(x, kh, kw):
    """x: (B, H, W, C) NHWC -> stacked transposed pooling-tap patch matrices.

    Returns T of shape (4, K, M) with K = kh*kw*C, M = B*PH*PW and
      T[di*2+dj, (i*kw+j)*C + c, (b*PH+ph)*PW + pw]
          = x[b, 2*ph + di + i, 2*pw + dj + j, c]
    i.e. the im2col rows each MaxPool2d(2) tap needs, with the pooled pixel
    index M in the minor (lane-dense) dimension.
    # TODO(synk): still materialized by XLA in HBM (K-fold expansion of the
    # raw activation); allow_input_fusion / in-kernel patch build is the
    # follow-up noted above.
    """
    B, H, W, C = x.shape
    OH, OW = H - kh + 1, W - kw + 1
    assert OH % 2 == 0 and OW % 2 == 0
    PH, PW = OH // 2, OW // 2
    M = B * PH * PW
    taps = []
    for di in range(2):
        for dj in range(2):
            cols = []
            for i in range(kh):
                for j in range(kw):
                    r0, c0 = di + i, dj + j
                    cols.append(x[:, r0:r0 + 2 * PH:2, c0:c0 + 2 * PW:2, :])
            t = jnp.stack(cols, axis=0)              # (kh*kw, B, PH, PW, C)
            t = jnp.transpose(t, (0, 4, 1, 2, 3))    # (kh*kw, C, B, PH, PW)
            taps.append(t.reshape(kh * kw * C, M))   # K index = (i*kw+j)*C + c
    return jnp.stack(taps, axis=0), (B, PH, PW)      # (4, K, M)


def policy_actor_forward(x_nchw, params):
    """Pallas implementation of PolicyNet.actor forward (inference semantics)."""
    x = jnp.transpose(x_nchw, (0, 2, 3, 1)).astype(jnp.float32)   # NCHW -> NHWC
    for blk in params["conv_blocks"]:
        kh, kw = blk["ksize"]
        taps, (B, PH, PW) = pooled_im2col_taps_t(x, kh, kw)
        y = conv_pool_bn_tanh(taps, blk["w2d_t"], blk["bn_scale"],
                              blk["bn_shift_b"])                  # (C, B*PH*PW)
        C = y.shape[0]
        x = jnp.transpose(y.reshape(C, B, PH, PW), (1, 2, 3, 0))  # NHWC again
    B = x.shape[0]
    # nn.Flatten flattens NCHW (channel-major); the transposed kernel output is
    # already channel-major so this is only a 16 KB XLA reshuffle, and fc1
    # needs no row permutation.
    feat = jnp.transpose(x, (0, 3, 1, 2)).reshape(B, -1)
    out = fc_head(feat, params["fc1_w"], params["fc1_b"],
                  params["fc2_wp"], params["fc2_bp"])
    return out[:, :params["action_dim"]]


def kaiming_uniform(key, shape, fan_in, a=0.1):
    gain = math.sqrt(2.0 / (1.0 + a * a))
    bound = gain * math.sqrt(3.0 / fan_in)
    return jax.random.uniform(key, shape, jnp.float32, -bound, bound)


def bias_uniform(key, shape, fan_in):
    bound = 1.0 / math.sqrt(fan_in)
    return jax.random.uniform(key, shape, jnp.float32, -bound, bound)


def init_params(key, action_dim=75):
    """Deterministic init matching PolicyNet.__init__ shapes & kaiming_uniform_(a=0.1)."""
    conv_defs = [(4, 8, 5), (8, 12, 3), (12, 20, 3)]
    params = {"conv_blocks": [], "action_dim": action_dim}
    ref = {"conv": []}
    keys = jax.random.split(key, 2 * len(conv_defs) + 4)
    ki = 0
    for (cin, cout, k) in conv_defs:
        fan_in = cin * k * k
        w = kaiming_uniform(keys[ki], (cout, cin, k, k), fan_in); ki += 1  # OIHW
        b = bias_uniform(keys[ki], (cout,), fan_in); ki += 1
        # TODO(synk): BatchNorm2d uses eval-mode running stats (fresh init:
        # gamma=1, beta=0, mean=0, var=1); train-mode batch stats not modeled.
        gamma = jnp.ones((cout,), jnp.float32)
        beta = jnp.zeros((cout,), jnp.float32)
        rmean = jnp.zeros((cout,), jnp.float32)
        rvar = jnp.ones((cout,), jnp.float32)
        scale = gamma / jnp.sqrt(rvar + EPS)
        shift = beta - rmean * scale
        # (Cout, kh*kw*Cin), patch-feature order (i, j, c) matching
        # pooled_im2col_taps_t.
        w2d_t = jnp.transpose(w, (0, 2, 3, 1)).reshape(cout, k * k * cin)
        params["conv_blocks"].append(dict(
            ksize=(k, k), w2d_t=w2d_t, bn_scale=scale,
            bn_shift_b=shift + scale * b))   # conv bias folded through pool+BN
        ref["conv"].append(dict(w=w, b=b, scale=scale, shift=shift))

    feat = 20 * 10 * 10
    w1 = kaiming_uniform(keys[ki], (128, feat), feat); ki += 1
    b1 = bias_uniform(keys[ki], (128,), feat); ki += 1
    w2 = kaiming_uniform(keys[ki], (action_dim, 128), 128); ki += 1
    b2 = bias_uniform(keys[ki], (action_dim,), 128); ki += 1
    # Pad the action dim to a lane-dense 128 multiple (sliced after the kernel).
    a_pad = _round_up(action_dim, 128)
    w2p = jnp.zeros((128, a_pad), jnp.float32).at[:, :action_dim].set(w2.T)
    b2p = jnp.zeros((a_pad,), jnp.float32).at[:action_dim].set(b2)
    params.update(fc1_w=w1.T, fc1_b=b1, fc2_wp=w2p, fc2_bp=b2p)
    ref.update(fc1_w=w1, fc1_b=b1, fc2_w=w2, fc2_b=b2)
    return params, ref


def reference_forward(x_nchw, ref):
    """Pure-JAX (lax) reference of the same actor forward for verification."""
    hp = lax.Precision.HIGHEST
    x = x_nchw.astype(jnp.float32)
    for blk in ref["conv"]:
        x = lax.conv_general_dilated(
            x, blk["w"], window_strides=(1, 1), padding="VALID",
            dimension_numbers=("NCHW", "OIHW", "NCHW"), precision=hp)
        x = x + blk["b"][None, :, None, None]
        x = lax.reduce_window(x, -jnp.inf, lax.max,
                              (1, 1, 2, 2), (1, 1, 2, 2), "VALID")
        x = jnp.tanh(x * blk["scale"][None, :, None, None]
                     + blk["shift"][None, :, None, None])
    B = x.shape[0]
    x = x.reshape(B, -1)
    x = jnp.tanh(jnp.dot(x, ref["fc1_w"].T, precision=hp) + ref["fc1_b"])
    x = jax.nn.sigmoid(jnp.dot(x, ref["fc2_w"].T, precision=hp) + ref["fc2_b"])
    return x


if __name__ == "__main__":
    key = jax.random.PRNGKey(0)
    kx, kp = jax.random.split(key)
    # Input implied by the actor: 4 channels, 96x96 grid so the third pooled
    # feature map is 20 x 10 x 10 (matches nn.Linear(20*10*10, 128)).
    x = jax.random.normal(kx, (2, 4, 96, 96), dtype=jnp.float32)
    params, ref = init_params(kp, action_dim=75)

    fwd = jax.jit(functools.partial(policy_actor_forward, params=params))
    out = jax.block_until_ready(fwd(x))
    assert out.shape == (2, 75), out.shape

    expected = reference_forward(x, ref)
    max_err = float(jnp.max(jnp.abs(out - expected)))
    # Tolerance covers possible MXU vs. XLA f32 accumulation differences while
    # still catching any layout / indexing bug (those show up at O(0.1)).
    assert max_err < 2e-2, max_err
    print("KERNEL_OK")
</pallas_src>

<mosaic_0001>
module attributes {stable_mosaic.version = 11 : i64} {
  func.func @_conv_pool_bn_tanh_kernel(%arg0: i32, %arg1: memref<4x100x2176xf32, #tpu.memory_space<vmem>>, %arg2: memref<8x100xf32, #tpu.memory_space<vmem>>, %arg3: memref<8x1xf32, #tpu.memory_space<vmem>>, %arg4: memref<8x1xf32, #tpu.memory_space<vmem>>, %arg5: memref<8x2176xf32, #tpu.memory_space<vmem>>) attributes {dimension_semantics = [#tpu.dimension_semantics<parallel>], iteration_bounds = array<i64: 2>, scalar_prefetch = 0 : i64, scratch_operands = 0 : i64, tpu.core_type = #tpu.core_type<tc>, window_params = [{transform_indices = @transform_0, window_bounds = array<i64: 4, 100, 2176>}, {pipeline_mode = #tpu.pipeline_mode<synchronous>, transform_indices = @transform_1, window_bounds = array<i64: 8, 100>}, {pipeline_mode = #tpu.pipeline_mode<synchronous>, transform_indices = @transform_2, window_bounds = array<i64: 8, 1>}, {pipeline_mode = #tpu.pipeline_mode<synchronous>, transform_indices = @transform_3, window_bounds = array<i64: 8, 1>}, {transform_indices = @transform_4, window_bounds = array<i64: 8, 2176>}]} {
    %c0 = arith.constant 0 : index
    %c0_0 = arith.constant 0 : index
    %0 = vector.load %arg2[%c0, %c0_0] : memref<8x100xf32, #tpu.memory_space<vmem>>, vector<8x100xf32>
    %c0_1 = arith.constant 0 : index
    %c0_2 = arith.constant 0 : index
    %c0_3 = arith.constant 0 : index
    %1 = vector.load %arg1[%c0_1, %c0_2, %c0_3] : memref<4x100x2176xf32, #tpu.memory_space<vmem>>, vector<1x100x2176xf32>
    %2 = vector.shape_cast %1 : vector<1x100x2176xf32> to vector<100x2176xf32>
    %cst = arith.constant dense<0.000000e+00> : vector<8x2176xf32>
    %3 = tpu.matmul %0, %2, %cst {dimension_numbers = #tpu.dot_dimension_numbers<[1], [0], [0], [1], [0, 0, 1, 1], [], []>} : vector<8x100xf32>, vector<100x2176xf32>, vector<8x2176xf32> -> vector<8x2176xf32>
    %c1 = arith.constant 1 : index
    %c0_4 = arith.constant 0 : index
    %c0_5 = arith.constant 0 : index
    %4 = vector.load %arg1[%c1, %c0_4, %c0_5] : memref<4x100x2176xf32, #tpu.memory_space<vmem>>, vector<1x100x2176xf32>
    %5 = vector.shape_cast %4 : vector<1x100x2176xf32> to vector<100x2176xf32>
    %cst_6 = arith.constant dense<0.000000e+00> : vector<8x2176xf32>
    %6 = tpu.matmul %0, %5, %cst_6 {dimension_numbers = #tpu.dot_dimension_numbers<[1], [0], [0], [1], [0, 0, 1, 1], [], []>} : vector<8x100xf32>, vector<100x2176xf32>, vector<8x2176xf32> -> vector<8x2176xf32>
    %7 = arith.maximumf %3, %6 : vector<8x2176xf32>
    %c2 = arith.constant 2 : index
    %c0_7 = arith.constant 0 : index
    %c0_8 = arith.constant 0 : index
    %8 = vector.load %arg1[%c2, %c0_7, %c0_8] : memref<4x100x2176xf32, #tpu.memory_space<vmem>>, vector<1x100x2176xf32>
    %9 = vector.shape_cast %8 : vector<1x100x2176xf32> to vector<100x2176xf32>
    %cst_9 = arith.constant dense<0.000000e+00> : vector<8x2176xf32>
    %10 = tpu.matmul %0, %9, %cst_9 {dimension_numbers = #tpu.dot_dimension_numbers<[1], [0], [0], [1], [0, 0, 1, 1], [], []>} : vector<8x100xf32>, vector<100x2176xf32>, vector<8x2176xf32> -> vector<8x2176xf32>
    %11 = arith.maximumf %7, %10 : vector<8x2176xf32>
    %c3 = arith.constant 3 : index
    %c0_10 = arith.constant 0 : index
    %c0_11 = arith.constant 0 : index
    %12 = vector.load %arg1[%c3, %c0_10, %c0_11] : memref<4x100x2176xf32, #tpu.memory_space<vmem>>, vector<1x100x2176xf32>
    %13 = vector.shape_cast %12 : vector<1x100x2176xf32> to vector<100x2176xf32>
    %cst_12 = arith.constant dense<0.000000e+00> : vector<8x2176xf32>
    %14 = tpu.matmul %0, %13, %cst_12 {dimension_numbers = #tpu.dot_dimension_numbers<[1], [0], [0], [1], [0, 0, 1, 1], [], []>} : vector<8x100xf32>, vector<100x2176xf32>, vector<8x2176xf32> -> vector<8x2176xf32>
    %15 = arith.maximumf %11, %14 : vector<8x2176xf32>
    %c0_13 = arith.constant 0 : index
    %c0_14 = arith.constant 0 : index
    %16 = vector.load %arg3[%c0_13, %c0_14] : memref<8x1xf32, #tpu.memory_space<vmem>>, vector<8x1xf32>
    %17 = vector.broadcast %16 : vector<8x1xf32> to vector<8x2176xf32>
    %18 = arith.mulf %15, %17 : vector<8x2176xf32>
    %c0_15 = arith.constant 0 : index
    %c0_16 = arith.constant 0 : index
    %19 = vector.load %arg4[%c0_15, %c0_16] : memref<8x1xf32, #tpu.memory_space<vmem>>, vector<8x1xf32>
    %20 = vector.broadcast %19 : vector<8x1xf32> to vector<8x2176xf32>
    %21 = arith.addf %18, %20 : vector<8x2176xf32>
    %22 = math.tanh %21 : vector<8x2176xf32>
    %c0_17 = arith.constant 0 : index
    %c0_18 = arith.constant 0 : index
    %23 = vector.load %arg5[%c0_17, %c0_18] : memref<8x2176xf32, #tpu.memory_space<vmem>>, vector<8x2176xf32>
    tpu.vector_store %arg5[%c0_17, %c0_18], %22 {strides = array<i32>} : memref<8x2176xf32, #tpu.memory_space<vmem>>, vector<8x2176xf32>,
    return
  }
  func.func @transform_0(%arg0: i32) -> (i32, i32, i32) {
    %c0_i32 = arith.constant 0 : i32
    %c0_i32_0 = arith.constant 0 : i32
    %c0_i32_1 = arith.constant 0 : i32
    return %c0_i32, %c0_i32_0, %arg0 : i32, i32, i32
  }
  func.func @transform_1(%arg0: i32) -> (i32, i32) {
    %c0_i32 = arith.constant 0 : i32
    %c0_i32_0 = arith.constant 0 : i32
    %c0_i32_1 = arith.constant 0 : i32
    return %c0_i32, %c0_i32_0 : i32, i32
  }
  func.func @transform_2(%arg0: i32) -> (i32, i32) {
    %c0_i32 = arith.constant 0 : i32
    %c0_i32_0 = arith.constant 0 : i32
    %c0_i32_1 = arith.constant 0 : i32
    return %c0_i32, %c0_i32_0 : i32, i32
  }
  func.func @transform_3(%arg0: i32) -> (i32, i32) {
    %c0_i32 = arith.constant 0 : i32
    %c0_i32_0 = arith.constant 0 : i32
    %c0_i32_1 = arith.constant 0 : i32
    return %c0_i32, %c0_i32_0 : i32, i32
  }
  func.func @transform_4(%arg0: i32) -> (i32, i32) {
    %c0_i32 = arith.constant 0 : i32
    %c0_i32_0 = arith.constant 0 : i32
    return %c0_i32, %arg0 : i32, i32
  }
}

module attributes {stable_mosaic.version = 11 : i64} {
  func.func @_conv_pool_bn_tanh_kernel(%arg0: i32, %arg1: memref<4x72x968xf32, #tpu.memory_space<vmem>>, %arg2: memref<12x72xf32, #tpu.memory_space<vmem>>, %arg3: memref<12x1xf32, #tpu.memory_space<vmem>>, %arg4: memref<12x1xf32, #tpu.memory_space<vmem>>, %arg5: memref<12x968xf32, #tpu.memory_space<vmem>>) attributes {dimension_semantics = [#tpu.dimension_semantics<parallel>], iteration_bounds = array<i64: 1>, scalar_prefetch = 0 : i64, scratch_operands = 0 : i64, tpu.core_type = #tpu.core_type<tc>, window_params = [{transform_indices = @transform_0, window_bounds = array<i64: 4, 72, 968>}, {pipeline_mode = #tpu.pipeline_mode<synchronous>, transform_indices = @transform_1, window_bounds = array<i64: 12, 72>}, {pipeline_mode = #tpu.pipeline_mode<synchronous>, transform_indices = @transform_2, window_bounds = array<i64: 12, 1>}, {pipeline_mode = #tpu.pipeline_mode<synchronous>, transform_indices = @transform_3, window_bounds = array<i64: 12, 1>}, {transform_indices = @transform_4, window_bounds = array<i64: 12, 968>}]} {
    %c0 = arith.constant 0 : index
    %c0_0 = arith.constant 0 : index
    %0 = vector.load %arg2[%c0, %c0_0] : memref<12x72xf32, #tpu.memory_space<vmem>>, vector<12x72xf32>
    %c0_1 = arith.constant 0 : index
    %c0_2 = arith.constant 0 : index
    %c0_3 = arith.constant 0 : index
    %1 = vector.load %arg1[%c0_1, %c0_2, %c0_3] : memref<4x72x968xf32, #tpu.memory_space<vmem>>, vector<1x72x968xf32>
    %2 = vector.shape_cast %1 : vector<1x72x968xf32> to vector<72x968xf32>
    %cst = arith.constant dense<0.000000e+00> : vector<12x968xf32>
    %3 = tpu.matmul %0, %2, %cst {dimension_numbers = #tpu.dot_dimension_numbers<[1], [0], [0], [1], [0, 0, 1, 1], [], []>} : vector<12x72xf32>, vector<72x968xf32>, vector<12x968xf32> -> vector<12x968xf32>
    %c1 = arith.constant 1 : index
    %c0_4 = arith.constant 0 : index
    %c0_5 = arith.constant 0 : index
    %4 = vector.load %arg1[%c1, %c0_4, %c0_5] : memref<4x72x968xf32, #tpu.memory_space<vmem>>, vector<1x72x968xf32>
    %5 = vector.shape_cast %4 : vector<1x72x968xf32> to vector<72x968xf32>
    %cst_6 = arith.constant dense<0.000000e+00> : vector<12x968xf32>
    %6 = tpu.matmul %0, %5, %cst_6 {dimension_numbers = #tpu.dot_dimension_numbers<[1], [0], [0], [1], [0, 0, 1, 1], [], []>} : vector<12x72xf32>, vector<72x968xf32>, vector<12x968xf32> -> vector<12x968xf32>
    %7 = arith.maximumf %3, %6 : vector<12x968xf32>
    %c2 = arith.constant 2 : index
    %c0_7 = arith.constant 0 : index
    %c0_8 = arith.constant 0 : index
    %8 = vector.load %arg1[%c2, %c0_7, %c0_8] : memref<4x72x968xf32, #tpu.memory_space<vmem>>, vector<1x72x968xf32>
    %9 = vector.shape_cast %8 : vector<1x72x968xf32> to vector<72x968xf32>
    %cst_9 = arith.constant dense<0.000000e+00> : vector<12x968xf32>
    %10 = tpu.matmul %0, %9, %cst_9 {dimension_numbers = #tpu.dot_dimension_numbers<[1], [0], [0], [1], [0, 0, 1, 1], [], []>} : vector<12x72xf32>, vector<72x968xf32>, vector<12x968xf32> -> vector<12x968xf32>
    %11 = arith.maximumf %7, %10 : vector<12x968xf32>
    %c3 = arith.constant 3 : index
    %c0_10 = arith.constant 0 : index
    %c0_11 = arith.constant 0 : index
    %12 = vector.load %arg1[%c3, %c0_10, %c0_11] : memref<4x72x968xf32, #tpu.memory_space<vmem>>, vector<1x72x968xf32>
    %13 = vector.shape_cast %12 : vector<1x72x968xf32> to vector<72x968xf32>
    %cst_12 = arith.constant dense<0.000000e+00> : vector<12x968xf32>
    %14 = tpu.matmul %0, %13, %cst_12 {dimension_numbers = #tpu.dot_dimension_numbers<[1], [0], [0], [1], [0, 0, 1, 1], [], []>} : vector<12x72xf32>, vector<72x968xf32>, vector<12x968xf32> -> vector<12x968xf32>
    %15 = arith.maximumf %11, %14 : vector<12x968xf32>
    %c0_13 = arith.constant 0 : index
    %c0_14 = arith.constant 0 : index
    %16 = vector.load %arg3[%c0_13, %c0_14] : memref<12x1xf32, #tpu.memory_space<vmem>>, vector<12x1xf32>
    %17 = vector.broadcast %16 : vector<12x1xf32> to vector<12x968xf32>
    %18 = arith.mulf %15, %17 : vector<12x968xf32>
    %c0_15 = arith.constant 0 : index
    %c0_16 = arith.constant 0 : index
    %19 = vector.load %arg4[%c0_15, %c0_16] : memref<12x1xf32, #tpu.memory_space<vmem>>, vector<12x1xf32>
    %20 = vector.broadcast %19 : vector<12x1xf32> to vector<12x968xf32>
    %21 = arith.addf %18, %20 : vector<12x968xf32>
    %22 = math.tanh %21 : vector<12x968xf32>
    %c0_17 = arith.constant 0 : index
    %c0_18 = arith.constant 0 : index
    %23 = vector.load %arg5[%c0_17, %c0_18] : memref<12x968xf32, #tpu.memory_space<vmem>>, vector<12x968xf32>
    tpu.vector_store %arg5[%c0_17, %c0_18], %22 {strides = array<i32>} : memref<12x968xf32, #tpu.memory_space<vmem>>, vector<12x968xf32>,
    return
  }
  func.func @transform_0(%arg0: i32) -> (i32, i32, i32) {
    %c0_i32 = arith.constant 0 : i32
    %c0_i32_0 = arith.constant 0 : i32
    %c0_i32_1 = arith.constant 0 : i32
    return %c0_i32, %c0_i32_0, %arg0 : i32, i32, i32
  }
  func.func @transform_1(%arg0: i32) -> (i32, i32) {
    %c0_i32 = arith.constant 0 : i32
    %c0_i32_0 = arith.constant 0 : i32
    %c0_i32_1 = arith.constant 0 : i32
    return %c0_i32, %c0_i32_0 : i32, i32
  }
  func.func @transform_2(%arg0: i32) -> (i32, i32) {
    %c0_i32 = arith.constant 0 : i32
    %c0_i32_0 = arith.constant 0 : i32
    %c0_i32_1 = arith.constant 0 : i32
    return %c0_i32, %c0_i32_0 : i32, i32
  }
  func.func @transform_3(%arg0: i32) -> (i32, i32) {
    %c0_i32 = arith.constant 0 : i32
    %c0_i32_0 = arith.constant 0 : i32
    %c0_i32_1 = arith.constant 0 : i32
    return %c0_i32, %c0_i32_0 : i32, i32
  }
  func.func @transform_4(%arg0: i32) -> (i32, i32) {
    %c0_i32 = arith.constant 0 : i32
    %c0_i32_0 = arith.constant 0 : i32
    return %c0_i32, %arg0 : i32, i32
  }
}

module attributes {stable_mosaic.version = 11 : i64} {
  func.func @_conv_pool_bn_tanh_kernel(%arg0: i32, %arg1: memref<4x108x200xf32, #tpu.memory_space<vmem>>, %arg2: memref<20x108xf32, #tpu.memory_space<vmem>>, %arg3: memref<20x1xf32, #tpu.memory_space<vmem>>, %arg4: memref<20x1xf32, #tpu.memory_space<vmem>>, %arg5: memref<20x200xf32, #tpu.memory_space<vmem>>) attributes {dimension_semantics = [#tpu.dimension_semantics<parallel>], iteration_bounds = array<i64: 1>, scalar_prefetch = 0 : i64, scratch_operands = 0 : i64, tpu.core_type = #tpu.core_type<tc>, window_params = [{transform_indices = @transform_0, window_bounds = array<i64: 4, 108, 200>}, {pipeline_mode = #tpu.pipeline_mode<synchronous>, transform_indices = @transform_1, window_bounds = array<i64: 20, 108>}, {pipeline_mode = #tpu.pipeline_mode<synchronous>, transform_indices = @transform_2, window_bounds = array<i64: 20, 1>}, {pipeline_mode = #tpu.pipeline_mode<synchronous>, transform_indices = @transform_3, window_bounds = array<i64: 20, 1>}, {transform_indices = @transform_4, window_bounds = array<i64: 20, 200>}]} {
    %c0 = arith.constant 0 : index
    %c0_0 = arith.constant 0 : index
    %0 = vector.load %arg2[%c0, %c0_0] : memref<20x108xf32, #tpu.memory_space<vmem>>, vector<20x108xf32>
    %c0_1 = arith.constant 0 : index
    %c0_2 = arith.constant 0 : index
    %c0_3 = arith.constant 0 : index
    %1 = vector.load %arg1[%c0_1, %c0_2, %c0_3] : memref<4x108x200xf32, #tpu.memory_space<vmem>>, vector<1x108x200xf32>
    %2 = vector.shape_cast %1 : vector<1x108x200xf32> to vector<108x200xf32>
    %cst = arith.constant dense<0.000000e+00> : vector<20x200xf32>
    %3 = tpu.matmul %0, %2, %cst {dimension_numbers = #tpu.dot_dimension_numbers<[1], [0], [0], [1], [0, 0, 1, 1], [], []>} : vector<20x108xf32>, vector<108x200xf32>, vector<20x200xf32> -> vector<20x200xf32>
    %c1 = arith.constant 1 : index
    %c0_4 = arith.constant 0 : index
    %c0_5 = arith.constant 0 : index
    %4 = vector.load %arg1[%c1, %c0_4, %c0_5] : memref<4x108x200xf32, #tpu.memory_space<vmem>>, vector<1x108x200xf32>
    %5 = vector.shape_cast %4 : vector<1x108x200xf32> to vector<108x200xf32>
    %cst_6 = arith.constant dense<0.000000e+00> : vector<20x200xf32>
    %6 = tpu.matmul %0, %5, %cst_6 {dimension_numbers = #tpu.dot_dimension_numbers<[1], [0], [0], [1], [0, 0, 1, 1], [], []>} : vector<20x108xf32>, vector<108x200xf32>, vector<20x200xf32> -> vector<20x200xf32>
    %7 = arith.maximumf %3, %6 : vector<20x200xf32>
    %c2 = arith.constant 2 : index
    %c0_7 = arith.constant 0 : index
    %c0_8 = arith.constant 0 : index
    %8 = vector.load %arg1[%c2, %c0_7, %c0_8] : memref<4x108x200xf32, #tpu.memory_space<vmem>>, vector<1x108x200xf32>
    %9 = vector.shape_cast %8 : vector<1x108x200xf32> to vector<108x200xf32>
    %cst_9 = arith.constant dense<0.000000e+00> : vector<20x200xf32>
    %10 = tpu.matmul %0, %9, %cst_9 {dimension_numbers = #tpu.dot_dimension_numbers<[1], [0], [0], [1], [0, 0, 1, 1], [], []>} : vector<20x108xf32>, vector<108x200xf32>, vector<20x200xf32> -> vector<20x200xf32>
    %11 = arith.maximumf %7, %10 : vector<20x200xf32>
    %c3 = arith.constant 3 : index
    %c0_10 = arith.constant 0 : index
    %c0_11 = arith.constant 0 : index
    %12 = vector.load %arg1[%c3, %c0_10, %c0_11] : memref<4x108x200xf32, #tpu.memory_space<vmem>>, vector<1x108x200xf32>
    %13 = vector.shape_cast %12 : vector<1x108x200xf32> to vector<108x200xf32>
    %cst_12 = arith.constant dense<0.000000e+00> : vector<20x200xf32>
    %14 = tpu.matmul %0, %13, %cst_12 {dimension_numbers = #tpu.dot_dimension_numbers<[1], [0], [0], [1], [0, 0, 1, 1], [], []>} : vector<20x108xf32>, vector<108x200xf32>, vector<20x200xf32> -> vector<20x200xf32>
    %15 = arith.maximumf %11, %14 : vector<20x200xf32>
    %c0_13 = arith.constant 0 : index
    %c0_14 = arith.constant 0 : index
    %16 = vector.load %arg3[%c0_13, %c0_14] : memref<20x1xf32, #tpu.memory_space<vmem>>, vector<20x1xf32>
    %17 = vector.broadcast %16 : vector<20x1xf32> to vector<20x200xf32>
    %18 = arith.mulf %15, %17 : vector<20x200xf32>
    %c0_15 = arith.constant 0 : index
    %c0_16 = arith.constant 0 : index
    %19 = vector.load %arg4[%c0_15, %c0_16] : memref<20x1xf32, #tpu.memory_space<vmem>>, vector<20x1xf32>
    %20 = vector.broadcast %19 : vector<20x1xf32> to vector<20x200xf32>
    %21 = arith.addf %18, %20 : vector<20x200xf32>
    %22 = math.tanh %21 : vector<20x200xf32>
    %c0_17 = arith.constant 0 : index
    %c0_18 = arith.constant 0 : index
    %23 = vector.load %arg5[%c0_17, %c0_18] : memref<20x200xf32, #tpu.memory_space<vmem>>, vector<20x200xf32>
    tpu.vector_store %arg5[%c0_17, %c0_18], %22 {strides = array<i32>} : memref<20x200xf32, #tpu.memory_space<vmem>>, vector<20x200xf32>,
    return
  }
  func.func @transform_0(%arg0: i32) -> (i32, i32, i32) {
    %c0_i32 = arith.constant 0 : i32
    %c0_i32_0 = arith.constant 0 : i32
    %c0_i32_1 = arith.constant 0 : i32
    return %c0_i32, %c0_i32_0, %arg0 : i32, i32, i32
  }
  func.func @transform_1(%arg0: i32) -> (i32, i32) {
    %c0_i32 = arith.constant 0 : i32
    %c0_i32_0 = arith.constant 0 : i32
    %c0_i32_1 = arith.constant 0 : i32
    return %c0_i32, %c0_i32_0 : i32, i32
  }
  func.func @transform_2(%arg0: i32) -> (i32, i32) {
    %c0_i32 = arith.constant 0 : i32
    %c0_i32_0 = arith.constant 0 : i32
    %c0_i32_1 = arith.constant 0 : i32
    return %c0_i32, %c0_i32_0 : i32, i32
  }
  func.func @transform_3(%arg0: i32) -> (i32, i32) {
    %c0_i32 = arith.constant 0 : i32
    %c0_i32_0 = arith.constant 0 : i32
    %c0_i32_1 = arith.constant 0 : i32
    return %c0_i32, %c0_i32_0 : i32, i32
  }
  func.func @transform_4(%arg0: i32) -> (i32, i32) {
    %c0_i32 = arith.constant 0 : i32
    %c0_i32_0 = arith.constant 0 : i32
    return %c0_i32, %arg0 : i32, i32
  }
}

module attributes {stable_mosaic.version = 11 : i64} {
  func.func @_fc_head_kernel(%arg0: i32, %arg1: memref<2x2000xf32, #tpu.memory_space<vmem>>, %arg2: memref<2000x128xf32, #tpu.memory_space<vmem>>, %arg3: memref<1x128xf32, #tpu.memory_space<vmem>>, %arg4: memref<128x128xf32, #tpu.memory_space<vmem>>, %arg5: memref<1x128xf32, #tpu.memory_space<vmem>>, %arg6: memref<2x128xf32, #tpu.memory_space<vmem>>) attributes {dimension_semantics = [#tpu.dimension_semantics<arbitrary>], iteration_bounds = array<i64: 1>, scalar_prefetch = 0 : i64, scratch_operands = 0 : i64, tpu.core_type = #tpu.core_type<tc>, window_params = [{pipeline_mode = #tpu.pipeline_mode<synchronous>, transform_indices = @transform_0, window_bounds = array<i64: 2, 2000>}, {pipeline_mode = #tpu.pipeline_mode<synchronous>, transform_indices = @transform_1, window_bounds = array<i64: 2000, 128>}, {pipeline_mode = #tpu.pipeline_mode<synchronous>, transform_indices = @transform_2, window_bounds = array<i64: 1, 128>}, {pipeline_mode = #tpu.pipeline_mode<synchronous>, transform_indices = @transform_3, window_bounds = array<i64: 128, 128>}, {pipeline_mode = #tpu.pipeline_mode<synchronous>, transform_indices = @transform_4, window_bounds = array<i64: 1, 128>}, {pipeline_mode = #tpu.pipeline_mode<synchronous>, transform_indices = @transform_5, window_bounds = array<i64: 2, 128>}]} {
    %c0 = arith.constant 0 : index
    %c0_0 = arith.constant 0 : index
    %0 = vector.load %arg1[%c0, %c0_0] : memref<2x2000xf32, #tpu.memory_space<vmem>>, vector<2x2000xf32>
    %c0_1 = arith.constant 0 : index
    %c0_2 = arith.constant 0 : index
    %1 = vector.load %arg2[%c0_1, %c0_2] : memref<2000x128xf32, #tpu.memory_space<vmem>>, vector<2000x128xf32>
    %cst = arith.constant dense<0.000000e+00> : vector<2x128xf32>
    %2 = tpu.matmul %0, %1, %cst {dimension_numbers = #tpu.dot_dimension_numbers<[1], [0], [0], [1], [0, 0, 1, 1], [], []>} : vector<2x2000xf32>, vector<2000x128xf32>, vector<2x128xf32> -> vector<2x128xf32>
    %c0_3 = arith.constant 0 : index
    %c0_4 = arith.constant 0 : index
    %3 = vector.load %arg3[%c0_3, %c0_4] : memref<1x128xf32, #tpu.memory_space<vmem>>, vector<1x128xf32>
    %4 = vector.broadcast %3 : vector<1x128xf32> to vector<2x128xf32>
    %5 = arith.addf %2, %4 : vector<2x128xf32>
    %6 = math.tanh %5 : vector<2x128xf32>
    %c0_5 = arith.constant 0 : index
    %c0_6 = arith.constant 0 : index
    %7 = vector.load %arg4[%c0_5, %c0_6] : memref<128x128xf32, #tpu.memory_space<vmem>>, vector<128x128xf32>
    %cst_7 = arith.constant dense<0.000000e+00> : vector<2x128xf32>
    %8 = tpu.matmul %6, %7, %cst_7 {dimension_numbers = #tpu.dot_dimension_numbers<[1], [0], [0], [1], [0, 0, 1, 1], [], []>} : vector<2x128xf32>, vector<128x128xf32>, vector<2x128xf32> -> vector<2x128xf32>
    %c0_8 = arith.constant 0 : index
    %c0_9 = arith.constant 0 : index
    %9 = vector.load %arg5[%c0_8, %c0_9] : memref<1x128xf32, #tpu.memory_space<vmem>>, vector<1x128xf32>
    %10 = vector.broadcast %9 : vector<1x128xf32> to vector<2x128xf32>
    %11 = arith.addf %8, %10 : vector<2x128xf32>
    %12 = arith.negf %11 : vector<2x128xf32>
    %13 = math.exp %12 : vector<2x128xf32>
    %cst_10 = arith.constant 1.000000e+00 : f32
    %14 = vector.broadcast %cst_10 : f32 to vector<2x128xf32>
    %15 = arith.addf %14, %13 : vector<2x128xf32>
    %16 = arith.divf %14, %15 : vector<2x128xf32>
    %c0_11 = arith.constant 0 : index
    %c0_12 = arith.constant 0 : index
    %17 = vector.load %arg6[%c0_11, %c0_12] : memref<2x128xf32, #tpu.memory_space<vmem>>, vector<2x128xf32>
    tpu.vector_store %arg6[%c0_11, %c0_12], %16 {strides = array<i32>} : memref<2x128xf32, #tpu.memory_space<vmem>>, vector<2x128xf32>,
    return
  }
  func.func @transform_0(%arg0: i32) -> (i32, i32) {
    %c0_i32 = arith.constant 0 : i32
    %c0_i32_0 = arith.constant 0 : i32
    %c0_i32_1 = arith.constant 0 : i32
    return %c0_i32, %c0_i32_0 : i32, i32
  }
  func.func @transform_1(%arg0: i32) -> (i32, i32) {
    %c0_i32 = arith.constant 0 : i32
    %c0_i32_0 = arith.constant 0 : i32
    %c0_i32_1 = arith.constant 0 : i32
    return %c0_i32, %c0_i32_0 : i32, i32
  }
  func.func @transform_2(%arg0: i32) -> (i32, i32) {
    %c0_i32 = arith.constant 0 : i32
    %c0_i32_0 = arith.constant 0 : i32
    %c0_i32_1 = arith.constant 0 : i32
    return %c0_i32, %c0_i32_0 : i32, i32
  }
  func.func @transform_3(%arg0: i32) -> (i32, i32) {
    %c0_i32 = arith.constant 0 : i32
    %c0_i32_0 = arith.constant 0 : i32
    %c0_i32_1 = arith.constant 0 : i32
    return %c0_i32, %c0_i32_0 : i32, i32
  }
  func.func @transform_4(%arg0: i32) -> (i32, i32) {
    %c0_i32 = arith.constant 0 : i32
    %c0_i32_0 = arith.constant 0 : i32
    %c0_i32_1 = arith.constant 0 : i32
    return %c0_i32, %c0_i32_0 : i32, i32
  }
  func.func @transform_5(%arg0: i32) -> (i32, i32) {
    %c0_i32 = arith.constant 0 : i32
    %c0_i32_0 = arith.constant 0 : i32
    %c0_i32_1 = arith.constant 0 : i32
    return %c0_i32, %c0_i32_0 : i32, i32
  }
}

</mosaic_0001>

<llo_original>
// kernel: policy_actor_forward.4
$region0: #{policy_actor_forward.4}
  #allocation0 [shape = 'u32[]', space=smem, size = 0x4, offset = 0x4, fixed_abs, tag = 'smem constant byte address 0x4 - core index']
  #allocation1 [shape = 'u32[144,128]{1,0:T(1,128)}', space=vmem, size = 0x12000, scoped, tag = 'internal scratch']
  %s0 = inlined_call_operand.vmem [shape: f32[4,100,4232], index: 0, kind: input, shape index: {}]
  %s1 = inlined_call_operand.vmem [shape: f32[8,100], index: 1, kind: input, shape index: {}]
  %s2 = inlined_call_operand.vmem [shape: f32[8,1], index: 2, kind: input, shape index: {}]
  %s3 = inlined_call_operand.vmem [shape: f32[8,1], index: 3, kind: input, shape index: {}]
  %s4 = inlined_call_operand.vmem [shape: f32[8,4232], index: 4, kind: output, shape index: {}]
  %s5 = sld [smem:[#allocation0]]
  $region72: #{policy_actor_forward.4} parent=0
    _
  %s7 = ssub.s32 1, %s5
  %s8 = scalar_select 0, %s7, %s5
  $region1: #{policy_actor_forward.4} parent=0
    #allocation2 [shape = 'u8[7241728]{0}', space=vmem, size = 0x6e8000, scoped, tag = 'input window, operand 0']
    loop: start=0, step=1, limit=4
    $region2: #{policy_actor_forward.4} parent=1 // loop_pre_header
      _
    $region3: #{policy_actor_forward.4} parent=1 // loop_header
      %s10 = sphi 0, %s14
      %p11 = scmp.ge.s32.totalorder %s10, 4
      %s20 = sphi 0, %s22
      %s23 = sphi 0, %s20
      %s24 = sphi 0, %s23
      %s40 = sphi 0, %s24
      %s44 = sphi 0, %s44
      %s46 = sphi 0, %s44
      %s47 = sphi 0, %s46
      %s61 = sphi 0, %s47
      %s65 = sphi 0, %s65
      %s67 = sphi 0, %s65
      %s68 = sphi 0, %s67
      %s82 = sphi 0, %s68
      %s86 = sphi 0, %s86
      %s88 = sphi 0, %s86
      %s89 = sphi 0, %s88
      %s103 = sphi 0, %s89
      %s109 = sphi 0, %s111
      %s112 = sphi 0, %s109
      %s113 = sphi 0, %s112
      %s129 = sphi 0, %s113
    $region4: #{policy_actor_forward.4} parent=1 // loop_header_branch
      %13 = sbr.rel (%p11) target = $region8
    $region5: #{policy_actor_forward.4} parent=1 // loop_body
      %s15 = ssub.s32 %s10, 1
      %s16 = ssub.s32 %s10, 2
      %s17 = sadd.s32 %s10, 1
      %s18 = ssub.s32 %s10, %s17
      %p19 = scmp.eq.s32.totalorder %s18, 0
      %s21 = sadd.s32 %s20, 1
      %s22 = scalar_select %p19, %s20, %s21
      %p25 = pneg %p19
      %p26 = scmp.eq.s32.totalorder %s10, 1
      %p27 = por %p25, %p26
      %p28 = scmp.ne.s32.totalorder %s20, %s23
      %p29 = scmp.eq.s32.totalorder %s10, 0
      %p30 = por %p28, %p29
      %p31 = scmp.ne.s32.totalorder %s20, %s23
      %p32 = scmp.eq.s32.totalorder %s15, 1
      %p33 = por %p31, %p32
      %p34 = scmp.ne.s32.totalorder %s23, %s24
      %p35 = scmp.eq.s32.totalorder %s15, 0
      %p36 = por %p34, %p35
      %p37 = scmp.ne.s32.totalorder %s23, %s24
      %p38 = scmp.eq.s32.totalorder %s16, 1
      %p39 = por %p37, %p38
      %p41 = scmp.ne.s32.totalorder %s24, %s40
      %p42 = scmp.eq.s32.totalorder %s16, 0
      %p43 = por %p41, %p42
      %s45 = sadd.s32 %s44, 1
      %p48 = scmp.eq.s32.totalorder %s10, 1
      %p49 = scmp.ne.s32.totalorder %s44, %s46
      %p50 = scmp.eq.s32.totalorder %s10, 0
      %p51 = por %p49, %p50
      %p52 = scmp.ne.s32.totalorder %s44, %s46
      %p53 = scmp.eq.s32.totalorder %s15, 1
      %p54 = por %p52, %p53
      %p55 = scmp.ne.s32.totalorder %s46, %s47
      %p56 = scmp.eq.s32.totalorder %s15, 0
      %p57 = por %p55, %p56
      %p58 = scmp.ne.s32.totalorder %s46, %s47
      %p59 = scmp.eq.s32.totalorder %s16, 1
      %p60 = por %p58, %p59
      %p62 = scmp.ne.s32.totalorder %s47, %s61
      %p63 = scmp.eq.s32.totalorder %s16, 0
      %p64 = por %p62, %p63
      %s66 = sadd.s32 %s65, 1
      %p69 = scmp.eq.s32.totalorder %s10, 1
      %p70 = scmp.ne.s32.totalorder %s65, %s67
      %p71 = scmp.eq.s32.totalorder %s10, 0
      %p72 = por %p70, %p71
      %p73 = scmp.ne.s32.totalorder %s65, %s67
      %p74 = scmp.eq.s32.totalorder %s15, 1
      %p75 = por %p73, %p74
      %p76 = scmp.ne.s32.totalorder %s67, %s68
      %p77 = scmp.eq.s32.totalorder %s15, 0
      %p78 = por %p76, %p77
      %p79 = scmp.ne.s32.totalorder %s67, %s68
      %p80 = scmp.eq.s32.totalorder %s16, 1
      %p81 = por %p79, %p80
      %p83 = scmp.ne.s32.totalorder %s68, %s82
      %p84 = scmp.eq.s32.totalorder %s16, 0
      %p85 = por %p83, %p84
      %s87 = sadd.s32 %s86, 1
      %p90 = scmp.eq.s32.totalorder %s10, 1
      %p91 = scmp.ne.s32.totalorder %s86, %s88
      %p92 = scmp.eq.s32.totalorder %s10, 0
      %p93 = por %p91, %p92
      %p94 = scmp.ne.s32.totalorder %s86, %s88
      %p95 = scmp.eq.s32.totalorder %s15, 1
      %p96 = por %p94, %p95
      %p97 = scmp.ne.s32.totalorder %s88, %s89
      %p98 = scmp.eq.s32.totalorder %s15, 0
      %p99 = por %p97, %p98
      %p100 = scmp.ne.s32.totalorder %s88, %s89
      %p101 = scmp.eq.s32.totalorder %s16, 1
      %p102 = por %p100, %p101
      %p104 = scmp.ne.s32.totalorder %s89, %s103
      %p105 = scmp.eq.s32.totalorder %s16, 0
      %p106 = por %p104, %p105
      %s107 = ssub.s32 %s10, %s17
      %p108 = scmp.eq.s32.totalorder %s107, 0
      %s110 = sadd.s32 %s109, 1
      %s111 = scalar_select %p108, %s109, %s110
      %p114 = pneg %p108
      %p115 = scmp.eq.s32.totalorder %s10, 1
      %p116 = por %p114, %p115
      %p117 = scmp.ne.s32.totalorder %s109, %s112
      %p118 = scmp.eq.s32.totalorder %s10, 0
      %p119 = por %p117, %p118
      %p120 = scmp.ne.s32.totalorder %s109, %s112
      %p121 = scmp.eq.s32.totalorder %s15, 1
      %p122 = por %p120, %p121
      %p123 = scmp.ne.s32.totalorder %s112, %s113
      %p124 = scmp.eq.s32.totalorder %s15, 0
      %p125 = por %p123, %p124
      %p126 = scmp.ne.s32.totalorder %s112, %s113
      %p127 = scmp.eq.s32.totalorder %s16, 1
      %p128 = por %p126, %p127
      %p130 = scmp.ne.s32.totalorder %s113, %s129
      %p131 = scmp.eq.s32.totalorder %s16, 0
      %p132 = por %p130, %p131
      %p133 = scmp.le.s32.totalorder 1, %s10
      %p134 = scmp.lt.s32.totalorder %s10, 3
      %p135 = pnand %p133, %p134
      %p136 = pneg %p135
      // Predicated region
      $region9: #{policy_actor_forward.4} parent=5 // pred_check
        _
      $region10: #{policy_actor_forward.4} parent=5 // pred_check_branch
        %138 = sbr.rel (%p135) target = $region12
      $region11: #{policy_actor_forward.4} parent=5 // pred_region
        %s139 = ssub.s32 %s10, 1
        // Predicated region
        $region13: #{policy_actor_forward.4} parent=11 // pred_check
          %p140 = pneg %p57
        $region14: #{policy_actor_forward.4} parent=11 // pred_check_branch
          %142 = sbr.rel (%p140) target = $region16
        $region15: #{policy_actor_forward.4} parent=11 // pred_region
          _
        $region16: #{policy_actor_forward.4} parent=11 // pred_fallthru
          _
        // Predicated region
        $region17: #{policy_actor_forward.4} parent=11 // pred_check
          %p143 = pneg %p78
        $region18: #{policy_actor_forward.4} parent=11 // pred_check_branch
          %145 = sbr.rel (%p143) target = $region20
        $region19: #{policy_actor_forward.4} parent=11 // pred_region
          _
        $region20: #{policy_actor_forward.4} parent=11 // pred_fallthru
          _
        // Predicated region
        $region21: #{policy_actor_forward.4} parent=11 // pred_check
          %p146 = pneg %p99
        $region22: #{policy_actor_forward.4} parent=11 // pred_check_branch
          %148 = sbr.rel (%p146) target = $region24
        $region23: #{policy_actor_forward.4} parent=11 // pred_region
          _
        $region24: #{policy_actor_forward.4} parent=11 // pred_fallthru
          _
      $region12: #{policy_actor_forward.4} parent=5 // pred_fallthru
        _
      %p149 = scmp.lt.s32.totalorder %s10, 2
      // Predicated region
      $region25: #{policy_actor_forward.4} parent=5 // pred_check
        %p150 = pneg %p149
      $region26: #{policy_actor_forward.4} parent=5 // pred_check_branch
        %152 = sbr.rel (%p150) target = $region28
      $region27: #{policy_actor_forward.4} parent=5 // pred_region
        // Predicated region
        $region29: #{policy_actor_forward.4} parent=27 // pred_check
          %p153 = pneg %p30
        $region30: #{policy_actor_forward.4} parent=27 // pred_check_branch
          %155 = sbr.rel (%p153) target = $region32
        $region31: #{policy_actor_forward.4} parent=27 // pred_region
          %s156 = sand.u32 %s20, 1
          %s157 = sand.u32 %s20, 1
          %s158 = smul.addr %s157, 7072
          %s159 = scalar_lea.vmem [#allocation2], %s158
          %s160 = smul.u32 17, %s10
          %s161 = smul.addr %s160, 8
          %s162 = scalar_lea.vmem %s0, %s161
          // Predicated region
          $region33: #{policy_actor_forward.4} parent=31 // pred_check
            _
          $region34: #{policy_actor_forward.4} parent=31 // pred_check_branch
            %164 = sbr.rel (0) target = $region36
          $region35: #{policy_actor_forward.4} parent=31 // pred_region
            // Predicated region
            $region37: #{policy_actor_forward.4} parent=35 // pred_check
              _
            $region38: #{policy_actor_forward.4} parent=35 // pred_check_branch
              %166 = sbr.rel (0) target = $region40
            $region39: #{policy_actor_forward.4} parent=35 // pred_region
              loop: start=0, step=1, limit=1
              $region41: #{policy_actor_forward.4} parent=39 // loop_pre_header
                _
              $region42: #{policy_actor_forward.4} parent=39 // loop_header
                %s168 = sphi 0, %s172
                %p169 = scmp.ge.s32.totalorder %s168, 1
                %s173 = sphi %s162, %s162
                %s174 = sphi %s159, %s159
              $region43: #{policy_actor_forward.4} parent=39 // loop_header_branch
                %171 = sbr.rel (%p169) target = $region47
              $region44: #{policy_actor_forward.4} parent=39 // loop_body
                %v175 = vld [vmem:[%s173] sm:$0xff]
                %176 = vst [vmem:[%s174] sm:$0xff] %v175
                %v177 = vld [vmem:[%s173 + $0x8] sm:$0xff]
                %178 = vst [vmem:[%s174 + $0x8] sm:$0xff] %v177
                %v179 = vld [vmem:[%s173 + $0x10] sm:$0xff]
                %180 = vst [vmem:[%s174 + $0x10] sm:$0xff] %v179
                %v181 = vld [vmem:[%s173 + $0x18] sm:$0xff]
                %182 = vst [vmem:[%s174 + $0x18] sm:$0xff] %v181
                %v183 = vld [vmem:[%s173 + $0x20] sm:$0xff]
                %184 = vst [vmem:[%s174 + $0x20] sm:$0xff] %v183
                %v185 = vld [vmem:[%s173 + $0x28] sm:$0xff]
                %186 = vst [vmem:[%s174 + $0x28] sm:$0xff] %v185
                %v187 = vld [vmem:[%s173 + $0x30] sm:$0xff]
                %188 = vst [vmem:[%s174 + $0x30] sm:$0xff] %v187
                %v189 = vld [vmem:[%s173 + $0x38] sm:$0xff]
                %190 = vst [vmem:[%s174 + $0x38] sm:$0xff] %v189
                %v191 = vld [vmem:[%s173 + $0x40] sm:$0xff]
                %192 = vst [vmem:[%s174 + $0x40] sm:$0xff] %v191
                %v193 = vld [vmem:[%s173 + $0x48] sm:$0xff]
                %194 = vst [vmem:[%s174 + $0x48] sm:$0xff] %v193
                %v195 = vld [vmem:[%s173 + $0x50] sm:$0xff]
                %196 = vst [vmem:[%s174 + $0x50] sm:$0xff] %v195
                %v197 = vld [vmem:[%s173 + $0x58] sm:$0xff]
                %198 = vst [vmem:[%s174 + $0x58] sm:$0xff] %v197
                %v199 = vld [vmem:[%s173 + $0x60] sm:$0xff]
                %200 = vst [vmem:[%s174 + $0x60] sm:$0xff] %v199
                %v201 = vld [vmem:[%s173 + $0x68] sm:$0xff]
                %202 = vst [vmem:[%s174 + $0x68] sm:$0xff] %v201
                %v203 = vld [vmem:[%s173 + $0x70] sm:$0xff]
                %204 = vst [vmem:[%s174 + $0x70] sm:$0xff] %v203
                %v205 = vld [vmem:[%s173 + $0x78] sm:$0xff]
                %206 = vst [vmem:[%s174 + $0x78] sm:$0xff] %v205
                %v207 = vld [vmem:[%s173 + $0x80] sm:$0xff]
                %208 = vst [vmem:[%s174 + $0x80] sm:$0xff] %v207
                %v209 = vld [vmem:[%s173 + $0x110] sm:$0xff]
                %210 = vst [vmem:[%s174 + $0x88] sm:$0xff] %v209
                %v211 = vld [vmem:[%s173 + $0x118] sm:$0xff]
                %212 = vst [vmem:[%s174 + $0x90] sm:$0xff] %v211
                %v213 = vld [vmem:[%s173 + $0x120] sm:$0xff]
                %214 = vst [vmem:[%s174 + $0x98] sm:$0xff] %v213
                %v215 = vld [vmem:[%s173 + $0x128] sm:$0xff]
                %216 = vst [vmem:[%s174 + $0xa0] sm:$0xff] %v215
                %v217 = vld [vmem:[%s173 + $0x130] sm:$0xff]
                %218 = vst [vmem:[%s174 + $0xa8] sm:$0xff] %v217
                %v219 = vld [vmem:[%s173 + $0x138] sm:$0xff]
                %220 = vst [vmem:[%s174 + $0xb0] sm:$0xff] %v219
                %v221 = vld [vmem:[%s173 + $0x140] sm:$0xff]
                %222 = vst [vmem:[%s174 + $0xb8] sm:$0xff] %v221
                %v223 = vld [vmem:[%s173 + $0x148] sm:$0xff]
                %224 = vst [vmem:[%s174 + $0xc0] sm:$0xff] %v223
                %v225 = vld [vmem:[%s173 + $0x150] sm:$0xff]
                %226 = vst [vmem:[%s174 + $0xc8] sm:$0xff] %v225
                %v227 = vld [vmem:[%s173 + $0x158] sm:$0xff]
                %228 = vst [vmem:[%s174 + $0xd0] sm:$0xff] %v227
                %v229 = vld [vmem:[%s173 + $0x160] sm:$0xff]
                %230 = vst [vmem:[%s174 + $0xd8] sm:$0xff] %v229
                %v231 = vld [vmem:[%s173 + $0x168] sm:$0xff]
                %232 = vst [vmem:[%s174 + $0xe0] sm:$0xff] %v231
                %v233 = vld [vmem:[%s173 + $0x170] sm:$0xff]
                %234 = vst [vmem:[%s174 + $0xe8] sm:$0xff] %v233
                %v235 = vld [vmem:[%s173 + $0x178] sm:$0xff]
                %236 = vst [vmem:[%s174 + $0xf0] sm:$0xff] %v235
                %v237 = vld [vmem:[%s173 + $0x180] sm:$0xff]
                %238 = vst [vmem:[%s174 + $0xf8] sm:$0xff] %v237
                %v239 = vld [vmem:[%s173 + $0x188] sm:$0xff]
                %240 = vst [vmem:[%s174 + $0x100] sm:$0xff] %v239
                %v241 = vld [vmem:[%s173 + $0x190] sm:$0xff]
                %242 = vst [vmem:[%s174 + $0x108] sm:$0xff] %v241
                %v243 = vld [vmem:[%s173 + $0x220] sm:$0xff]
                %244 = vst [vmem:[%s174 + $0x110] sm:$0xff] %v243
                %v245 = vld [vmem:[%s173 + $0x228] sm:$0xff]
                %246 = vst [vmem:[%s174 + $0x118] sm:$0xff] %v245
                %v247 = vld [vmem:[%s173 + $0x230] sm:$0xff]
                %248 = vst [vmem:[%s174 + $0x120] sm:$0xff] %v247
                %v249 = vld [vmem:[%s173 + $0x238] sm:$0xff]
                %250 = vst [vmem:[%s174 + $0x128] sm:$0xff] %v249
                %v251 = vld [vmem:[%s173 + $0x240] sm:$0xff]
                %252 = vst [vmem:[%s174 + $0x130] sm:$0xff] %v251
                %v253 = vld [vmem:[%s173 + $0x248] sm:$0xff]
                %254 = vst [vmem:[%s174 + $0x138] sm:$0xff] %v253
                %v255 = vld [vmem:[%s173 + $0x250] sm:$0xff]
                %256 = vst [vmem:[%s174 + $0x140] sm:$0xff] %v255
                %v257 = vld [vmem:[%s173 + $0x258] sm:$0xff]
                %258 = vst [vmem:[%s174 + $0x148] sm:$0xff] %v257
                %v259 = vld [vmem:[%s173 + $0x260] sm:$0xff]
                %260 = vst [vmem:[%s174 + $0x150] sm:$0xff] %v259
                %v261 = vld [vmem:[%s173 + $0x268] sm:$0xff]
                %262 = vst [vmem:[%s174 + $0x158] sm:$0xff] %v261
                %v263 = vld [vmem:[%s173 + $0x270] sm:$0xff]
                %264 = vst [vmem:[%s174 + $0x160] sm:$0xff] %v263
                %v265 = vld [vmem:[%s173 + $0x278] sm:$0xff]
                %266 = vst [vmem:[%s174 + $0x168] sm:$0xff] %v265
                %v267 = vld [vmem:[%s173 + $0x280] sm:$0xff]
                %268 = vst [vmem:[%s174 + $0x170] sm:$0xff] %v267
                %v269 = vld [vmem:[%s173 + $0x288] sm:$0xff]
                %270 = vst [vmem:[%s174 + $0x178] sm:$0xff] %v269
                %v271 = vld [vmem:[%s173 + $0x290] sm:$0xff]
                %272 = vst [vmem:[%s174 + $0x180] sm:$0xff] %v271
                %v273 = vld [vmem:[%s173 + $0x298] sm:$0xff]
                %274 = vst [vmem:[%s174 + $0x188] sm:$0xff] %v273
                %v275 = vld [vmem:[%s173 + $0x2a0] sm:$0xff]
                %276 = vst [vmem:[%s174 + $0x190] sm:$0xff] %v275
                %v277 = vld [vmem:[%s173 + $0x330] sm:$0xff]
                %278 = vst [vmem:[%s174 + $0x198] sm:$0xff] %v277
                %v279 = vld [vmem:[%s173 + $0x338] sm:$0xff]
                %280 = vst [vmem:[%s174 + $0x1a0] sm:$0xff] %v279
                %v281 = vld [vmem:[%s173 + $0x340] sm:$0xff]
                %282 = vst [vmem:[%s174 + $0x1a8] sm:$0xff] %v281
                %v283 = vld [vmem:[%s173 + $0x348] sm:$0xff]
                %284 = vst [vmem:[%s174 + $0x1b0] sm:$0xff] %v283
                %v285 = vld [vmem:[%s173 + $0x350] sm:$0xff]
                %286 = vst [vmem:[%s174 + $0x1b8] sm:$0xff] %v285
                %v287 = vld [vmem:[%s173 + $0x358] sm:$0xff]
                %288 = vst [vmem:[%s174 + $0x1c0] sm:$0xff] %v287
                %v289 = vld [vmem:[%s173 + $0x360] sm:$0xff]
                %290 = vst [vmem:[%s174 + $0x1c8] sm:$0xff] %v289
                %v291 = vld [vmem:[%s173 + $0x368] sm:$0xff]
                %292 = vst [vmem:[%s174 + $0x1d0] sm:$0xff] %v291
                %v293 = vld [vmem:[%s173 + $0x370] sm:$0xff]
                %294 = vst [vmem:[%s174 + $0x1d8] sm:$0xff] %v293
                %v295 = vld [vmem:[%s173 + $0x378] sm:$0xff]
                %296 = vst [vmem:[%s174 + $0x1e0] sm:$0xff] %v295
                %v297 = vld [vmem:[%s173 + $0x380] sm:$0xff]
                %298 = vst [vmem:[%s174 + $0x1e8] sm:$0xff] %v297
                %v299 = vld [vmem:[%s173 + $0x388] sm:$0xff]
                %300 = vst [vmem:[%s174 + $0x1f0] sm:$0xff] %v299
                %v301 = vld [vmem:[%s173 + $0x390] sm:$0xff]
                %302 = vst [vmem:[%s174 + $0x1f8] sm:$0xff] %v301
                %v303 = vld [vmem:[%s173 + $0x398] sm:$0xff]
                %304 = vst [vmem:[%s174 + $0x200] sm:$0xff] %v303
                %v305 = vld [vmem:[%s173 + $0x3a0] sm:$0xff]
                %306 = vst [vmem:[%s174 + $0x208] sm:$0xff] %v305
                %v307 = vld [vmem:[%s173 + $0x3a8] sm:$0xff]
                %308 = vst [vmem:[%s174 + $0x210] sm:$0xff] %v307
                %v309 = vld [vmem:[%s173 + $0x3b0] sm:$0xff]
                %310 = vst [vmem:[%s174 + $0x218] sm:$0xff] %v309
                %v311 = vld [vmem:[%s173 + $0x440] sm:$0xff]
                %312 = vst [vmem:[%s174 + $0x220] sm:$0xff] %v311
                %v313 = vld [vmem:[%s173 + $0x448] sm:$0xff]
                %314 = vst [vmem:[%s174 + $0x228] sm:$0xff] %v313
                %v315 = vld [vmem:[%s173 + $0x450] sm:$0xff]
                %316 = vst [vmem:[%s174 + $0x230] sm:$0xff] %v315
                %v317 = vld [vmem:[%s173 + $0x458] sm:$0xff]
                %318 = vst [vmem:[%s174 + $0x238] sm:$0xff] %v317
                %v319 = vld [vmem:[%s173 + $0x460] sm:$0xff]
                %320 = vst [vmem:[%s174 + $0x240] sm:$0xff] %v319
                %v321 = vld [vmem:[%s173 + $0x468] sm:$0xff]
                %322 = vst [vmem:[%s174 + $0x248] sm:$0xff] %v321
                %v323 = vld [vmem:[%s173 + $0x470] sm:$0xff]
                %324 = vst [vmem:[%s174 + $0x250] sm:$0xff] %v323
                %v325 = vld [vmem:[%s173 + $0x478] sm:$0xff]
                %326 = vst [vmem:[%s174 + $0x258] sm:$0xff] %v325
                %v327 = vld [vmem:[%s173 + $0x480] sm:$0xff]
                %328 = vst [vmem:[%s174 + $0x260] sm:$0xff] %v327
                %v329 = vld [vmem:[%s173 + $0x488] sm:$0xff]
                %330 = vst [vmem:[%s174 + $0x268] sm:$0xff] %v329
                %v331 = vld [vmem:[%s173 + $0x490] sm:$0xff]
                %332 = vst [vmem:[%s174 + $0x270] sm:$0xff] %v331
                %v333 = vld [vmem:[%s173 + $0x498] sm:$0xff]
                %334 = vst [vmem:[%s174 + $0x278] sm:$0xff] %v333
                %v335 = vld [vmem:[%s173 + $0x4a0] sm:$0xff]
                %336 = vst [vmem:[%s174 + $0x280] sm:$0xff] %v335
                %v337 = vld [vmem:[%s173 + $0x4a8] sm:$0xff]
                %338 = vst [vmem:[%s174 + $0x288] sm:$0xff] %v337
                %v339 = vld [vmem:[%s173 + $0x4b0] sm:$0xff]
                %340 = vst [vmem:[%s174 + $0x290] sm:$0xff] %v339
                %v341 = vld [vmem:[%s173 + $0x4b8] sm:$0xff]
                %342 = vst [vmem:[%s174 + $0x298] sm:$0xff] %v341
                %v343 = vld [vmem:[%s173 + $0x4c0] sm:$0xff]
                %344 = vst [vmem:[%s174 + $0x2a0] sm:$0xff] %v343
                %v345 = vld [vmem:[%s173 + $0x550] sm:$0xff]
                %346 = vst [vmem:[%s174 + $0x2a8] sm:$0xff] %v345
                %v347 = vld [vmem:[%s173 + $0x558] sm:$0xff]
                %348 = vst [vmem:[%s174 + $0x2b0] sm:$0xff] %v347
                %v349 = vld [vmem:[%s173 + $0x560] sm:$0xff]
                %350 = vst [vmem:[%s174 + $0x2b8] sm:$0xff] %v349
                %v351 = vld [vmem:[%s173 + $0x568] sm:$0xff]
                %352 = vst [vmem:[%s174 + $0x2c0] sm:$0xff] %v351
                %v353 = vld [vmem:[%s173 + $0x570] sm:$0xff]
                %354 = vst [vmem:[%s174 + $0x2c8] sm:$0xff] %v353
                %v355 = vld [vmem:[%s173 + $0x578] sm:$0xff]
                %356 = vst [vmem:[%s174 + $0x2d0] sm:$0xff] %v355
                %v357 = vld [vmem:[%s173 + $0x580] sm:$0xff]
                %358 = vst [vmem:[%s174 + $0x2d8] sm:$0xff] %v357
                %v359 = vld [vmem:[%s173 + $0x588] sm:$0xff]
                %360 = vst [vmem:[%s174 + $0x2e0] sm:$0xff] %v359
                %v361 = vld [vmem:[%s173 + $0x590] sm:$0xff]
                %362 = vst [vmem:[%s174 + $0x2e8] sm:$0xff] %v361
                %v363 = vld [vmem:[%s173 + $0x598] sm:$0xff]
                %364 = vst [vmem:[%s174 + $0x2f0] sm:$0xff] %v363
                %v365 = vld [vmem:[%s173 + $0x5a0] sm:$0xff]
                %366 = vst [vmem:[%s174 + $0x2f8] sm:$0xff] %v365
                %v367 = vld [vmem:[%s173 + $0x5a8] sm:$0xff]
                %368 = vst [vmem:[%s174 + $0x300] sm:$0xff] %v367
                %v369 = vld [vmem:[%s173 + $0x5b0] sm:$0xff]
                %370 = vst [vmem:[%s174 + $0x308] sm:$0xff] %v369
                %v371 = vld [vmem:[%s173 + $0x5b8] sm:$0xff]
                %372 = vst [vmem:[%s174 + $0x310] sm:$0xff] %v371
                %v373 = vld [vmem:[%s173 + $0x5c0] sm:$0xff]
                %374 = vst [vmem:[%s174 + $0x318] sm:$0xff] %v373
                %v375 = vld [vmem:[%s173 + $0x5c8] sm:$0xff]
                %376 = vst [vmem:[%s174 + $0x320] sm:$0xff] %v375
                %v377 = vld [vmem:[%s173 + $0x5d0] sm:$0xff]
                %378 = vst [vmem:[%s174 + $0x328] sm:$0xff] %v377
                %v379 = vld [vmem:[%s173 + $0x660] sm:$0xff]
                %380 = vst [vmem:[%s174 + $0x330] sm:$0xff] %v379
                %v381 = vld [vmem:[%s173 + $0x668] sm:$0xff]
                %382 = vst [vmem:[%s174 + $0x338] sm:$0xff] %v381
                %v383 = vld [vmem:[%s173 + $0x670] sm:$0xff]
                %384 = vst [vmem:[%s174 + $0x340] sm:$0xff] %v383
                %v385 = vld [vmem:[%s173 + $0x678] sm:$0xff]
                %386 = vst [vmem:[%s174 + $0x348] sm:$0xff] %v385
                %v387 = vld [vmem:[%s173 + $0x680] sm:$0xff]
                %388 = vst [vmem:[%s174 + $0x350] sm:$0xff] %v387
                %v389 = vld [vmem:[%s173 + $0x688] sm:$0xff]
                %390 = vst [vmem:[%s174 + $0x358] sm:$0xff] %v389
                %v391 = vld [vmem:[%s173 + $0x690] sm:$0xff]
                %392 = vst [vmem:[%s174 + $0x360] sm:$0xff] %v391
                %v393 = vld [vmem:[%s173 + $0x698] sm:$0xff]
                %394 = vst [vmem:[%s174 + $0x368] sm:$0xff] %v393
                %v395 = vld [vmem:[%s173 + $0x6a0] sm:$0xff]
                %396 = vst [vmem:[%s174 + $0x370] sm:$0xff] %v395
                %v397 = vld [vmem:[%s173 + $0x6a8] sm:$0xff]
                %398 = vst [vmem:[%s174 + $0x378] sm:$0xff] %v397
                %v399 = vld [vmem:[%s173 + $0x6b0] sm:$0xff]
                %400 = vst [vmem:[%s174 + $0x380] sm:$0xff] %v399
                %v401 = vld [vmem:[%s173 + $0x6b8] sm:$0xff]
                %402 = vst [vmem:[%s174 + $0x388] sm:$0xff] %v401
                %v403 = vld [vmem:[%s173 + $0x6c0] sm:$0xff]
                %404 = vst [vmem:[%s174 + $0x390] sm:$0xff] %v403
                %v405 = vld [vmem:[%s173 + $0x6c8] sm:$0xff]
                %406 = vst [vmem:[%s174 + $0x398] sm:$0xff] %v405
                %v407 = vld [vmem:[%s173 + $0x6d0] sm:$0xff]
                %408 = vst [vmem:[%s174 + $0x3a0] sm:$0xff] %v407
                %v409 = vld [vmem:[%s173 + $0x6d8] sm:$0xff]
                %410 = vst [vmem:[%s174 + $0x3a8] sm:$0xff] %v409
                %v411 = vld [vmem:[%s173 + $0x6e0] sm:$0xff]
                %412 = vst [vmem:[%s174 + $0x3b0] sm:$0xff] %v411
                %v413 = vld [vmem:[%s173 + $0x770] sm:$0xff]
                %414 = vst [vmem:[%s174 + $0x3b8] sm:$0xff] %v413
                %v415 = vld [vmem:[%s173 + $0x778] sm:$0xff]
                %416 = vst [vmem:[%s174 + $0x3c0] sm:$0xff] %v415
                %v417 = vld [vmem:[%s173 + $0x780] sm:$0xff]
                %418 = vst [vmem:[%s174 + $0x3c8] sm:$0xff] %v417
                %v419 = vld [vmem:[%s173 + $0x788] sm:$0xff]
                %420 = vst [vmem:[%s174 + $0x3d0] sm:$0xff] %v419
                %v421 = vld [vmem:[%s173 + $0x790] sm:$0xff]
                %422 = vst [vmem:[%s174 + $0x3d8] sm:$0xff] %v421
                %v423 = vld [vmem:[%s173 + $0x798] sm:$0xff]
                %424 = vst [vmem:[%s174 + $0x3e0] sm:$0xff] %v423
                %v425 = vld [vmem:[%s173 + $0x7a0] sm:$0xff]
                %426 = vst [vmem:[%s174 + $0x3e8] sm:$0xff] %v425
                %v427 = vld [vmem:[%s173 + $0x7a8] sm:$0xff]
                %428 = vst [vmem:[%s174 + $0x3f0] sm:$0xff] %v427
                %v429 = vld [vmem:[%s173 + $0x7b0] sm:$0xff]
                %430 = vst [vmem:[%s174 + $0x3f8] sm:$0xff] %v429
                %v431 = vld [vmem:[%s173 + $0x7b8] sm:$0xff]
                %432 = vst [vmem:[%s174 + $0x400] sm:$0xff] %v431
                %v433 = vld [vmem:[%s173 + $0x7c0] sm:$0xff]
                %434 = vst [vmem:[%s174 + $0x408] sm:$0xff] %v433
                %v435 = vld [vmem:[%s173 + $0x7c8] sm:$0xff]
                %436 = vst [vmem:[%s174 + $0x410] sm:$0xff] %v435
                %v437 = vld [vmem:[%s173 + $0x7d0] sm:$0xff]
                %438 = vst [vmem:[%s174 + $0x418] sm:$0xff] %v437
                %v439 = vld [vmem:[%s173 + $0x7d8] sm:$0xff]
                %440 = vst [vmem:[%s174 + $0x420] sm:$0xff] %v439
                %v441 = vld [vmem:[%s173 + $0x7e0] sm:$0xff]
                %442 = vst [vmem:[%s174 + $0x428] sm:$0xff] %v441
                %v443 = vld [vmem:[%s173 + $0x7e8] sm:$0xff]
                %444 = vst [vmem:[%s174 + $0x430] sm:$0xff] %v443
                %v445 = vld [vmem:[%s173 + $0x7f0] sm:$0xff]
                %446 = vst [vmem:[%s174 + $0x438] sm:$0xff] %v445
                %v447 = vld [vmem:[%s173 + $0x880] sm:$0xff]
                %448 = vst [vmem:[%s174 + $0x440] sm:$0xff] %v447
                %v449 = vld [vmem:[%s173 + $0x888] sm:$0xff]
                %450 = vst [vmem:[%s174 + $0x448] sm:$0xff] %v449
                %v451 = vld [vmem:[%s173 + $0x890] sm:$0xff]
                %452 = vst [vmem:[%s174 + $0x450] sm:$0xff] %v451
                %v453 = vld [vmem:[%s173 + $0x898] sm:$0xff]
                %454 = vst [vmem:[%s174 + $0x458] sm:$0xff] %v453
                %v455 = vld [vmem:[%s173 + $0x8a0] sm:$0xff]
                %456 = vst [vmem:[%s174 + $0x460] sm:$0xff] %v455
                %v457 = vld [vmem:[%s173 + $0x8a8] sm:$0xff]
                %458 = vst [vmem:[%s174 + $0x468] sm:$0xff] %v457
                %v459 = vld [vmem:[%s173 + $0x8b0] sm:$0xff]
                %460 = vst [vmem:[%s174 + $0x470] sm:$0xff] %v459
                %v461 = vld [vmem:[%s173 + $0x8b8] sm:$0xff]
                %462 = vst [vmem:[%s174 + $0x478] sm:$0xff] %v461
                %v463 = vld [vmem:[%s173 + $0x8c0] sm:$0xff]
                %464 = vst [vmem:[%s174 + $0x480] sm:$0xff] %v463
                %v465 = vld [vmem:[%s173 + $0x8c8] sm:$0xff]
                %466 = vst [vmem:[%s174 + $0x488] sm:$0xff] %v465
                %v467 = vld [vmem:[%s173 + $0x8d0] sm:$0xff]
                %468 = vst [vmem:[%s174 + $0x490] sm:$0xff] %v467
                %v469 = vld [vmem:[%s173 + $0x8d8] sm:$0xff]
                %470 = vst [vmem:[%s174 + $0x498] sm:$0xff] %v469
                %v471 = vld [vmem:[%s173 + $0x8e0] sm:$0xff]
                %472 = vst [vmem:[%s174 + $0x4a0] sm:$0xff] %v471
                %v473 = vld [vmem:[%s173 + $0x8e8] sm:$0xff]
                %474 = vst [vmem:[%s174 + $0x4a8] sm:$0xff] %v473
                %v475 = vld [vmem:[%s173 + $0x8f0] sm:$0xff]
                %476 = vst [vmem:[%s174 + $0x4b0] sm:$0xff] %v475
                %v477 = vld [vmem:[%s173 + $0x8f8] sm:$0xff]
                %478 = vst [vmem:[%s174 + $0x4b8] sm:$0xff] %v477
                %v479 = vld [vmem:[%s173 + $0x900] sm:$0xff]
                %480 = vst [vmem:[%s174 + $0x4c0] sm:$0xff] %v479
                %v481 = vld [vmem:[%s173 + $0x990] sm:$0xff]
                %482 = vst [vmem:[%s174 + $0x4c8] sm:$0xff] %v481
                %v483 = vld [vmem:[%s173 + $0x998] sm:$0xff]
                %484 = vst [vmem:[%s174 + $0x4d0] sm:$0xff] %v483
                %v485 = vld [vmem:[%s173 + $0x9a0] sm:$0xff]
                %486 = vst [vmem:[%s174 + $0x4d8] sm:$0xff] %v485
                %v487 = vld [vmem:[%s173 + $0x9a8] sm:$0xff]
                %488 = vst [vmem:[%s174 + $0x4e0] sm:$0xff] %v487
                %v489 = vld [vmem:[%s173 + $0x9b0] sm:$0xff]
                %490 = vst [vmem:[%s174 + $0x4e8] sm:$0xff] %v489
                %v491 = vld [vmem:[%s173 + $0x9b8] sm:$0xff]
                %492 = vst [vmem:[%s174 + $0x4f0] sm:$0xff] %v491
                %v493 = vld [vmem:[%s173 + $0x9c0] sm:$0xff]
                %494 = vst [vmem:[%s174 + $0x4f8] sm:$0xff] %v493
                %v495 = vld [vmem:[%s173 + $0x9c8] sm:$0xff]
                %496 = vst [vmem:[%s174 + $0x500] sm:$0xff] %v495
                %v497 = vld [vmem:[%s173 + $0x9d0] sm:$0xff]
                %498 = vst [vmem:[%s174 + $0x508] sm:$0xff] %v497
                %v499 = vld [vmem:[%s173 + $0x9d8] sm:$0xff]
                %500 = vst [vmem:[%s174 + $0x510] sm:$0xff] %v499
                %v501 = vld [vmem:[%s173 + $0x9e0] sm:$0xff]
                %502 = vst [vmem:[%s174 + $0x518] sm:$0xff] %v501
                %v503 = vld [vmem:[%s173 + $0x9e8] sm:$0xff]
                %504 = vst [vmem:[%s174 + $0x520] sm:$0xff] %v503
                %v505 = vld [vmem:[%s173 + $0x9f0] sm:$0xff]
                %506 = vst [vmem:[%s174 + $0x528] sm:$0xff] %v505
                %v507 = vld [vmem:[%s173 + $0x9f8] sm:$0xff]
                %508 = vst [vmem:[%s174 + $0x530] sm:$0xff] %v507
                %v509 = vld [vmem:[%s173 + $0xa00] sm:$0xff]
                %510 = vst [vmem:[%s174 + $0x538] sm:$0xff] %v509
                %v511 = vld [vmem:[%s173 + $0xa08] sm:$0xff]
                %512 = vst [vmem:[%s174 + $0x540] sm:$0xff] %v511
                %v513 = vld [vmem:[%s173 + $0xa10] sm:$0xff]
                %514 = vst [vmem:[%s174 + $0x548] sm:$0xff] %v513
                %v515 = vld [vmem:[%s173 + $0xaa0] sm:$0xff]
                %516 = vst [vmem:[%s174 + $0x550] sm:$0xff] %v515
                %v517 = vld [vmem:[%s173 + $0xaa8] sm:$0xff]
                %518 = vst [vmem:[%s174 + $0x558] sm:$0xff] %v517
                %v519 = vld [vmem:[%s173 + $0xab0] sm:$0xff]
                %520 = vst [vmem:[%s174 + $0x560] sm:$0xff] %v519
                %v521 = vld [vmem:[%s173 + $0xab8] sm:$0xff]
                %522 = vst [vmem:[%s174 + $0x568] sm:$0xff] %v521
                %v523 = vld [vmem:[%s173 + $0xac0] sm:$0xff]
                %524 = vst [vmem:[%s174 + $0x570] sm:$0xff] %v523
                %v525 = vld [vmem:[%s173 + $0xac8] sm:$0xff]
                %526 = vst [vmem:[%s174 + $0x578] sm:$0xff] %v525
                %v527 = vld [vmem:[%s173 + $0xad0] sm:$0xff]
                %528 = vst [vmem:[%s174 + $0x580] sm:$0xff] %v527
                %v529 = vld [vmem:[%s173 + $0xad8] sm:$0xff]
                %530 = vst [vmem:[%s174 + $0x588] sm:$0xff] %v529
                %v531 = vld [vmem:[%s173 + $0xae0] sm:$0xff]
                %532 = vst [vmem:[%s174 + $0x590] sm:$0xff] %v531
                %v533 = vld [vmem:[%s173 + $0xae8] sm:$0xff]
                %534 = vst [vmem:[%s174 + $0x598] sm:$0xff] %v533
                %v535 = vld [vmem:[%s173 + $0xaf0] sm:$0xff]
                %536 = vst [vmem:[%s174 + $0x5a0] sm:$0xff] %v535
                %v537 = vld [vmem:[%s173 + $0xaf8] sm:$0xff]
                %538 = vst [vmem:[%s174 + $0x5a8] sm:$0xff] %v537
                %v539 = vld [vmem:[%s173 + $0xb00] sm:$0xff]
                %540 = vst [vmem:[%s174 + $0x5b0] sm:$0xff] %v539
                %v541 = vld [vmem:[%s173 + $0xb08] sm:$0xff]
                %542 = vst [vmem:[%s174 + $0x5b8] sm:$0xff] %v541
                %v543 = vld [vmem:[%s173 + $0xb10] sm:$0xff]
                %544 = vst [vmem:[%s174 + $0x5c0] sm:$0xff] %v543
                %v545 = vld [vmem:[%s173 + $0xb18] sm:$0xff]
                %546 = vst [vmem:[%s174 + $0x5c8] sm:$0xff] %v545
                %v547 = vld [vmem:[%s173 + $0xb20] sm:$0xff]
                %548 = vst [vmem:[%s174 + $0x5d0] sm:$0xff] %v547
                %v549 = vld [vmem:[%s173 + $0xbb0] sm:$0xff]
                %550 = vst [vmem:[%s174 + $0x5d8] sm:$0xff] %v549
                %v551 = vld [vmem:[%s173 + $0xbb8] sm:$0xff]
                %552 = vst [vmem:[%s174 + $0x5e0] sm:$0xff] %v551
                %v553 = vld [vmem:[%s173 + $0xbc0] sm:$0xff]
                %554 = vst [vmem:[%s174 + $0x5e8] sm:$0xff] %v553
                %v555 = vld [vmem:[%s173 + $0xbc8] sm:$0xff]
                %556 = vst [vmem:[%s174 + $0x5f0] sm:$0xff] %v555
                %v557 = vld [vmem:[%s173 + $0xbd0] sm:$0xff]
                %558 = vst [vmem:[%s174 + $0x5f8] sm:$0xff] %v557
                %v559 = vld [vmem:[%s173 + $0xbd8] sm:$0xff]
                %560 = vst [vmem:[%s174 + $0x600] sm:$0xff] %v559
                %v561 = vld [vmem:[%s173 + $0xbe0] sm:$0xff]
                %562 = vst [vmem:[%s174 + $0x608] sm:$0xff] %v561
                %v563 = vld [vmem:[%s173 + $0xbe8] sm:$0xff]
                %564 = vst [vmem:[%s174 + $0x610] sm:$0xff] %v563
                %v565 = vld [vmem:[%s173 + $0xbf0] sm:$0xff]
                %566 = vst [vmem:[%s174 + $0x618] sm:$0xff] %v565
                %v567 = vld [vmem:[%s173 + $0xbf8] sm:$0xff]
                %568 = vst [vmem:[%s174 + $0x620] sm:$0xff] %v567
                %v569 = vld [vmem:[%s173 + $0xc00] sm:$0xff]
                %570 = vst [vmem:[%s174 + $0x628] sm:$0xff] %v569
                %v571 = vld [vmem:[%s173 + $0xc08] sm:$0xff]
                %572 = vst [vmem:[%s174 + $0x630] sm:$0xff] %v571
                %v573 = vld [vmem:[%s173 + $0xc10] sm:$0xff]
                %574 = vst [vmem:[%s174 + $0x638] sm:$0xff] %v573
                %v575 = vld [vmem:[%s173 + $0xc18] sm:$0xff]
                %576 = vst [vmem:[%s174 + $0x640] sm:$0xff] %v575
                %v577 = vld [vmem:[%s173 + $0xc20] sm:$0xff]
                %578 = vst [vmem:[%s174 + $0x648] sm:$0xff] %v577
                %v579 = vld [vmem:[%s173 + $0xc28] sm:$0xff]
                %580 = vst [vmem:[%s174 + $0x650] sm:$0xff] %v579
                %v581 = vld [vmem:[%s173 + $0xc30] sm:$0xff]
                %582 = vst [vmem:[%s174 + $0x658] sm:$0xff] %v581
                %v583 = vld [vmem:[%s173 + $0xcc0] sm:$0xff]
                %584 = vst [vmem:[%s174 + $0x660] sm:$0xff] %v583
                %v585 = vld [vmem:[%s173 + $0xcc8] sm:$0xff]
                %586 = vst [vmem:[%s174 + $0x668] sm:$0xff] %v585
                %v587 = vld [vmem:[%s173 + $0xcd0] sm:$0xff]
                %588 = vst [vmem:[%s174 + $0x670] sm:$0xff] %v587
                %v589 = vld [vmem:[%s173 + $0xcd8] sm:$0xff]
                %590 = vst [vmem:[%s174 + $0x678] sm:$0xff] %v589
                %v591 = vld [vmem:[%s173 + $0xce0] sm:$0xff]
                %592 = vst [vmem:[%s174 + $0x680] sm:$0xff] %v591
                %v593 = vld [vmem:[%s173 + $0xce8] sm:$0xff]
                %594 = vst [vmem:[%s174 + $0x688] sm:$0xff] %v593
                %v595 = vld [vmem:[%s173 + $0xcf0] sm:$0xff]
                %596 = vst [vmem:[%s174 + $0x690] sm:$0xff] %v595
                %v597 = vld [vmem:[%s173 + $0xcf8] sm:$0xff]
                %598 = vst [vmem:[%s174 + $0x698] sm:$0xff] %v597
                %v599 = vld [vmem:[%s173 + $0xd00] sm:$0xff]
                %600 = vst [vmem:[%s174 + $0x6a0] sm:$0xff] %v599
                %v601 = vld [vmem:[%s173 + $0xd08] sm:$0xff]
                %602 = vst [vmem:[%s174 + $0x6a8] sm:$0xff] %v601
                %v603 = vld [vmem:[%s173 + $0xd10] sm:$0xff]
                %604 = vst [vmem:[%s174 + $0x6b0] sm:$0xff] %v603
                %v605 = vld [vmem:[%s173 + $0xd18] sm:$0xff]
                %606 = vst [vmem:[%s174 + $0x6b8] sm:$0xff] %v605
                %v607 = vld [vmem:[%s173 + $0xd20] sm:$0xff]
                %608 = vst [vmem:[%s174 + $0x6c0] sm:$0xff] %v607
                %v609 = vld [vmem:[%s173 + $0xd28] sm:$0xff]
                %610 = vst [vmem:[%s174 + $0x6c8] sm:$0xff] %v609
                %v611 = vld [vmem:[%s173 + $0xd30] sm:$0xff]
                %612 = vst [vmem:[%s174 + $0x6d0] sm:$0xff] %v611
                %v613 = vld [vmem:[%s173 + $0xd38] sm:$0xff]
                %614 = vst [vmem:[%s174 + $0x6d8] sm:$0xff] %v613
                %v615 = vld [vmem:[%s173 + $0xd40] sm:$0xff]
                %616 = vst [vmem:[%s174 + $0x6e0] sm:$0xff] %v615
                %v617 = vld [vmem:[%s173 + $0xdd0] sm:$0xff]
                %618 = vst [vmem:[%s174 + $0x6e8] sm:$0xff] %v617
                %v619 = vld [vmem:[%s173 + $0xdd8] sm:$0xff]
                %620 = vst [vmem:[%s174 + $0x6f0] sm:$0xff] %v619
                %v621 = vld [vmem:[%s173 + $0xde0] sm:$0xff]
                %622 = vst [vmem:[%s174 + $0x6f8] sm:$0xff] %v621
                %v623 = vld [vmem:[%s173 + $0xde8] sm:$0xff]
                %624 = vst [vmem:[%s174 + $0x700] sm:$0xff] %v623
                %v625 = vld [vmem:[%s173 + $0xdf0] sm:$0xff]
                %626 = vst [vmem:[%s174 + $0x708] sm:$0xff] %v625
                %v627 = vld [vmem:[%s173 + $0xdf8] sm:$0xff]
                %628 = vst [vmem:[%s174 + $0x710] sm:$0xff] %v627
                %v629 = vld [vmem:[%s173 + $0xe00] sm:$0xff]
                %630 = vst [vmem:[%s174 + $0x718] sm:$0xff] %v629
                %v631 = vld [vmem:[%s173 + $0xe08] sm:$0xff]
                %632 = vst [vmem:[%s174 + $0x720] sm:$0xff] %v631
                %v633 = vld [vmem:[%s173 + $0xe10] sm:$0xff]
                %634 = vst [vmem:[%s174 + $0x728] sm:$0xff] %v633
                %v635 = vld [vmem:[%s173 + $0xe18] sm:$0xff]
                %636 = vst [vmem:[%s174 + $0x730] sm:$0xff] %v635
                %v637 = vld [vmem:[%s173 + $0xe20] sm:$0xff]
                %638 = vst [vmem:[%s174 + $0x738] sm:$0xff] %v637
                %v639 = vld [vmem:[%s173 + $0xe28] sm:$0xff]
                %640 = vst [vmem:[%s174 + $0x740] sm:$0xff] %v639
                %v641 = vld [vmem:[%s173 + $0xe30] sm:$0xff]
                %642 = vst [vmem:[%s174 + $0x748] sm:$0xff] %v641
                %v643 = vld [vmem:[%s173 + $0xe38] sm:$0xff]
                %644 = vst [vmem:[%s174 + $0x750] sm:$0xff] %v643
                %v645 = vld [vmem:[%s173 + $0xe40] sm:$0xff]
                %646 = vst [vmem:[%s174 + $0x758] sm:$0xff] %v645
                %v647 = vld [vmem:[%s173 + $0xe48] sm:$0xff]
                %648 = vst [vmem:[%s174 + $0x760] sm:$0xff] %v647
                %v649 = vld [vmem:[%s173 + $0xe50] sm:$0xff]
                %650 = vst [vmem:[%s174 + $0x768] sm:$0xff] %v649
                %v651 = vld [vmem:[%s173 + $0xee0] sm:$0xff]
                %652 = vst [vmem:[%s174 + $0x770] sm:$0xff] %v651
                %v653 = vld [vmem:[%s173 + $0xee8] sm:$0xff]
                %654 = vst [vmem:[%s174 + $0x778] sm:$0xff] %v653
                %v655 = vld [vmem:[%s173 + $0xef0] sm:$0xff]
                %656 = vst [vmem:[%s174 + $0x780] sm:$0xff] %v655
                %v657 = vld [vmem:[%s173 + $0xef8] sm:$0xff]
                %658 = vst [vmem:[%s174 + $0x788] sm:$0xff] %v657
                %v659 = vld [vmem:[%s173 + $0xf00] sm:$0xff]
                %660 = vst [vmem:[%s174 + $0x790] sm:$0xff] %v659
                %v661 = vld [vmem:[%s173 + $0xf08] sm:$0xff]
                %662 = vst [vmem:[%s174 + $0x798] sm:$0xff] %v661
                %v663 = vld [vmem:[%s173 + $0xf10] sm:$0xff]
                %664 = vst [vmem:[%s174 + $0x7a0] sm:$0xff] %v663
                %v665 = vld [vmem:[%s173 + $0xf18] sm:$0xff]
                %666 = vst [vmem:[%s174 + $0x7a8] sm:$0xff] %v665
                %v667 = vld [vmem:[%s173 + $0xf20] sm:$0xff]
                %668 = vst [vmem:[%s174 + $0x7b0] sm:$0xff] %v667
                %v669 = vld [vmem:[%s173 + $0xf28] sm:$0xff]
                %670 = vst [vmem:[%s174 + $0x7b8] sm:$0xff] %v669
                %v671 = vld [vmem:[%s173 + $0xf30] sm:$0xff]
                %672 = vst [vmem:[%s174 + $0x7c0] sm:$0xff] %v671
                %v673 = vld [vmem:[%s173 + $0xf38] sm:$0xff]
                %674 = vst [vmem:[%s174 + $0x7c8] sm:$0xff] %v673
                %v675 = vld [vmem:[%s173 + $0xf40] sm:$0xff]
                %676 = vst [vmem:[%s174 + $0x7d0] sm:$0xff] %v675
                %v677 = vld [vmem:[%s173 + $0xf48] sm:$0xff]
                %678 = vst [vmem:[%s174 + $0x7d8] sm:$0xff] %v677
                %v679 = vld [vmem:[%s173 + $0xf50] sm:$0xff]
                %680 = vst [vmem:[%s174 + $0x7e0] sm:$0xff] %v679
                %v681 = vld [vmem:[%s173 + $0xf58] sm:$0xff]
                %682 = vst [vmem:[%s174 + $0x7e8] sm:$0xff] %v681
                %v683 = vld [vmem:[%s173 + $0xf60] sm:$0xff]
                %684 = vst [vmem:[%s174 + $0x7f0] sm:$0xff] %v683
                %v685 = vld [vmem:[%s173 + $0xff0] sm:$0xff]
                %686 = vst [vmem:[%s174 + $0x7f8] sm:$0xff] %v685
                %v687 = vld [vmem:[%s173 + $0xff8] sm:$0xff]
                %688 = vst [vmem:[%s174 + $0x800] sm:$0xff] %v687
                %v689 = vld [vmem:[%s173 + $0x1000] sm:$0xff]
                %690 = vst [vmem:[%s174 + $0x808] sm:$0xff] %v689
                %v691 = vld [vmem:[%s173 + $0x1008] sm:$0xff]
                %692 = vst [vmem:[%s174 + $0x810] sm:$0xff] %v691
                %v693 = vld [vmem:[%s173 + $0x1010] sm:$0xff]
                %694 = vst [vmem:[%s174 + $0x818] sm:$0xff] %v693
                %v695 = vld [vmem:[%s173 + $0x1018] sm:$0xff]
                %696 = vst [vmem:[%s174 + $0x820] sm:$0xff] %v695
                %v697 = vld [vmem:[%s173 + $0x1020] sm:$0xff]
                %698 = vst [vmem:[%s174 + $0x828] sm:$0xff] %v697
                %v699 = vld [vmem:[%s173 + $0x1028] sm:$0xff]
                %700 = vst [vmem:[%s174 + $0x830] sm:$0xff] %v699
                %v701 = vld [vmem:[%s173 + $0x1030] sm:$0xff]
                %702 = vst [vmem:[%s174 + $0x838] sm:$0xff] %v701
                %v703 = vld [vmem:[%s173 + $0x1038] sm:$0xff]
                %704 = vst [vmem:[%s174 + $0x840] sm:$0xff] %v703
                %v705 = vld [vmem:[%s173 + $0x1040] sm:$0xff]
                %706 = vst [vmem:[%s174 + $0x848] sm:$0xff] %v705
                %v707 = vld [vmem:[%s173 + $0x1048] sm:$0xff]
                %708 = vst [vmem:[%s174 + $0x850] sm:$0xff] %v707
                %v709 = vld [vmem:[%s173 + $0x1050] sm:$0xff]
                %710 = vst [vmem:[%s174 + $0x858] sm:$0xff] %v709
                %v711 = vld [vmem:[%s173 + $0x1058] sm:$0xff]
                %712 = vst [vmem:[%s174 + $0x860] sm:$0xff] %v711
                %v713 = vld [vmem:[%s173 + $0x1060] sm:$0xff]
                %714 = vst [vmem:[%s174 + $0x868] sm:$0xff] %v713
                %v715 = vld [vmem:[%s173 + $0x1068] sm:$0xff]
                %716 = vst [vmem:[%s174 + $0x870] sm:$0xff] %v715
                %v717 = vld [vmem:[%s173 + $0x1070] sm:$0xff]
                %718 = vst [vmem:[%s174 + $0x878] sm:$0xff] %v717
                %v719 = vld [vmem:[%s173 + $0x1100] sm:$0xff]
                %720 = vst [vmem:[%s174 + $0x880] sm:$0xff] %v719
                %v721 = vld [vmem:[%s173 + $0x1108] sm:$0xff]
                %722 = vst [vmem:[%s174 + $0x888] sm:$0xff] %v721
                %v723 = vld [vmem:[%s173 + $0x1110] sm:$0xff]
                %724 = vst [vmem:[%s174 + $0x890] sm:$0xff] %v723
                %v725 = vld [vmem:[%s173 + $0x1118] sm:$0xff]
                %726 = vst [vmem:[%s174 + $0x898] sm:$0xff] %v725
                %v727 = vld [vmem:[%s173 + $0x1120] sm:$0xff]
                %728 = vst [vmem:[%s174 + $0x8a0] sm:$0xff] %v727
                %v729 = vld [vmem:[%s173 + $0x1128] sm:$0xff]
                %730 = vst [vmem:[%s174 + $0x8a8] sm:$0xff] %v729
                %v731 = vld [vmem:[%s173 + $0x1130] sm:$0xff]
                %732 = vst [vmem:[%s174 + $0x8b0] sm:$0xff] %v731
                %v733 = vld [vmem:[%s173 + $0x1138] sm:$0xff]
                %734 = vst [vmem:[%s174 + $0x8b8] sm:$0xff] %v733
                %v735 = vld [vmem:[%s173 + $0x1140] sm:$0xff]
                %736 = vst [vmem:[%s174 + $0x8c0] sm:$0xff] %v735
                %v737 = vld [vmem:[%s173 + $0x1148] sm:$0xff]
                %738 = vst [vmem:[%s174 + $0x8c8] sm:$0xff] %v737
                %v739 = vld [vmem:[%s173 + $0x1150] sm:$0xff]
                %740 = vst [vmem:[%s174 + $0x8d0] sm:$0xff] %v739
                %v741 = vld [vmem:[%s173 + $0x1158] sm:$0xff]
                %742 = vst [vmem:[%s174 + $0x8d8] sm:$0xff] %v741
                %v743 = vld [vmem:[%s173 + $0x1160] sm:$0xff]
                %744 = vst [vmem:[%s174 + $0x8e0] sm:$0xff] %v743
                %v745 = vld [vmem:[%s173 + $0x1168] sm:$0xff]
                %746 = vst [vmem:[%s174 + $0x8e8] sm:$0xff] %v745
                %v747 = vld [vmem:[%s173 + $0x1170] sm:$0xff]
                %748 = vst [vmem:[%s174 + $0x8f0] sm:$0xff] %v747
                %v749 = vld [vmem:[%s173 + $0x1178] sm:$0xff]
                %750 = vst [vmem:[%s174 + $0x8f8] sm:$0xff] %v749
                %v751 = vld [vmem:[%s173 + $0x1180] sm:$0xff]
                %752 = vst [vmem:[%s174 + $0x900] sm:$0xff] %v751
                %v753 = vld [vmem:[%s173 + $0x1210] sm:$0xff]
                %754 = vst [vmem:[%s174 + $0x908] sm:$0xff] %v753
                %v755 = vld [vmem:[%s173 + $0x1218] sm:$0xff]
                %756 = vst [vmem:[%s174 + $0x910] sm:$0xff] %v755
                %v757 = vld [vmem:[%s173 + $0x1220] sm:$0xff]
                %758 = vst [vmem:[%s174 + $0x918] sm:$0xff] %v757
                %v759 = vld [vmem:[%s173 + $0x1228] sm:$0xff]
                %760 = vst [vmem:[%s174 + $0x920] sm:$0xff] %v759
                %v761 = vld [vmem:[%s173 + $0x1230] sm:$0xff]
                %762 = vst [vmem:[%s174 + $0x928] sm:$0xff] %v761
                %v763 = vld [vmem:[%s173 + $0x1238] sm:$0xff]
                %764 = vst [vmem:[%s174 + $0x930] sm:$0xff] %v763
                %v765 = vld [vmem:[%s173 + $0x1240] sm:$0xff]
                %766 = vst [vmem:[%s174 + $0x938] sm:$0xff] %v765
                %v767 = vld [vmem:[%s173 + $0x1248] sm:$0xff]
                %768 = vst [vmem:[%s174 + $0x940] sm:$0xff] %v767
                %v769 = vld [vmem:[%s173 + $0x1250] sm:$0xff]
                %770 = vst [vmem:[%s174 + $0x948] sm:$0xff] %v769
                %v771 = vld [vmem:[%s173 + $0x1258] sm:$0xff]
                %772 = vst [vmem:[%s174 + $0x950] sm:$0xff] %v771
                %v773 = vld [vmem:[%s173 + $0x1260] sm:$0xff]
                %774 = vst [vmem:[%s174 + $0x958] sm:$0xff] %v773
                %v775 = vld [vmem:[%s173 + $0x1268] sm:$0xff]
                %776 = vst [vmem:[%s174 + $0x960] sm:$0xff] %v775
                %v777 = vld [vmem:[%s173 + $0x1270] sm:$0xff]
                %778 = vst [vmem:[%s174 + $0x968] sm:$0xff] %v777
                %v779 = vld [vmem:[%s173 + $0x1278] sm:$0xff]
                %780 = vst [vmem:[%s174 + $0x970] sm:$0xff] %v779
                %v781 = vld [vmem:[%s173 + $0x1280] sm:$0xff]
                %782 = vst [vmem:[%s174 + $0x978] sm:$0xff] %v781
                %v783 = vld [vmem:[%s173 + $0x1288] sm:$0xff]
                %784 = vst [vmem:[%s174 + $0x980] sm:$0xff] %v783
                %v785 = vld [vmem:[%s173 + $0x1290] sm:$0xff]
                %786 = vst [vmem:[%s174 + $0x988] sm:$0xff] %v785
                %v787 = vld [vmem:[%s173 + $0x1320] sm:$0xff]
                %788 = vst [vmem:[%s174 + $0x990] sm:$0xff] %v787
                %v789 = vld [vmem:[%s173 + $0x1328] sm:$0xff]
                %790 = vst [vmem:[%s174 + $0x998] sm:$0xff] %v789
                %v791 = vld [vmem:[%s173 + $0x1330] sm:$0xff]
                %792 = vst [vmem:[%s174 + $0x9a0] sm:$0xff] %v791
                %v793 = vld [vmem:[%s173 + $0x1338] sm:$0xff]
                %794 = vst [vmem:[%s174 + $0x9a8] sm:$0xff] %v793
                %v795 = vld [vmem:[%s173 + $0x1340] sm:$0xff]
                %796 = vst [vmem:[%s174 + $0x9b0] sm:$0xff] %v795
                %v797 = vld [vmem:[%s173 + $0x1348] sm:$0xff]
                %798 = vst [vmem:[%s174 + $0x9b8] sm:$0xff] %v797
                %v799 = vld [vmem:[%s173 + $0x1350] sm:$0xff]
                %800 = vst [vmem:[%s174 + $0x9c0] sm:$0xff] %v799
                %v801 = vld [vmem:[%s173 + $0x1358] sm:$0xff]
                %802 = vst [vmem:[%s174 + $0x9c8] sm:$0xff] %v801
                %v803 = vld [vmem:[%s173 + $0x1360] sm:$0xff]
                %804 = vst [vmem:[%s174 + $0x9d0] sm:$0xff] %v803
                %v805 = vld [vmem:[%s173 + $0x1368] sm:$0xff]
                %806 = vst [vmem:[%s174 + $0x9d8] sm:$0xff] %v805
                %v807 = vld [vmem:[%s173 + $0x1370] sm:$0xff]
                %808 = vst [vmem:[%s174 + $0x9e0] sm:$0xff] %v807
                %v809 = vld [vmem:[%s173 + $0x1378] sm:$0xff]
                %810 = vst [vmem:[%s174 + $0x9e8] sm:$0xff] %v809
                %v811 = vld [vmem:[%s173 + $0x1380] sm:$0xff]
                %812 = vst [vmem:[%s174 + $0x9f0] sm:$0xff] %v811
                %v813 = vld [vmem:[%s173 + $0x1388] sm:$0xff]
                %814 = vst [vmem:[%s174 + $0x9f8] sm:$0xff] %v813
                %v815 = vld [vmem:[%s173 + $0x1390] sm:$0xff]
                %816 = vst [vmem:[%s174 + $0xa00] sm:$0xff] %v815
                %v817 = vld [vmem:[%s173 + $0x1398] sm:$0xff]
                %818 = vst [vmem:[%s174 + $0xa08] sm:$0xff] %v817
                %v819 = vld [vmem:[%s173 + $0x13a0] sm:$0xff]
                %820 = vst [vmem:[%s174 + $0xa10] sm:$0xff] %v819
                %v821 = vld [vmem:[%s173 + $0x1430] sm:$0xff]
                %822 = vst [vmem:[%s174 + $0xa18] sm:$0xff] %v821
                %v823 = vld [vmem:[%s173 + $0x1438] sm:$0xff]
                %824 = vst [vmem:[%s174 + $0xa20] sm:$0xff] %v823
                %v825 = vld [vmem:[%s173 + $0x1440] sm:$0xff]
                %826 = vst [vmem:[%s174 + $0xa28] sm:$0xff] %v825
                %v827 = vld [vmem:[%s173 + $0x1448] sm:$0xff]
                %828 = vst [vmem:[%s174 + $0xa30] sm:$0xff] %v827
                %v829 = vld [vmem:[%s173 + $0x1450] sm:$0xff]
                %830 = vst [vmem:[%s174 + $0xa38] sm:$0xff] %v829
                %v831 = vld [vmem:[%s173 + $0x1458] sm:$0xff]
                %832 = vst [vmem:[%s174 + $0xa40] sm:$0xff] %v831
                %v833 = vld [vmem:[%s173 + $0x1460] sm:$0xff]
                %834 = vst [vmem:[%s174 + $0xa48] sm:$0xff] %v833
                %v835 = vld [vmem:[%s173 + $0x1468] sm:$0xff]
                %836 = vst [vmem:[%s174 + $0xa50] sm:$0xff] %v835
                %v837 = vld [vmem:[%s173 + $0x1470] sm:$0xff]
                %838 = vst [vmem:[%s174 + $0xa58] sm:$0xff] %v837
                %v839 = vld [vmem:[%s173 + $0x1478] sm:$0xff]
                %840 = vst [vmem:[%s174 + $0xa60] sm:$0xff] %v839
                %v841 = vld [vmem:[%s173 + $0x1480] sm:$0xff]
                %842 = vst [vmem:[%s174 + $0xa68] sm:$0xff] %v841
                %v843 = vld [vmem:[%s173 + $0x1488] sm:$0xff]
                %844 = vst [vmem:[%s174 + $0xa70] sm:$0xff] %v843
                %v845 = vld [vmem:[%s173 + $0x1490] sm:$0xff]
                %846 = vst [vmem:[%s174 + $0xa78] sm:$0xff] %v845
                %v847 = vld [vmem:[%s173 + $0x1498] sm:$0xff]
                %848 = vst [vmem:[%s174 + $0xa80] sm:$0xff] %v847
                %v849 = vld [vmem:[%s173 + $0x14a0] sm:$0xff]
                %850 = vst [vmem:[%s174 + $0xa88] sm:$0xff] %v849
                %v851 = vld [vmem:[%s173 + $0x14a8] sm:$0xff]
                %852 = vst [vmem:[%s174 + $0xa90] sm:$0xff] %v851
                %v853 = vld [vmem:[%s173 + $0x14b0] sm:$0xff]
                %854 = vst [vmem:[%s174 + $0xa98] sm:$0xff] %v853
                %v855 = vld [vmem:[%s173 + $0x1540] sm:$0xff]
                %856 = vst [vmem:[%s174 + $0xaa0] sm:$0xff] %v855
                %v857 = vld [vmem:[%s173 + $0x1548] sm:$0xff]
                %858 = vst [vmem:[%s174 + $0xaa8] sm:$0xff] %v857
                %v859 = vld [vmem:[%s173 + $0x1550] sm:$0xff]
                %860 = vst [vmem:[%s174 + $0xab0] sm:$0xff] %v859
                %v861 = vld [vmem:[%s173 + $0x1558] sm:$0xff]
                %862 = vst [vmem:[%s174 + $0xab8] sm:$0xff] %v861
                %v863 = vld [vmem:[%s173 + $0x1560] sm:$0xff]
                %864 = vst [vmem:[%s174 + $0xac0] sm:$0xff] %v863
                %v865 = vld [vmem:[%s173 + $0x1568] sm:$0xff]
                %866 = vst [vmem:[%s174 + $0xac8] sm:$0xff] %v865
                %v867 = vld [vmem:[%s173 + $0x1570] sm:$0xff]
                %868 = vst [vmem:[%s174 + $0xad0] sm:$0xff] %v867
                %v869 = vld [vmem:[%s173 + $0x1578] sm:$0xff]
                %870 = vst [vmem:[%s174 + $0xad8] sm:$0xff] %v869
                %v871 = vld [vmem:[%s173 + $0x1580] sm:$0xff]
                %872 = vst [vmem:[%s174 + $0xae0] sm:$0xff] %v871
                %v873 = vld [vmem:[%s173 + $0x1588] sm:$0xff]
                %874 = vst [vmem:[%s174 + $0xae8] sm:$0xff] %v873
                %v875 = vld [vmem:[%s173 + $0x1590] sm:$0xff]
                %876 = vst [vmem:[%s174 + $0xaf0] sm:$0xff] %v875
                %v877 = vld [vmem:[%s173 + $0x1598] sm:$0xff]
                %878 = vst [vmem:[%s174 + $0xaf8] sm:$0xff] %v877
                %v879 = vld [vmem:[%s173 + $0x15a0] sm:$0xff]
                %880 = vst [vmem:[%s174 + $0xb00] sm:$0xff] %v879
                %v881 = vld [vmem:[%s173 + $0x15a8] sm:$0xff]
                %882 = vst [vmem:[%s174 + $0xb08] sm:$0xff] %v881
                %v883 = vld [vmem:[%s173 + $0x15b0] sm:$0xff]
                %884 = vst [vmem:[%s174 + $0xb10] sm:$0xff] %v883
                %v885 = vld [vmem:[%s173 + $0x15b8] sm:$0xff]
                %886 = vst [vmem:[%s174 + $0xb18] sm:$0xff] %v885
                %v887 = vld [vmem:[%s173 + $0x15c0] sm:$0xff]
                %888 = vst [vmem:[%s174 + $0xb20] sm:$0xff] %v887
                %v889 = vld [vmem:[%s173 + $0x1650] sm:$0xff]
                %890 = vst [vmem:[%s174 + $0xb28] sm:$0xff] %v889
                %v891 = vld [vmem:[%s173 + $0x1658] sm:$0xff]
                %892 = vst [vmem:[%s174 + $0xb30] sm:$0xff] %v891
                %v893 = vld [vmem:[%s173 + $0x1660] sm:$0xff]
                %894 = vst [vmem:[%s174 + $0xb38] sm:$0xff] %v893
                %v895 = vld [vmem:[%s173 + $0x1668] sm:$0xff]
                %896 = vst [vmem:[%s174 + $0xb40] sm:$0xff] %v895
                %v897 = vld [vmem:[%s173 + $0x1670] sm:$0xff]
                %898 = vst [vmem:[%s174 + $0xb48] sm:$0xff] %v897
                %v899 = vld [vmem:[%s173 + $0x1678] sm:$0xff]
                %900 = vst [vmem:[%s174 + $0xb50] sm:$0xff] %v899
                %v901 = vld [vmem:[%s173 + $0x1680] sm:$0xff]
                %902 = vst [vmem:[%s174 + $0xb58] sm:$0xff] %v901
                %v903 = vld [vmem:[%s173 + $0x1688] sm:$0xff]
                %904 = vst [vmem:[%s174 + $0xb60] sm:$0xff] %v903
                %v905 = vld [vmem:[%s173 + $0x1690] sm:$0xff]
                %906 = vst [vmem:[%s174 + $0xb68] sm:$0xff] %v905
                %v907 = vld [vmem:[%s173 + $0x1698] sm:$0xff]
                %908 = vst [vmem:[%s174 + $0xb70] sm:$0xff] %v907
                %v909 = vld [vmem:[%s173 + $0x16a0] sm:$0xff]
                %910 = vst [vmem:[%s174 + $0xb78] sm:$0xff] %v909
                %v911 = vld [vmem:[%s173 + $0x16a8] sm:$0xff]
                %912 = vst [vmem:[%s174 + $0xb80] sm:$0xff] %v911
                %v913 = vld [vmem:[%s173 + $0x16b0] sm:$0xff]
                %914 = vst [vmem:[%s174 + $0xb88] sm:$0xff] %v913
                %v915 = vld [vmem:[%s173 + $0x16b8] sm:$0xff]
                %916 = vst [vmem:[%s174 + $0xb90] sm:$0xff] %v915
                %v917 = vld [vmem:[%s173 + $0x16c0] sm:$0xff]
                %918 = vst [vmem:[%s174 + $0xb98] sm:$0xff] %v917
                %v919 = vld [vmem:[%s173 + $0x16c8] sm:$0xff]
                %920 = vst [vmem:[%s174 + $0xba0] sm:$0xff] %v919
                %v921 = vld [vmem:[%s173 + $0x16d0] sm:$0xff]
                %922 = vst [vmem:[%s174 + $0xba8] sm:$0xff] %v921
                %v923 = vld [vmem:[%s173 + $0x1760] sm:$0xff]
                %924 = vst [vmem:[%s174 + $0xbb0] sm:$0xff] %v923
                %v925 = vld [vmem:[%s173 + $0x1768] sm:$0xff]
                %926 = vst [vmem:[%s174 + $0xbb8] sm:$0xff] %v925
                %v927 = vld [vmem:[%s173 + $0x1770] sm:$0xff]
                %928 = vst [vmem:[%s174 + $0xbc0] sm:$0xff] %v927
                %v929 = vld [vmem:[%s173 + $0x1778] sm:$0xff]
                %930 = vst [vmem:[%s174 + $0xbc8] sm:$0xff] %v929
                %v931 = vld [vmem:[%s173 + $0x1780] sm:$0xff]
                %932 = vst [vmem:[%s174 + $0xbd0] sm:$0xff] %v931
                %v933 = vld [vmem:[%s173 + $0x1788] sm:$0xff]
                %934 = vst [vmem:[%s174 + $0xbd8] sm:$0xff] %v933
                %v935 = vld [vmem:[%s173 + $0x1790] sm:$0xff]
                %936 = vst [vmem:[%s174 + $0xbe0] sm:$0xff] %v935
                %v937 = vld [vmem:[%s173 + $0x1798] sm:$0xff]
                %938 = vst [vmem:[%s174 + $0xbe8] sm:$0xff] %v937
                %v939 = vld [vmem:[%s173 + $0x17a0] sm:$0xff]
                %940 = vst [vmem:[%s174 + $0xbf0] sm:$0xff] %v939
                %v941 = vld [vmem:[%s173 + $0x17a8] sm:$0xff]
                %942 = vst [vmem:[%s174 + $0xbf8] sm:$0xff] %v941
                %v943 = vld [vmem:[%s173 + $0x17b0] sm:$0xff]
                %944 = vst [vmem:[%s174 + $0xc00] sm:$0xff] %v943
                %v945 = vld [vmem:[%s173 + $0x17b8] sm:$0xff]
                %946 = vst [vmem:[%s174 + $0xc08] sm:$0xff] %v945
                %v947 = vld [vmem:[%s173 + $0x17c0] sm:$0xff]
                %948 = vst [vmem:[%s174 + $0xc10] sm:$0xff] %v947
                %v949 = vld [vmem:[%s173 + $0x17c8] sm:$0xff]
                %950 = vst [vmem:[%s174 + $0xc18] sm:$0xff] %v949
                %v951 = vld [vmem:[%s173 + $0x17d0] sm:$0xff]
                %952 = vst [vmem:[%s174 + $0xc20] sm:$0xff] %v951
                %v953 = vld [vmem:[%s173 + $0x17d8] sm:$0xff]
                %954 = vst [vmem:[%s174 + $0xc28] sm:$0xff] %v953
                %v955 = vld [vmem:[%s173 + $0x17e0] sm:$0xff]
                %956 = vst [vmem:[%s174 + $0xc30] sm:$0xff] %v955
                %v957 = vld [vmem:[%s173 + $0x1870] sm:$0xff]
                %958 = vst [vmem:[%s174 + $0xc38] sm:$0xff] %v957
                %v959 = vld [vmem:[%s173 + $0x1878] sm:$0xff]
                %960 = vst [vmem:[%s174 + $0xc40] sm:$0xff] %v959
                %v961 = vld [vmem:[%s173 + $0x1880] sm:$0xff]
                %962 = vst [vmem:[%s174 + $0xc48] sm:$0xff] %v961
                %v963 = vld [vmem:[%s173 + $0x1888] sm:$0xff]
                %964 = vst [vmem:[%s174 + $0xc50] sm:$0xff] %v963
                %v965 = vld [vmem:[%s173 + $0x1890] sm:$0xff]
                %966 = vst [vmem:[%s174 + $0xc58] sm:$0xff] %v965
                %v967 = vld [vmem:[%s173 + $0x1898] sm:$0xff]
                %968 = vst [vmem:[%s174 + $0xc60] sm:$0xff] %v967
                %v969 = vld [vmem:[%s173 + $0x18a0] sm:$0xff]
                %970 = vst [vmem:[%s174 + $0xc68] sm:$0xff] %v969
                %v971 = vld [vmem:[%s173 + $0x18a8] sm:$0xff]
                %972 = vst [vmem:[%s174 + $0xc70] sm:$0xff] %v971
                %v973 = vld [vmem:[%s173 + $0x18b0] sm:$0xff]
                %974 = vst [vmem:[%s174 + $0xc78] sm:$0xff] %v973
                %v975 = vld [vmem:[%s173 + $0x18b8] sm:$0xff]
                %976 = vst [vmem:[%s174 + $0xc80] sm:$0xff] %v975
                %v977 = vld [vmem:[%s173 + $0x18c0] sm:$0xff]
                %978 = vst [vmem:[%s174 + $0xc88] sm:$0xff] %v977
                %v979 = vld [vmem:[%s173 + $0x18c8] sm:$0xff]
                %980 = vst [vmem:[%s174 + $0xc90] sm:$0xff] %v979
                %v981 = vld [vmem:[%s173 + $0x18d0] sm:$0xff]
                %982 = vst [vmem:[%s174 + $0xc98] sm:$0xff] %v981
                %v983 = vld [vmem:[%s173 + $0x18d8] sm:$0xff]
                %984 = vst [vmem:[%s174 + $0xca0] sm:$0xff] %v983
                %v985 = vld [vmem:[%s173 + $0x18e0] sm:$0xff]
                %986 = vst [vmem:[%s174 + $0xca8] sm:$0xff] %v985
                %v987 = vld [vmem:[%s173 + $0x18e8] sm:$0xff]
                %988 = vst [vmem:[%s174 + $0xcb0] sm:$0xff] %v987
                %v989 = vld [vmem:[%s173 + $0x18f0] sm:$0xff]
                %990 = vst [vmem:[%s174 + $0xcb8] sm:$0xff] %v989
                %v991 = vld [vmem:[%s173 + $0x1980] sm:$0xff]
                %992 = vst [vmem:[%s174 + $0xcc0] sm:$0xff] %v991
                %v993 = vld [vmem:[%s173 + $0x1988] sm:$0xff]
                %994 = vst [vmem:[%s174 + $0xcc8] sm:$0xff] %v993
                %v995 = vld [vmem:[%s173 + $0x1990] sm:$0xff]
                %996 = vst [vmem:[%s174 + $0xcd0] sm:$0xff] %v995
                %v997 = vld [vmem:[%s173 + $0x1998] sm:$0xff]
                %998 = vst [vmem:[%s174 + $0xcd8] sm:$0xff] %v997
                %v999 = vld [vmem:[%s173 + $0x19a0] sm:$0xff]
                %1000 = vst [vmem:[%s174 + $0xce0] sm:$0xff] %v999
                %v1001 = vld [vmem:[%s173 + $0x19a8] sm:$0xff]
                %1002 = vst [vmem:[%s174 + $0xce8] sm:$0xff] %v1001
                %v1003 = vld [vmem:[%s173 + $0x19b0] sm:$0xff]
                %1004 = vst [vmem:[%s174 + $0xcf0] sm:$0xff] %v1003
                %v1005 = vld [vmem:[%s173 + $0x19b8] sm:$0xff]
                %1006 = vst [vmem:[%s174 + $0xcf8] sm:$0xff] %v1005
                %v1007 = vld [vmem:[%s173 + $0x19c0] sm:$0xff]
                %1008 = vst [vmem:[%s174 + $0xd00] sm:$0xff] %v1007
                %v1009 = vld [vmem:[%s173 + $0x19c8] sm:$0xff]
                %1010 = vst [vmem:[%s174 + $0xd08] sm:$0xff] %v1009
                %v1011 = vld [vmem:[%s173 + $0x19d0] sm:$0xff]
                %1012 = vst [vmem:[%s174 + $0xd10] sm:$0xff] %v1011
                %v1013 = vld [vmem:[%s173 + $0x19d8] sm:$0xff]
                %1014 = vst [vmem:[%s174 + $0xd18] sm:$0xff] %v1013
                %v1015 = vld [vmem:[%s173 + $0x19e0] sm:$0xff]
                %1016 = vst [vmem:[%s174 + $0xd20] sm:$0xff] %v1015
                %v1017 = vld [vmem:[%s173 + $0x19e8] sm:$0xff]
                %1018 = vst [vmem:[%s174 + $0xd28] sm:$0xff] %v1017
                %v1019 = vld [vmem:[%s173 + $0x19f0] sm:$0xff]
                %1020 = vst [vmem:[%s174 + $0xd30] sm:$0xff] %v1019
                %v1021 = vld [vmem:[%s173 + $0x19f8] sm:$0xff]
                %1022 = vst [vmem:[%s174 + $0xd38] sm:$0xff] %v1021
                %v1023 = vld [vmem:[%s173 + $0x1a00] sm:$0xff]
                %1024 = vst [vmem:[%s174 + $0xd40] sm:$0xff] %v1023
                %v1025 = vld [vmem:[%s173 + $0x1a90] sm:$0xff]
                %1026 = vst [vmem:[%s174 + $0xd48] sm:$0xff] %v1025
                %v1027 = vld [vmem:[%s173 + $0x1a98] sm:$0xff]
                %1028 = vst [vmem:[%s174 + $0xd50] sm:$0xff] %v1027
                %v1029 = vld [vmem:[%s173 + $0x1aa0] sm:$0xff]
                %1030 = vst [vmem:[%s174 + $0xd58] sm:$0xff] %v1029
                %v1031 = vld [vmem:[%s173 + $0x1aa8] sm:$0xff]
                %1032 = vst [vmem:[%s174 + $0xd60] sm:$0xff] %v1031
                %v1033 = vld [vmem:[%s173 + $0x1ab0] sm:$0xff]
                %1034 = vst [vmem:[%s174 + $0xd68] sm:$0xff] %v1033
                %v1035 = vld [vmem:[%s173 + $0x1ab8] sm:$0xff]
                %1036 = vst [vmem:[%s174 + $0xd70] sm:$0xff] %v1035
                %v1037 = vld [vmem:[%s173 + $0x1ac0] sm:$0xff]
                %1038 = vst [vmem:[%s174 + $0xd78] sm:$0xff] %v1037
                %v1039 = vld [vmem:[%s173 + $0x1ac8] sm:$0xff]
                %1040 = vst [vmem:[%s174 + $0xd80] sm:$0xff] %v1039
                %v1041 = vld [vmem:[%s173 + $0x1ad0] sm:$0xff]
                %1042 = vst [vmem:[%s174 + $0xd88] sm:$0xff] %v1041
                %v1043 = vld [vmem:[%s173 + $0x1ad8] sm:$0xff]
                %1044 = vst [vmem:[%s174 + $0xd90] sm:$0xff] %v1043
                %v1045 = vld [vmem:[%s173 + $0x1ae0] sm:$0xff]
                %1046 = vst [vmem:[%s174 + $0xd98] sm:$0xff] %v1045
                %v1047 = vld [vmem:[%s173 + $0x1ae8] sm:$0xff]
                %1048 = vst [vmem:[%s174 + $0xda0] sm:$0xff] %v1047
                %v1049 = vld [vmem:[%s173 + $0x1af0] sm:$0xff]
                %1050 = vst [vmem:[%s174 + $0xda8] sm:$0xff] %v1049
                %v1051 = vld [vmem:[%s173 + $0x1af8] sm:$0xff]
                %1052 = vst [vmem:[%s174 + $0xdb0] sm:$0xff] %v1051
                %v1053 = vld [vmem:[%s173 + $0x1b00] sm:$0xff]
                %1054 = vst [vmem:[%s174 + $0xdb8] sm:$0xff] %v1053
                %v1055 = vld [vmem:[%s173 + $0x1b08] sm:$0xff]
                %1056 = vst [vmem:[%s174 + $0xdc0] sm:$0xff] %v1055
                %v1057 = vld [vmem:[%s173 + $0x1b10] sm:$0xff]
                %1058 = vst [vmem:[%s174 + $0xdc8] sm:$0xff] %v1057
                %v1059 = vld [vmem:[%s173 + $0x1ba0] sm:$0xff]
                %1060 = vst [vmem:[%s174 + $0xdd0] sm:$0xff] %v1059
                %v1061 = vld [vmem:[%s173 + $0x1ba8] sm:$0xff]
                %1062 = vst [vmem:[%s174 + $0xdd8] sm:$0xff] %v1061
                %v1063 = vld [vmem:[%s173 + $0x1bb0] sm:$0xff]
                %1064 = vst [vmem:[%s174 + $0xde0] sm:$0xff] %v1063
                %v1065 = vld [vmem:[%s173 + $0x1bb8] sm:$0xff]
                %1066 = vst [vmem:[%s174 + $0xde8] sm:$0xff] %v1065
                %v1067 = vld [vmem:[%s173 + $0x1bc0] sm:$0xff]
                %1068 = vst [vmem:[%s174 + $0xdf0] sm:$0xff] %v1067
                %v1069 = vld [vmem:[%s173 + $0x1bc8] sm:$0xff]
                %1070 = vst [vmem:[%s174 + $0xdf8] sm:$0xff] %v1069
                %v1071 = vld [vmem:[%s173 + $0x1bd0] sm:$0xff]
                %1072 = vst [vmem:[%s174 + $0xe00] sm:$0xff] %v1071
                %v1073 = vld [vmem:[%s173 + $0x1bd8] sm:$0xff]
                %1074 = vst [vmem:[%s174 + $0xe08] sm:$0xff] %v1073
                %v1075 = vld [vmem:[%s173 + $0x1be0] sm:$0xff]
                %1076 = vst [vmem:[%s174 + $0xe10] sm:$0xff] %v1075
                %v1077 = vld [vmem:[%s173 + $0x1be8] sm:$0xff]
                %1078 = vst [vmem:[%s174 + $0xe18] sm:$0xff] %v1077
                %v1079 = vld [vmem:[%s173 + $0x1bf0] sm:$0xff]
                %1080 = vst [vmem:[%s174 + $0xe20] sm:$0xff] %v1079
                %v1081 = vld [vmem:[%s173 + $0x1bf8] sm:$0xff]
                %1082 = vst [vmem:[%s174 + $0xe28] sm:$0xff] %v1081
                %v1083 = vld [vmem:[%s173 + $0x1c00] sm:$0xff]
                %1084 = vst [vmem:[%s174 + $0xe30] sm:$0xff] %v1083
                %v1085 = vld [vmem:[%s173 + $0x1c08] sm:$0xff]
                %1086 = vst [vmem:[%s174 + $0xe38] sm:$0xff] %v1085
                %v1087 = vld [vmem:[%s173 + $0x1c10] sm:$0xff]
                %1088 = vst [vmem:[%s174 + $0xe40] sm:$0xff] %v1087
                %v1089 = vld [vmem:[%s173 + $0x1c18] sm:$0xff]
                %1090 = vst [vmem:[%s174 + $0xe48] sm:$0xff] %v1089
                %v1091 = vld [vmem:[%s173 + $0x1c20] sm:$0xff]
                %1092 = vst [vmem:[%s174 + $0xe50] sm:$0xff] %v1091
                %v1093 = vld [vmem:[%s173 + $0x1cb0] sm:$0xff]
                %1094 = vst [vmem:[%s174 + $0xe58] sm:$0xff] %v1093
                %v1095 = vld [vmem:[%s173 + $0x1cb8] sm:$0xff]
                %1096 = vst [vmem:[%s174 + $0xe60] sm:$0xff] %v1095
                %v1097 = vld [vmem:[%s173 + $0x1cc0] sm:$0xff]
                %1098 = vst [vmem:[%s174 + $0xe68] sm:$0xff] %v1097
                %v1099 = vld [vmem:[%s173 + $0x1cc8] sm:$0xff]
                %1100 = vst [vmem:[%s174 + $0xe70] sm:$0xff] %v1099
                %v1101 = vld [vmem:[%s173 + $0x1cd0] sm:$0xff]
                %1102 = vst [vmem:[%s174 + $0xe78] sm:$0xff] %v1101
                %v1103 = vld [vmem:[%s173 + $0x1cd8] sm:$0xff]
                %1104 = vst [vmem:[%s174 + $0xe80] sm:$0xff] %v1103
                %v1105 = vld [vmem:[%s173 + $0x1ce0] sm:$0xff]
                %1106 = vst [vmem:[%s174 + $0xe88] sm:$0xff] %v1105
                %v1107 = vld [vmem:[%s173 + $0x1ce8] sm:$0xff]
                %1108 = vst [vmem:[%s174 + $0xe90] sm:$0xff] %v1107
                %v1109 = vld [vmem:[%s173 + $0x1cf0] sm:$0xff]
                %1110 = vst [vmem:[%s174 + $0xe98] sm:$0xff] %v1109
                %v1111 = vld [vmem:[%s173 + $0x1cf8] sm:$0xff]
                %1112 = vst [vmem:[%s174 + $0xea0] sm:$0xff] %v1111
                %v1113 = vld [vmem:[%s173 + $0x1d00] sm:$0xff]
                %1114 = vst [vmem:[%s174 + $0xea8] sm:$0xff] %v1113
                %v1115 = vld [vmem:[%s173 + $0x1d08] sm:$0xff]
                %1116 = vst [vmem:[%s174 + $0xeb0] sm:$0xff] %v1115
                %v1117 = vld [vmem:[%s173 + $0x1d10] sm:$0xff]
                %1118 = vst [vmem:[%s174 + $0xeb8] sm:$0xff] %v1117
                %v1119 = vld [vmem:[%s173 + $0x1d18] sm:$0xff]
                %1120 = vst [vmem:[%s174 + $0xec0] sm:$0xff] %v1119
                %v1121 = vld [vmem:[%s173 + $0x1d20] sm:$0xff]
                %1122 = vst [vmem:[%s174 + $0xec8] sm:$0xff] %v1121
                %v1123 = vld [vmem:[%s173 + $0x1d28] sm:$0xff]
                %1124 = vst [vmem:[%s174 + $0xed0] sm:$0xff] %v1123
                %v1125 = vld [vmem:[%s173 + $0x1d30] sm:$0xff]
                %1126 = vst [vmem:[%s174 + $0xed8] sm:$0xff] %v1125
                %v1127 = vld [vmem:[%s173 + $0x1dc0] sm:$0xff]
                %1128 = vst [vmem:[%s174 + $0xee0] sm:$0xff] %v1127
                %v1129 = vld [vmem:[%s173 + $0x1dc8] sm:$0xff]
                %1130 = vst [vmem:[%s174 + $0xee8] sm:$0xff] %v1129
                %v1131 = vld [vmem:[%s173 + $0x1dd0] sm:$0xff]
                %1132 = vst [vmem:[%s174 + $0xef0] sm:$0xff] %v1131
                %v1133 = vld [vmem:[%s173 + $0x1dd8] sm:$0xff]
                %1134 = vst [vmem:[%s174 + $0xef8] sm:$0xff] %v1133
                %v1135 = vld [vmem:[%s173 + $0x1de0] sm:$0xff]
                %1136 = vst [vmem:[%s174 + $0xf00] sm:$0xff] %v1135
                %v1137 = vld [vmem:[%s173 + $0x1de8] sm:$0xff]
                %1138 = vst [vmem:[%s174 + $0xf08] sm:$0xff] %v1137
                %v1139 = vld [vmem:[%s173 + $0x1df0] sm:$0xff]
                %1140 = vst [vmem:[%s174 + $0xf10] sm:$0xff] %v1139
                %v1141 = vld [vmem:[%s173 + $0x1df8] sm:$0xff]
                %1142 = vst [vmem:[%s174 + $0xf18] sm:$0xff] %v1141
                %v1143 = vld [vmem:[%s173 + $0x1e00] sm:$0xff]
                %1144 = vst [vmem:[%s174 + $0xf20] sm:$0xff] %v1143
                %v1145 = vld [vmem:[%s173 + $0x1e08] sm:$0xff]
                %1146 = vst [vmem:[%s174 + $0xf28] sm:$0xff] %v1145
                %v1147 = vld [vmem:[%s173 + $0x1e10] sm:$0xff]
                %1148 = vst [vmem:[%s174 + $0xf30] sm:$0xff] %v1147
                %v1149 = vld [vmem:[%s173 + $0x1e18] sm:$0xff]
                %1150 = vst [vmem:[%s174 + $0xf38] sm:$0xff] %v1149
                %v1151 = vld [vmem:[%s173 + $0x1e20] sm:$0xff]
                %1152 = vst [vmem:[%s174 + $0xf40] sm:$0xff] %v1151
                %v1153 = vld [vmem:[%s173 + $0x1e28] sm:$0xff]
                %1154 = vst [vmem:[%s174 + $0xf48] sm:$0xff] %v1153
                %v1155 = vld [vmem:[%s173 + $0x1e30] sm:$0xff]
                %1156 = vst [vmem:[%s174 + $0xf50] sm:$0xff] %v1155
                %v1157 = vld [vmem:[%s173 + $0x1e38] sm:$0xff]
                %1158 = vst [vmem:[%s174 + $0xf58] sm:$0xff] %v1157
                %v1159 = vld [vmem:[%s173 + $0x1e40] sm:$0xff]
                %1160 = vst [vmem:[%s174 + $0xf60] sm:$0xff] %v1159
                %v1161 = vld [vmem:[%s173 + $0x1ed0] sm:$0xff]
                %1162 = vst [vmem:[%s174 + $0xf68] sm:$0xff] %v1161
                %v1163 = vld [vmem:[%s173 + $0x1ed8] sm:$0xff]
                %1164 = vst [vmem:[%s174 + $0xf70] sm:$0xff] %v1163
                %v1165 = vld [vmem:[%s173 + $0x1ee0] sm:$0xff]
                %1166 = vst [vmem:[%s174 + $0xf78] sm:$0xff] %v1165
                %v1167 = vld [vmem:[%s173 + $0x1ee8] sm:$0xff]
                %1168 = vst [vmem:[%s174 + $0xf80] sm:$0xff] %v1167
                %v1169 = vld [vmem:[%s173 + $0x1ef0] sm:$0xff]
                %1170 = vst [vmem:[%s174 + $0xf88] sm:$0xff] %v1169
                %v1171 = vld [vmem:[%s173 + $0x1ef8] sm:$0xff]
                %1172 = vst [vmem:[%s174 + $0xf90] sm:$0xff] %v1171
                %v1173 = vld [vmem:[%s173 + $0x1f00] sm:$0xff]
                %1174 = vst [vmem:[%s174 + $0xf98] sm:$0xff] %v1173
                %v1175 = vld [vmem:[%s173 + $0x1f08] sm:$0xff]
                %1176 = vst [vmem:[%s174 + $0xfa0] sm:$0xff] %v1175
                %v1177 = vld [vmem:[%s173 + $0x1f10] sm:$0xff]
                %1178 = vst [vmem:[%s174 + $0xfa8] sm:$0xff] %v1177
                %v1179 = vld [vmem:[%s173 + $0x1f18] sm:$0xff]
                %1180 = vst [vmem:[%s174 + $0xfb0] sm:$0xff] %v1179
                %v1181 = vld [vmem:[%s173 + $0x1f20] sm:$0xff]
                %1182 = vst [vmem:[%s174 + $0xfb8] sm:$0xff] %v1181
                %v1183 = vld [vmem:[%s173 + $0x1f28] sm:$0xff]
                %1184 = vst [vmem:[%s174 + $0xfc0] sm:$0xff] %v1183
                %v1185 = vld [vmem:[%s173 + $0x1f30] sm:$0xff]
                %1186 = vst [vmem:[%s174 + $0xfc8] sm:$0xff] %v1185
                %v1187 = vld [vmem:[%s173 + $0x1f38] sm:$0xff]
                %1188 = vst [vmem:[%s174 + $0xfd0] sm:$0xff] %v1187
                %v1189 = vld [vmem:[%s173 + $0x1f40] sm:$0xff]
                %1190 = vst [vmem:[%s174 + $0xfd8] sm:$0xff] %v1189
                %v1191 = vld [vmem:[%s173 + $0x1f48] sm:$0xff]
                %1192 = vst [vmem:[%s174 + $0xfe0] sm:$0xff] %v1191
                %v1193 = vld [vmem:[%s173 + $0x1f50] sm:$0xff]
                %1194 = vst [vmem:[%s174 + $0xfe8] sm:$0xff] %v1193
                %v1195 = vld [vmem:[%s173 + $0x1fe0] sm:$0xff]
                %1196 = vst [vmem:[%s174 + $0xff0] sm:$0xff] %v1195
                %v1197 = vld [vmem:[%s173 + $0x1fe8] sm:$0xff]
                %1198 = vst [vmem:[%s174 + $0xff8] sm:$0xff] %v1197
                %v1199 = vld [vmem:[%s173 + $0x1ff0] sm:$0xff]
                %1200 = vst [vmem:[%s174 + $0x1000] sm:$0xff] %v1199
                %v1201 = vld [vmem:[%s173 + $0x1ff8] sm:$0xff]
                %1202 = vst [vmem:[%s174 + $0x1008] sm:$0xff] %v1201
                %v1203 = vld [vmem:[%s173 + $0x2000] sm:$0xff]
                %1204 = vst [vmem:[%s174 + $0x1010] sm:$0xff] %v1203
                %v1205 = vld [vmem:[%s173 + $0x2008] sm:$0xff]
                %1206 = vst [vmem:[%s174 + $0x1018] sm:$0xff] %v1205
                %v1207 = vld [vmem:[%s173 + $0x2010] sm:$0xff]
                %1208 = vst [vmem:[%s174 + $0x1020] sm:$0xff] %v1207
                %v1209 = vld [vmem:[%s173 + $0x2018] sm:$0xff]
                %1210 = vst [vmem:[%s174 + $0x1028] sm:$0xff] %v1209
                %v1211 = vld [vmem:[%s173 + $0x2020] sm:$0xff]
                %1212 = vst [vmem:[%s174 + $0x1030] sm:$0xff] %v1211
                %v1213 = vld [vmem:[%s173 + $0x2028] sm:$0xff]
                %1214 = vst [vmem:[%s174 + $0x1038] sm:$0xff] %v1213
                %v1215 = vld [vmem:[%s173 + $0x2030] sm:$0xff]
                %1216 = vst [vmem:[%s174 + $0x1040] sm:$0xff] %v1215
                %v1217 = vld [vmem:[%s173 + $0x2038] sm:$0xff]
                %1218 = vst [vmem:[%s174 + $0x1048] sm:$0xff] %v1217
                %v1219 = vld [vmem:[%s173 + $0x2040] sm:$0xff]
                %1220 = vst [vmem:[%s174 + $0x1050] sm:$0xff] %v1219
                %v1221 = vld [vmem:[%s173 + $0x2048] sm:$0xff]
                %1222 = vst [vmem:[%s174 + $0x1058] sm:$0xff] %v1221
                %v1223 = vld [vmem:[%s173 + $0x2050] sm:$0xff]
                %1224 = vst [vmem:[%s174 + $0x1060] sm:$0xff] %v1223
                %v1225 = vld [vmem:[%s173 + $0x2058] sm:$0xff]
                %1226 = vst [vmem:[%s174 + $0x1068] sm:$0xff] %v1225
                %v1227 = vld [vmem:[%s173 + $0x2060] sm:$0xff]
                %1228 = vst [vmem:[%s174 + $0x1070] sm:$0xff] %v1227
                %v1229 = vld [vmem:[%s173 + $0x20f0] sm:$0xff]
                %1230 = vst [vmem:[%s174 + $0x1078] sm:$0xff] %v1229
                %v1231 = vld [vmem:[%s173 + $0x20f8] sm:$0xff]
                %1232 = vst [vmem:[%s174 + $0x1080] sm:$0xff] %v1231
                %v1233 = vld [vmem:[%s173 + $0x2100] sm:$0xff]
                %1234 = vst [vmem:[%s174 + $0x1088] sm:$0xff] %v1233
                %v1235 = vld [vmem:[%s173 + $0x2108] sm:$0xff]
                %1236 = vst [vmem:[%s174 + $0x1090] sm:$0xff] %v1235
                %v1237 = vld [vmem:[%s173 + $0x2110] sm:$0xff]
                %1238 = vst [vmem:[%s174 + $0x1098] sm:$0xff] %v1237
                %v1239 = vld [vmem:[%s173 + $0x2118] sm:$0xff]
                %1240 = vst [vmem:[%s174 + $0x10a0] sm:$0xff] %v1239
                %v1241 = vld [vmem:[%s173 + $0x2120] sm:$0xff]
                %1242 = vst [vmem:[%s174 + $0x10a8] sm:$0xff] %v1241
                %v1243 = vld [vmem:[%s173 + $0x2128] sm:$0xff]
                %1244 = vst [vmem:[%s174 + $0x10b0] sm:$0xff] %v1243
                %v1245 = vld [vmem:[%s173 + $0x2130] sm:$0xff]
                %1246 = vst [vmem:[%s174 + $0x10b8] sm:$0xff] %v1245
                %v1247 = vld [vmem:[%s173 + $0x2138] sm:$0xff]
                %1248 = vst [vmem:[%s174 + $0x10c0] sm:$0xff] %v1247
                %v1249 = vld [vmem:[%s173 + $0x2140] sm:$0xff]
                %1250 = vst [vmem:[%s174 + $0x10c8] sm:$0xff] %v1249
                %v1251 = vld [vmem:[%s173 + $0x2148] sm:$0xff]
                %1252 = vst [vmem:[%s174 + $0x10d0] sm:$0xff] %v1251
                %v1253 = vld [vmem:[%s173 + $0x2150] sm:$0xff]
                %1254 = vst [vmem:[%s174 + $0x10d8] sm:$0xff] %v1253
                %v1255 = vld [vmem:[%s173 + $0x2158] sm:$0xff]
                %1256 = vst [vmem:[%s174 + $0x10e0] sm:$0xff] %v1255
                %v1257 = vld [vmem:[%s173 + $0x2160] sm:$0xff]
                %1258 = vst [vmem:[%s174 + $0x10e8] sm:$0xff] %v1257
                %v1259 = vld [vmem:[%s173 + $0x2168] sm:$0xff]
                %1260 = vst [vmem:[%s174 + $0x10f0] sm:$0xff] %v1259
                %v1261 = vld [vmem:[%s173 + $0x2170] sm:$0xff]
                %1262 = vst [vmem:[%s174 + $0x10f8] sm:$0xff] %v1261
                %v1263 = vld [vmem:[%s173 + $0x2200] sm:$0xff]
                %1264 = vst [vmem:[%s174 + $0x1100] sm:$0xff] %v1263
                %v1265 = vld [vmem:[%s173 + $0x2208] sm:$0xff]
                %1266 = vst [vmem:[%s174 + $0x1108] sm:$0xff] %v1265
                %v1267 = vld [vmem:[%s173 + $0x2210] sm:$0xff]
                %1268 = vst [vmem:[%s174 + $0x1110] sm:$0xff] %v1267
                %v1269 = vld [vmem:[%s173 + $0x2218] sm:$0xff]
                %1270 = vst [vmem:[%s174 + $0x1118] sm:$0xff] %v1269
                %v1271 = vld [vmem:[%s173 + $0x2220] sm:$0xff]
                %1272 = vst [vmem:[%s174 + $0x1120] sm:$0xff] %v1271
                %v1273 = vld [vmem:[%s173 + $0x2228] sm:$0xff]
                %1274 = vst [vmem:[%s174 + $0x1128] sm:$0xff] %v1273
                %v1275 = vld [vmem:[%s173 + $0x2230] sm:$0xff]
                %1276 = vst [vmem:[%s174 + $0x1130] sm:$0xff] %v1275
                %v1277 = vld [vmem:[%s173 + $0x2238] sm:$0xff]
                %1278 = vst [vmem:[%s174 + $0x1138] sm:$0xff] %v1277
                %v1279 = vld [vmem:[%s173 + $0x2240] sm:$0xff]
                %1280 = vst [vmem:[%s174 + $0x1140] sm:$0xff] %v1279
                %v1281 = vld [vmem:[%s173 + $0x2248] sm:$0xff]
                %1282 = vst [vmem:[%s174 + $0x1148] sm:$0xff] %v1281
                %v1283 = vld [vmem:[%s173 + $0x2250] sm:$0xff]
                %1284 = vst [vmem:[%s174 + $0x1150] sm:$0xff] %v1283
                %v1285 = vld [vmem:[%s173 + $0x2258] sm:$0xff]
                %1286 = vst [vmem:[%s174 + $0x1158] sm:$0xff] %v1285
                %v1287 = vld [vmem:[%s173 + $0x2260] sm:$0xff]
                %1288 = vst [vmem:[%s174 + $0x1160] sm:$0xff] %v1287
                %v1289 = vld [vmem:[%s173 + $0x2268] sm:$0xff]
                %1290 = vst [vmem:[%s174 + $0x1168] sm:$0xff] %v1289
                %v1291 = vld [vmem:[%s173 + $0x2270] sm:$0xff]
                %1292 = vst [vmem:[%s174 + $0x1170] sm:$0xff] %v1291
                %v1293 = vld [vmem:[%s173 + $0x2278] sm:$0xff]
                %1294 = vst [vmem:[%s174 + $0x1178] sm:$0xff] %v1293
                %v1295 = vld [vmem:[%s173 + $0x2280] sm:$0xff]
                %1296 = vst [vmem:[%s174 + $0x1180] sm:$0xff] %v1295
                %v1297 = vld [vmem:[%s173 + $0x2310] sm:$0xff]
                %1298 = vst [vmem:[%s174 + $0x1188] sm:$0xff] %v1297
                %v1299 = vld [vmem:[%s173 + $0x2318] sm:$0xff]
                %1300 = vst [vmem:[%s174 + $0x1190] sm:$0xff] %v1299
                %v1301 = vld [vmem:[%s173 + $0x2320] sm:$0xff]
                %1302 = vst [vmem:[%s174 + $0x1198] sm:$0xff] %v1301
                %v1303 = vld [vmem:[%s173 + $0x2328] sm:$0xff]
                %1304 = vst [vmem:[%s174 + $0x11a0] sm:$0xff] %v1303
                %v1305 = vld [vmem:[%s173 + $0x2330] sm:$0xff]
                %1306 = vst [vmem:[%s174 + $0x11a8] sm:$0xff] %v1305
                %v1307 = vld [vmem:[%s173 + $0x2338] sm:$0xff]
                %1308 = vst [vmem:[%s174 + $0x11b0] sm:$0xff] %v1307
                %v1309 = vld [vmem:[%s173 + $0x2340] sm:$0xff]
                %1310 = vst [vmem:[%s174 + $0x11b8] sm:$0xff] %v1309
                %v1311 = vld [vmem:[%s173 + $0x2348] sm:$0xff]
                %1312 = vst [vmem:[%s174 + $0x11c0] sm:$0xff] %v1311
                %v1313 = vld [vmem:[%s173 + $0x2350] sm:$0xff]
                %1314 = vst [vmem:[%s174 + $0x11c8] sm:$0xff] %v1313
                %v1315 = vld [vmem:[%s173 + $0x2358] sm:$0xff]
                %1316 = vst [vmem:[%s174 + $0x11d0] sm:$0xff] %v1315
                %v1317 = vld [vmem:[%s173 + $0x2360] sm:$0xff]
                %1318 = vst [vmem:[%s174 + $0x11d8] sm:$0xff] %v1317
                %v1319 = vld [vmem:[%s173 + $0x2368] sm:$0xff]
                %1320 = vst [vmem:[%s174 + $0x11e0] sm:$0xff] %v1319
                %v1321 = vld [vmem:[%s173 + $0x2370] sm:$0xff]
                %1322 = vst [vmem:[%s174 + $0x11e8] sm:$0xff] %v1321
                %v1323 = vld [vmem:[%s173 + $0x2378] sm:$0xff]
                %1324 = vst [vmem:[%s174 + $0x11f0] sm:$0xff] %v1323
                %v1325 = vld [vmem:[%s173 + $0x2380] sm:$0xff]
                %1326 = vst [vmem:[%s174 + $0x11f8] sm:$0xff] %v1325
                %v1327 = vld [vmem:[%s173 + $0x2388] sm:$0xff]
                %1328 = vst [vmem:[%s174 + $0x1200] sm:$0xff] %v1327
                %v1329 = vld [vmem:[%s173 + $0x2390] sm:$0xff]
                %1330 = vst [vmem:[%s174 + $0x1208] sm:$0xff] %v1329
                %v1331 = vld [vmem:[%s173 + $0x2420] sm:$0xff]
                %1332 = vst [vmem:[%s174 + $0x1210] sm:$0xff] %v1331
                %v1333 = vld [vmem:[%s173 + $0x2428] sm:$0xff]
                %1334 = vst [vmem:[%s174 + $0x1218] sm:$0xff] %v1333
                %v1335 = vld [vmem:[%s173 + $0x2430] sm:$0xff]
                %1336 = vst [vmem:[%s174 + $0x1220] sm:$0xff] %v1335
                %v1337 = vld [vmem:[%s173 + $0x2438] sm:$0xff]
                %1338 = vst [vmem:[%s174 + $0x1228] sm:$0xff] %v1337
                %v1339 = vld [vmem:[%s173 + $0x2440] sm:$0xff]
                %1340 = vst [vmem:[%s174 + $0x1230] sm:$0xff] %v1339
                %v1341 = vld [vmem:[%s173 + $0x2448] sm:$0xff]
                %1342 = vst [vmem:[%s174 + $0x1238] sm:$0xff] %v1341
                %v1343 = vld [vmem:[%s173 + $0x2450] sm:$0xff]
                %1344 = vst [vmem:[%s174 + $0x1240] sm:$0xff] %v1343
                %v1345 = vld [vmem:[%s173 + $0x2458] sm:$0xff]
                %1346 = vst [vmem:[%s174 + $0x1248] sm:$0xff] %v1345
                %v1347 = vld [vmem:[%s173 + $0x2460] sm:$0xff]
                %1348 = vst [vmem:[%s174 + $0x1250] sm:$0xff] %v1347
                %v1349 = vld [vmem:[%s173 + $0x2468] sm:$0xff]
                %1350 = vst [vmem:[%s174 + $0x1258] sm:$0xff] %v1349
                %v1351 = vld [vmem:[%s173 + $0x2470] sm:$0xff]
                %1352 = vst [vmem:[%s174 + $0x1260] sm:$0xff] %v1351
                %v1353 = vld [vmem:[%s173 + $0x2478] sm:$0xff]
                %1354 = vst [vmem:[%s174 + $0x1268] sm:$0xff] %v1353
                %v1355 = vld [vmem:[%s173 + $0x2480] sm:$0xff]
                %1356 = vst [vmem:[%s174 + $0x1270] sm:$0xff] %v1355
                %v1357 = vld [vmem:[%s173 + $0x2488] sm:$0xff]
                %1358 = vst [vmem:[%s174 + $0x1278] sm:$0xff] %v1357
                %v1359 = vld [vmem:[%s173 + $0x2490] sm:$0xff]
                %1360 = vst [vmem:[%s174 + $0x1280] sm:$0xff] %v1359
                %v1361 = vld [vmem:[%s173 + $0x2498] sm:$0xff]
                %1362 = vst [vmem:[%s174 + $0x1288] sm:$0xff] %v1361
                %v1363 = vld [vmem:[%s173 + $0x24a0] sm:$0xff]
                %1364 = vst [vmem:[%s174 + $0x1290] sm:$0xff] %v1363
                %v1365 = vld [vmem:[%s173 + $0x2530] sm:$0xff]
                %1366 = vst [vmem:[%s174 + $0x1298] sm:$0xff] %v1365
                %v1367 = vld [vmem:[%s173 + $0x2538] sm:$0xff]
                %1368 = vst [vmem:[%s174 + $0x12a0] sm:$0xff] %v1367
                %v1369 = vld [vmem:[%s173 + $0x2540] sm:$0xff]
                %1370 = vst [vmem:[%s174 + $0x12a8] sm:$0xff] %v1369
                %v1371 = vld [vmem:[%s173 + $0x2548] sm:$0xff]
                %1372 = vst [vmem:[%s174 + $0x12b0] sm:$0xff] %v1371
                %v1373 = vld [vmem:[%s173 + $0x2550] sm:$0xff]
                %1374 = vst [vmem:[%s174 + $0x12b8] sm:$0xff] %v1373
                %v1375 = vld [vmem:[%s173 + $0x2558] sm:$0xff]
                %1376 = vst [vmem:[%s174 + $0x12c0] sm:$0xff] %v1375
                %v1377 = vld [vmem:[%s173 + $0x2560] sm:$0xff]
                %1378 = vst [vmem:[%s174 + $0x12c8] sm:$0xff] %v1377
                %v1379 = vld [vmem:[%s173 + $0x2568] sm:$0xff]
                %1380 = vst [vmem:[%s174 + $0x12d0] sm:$0xff] %v1379
                %v1381 = vld [vmem:[%s173 + $0x2570] sm:$0xff]
                %1382 = vst [vmem:[%s174 + $0x12d8] sm:$0xff] %v1381
                %v1383 = vld [vmem:[%s173 + $0x2578] sm:$0xff]
                %1384 = vst [vmem:[%s174 + $0x12e0] sm:$0xff] %v1383
                %v1385 = vld [vmem:[%s173 + $0x2580] sm:$0xff]
                %1386 = vst [vmem:[%s174 + $0x12e8] sm:$0xff] %v1385
                %v1387 = vld [vmem:[%s173 + $0x2588] sm:$0xff]
                %1388 = vst [vmem:[%s174 + $0x12f0] sm:$0xff] %v1387
                %v1389 = vld [vmem:[%s173 + $0x2590] sm:$0xff]
                %1390 = vst [vmem:[%s174 + $0x12f8] sm:$0xff] %v1389
                %v1391 = vld [vmem:[%s173 + $0x2598] sm:$0xff]
                %1392 = vst [vmem:[%s174 + $0x1300] sm:$0xff] %v1391
                %v1393 = vld [vmem:[%s173 + $0x25a0] sm:$0xff]
                %1394 = vst [vmem:[%s174 + $0x1308] sm:$0xff] %v1393
                %v1395 = vld [vmem:[%s173 + $0x25a8] sm:$0xff]
                %1396 = vst [vmem:[%s174 + $0x1310] sm:$0xff] %v1395
                %v1397 = vld [vmem:[%s173 + $0x25b0] sm:$0xff]
                %1398 = vst [vmem:[%s174 + $0x1318] sm:$0xff] %v1397
                %v1399 = vld [vmem:[%s173 + $0x2640] sm:$0xff]
                %1400 = vst [vmem:[%s174 + $0x1320] sm:$0xff] %v1399
                %v1401 = vld [vmem:[%s173 + $0x2648] sm:$0xff]
                %1402 = vst [vmem:[%s174 + $0x1328] sm:$0xff] %v1401
                %v1403 = vld [vmem:[%s173 + $0x2650] sm:$0xff]
                %1404 = vst [vmem:[%s174 + $0x1330] sm:$0xff] %v1403
                %v1405 = vld [vmem:[%s173 + $0x2658] sm:$0xff]
                %1406 = vst [vmem:[%s174 + $0x1338] sm:$0xff] %v1405
                %v1407 = vld [vmem:[%s173 + $0x2660] sm:$0xff]
                %1408 = vst [vmem:[%s174 + $0x1340] sm:$0xff] %v1407
                %v1409 = vld [vmem:[%s173 + $0x2668] sm:$0xff]
                %1410 = vst [vmem:[%s174 + $0x1348] sm:$0xff] %v1409
                %v1411 = vld [vmem:[%s173 + $0x2670] sm:$0xff]
                %1412 = vst [vmem:[%s174 + $0x1350] sm:$0xff] %v1411
                %v1413 = vld [vmem:[%s173 + $0x2678] sm:$0xff]
                %1414 = vst [vmem:[%s174 + $0x1358] sm:$0xff] %v1413
                %v1415 = vld [vmem:[%s173 + $0x2680] sm:$0xff]
                %1416 = vst [vmem:[%s174 + $0x1360] sm:$0xff] %v1415
                %v1417 = vld [vmem:[%s173 + $0x2688] sm:$0xff]
                %1418 = vst [vmem:[%s174 + $0x1368] sm:$0xff] %v1417
                %v1419 = vld [vmem:[%s173 + $0x2690] sm:$0xff]
                %1420 = vst [vmem:[%s174 + $0x1370] sm:$0xff] %v1419
                %v1421 = vld [vmem:[%s173 + $0x2698] sm:$0xff]
                %1422 = vst [vmem:[%s174 + $0x1378] sm:$0xff] %v1421
                %v1423 = vld [vmem:[%s173 + $0x26a0] sm:$0xff]
                %1424 = vst [vmem:[%s174 + $0x1380] sm:$0xff] %v1423
                %v1425 = vld [vmem:[%s173 + $0x26a8] sm:$0xff]
                %1426 = vst [vmem:[%s174 + $0x1388] sm:$0xff] %v1425
                %v1427 = vld [vmem:[%s173 + $0x26b0] sm:$0xff]
                %1428 = vst [vmem:[%s174 + $0x1390] sm:$0xff] %v1427
                %v1429 = vld [vmem:[%s173 + $0x26b8] sm:$0xff]
                %1430 = vst [vmem:[%s174 + $0x1398] sm:$0xff] %v1429
                %v1431 = vld [vmem:[%s173 + $0x26c0] sm:$0xff]
                %1432 = vst [vmem:[%s174 + $0x13a0] sm:$0xff] %v1431
                %v1433 = vld [vmem:[%s173 + $0x2750] sm:$0xff]
                %1434 = vst [vmem:[%s174 + $0x13a8] sm:$0xff] %v1433
                %v1435 = vld [vmem:[%s173 + $0x2758] sm:$0xff]
                %1436 = vst [vmem:[%s174 + $0x13b0] sm:$0xff] %v1435
                %v1437 = vld [vmem:[%s173 + $0x2760] sm:$0xff]
                %1438 = vst [vmem:[%s174 + $0x13b8] sm:$0xff] %v1437
                %v1439 = vld [vmem:[%s173 + $0x2768] sm:$0xff]
                %1440 = vst [vmem:[%s174 + $0x13c0] sm:$0xff] %v1439
                %v1441 = vld [vmem:[%s173 + $0x2770] sm:$0xff]
                %1442 = vst [vmem:[%s174 + $0x13c8] sm:$0xff] %v1441
                %v1443 = vld [vmem:[%s173 + $0x2778] sm:$0xff]
                %1444 = vst [vmem:[%s174 + $0x13d0] sm:$0xff] %v1443
                %v1445 = vld [vmem:[%s173 + $0x2780] sm:$0xff]
                %1446 = vst [vmem:[%s174 + $0x13d8] sm:$0xff] %v1445
                %v1447 = vld [vmem:[%s173 + $0x2788] sm:$0xff]
                %1448 = vst [vmem:[%s174 + $0x13e0] sm:$0xff] %v1447
                %v1449 = vld [vmem:[%s173 + $0x2790] sm:$0xff]
                %1450 = vst [vmem:[%s174 + $0x13e8] sm:$0xff] %v1449
                %v1451 = vld [vmem:[%s173 + $0x2798] sm:$0xff]
                %1452 = vst [vmem:[%s174 + $0x13f0] sm:$0xff] %v1451
                %v1453 = vld [vmem:[%s173 + $0x27a0] sm:$0xff]
                %1454 = vst [vmem:[%s174 + $0x13f8] sm:$0xff] %v1453
                %v1455 = vld [vmem:[%s173 + $0x27a8] sm:$0xff]
                %1456 = vst [vmem:[%s174 + $0x1400] sm:$0xff] %v1455
                %v1457 = vld [vmem:[%s173 + $0x27b0] sm:$0xff]
                %1458 = vst [vmem:[%s174 + $0x1408] sm:$0xff] %v1457
                %v1459 = vld [vmem:[%s173 + $0x27b8] sm:$0xff]
                %1460 = vst [vmem:[%s174 + $0x1410] sm:$0xff] %v1459
                %v1461 = vld [vmem:[%s173 + $0x27c0] sm:$0xff]
                %1462 = vst [vmem:[%s174 + $0x1418] sm:$0xff] %v1461
                %v1463 = vld [vmem:[%s173 + $0x27c8] sm:$0xff]
                %1464 = vst [vmem:[%s174 + $0x1420] sm:$0xff] %v1463
                %v1465 = vld [vmem:[%s173 + $0x27d0] sm:$0xff]
                %1466 = vst [vmem:[%s174 + $0x1428] sm:$0xff] %v1465
                %v1467 = vld [vmem:[%s173 + $0x2860] sm:$0xff]
                %1468 = vst [vmem:[%s174 + $0x1430] sm:$0xff] %v1467
                %v1469 = vld [vmem:[%s173 + $0x2868] sm:$0xff]
                %1470 = vst [vmem:[%s174 + $0x1438] sm:$0xff] %v1469
                %v1471 = vld [vmem:[%s173 + $0x2870] sm:$0xff]
                %1472 = vst [vmem:[%s174 + $0x1440] sm:$0xff] %v1471
                %v1473 = vld [vmem:[%s173 + $0x2878] sm:$0xff]
                %1474 = vst [vmem:[%s174 + $0x1448] sm:$0xff] %v1473
                %v1475 = vld [vmem:[%s173 + $0x2880] sm:$0xff]
                %1476 = vst [vmem:[%s174 + $0x1450] sm:$0xff] %v1475
                %v1477 = vld [vmem:[%s173 + $0x2888] sm:$0xff]
                %1478 = vst [vmem:[%s174 + $0x1458] sm:$0xff] %v1477
                %v1479 = vld [vmem:[%s173 + $0x2890] sm:$0xff]
                %1480 = vst [vmem:[%s174 + $0x1460] sm:$0xff] %v1479
                %v1481 = vld [vmem:[%s173 + $0x2898] sm:$0xff]
                %1482 = vst [vmem:[%s174 + $0x1468] sm:$0xff] %v1481
                %v1483 = vld [vmem:[%s173 + $0x28a0] sm:$0xff]
                %1484 = vst [vmem:[%s174 + $0x1470] sm:$0xff] %v1483
                %v1485 = vld [vmem:[%s173 + $0x28a8] sm:$0xff]
                %1486 = vst [vmem:[%s174 + $0x1478] sm:$0xff] %v1485
                %v1487 = vld [vmem:[%s173 + $0x28b0] sm:$0xff]
                %1488 = vst [vmem:[%s174 + $0x1480] sm:$0xff] %v1487
                %v1489 = vld [vmem:[%s173 + $0x28b8] sm:$0xff]
                %1490 = vst [vmem:[%s174 + $0x1488] sm:$0xff] %v1489
                %v1491 = vld [vmem:[%s173 + $0x28c0] sm:$0xff]
                %1492 = vst [vmem:[%s174 + $0x1490] sm:$0xff] %v1491
                %v1493 = vld [vmem:[%s173 + $0x28c8] sm:$0xff]
                %1494 = vst [vmem:[%s174 + $0x1498] sm:$0xff] %v1493
                %v1495 = vld [vmem:[%s173 + $0x28d0] sm:$0xff]
                %1496 = vst [vmem:[%s174 + $0x14a0] sm:$0xff] %v1495
                %v1497 = vld [vmem:[%s173 + $0x28d8] sm:$0xff]
                %1498 = vst [vmem:[%s174 + $0x14a8] sm:$0xff] %v1497
                %v1499 = vld [vmem:[%s173 + $0x28e0] sm:$0xff]
                %1500 = vst [vmem:[%s174 + $0x14b0] sm:$0xff] %v1499
                %v1501 = vld [vmem:[%s173 + $0x2970] sm:$0xff]
                %1502 = vst [vmem:[%s174 + $0x14b8] sm:$0xff] %v1501
                %v1503 = vld [vmem:[%s173 + $0x2978] sm:$0xff]
                %1504 = vst [vmem:[%s174 + $0x14c0] sm:$0xff] %v1503
                %v1505 = vld [vmem:[%s173 + $0x2980] sm:$0xff]
                %1506 = vst [vmem:[%s174 + $0x14c8] sm:$0xff] %v1505
                %v1507 = vld [vmem:[%s173 + $0x2988] sm:$0xff]
                %1508 = vst [vmem:[%s174 + $0x14d0] sm:$0xff] %v1507
                %v1509 = vld [vmem:[%s173 + $0x2990] sm:$0xff]
                %1510 = vst [vmem:[%s174 + $0x14d8] sm:$0xff] %v1509
                %v1511 = vld [vmem:[%s173 + $0x2998] sm:$0xff]
                %1512 = vst [vmem:[%s174 + $0x14e0] sm:$0xff] %v1511
                %v1513 = vld [vmem:[%s173 + $0x29a0] sm:$0xff]
                %1514 = vst [vmem:[%s174 + $0x14e8] sm:$0xff] %v1513
                %v1515 = vld [vmem:[%s173 + $0x29a8] sm:$0xff]
                %1516 = vst [vmem:[%s174 + $0x14f0] sm:$0xff] %v1515
                %v1517 = vld [vmem:[%s173 + $0x29b0] sm:$0xff]
                %1518 = vst [vmem:[%s174 + $0x14f8] sm:$0xff] %v1517
                %v1519 = vld [vmem:[%s173 + $0x29b8] sm:$0xff]
                %1520 = vst [vmem:[%s174 + $0x1500] sm:$0xff] %v1519
                %v1521 = vld [vmem:[%s173 + $0x29c0] sm:$0xff]
                %1522 = vst [vmem:[%s174 + $0x1508] sm:$0xff] %v1521
                %v1523 = vld [vmem:[%s173 + $0x29c8] sm:$0xff]
                %1524 = vst [vmem:[%s174 + $0x1510] sm:$0xff] %v1523
                %v1525 = vld [vmem:[%s173 + $0x29d0] sm:$0xff]
                %1526 = vst [vmem:[%s174 + $0x1518] sm:$0xff] %v1525
                %v1527 = vld [vmem:[%s173 + $0x29d8] sm:$0xff]
                %1528 = vst [vmem:[%s174 + $0x1520] sm:$0xff] %v1527
                %v1529 = vld [vmem:[%s173 + $0x29e0] sm:$0xff]
                %1530 = vst [vmem:[%s174 + $0x1528] sm:$0xff] %v1529
                %v1531 = vld [vmem:[%s173 + $0x29e8] sm:$0xff]
                %1532 = vst [vmem:[%s174 + $0x1530] sm:$0xff] %v1531
                %v1533 = vld [vmem:[%s173 + $0x29f0] sm:$0xff]
                %1534 = vst [vmem:[%s174 + $0x1538] sm:$0xff] %v1533
                %v1535 = vld [vmem:[%s173 + $0x2a80] sm:$0xff]
                %1536 = vst [vmem:[%s174 + $0x1540] sm:$0xff] %v1535
                %v1537 = vld [vmem:[%s173 + $0x2a88] sm:$0xff]
                %1538 = vst [vmem:[%s174 + $0x1548] sm:$0xff] %v1537
                %v1539 = vld [vmem:[%s173 + $0x2a90] sm:$0xff]
                %1540 = vst [vmem:[%s174 + $0x1550] sm:$0xff] %v1539
                %v1541 = vld [vmem:[%s173 + $0x2a98] sm:$0xff]
                %1542 = vst [vmem:[%s174 + $0x1558] sm:$0xff] %v1541
                %v1543 = vld [vmem:[%s173 + $0x2aa0] sm:$0xff]
                %1544 = vst [vmem:[%s174 + $0x1560] sm:$0xff] %v1543
                %v1545 = vld [vmem:[%s173 + $0x2aa8] sm:$0xff]
                %1546 = vst [vmem:[%s174 + $0x1568] sm:$0xff] %v1545
                %v1547 = vld [vmem:[%s173 + $0x2ab0] sm:$0xff]
                %1548 = vst [vmem:[%s174 + $0x1570] sm:$0xff] %v1547
                %v1549 = vld [vmem:[%s173 + $0x2ab8] sm:$0xff]
                %1550 = vst [vmem:[%s174 + $0x1578] sm:$0xff] %v1549
                %v1551 = vld [vmem:[%s173 + $0x2ac0] sm:$0xff]
                %1552 = vst [vmem:[%s174 + $0x1580] sm:$0xff] %v1551
                %v1553 = vld [vmem:[%s173 + $0x2ac8] sm:$0xff]
                %1554 = vst [vmem:[%s174 + $0x1588] sm:$0xff] %v1553
                %v1555 = vld [vmem:[%s173 + $0x2ad0] sm:$0xff]
                %1556 = vst [vmem:[%s174 + $0x1590] sm:$0xff] %v1555
                %v1557 = vld [vmem:[%s173 + $0x2ad8] sm:$0xff]
                %1558 = vst [vmem:[%s174 + $0x1598] sm:$0xff] %v1557
                %v1559 = vld [vmem:[%s173 + $0x2ae0] sm:$0xff]
                %1560 = vst [vmem:[%s174 + $0x15a0] sm:$0xff] %v1559
                %v1561 = vld [vmem:[%s173 + $0x2ae8] sm:$0xff]
                %1562 = vst [vmem:[%s174 + $0x15a8] sm:$0xff] %v1561
                %v1563 = vld [vmem:[%s173 + $0x2af0] sm:$0xff]
                %1564 = vst [vmem:[%s174 + $0x15b0] sm:$0xff] %v1563
                %v1565 = vld [vmem:[%s173 + $0x2af8] sm:$0xff]
                %1566 = vst [vmem:[%s174 + $0x15b8] sm:$0xff] %v1565
                %v1567 = vld [vmem:[%s173 + $0x2b00] sm:$0xff]
                %1568 = vst [vmem:[%s174 + $0x15c0] sm:$0xff] %v1567
                %v1569 = vld [vmem:[%s173 + $0x2b90] sm:$0xff]
                %1570 = vst [vmem:[%s174 + $0x15c8] sm:$0xff] %v1569
                %v1571 = vld [vmem:[%s173 + $0x2b98] sm:$0xff]
                %1572 = vst [vmem:[%s174 + $0x15d0] sm:$0xff] %v1571
                %v1573 = vld [vmem:[%s173 + $0x2ba0] sm:$0xff]
                %1574 = vst [vmem:[%s174 + $0x15d8] sm:$0xff] %v1573
                %v1575 = vld [vmem:[%s173 + $0x2ba8] sm:$0xff]
                %1576 = vst [vmem:[%s174 + $0x15e0] sm:$0xff] %v1575
                %v1577 = vld [vmem:[%s173 + $0x2bb0] sm:$0xff]
                %1578 = vst [vmem:[%s174 + $0x15e8] sm:$0xff] %v1577
                %v1579 = vld [vmem:[%s173 + $0x2bb8] sm:$0xff]
                %1580 = vst [vmem:[%s174 + $0x15f0] sm:$0xff] %v1579
                %v1581 = vld [vmem:[%s173 + $0x2bc0] sm:$0xff]
                %1582 = vst [vmem:[%s174 + $0x15f8] sm:$0xff] %v1581
                %v1583 = vld [vmem:[%s173 + $0x2bc8] sm:$0xff]
                %1584 = vst [vmem:[%s174 + $0x1600] sm:$0xff] %v1583
                %v1585 = vld [vmem:[%s173 + $0x2bd0] sm:$0xff]
                %1586 = vst [vmem:[%s174 + $0x1608] sm:$0xff] %v1585
                %v1587 = vld [vmem:[%s173 + $0x2bd8] sm:$0xff]
                %1588 = vst [vmem:[%s174 + $0x1610] sm:$0xff] %v1587
                %v1589 = vld [vmem:[%s173 + $0x2be0] sm:$0xff]
                %1590 = vst [vmem:[%s174 + $0x1618] sm:$0xff] %v1589
                %v1591 = vld [vmem:[%s173 + $0x2be8] sm:$0xff]
                %1592 = vst [vmem:[%s174 + $0x1620] sm:$0xff] %v1591
                %v1593 = vld [vmem:[%s173 + $0x2bf0] sm:$0xff]
                %1594 = vst [vmem:[%s174 + $0x1628] sm:$0xff] %v1593
                %v1595 = vld [vmem:[%s173 + $0x2bf8] sm:$0xff]
                %1596 = vst [vmem:[%s174 + $0x1630] sm:$0xff] %v1595
                %v1597 = vld [vmem:[%s173 + $0x2c00] sm:$0xff]
                %1598 = vst [vmem:[%s174 + $0x1638] sm:$0xff] %v1597
                %v1599 = vld [vmem:[%s173 + $0x2c08] sm:$0xff]
                %1600 = vst [vmem:[%s174 + $0x1640] sm:$0xff] %v1599
                %v1601 = vld [vmem:[%s173 + $0x2c10] sm:$0xff]
                %1602 = vst [vmem:[%s174 + $0x1648] sm:$0xff] %v1601
                %v1603 = vld [vmem:[%s173 + $0x2ca0] sm:$0xff]
                %1604 = vst [vmem:[%s174 + $0x1650] sm:$0xff] %v1603
                %v1605 = vld [vmem:[%s173 + $0x2ca8] sm:$0xff]
                %1606 = vst [vmem:[%s174 + $0x1658] sm:$0xff] %v1605
                %v1607 = vld [vmem:[%s173 + $0x2cb0] sm:$0xff]
                %1608 = vst [vmem:[%s174 + $0x1660] sm:$0xff] %v1607
                %v1609 = vld [vmem:[%s173 + $0x2cb8] sm:$0xff]
                %1610 = vst [vmem:[%s174 + $0x1668] sm:$0xff] %v1609
                %v1611 = vld [vmem:[%s173 + $0x2cc0] sm:$0xff]
                %1612 = vst [vmem:[%s174 + $0x1670] sm:$0xff] %v1611
                %v1613 = vld [vmem:[%s173 + $0x2cc8] sm:$0xff]
                %1614 = vst [vmem:[%s174 + $0x1678] sm:$0xff] %v1613
                %v1615 = vld [vmem:[%s173 + $0x2cd0] sm:$0xff]
                %1616 = vst [vmem:[%s174 + $0x1680] sm:$0xff] %v1615
                %v1617 = vld [vmem:[%s173 + $0x2cd8] sm:$0xff]
                %1618 = vst [vmem:[%s174 + $0x1688] sm:$0xff] %v1617
                %v1619 = vld [vmem:[%s173 + $0x2ce0] sm:$0xff]
                %1620 = vst [vmem:[%s174 + $0x1690] sm:$0xff] %v1619
                %v1621 = vld [vmem:[%s173 + $0x2ce8] sm:$0xff]
                %1622 = vst [vmem:[%s174 + $0x1698] sm:$0xff] %v1621
                %v1623 = vld [vmem:[%s173 + $0x2cf0] sm:$0xff]
                %1624 = vst [vmem:[%s174 + $0x16a0] sm:$0xff] %v1623
                %v1625 = vld [vmem:[%s173 + $0x2cf8] sm:$0xff]
                %1626 = vst [vmem:[%s174 + $0x16a8] sm:$0xff] %v1625
                %v1627 = vld [vmem:[%s173 + $0x2d00] sm:$0xff]
                %1628 = vst [vmem:[%s174 + $0x16b0] sm:$0xff] %v1627
                %v1629 = vld [vmem:[%s173 + $0x2d08] sm:$0xff]
                %1630 = vst [vmem:[%s174 + $0x16b8] sm:$0xff] %v1629
                %v1631 = vld [vmem:[%s173 + $0x2d10] sm:$0xff]
                %1632 = vst [vmem:[%s174 + $0x16c0] sm:$0xff] %v1631
                %v1633 = vld [vmem:[%s173 + $0x2d18] sm:$0xff]
                %1634 = vst [vmem:[%s174 + $0x16c8] sm:$0xff] %v1633
                %v1635 = vld [vmem:[%s173 + $0x2d20] sm:$0xff]
                %1636 = vst [vmem:[%s174 + $0x16d0] sm:$0xff] %v1635
                %v1637 = vld [vmem:[%s173 + $0x2db0] sm:$0xff]
                %1638 = vst [vmem:[%s174 + $0x16d8] sm:$0xff] %v1637
                %v1639 = vld [vmem:[%s173 + $0x2db8] sm:$0xff]
                %1640 = vst [vmem:[%s174 + $0x16e0] sm:$0xff] %v1639
                %v1641 = vld [vmem:[%s173 + $0x2dc0] sm:$0xff]
                %1642 = vst [vmem:[%s174 + $0x16e8] sm:$0xff] %v1641
                %v1643 = vld [vmem:[%s173 + $0x2dc8] sm:$0xff]
                %1644 = vst [vmem:[%s174 + $0x16f0] sm:$0xff] %v1643
                %v1645 = vld [vmem:[%s173 + $0x2dd0] sm:$0xff]
                %1646 = vst [vmem:[%s174 + $0x16f8] sm:$0xff] %v1645
                %v1647 = vld [vmem:[%s173 + $0x2dd8] sm:$0xff]
                %1648 = vst [vmem:[%s174 + $0x1700] sm:$0xff] %v1647
                %v1649 = vld [vmem:[%s173 + $0x2de0] sm:$0xff]
                %1650 = vst [vmem:[%s174 + $0x1708] sm:$0xff] %v1649
                %v1651 = vld [vmem:[%s173 + $0x2de8] sm:$0xff]
                %1652 = vst [vmem:[%s174 + $0x1710] sm:$0xff] %v1651
                %v1653 = vld [vmem:[%s173 + $0x2df0] sm:$0xff]
                %1654 = vst [vmem:[%s174 + $0x1718] sm:$0xff] %v1653
                %v1655 = vld [vmem:[%s173 + $0x2df8] sm:$0xff]
                %1656 = vst [vmem:[%s174 + $0x1720] sm:$0xff] %v1655
                %v1657 = vld [vmem:[%s173 + $0x2e00] sm:$0xff]
                %1658 = vst [vmem:[%s174 + $0x1728] sm:$0xff] %v1657
                %v1659 = vld [vmem:[%s173 + $0x2e08] sm:$0xff]
                %1660 = vst [vmem:[%s174 + $0x1730] sm:$0xff] %v1659
                %v1661 = vld [vmem:[%s173 + $0x2e10] sm:$0xff]
                %1662 = vst [vmem:[%s174 + $0x1738] sm:$0xff] %v1661
                %v1663 = vld [vmem:[%s173 + $0x2e18] sm:$0xff]
                %1664 = vst [vmem:[%s174 + $0x1740] sm:$0xff] %v1663
                %v1665 = vld [vmem:[%s173 + $0x2e20] sm:$0xff]
                %1666 = vst [vmem:[%s174 + $0x1748] sm:$0xff] %v1665
                %v1667 = vld [vmem:[%s173 + $0x2e28] sm:$0xff]
                %1668 = vst [vmem:[%s174 + $0x1750] sm:$0xff] %v1667
                %v1669 = vld [vmem:[%s173 + $0x2e30] sm:$0xff]
                %1670 = vst [vmem:[%s174 + $0x1758] sm:$0xff] %v1669
                %v1671 = vld [vmem:[%s173 + $0x2ec0] sm:$0xff]
                %1672 = vst [vmem:[%s174 + $0x1760] sm:$0xff] %v1671
                %v1673 = vld [vmem:[%s173 + $0x2ec8] sm:$0xff]
                %1674 = vst [vmem:[%s174 + $0x1768] sm:$0xff] %v1673
                %v1675 = vld [vmem:[%s173 + $0x2ed0] sm:$0xff]
                %1676 = vst [vmem:[%s174 + $0x1770] sm:$0xff] %v1675
                %v1677 = vld [vmem:[%s173 + $0x2ed8] sm:$0xff]
                %1678 = vst [vmem:[%s174 + $0x1778] sm:$0xff] %v1677
                %v1679 = vld [vmem:[%s173 + $0x2ee0] sm:$0xff]
                %1680 = vst [vmem:[%s174 + $0x1780] sm:$0xff] %v1679
                %v1681 = vld [vmem:[%s173 + $0x2ee8] sm:$0xff]
                %1682 = vst [vmem:[%s174 + $0x1788] sm:$0xff] %v1681
                %v1683 = vld [vmem:[%s173 + $0x2ef0] sm:$0xff]
                %1684 = vst [vmem:[%s174 + $0x1790] sm:$0xff] %v1683
                %v1685 = vld [vmem:[%s173 + $0x2ef8] sm:$0xff]
                %1686 = vst [vmem:[%s174 + $0x1798] sm:$0xff] %v1685
                %v1687 = vld [vmem:[%s173 + $0x2f00] sm:$0xff]
                %1688 = vst [vmem:[%s174 + $0x17a0] sm:$0xff] %v1687
                %v1689 = vld [vmem:[%s173 + $0x2f08] sm:$0xff]
                %1690 = vst [vmem:[%s174 + $0x17a8] sm:$0xff] %v1689
                %v1691 = vld [vmem:[%s173 + $0x2f10] sm:$0xff]
                %1692 = vst [vmem:[%s174 + $0x17b0] sm:$0xff] %v1691
                %v1693 = vld [vmem:[%s173 + $0x2f18] sm:$0xff]
                %1694 = vst [vmem:[%s174 + $0x17b8] sm:$0xff] %v1693
                %v1695 = vld [vmem:[%s173 + $0x2f20] sm:$0xff]
                %1696 = vst [vmem:[%s174 + $0x17c0] sm:$0xff] %v1695
                %v1697 = vld [vmem:[%s173 + $0x2f28] sm:$0xff]
                %1698 = vst [vmem:[%s174 + $0x17c8] sm:$0xff] %v1697
                %v1699 = vld [vmem:[%s173 + $0x2f30] sm:$0xff]
                %1700 = vst [vmem:[%s174 + $0x17d0] sm:$0xff] %v1699
                %v1701 = vld [vmem:[%s173 + $0x2f38] sm:$0xff]
                %1702 = vst [vmem:[%s174 + $0x17d8] sm:$0xff] %v1701
                %v1703 = vld [vmem:[%s173 + $0x2f40] sm:$0xff]
                %1704 = vst [vmem:[%s174 + $0x17e0] sm:$0xff] %v1703
                %v1705 = vld [vmem:[%s173 + $0x2fd0] sm:$0xff]
                %1706 = vst [vmem:[%s174 + $0x17e8] sm:$0xff] %v1705
                %v1707 = vld [vmem:[%s173 + $0x2fd8] sm:$0xff]
                %1708 = vst [vmem:[%s174 + $0x17f0] sm:$0xff] %v1707
                %v1709 = vld [vmem:[%s173 + $0x2fe0] sm:$0xff]
                %1710 = vst [vmem:[%s174 + $0x17f8] sm:$0xff] %v1709
                %v1711 = vld [vmem:[%s173 + $0x2fe8] sm:$0xff]
                %1712 = vst [vmem:[%s174 + $0x1800] sm:$0xff] %v1711
                %v1713 = vld [vmem:[%s173 + $0x2ff0] sm:$0xff]
                %1714 = vst [vmem:[%s174 + $0x1808] sm:$0xff] %v1713
                %v1715 = vld [vmem:[%s173 + $0x2ff8] sm:$0xff]
                %1716 = vst [vmem:[%s174 + $0x1810] sm:$0xff] %v1715
                %v1717 = vld [vmem:[%s173 + $0x3000] sm:$0xff]
                %1718 = vst [vmem:[%s174 + $0x1818] sm:$0xff] %v1717
                %v1719 = vld [vmem:[%s173 + $0x3008] sm:$0xff]
                %1720 = vst [vmem:[%s174 + $0x1820] sm:$0xff] %v1719
                %v1721 = vld [vmem:[%s173 + $0x3010] sm:$0xff]
                %1722 = vst [vmem:[%s174 + $0x1828] sm:$0xff] %v1721
                %v1723 = vld [vmem:[%s173 + $0x3018] sm:$0xff]
                %1724 = vst [vmem:[%s174 + $0x1830] sm:$0xff] %v1723
                %v1725 = vld [vmem:[%s173 + $0x3020] sm:$0xff]
                %1726 = vst [vmem:[%s174 + $0x1838] sm:$0xff] %v1725
                %v1727 = vld [vmem:[%s173 + $0x3028] sm:$0xff]
                %1728 = vst [vmem:[%s174 + $0x1840] sm:$0xff] %v1727
                %v1729 = vld [vmem:[%s173 + $0x3030] sm:$0xff]
                %1730 = vst [vmem:[%s174 + $0x1848] sm:$0xff] %v1729
                %v1731 = vld [vmem:[%s173 + $0x3038] sm:$0xff]
                %1732 = vst [vmem:[%s174 + $0x1850] sm:$0xff] %v1731
                %v1733 = vld [vmem:[%s173 + $0x3040] sm:$0xff]
                %1734 = vst [vmem:[%s174 + $0x1858] sm:$0xff] %v1733
                %v1735 = vld [vmem:[%s173 + $0x3048] sm:$0xff]
                %1736 = vst [vmem:[%s174 + $0x1860] sm:$0xff] %v1735
                %v1737 = vld [vmem:[%s173 + $0x3050] sm:$0xff]
                %1738 = vst [vmem:[%s174 + $0x1868] sm:$0xff] %v1737
                %v1739 = vld [vmem:[%s173 + $0x30e0] sm:$0xff]
                %1740 = vst [vmem:[%s174 + $0x1870] sm:$0xff] %v1739
                %v1741 = vld [vmem:[%s173 + $0x30e8] sm:$0xff]
                %1742 = vst [vmem:[%s174 + $0x1878] sm:$0xff] %v1741
                %v1743 = vld [vmem:[%s173 + $0x30f0] sm:$0xff]
                %1744 = vst [vmem:[%s174 + $0x1880] sm:$0xff] %v1743
                %v1745 = vld [vmem:[%s173 + $0x30f8] sm:$0xff]
                %1746 = vst [vmem:[%s174 + $0x1888] sm:$0xff] %v1745
                %v1747 = vld [vmem:[%s173 + $0x3100] sm:$0xff]
                %1748 = vst [vmem:[%s174 + $0x1890] sm:$0xff] %v1747
                %v1749 = vld [vmem:[%s173 + $0x3108] sm:$0xff]
                %1750 = vst [vmem:[%s174 + $0x1898] sm:$0xff] %v1749
                %v1751 = vld [vmem:[%s173 + $0x3110] sm:$0xff]
                %1752 = vst [vmem:[%s174 + $0x18a0] sm:$0xff] %v1751
                %v1753 = vld [vmem:[%s173 + $0x3118] sm:$0xff]
                %1754 = vst [vmem:[%s174 + $0x18a8] sm:$0xff] %v1753
                %v1755 = vld [vmem:[%s173 + $0x3120] sm:$0xff]
                %1756 = vst [vmem:[%s174 + $0x18b0] sm:$0xff] %v1755
                %v1757 = vld [vmem:[%s173 + $0x3128] sm:$0xff]
                %1758 = vst [vmem:[%s174 + $0x18b8] sm:$0xff] %v1757
                %v1759 = vld [vmem:[%s173 + $0x3130] sm:$0xff]
                %1760 = vst [vmem:[%s174 + $0x18c0] sm:$0xff] %v1759
                %v1761 = vld [vmem:[%s173 + $0x3138] sm:$0xff]
                %1762 = vst [vmem:[%s174 + $0x18c8] sm:$0xff] %v1761
                %v1763 = vld [vmem:[%s173 + $0x3140] sm:$0xff]
                %1764 = vst [vmem:[%s174 + $0x18d0] sm:$0xff] %v1763
                %v1765 = vld [vmem:[%s173 + $0x3148] sm:$0xff]
                %1766 = vst [vmem:[%s174 + $0x18d8] sm:$0xff] %v1765
                %v1767 = vld [vmem:[%s173 + $0x3150] sm:$0xff]
                %1768 = vst [vmem:[%s174 + $0x18e0] sm:$0xff] %v1767
                %v1769 = vld [vmem:[%s173 + $0x3158] sm:$0xff]
                %1770 = vst [vmem:[%s174 + $0x18e8] sm:$0xff] %v1769
                %v1771 = vld [vmem:[%s173 + $0x3160] sm:$0xff]
                %1772 = vst [vmem:[%s174 + $0x18f0] sm:$0xff] %v1771
                %v1773 = vld [vmem:[%s173 + $0x31f0] sm:$0xff]
                %1774 = vst [vmem:[%s174 + $0x18f8] sm:$0xff] %v1773
                %v1775 = vld [vmem:[%s173 + $0x31f8] sm:$0xff]
                %1776 = vst [vmem:[%s174 + $0x1900] sm:$0xff] %v1775
                %v1777 = vld [vmem:[%s173 + $0x3200] sm:$0xff]
                %1778 = vst [vmem:[%s174 + $0x1908] sm:$0xff] %v1777
                %v1779 = vld [vmem:[%s173 + $0x3208] sm:$0xff]
                %1780 = vst [vmem:[%s174 + $0x1910] sm:$0xff] %v1779
                %v1781 = vld [vmem:[%s173 + $0x3210] sm:$0xff]
                %1782 = vst [vmem:[%s174 + $0x1918] sm:$0xff] %v1781
                %v1783 = vld [vmem:[%s173 + $0x3218] sm:$0xff]
                %1784 = vst [vmem:[%s174 + $0x1920] sm:$0xff] %v1783
                %v1785 = vld [vmem:[%s173 + $0x3220] sm:$0xff]
                %1786 = vst [vmem:[%s174 + $0x1928] sm:$0xff] %v1785
                %v1787 = vld [vmem:[%s173 + $0x3228] sm:$0xff]
                %1788 = vst [vmem:[%s174 + $0x1930] sm:$0xff] %v1787
                %v1789 = vld [vmem:[%s173 + $0x3230] sm:$0xff]
                %1790 = vst [vmem:[%s174 + $0x1938] sm:$0xff] %v1789
                %v1791 = vld [vmem:[%s173 + $0x3238] sm:$0xff]
                %1792 = vst [vmem:[%s174 + $0x1940] sm:$0xff] %v1791
                %v1793 = vld [vmem:[%s173 + $0x3240] sm:$0xff]
                %1794 = vst [vmem:[%s174 + $0x1948] sm:$0xff] %v1793
                %v1795 = vld [vmem:[%s173 + $0x3248] sm:$0xff]
                %1796 = vst [vmem:[%s174 + $0x1950] sm:$0xff] %v1795
                %v1797 = vld [vmem:[%s173 + $0x3250] sm:$0xff]
                %1798 = vst [vmem:[%s174 + $0x1958] sm:$0xff] %v1797
                %v1799 = vld [vmem:[%s173 + $0x3258] sm:$0xff]
                %1800 = vst [vmem:[%s174 + $0x1960] sm:$0xff] %v1799
                %v1801 = vld [vmem:[%s173 + $0x3260] sm:$0xff]
                %1802 = vst [vmem:[%s174 + $0x1968] sm:$0xff] %v1801
                %v1803 = vld [vmem:[%s173 + $0x3268] sm:$0xff]
                %1804 = vst [vmem:[%s174 + $0x1970] sm:$0xff] %v1803
                %v1805 = vld [vmem:[%s173 + $0x3270] sm:$0xff]
                %1806 = vst [vmem:[%s174 + $0x1978] sm:$0xff] %v1805
                %v1807 = vld [vmem:[%s173 + $0x3300] sm:$0xff]
                %1808 = vst [vmem:[%s174 + $0x1980] sm:$0xff] %v1807
                %v1809 = vld [vmem:[%s173 + $0x3308] sm:$0xff]
                %1810 = vst [vmem:[%s174 + $0x1988] sm:$0xff] %v1809
                %v1811 = vld [vmem:[%s173 + $0x3310] sm:$0xff]
                %1812 = vst [vmem:[%s174 + $0x1990] sm:$0xff] %v1811
                %v1813 = vld [vmem:[%s173 + $0x3318] sm:$0xff]
                %1814 = vst [vmem:[%s174 + $0x1998] sm:$0xff] %v1813
                %v1815 = vld [vmem:[%s173 + $0x3320] sm:$0xff]
                %1816 = vst [vmem:[%s174 + $0x19a0] sm:$0xff] %v1815
                %v1817 = vld [vmem:[%s173 + $0x3328] sm:$0xff]
                %1818 = vst [vmem:[%s174 + $0x19a8] sm:$0xff] %v1817
                %v1819 = vld [vmem:[%s173 + $0x3330] sm:$0xff]
                %1820 = vst [vmem:[%s174 + $0x19b0] sm:$0xff] %v1819
                %v1821 = vld [vmem:[%s173 + $0x3338] sm:$0xff]
                %1822 = vst [vmem:[%s174 + $0x19b8] sm:$0xff] %v1821
                %v1823 = vld [vmem:[%s173 + $0x3340] sm:$0xff]
                %1824 = vst [vmem:[%s174 + $0x19c0] sm:$0xff] %v1823
                %v1825 = vld [vmem:[%s173 + $0x3348] sm:$0xff]
                %1826 = vst [vmem:[%s174 + $0x19c8] sm:$0xff] %v1825
                %v1827 = vld [vmem:[%s173 + $0x3350] sm:$0xff]
                %1828 = vst [vmem:[%s174 + $0x19d0] sm:$0xff] %v1827
                %v1829 = vld [vmem:[%s173 + $0x3358] sm:$0xff]
                %1830 = vst [vmem:[%s174 + $0x19d8] sm:$0xff] %v1829
                %v1831 = vld [vmem:[%s173 + $0x3360] sm:$0xff]
                %1832 = vst [vmem:[%s174 + $0x19e0] sm:$0xff] %v1831
                %v1833 = vld [vmem:[%s173 + $0x3368] sm:$0xff]
                %1834 = vst [vmem:[%s174 + $0x19e8] sm:$0xff] %v1833
                %v1835 = vld [vmem:[%s173 + $0x3370] sm:$0xff]
                %1836 = vst [vmem:[%s174 + $0x19f0] sm:$0xff] %v1835
                %v1837 = vld [vmem:[%s173 + $0x3378] sm:$0xff]
                %1838 = vst [vmem:[%s174 + $0x19f8] sm:$0xff] %v1837
                %v1839 = vld [vmem:[%s173 + $0x3380] sm:$0xff]
                %1840 = vst [vmem:[%s174 + $0x1a00] sm:$0xff] %v1839
                %v1841 = vld [vmem:[%s173 + $0x3410] sm:$0xff]
                %1842 = vst [vmem:[%s174 + $0x1a08] sm:$0xff] %v1841
                %v1843 = vld [vmem:[%s173 + $0x3418] sm:$0xff]
                %1844 = vst [vmem:[%s174 + $0x1a10] sm:$0xff] %v1843
                %v1845 = vld [vmem:[%s173 + $0x3420] sm:$0xff]
                %1846 = vst [vmem:[%s174 + $0x1a18] sm:$0xff] %v1845
                %v1847 = vld [vmem:[%s173 + $0x3428] sm:$0xff]
                %1848 = vst [vmem:[%s174 + $0x1a20] sm:$0xff] %v1847
                %v1849 = vld [vmem:[%s173 + $0x3430] sm:$0xff]
                %1850 = vst [vmem:[%s174 + $0x1a28] sm:$0xff] %v1849
                %v1851 = vld [vmem:[%s173 + $0x3438] sm:$0xff]
                %1852 = vst [vmem:[%s174 + $0x1a30] sm:$0xff] %v1851
                %v1853 = vld [vmem:[%s173 + $0x3440] sm:$0xff]
                %1854 = vst [vmem:[%s174 + $0x1a38] sm:$0xff] %v1853
                %v1855 = vld [vmem:[%s173 + $0x3448] sm:$0xff]
                %1856 = vst [vmem:[%s174 + $0x1a40] sm:$0xff] %v1855
                %v1857 = vld [vmem:[%s173 + $0x3450] sm:$0xff]
                %1858 = vst [vmem:[%s174 + $0x1a48] sm:$0xff] %v1857
                %v1859 = vld [vmem:[%s173 + $0x3458] sm:$0xff]
                %1860 = vst [vmem:[%s174 + $0x1a50] sm:$0xff] %v1859
                %v1861 = vld [vmem:[%s173 + $0x3460] sm:$0xff]
                %1862 = vst [vmem:[%s174 + $0x1a58] sm:$0xff] %v1861
                %v1863 = vld [vmem:[%s173 + $0x3468] sm:$0xff]
                %1864 = vst [vmem:[%s174 + $0x1a60] sm:$0xff] %v1863
                %v1865 = vld [vmem:[%s173 + $0x3470] sm:$0xff]
                %1866 = vst [vmem:[%s174 + $0x1a68] sm:$0xff] %v1865
                %v1867 = vld [vmem:[%s173 + $0x3478] sm:$0xff]
                %1868 = vst [vmem:[%s174 + $0x1a70] sm:$0xff] %v1867
                %v1869 = vld [vmem:[%s173 + $0x3480] sm:$0xff]
                %1870 = vst [vmem:[%s174 + $0x1a78] sm:$0xff] %v1869
                %v1871 = vld [vmem:[%s173 + $0x3488] sm:$0xff]
                %1872 = vst [vmem:[%s174 + $0x1a80] sm:$0xff] %v1871
                %v1873 = vld [vmem:[%s173 + $0x3490] sm:$0xff]
                %1874 = vst [vmem:[%s174 + $0x1a88] sm:$0xff] %v1873
                %v1875 = vld [vmem:[%s173 + $0x3520] sm:$0xff]
                %1876 = vst [vmem:[%s174 + $0x1a90] sm:$0xff] %v1875
                %v1877 = vld [vmem:[%s173 + $0x3528] sm:$0xff]
                %1878 = vst [vmem:[%s174 + $0x1a98] sm:$0xff] %v1877
                %v1879 = vld [vmem:[%s173 + $0x3530] sm:$0xff]
                %1880 = vst [vmem:[%s174 + $0x1aa0] sm:$0xff] %v1879
                %v1881 = vld [vmem:[%s173 + $0x3538] sm:$0xff]
                %1882 = vst [vmem:[%s174 + $0x1aa8] sm:$0xff] %v1881
                %v1883 = vld [vmem:[%s173 + $0x3540] sm:$0xff]
                %1884 = vst [vmem:[%s174 + $0x1ab0] sm:$0xff] %v1883
                %v1885 = vld [vmem:[%s173 + $0x3548] sm:$0xff]
                %1886 = vst [vmem:[%s174 + $0x1ab8] sm:$0xff] %v1885
                %v1887 = vld [vmem:[%s173 + $0x3550] sm:$0xff]
                %1888 = vst [vmem:[%s174 + $0x1ac0] sm:$0xff] %v1887
                %v1889 = vld [vmem:[%s173 + $0x3558] sm:$0xff]
                %1890 = vst [vmem:[%s174 + $0x1ac8] sm:$0xff] %v1889
                %v1891 = vld [vmem:[%s173 + $0x3560] sm:$0xff]
                %1892 = vst [vmem:[%s174 + $0x1ad0] sm:$0xff] %v1891
                %v1893 = vld [vmem:[%s173 + $0x3568] sm:$0xff]
                %1894 = vst [vmem:[%s174 + $0x1ad8] sm:$0xff] %v1893
                %v1895 = vld [vmem:[%s173 + $0x3570] sm:$0xff]
                %1896 = vst [vmem:[%s174 + $0x1ae0] sm:$0xff] %v1895
                %v1897 = vld [vmem:[%s173 + $0x3578] sm:$0xff]
                %1898 = vst [vmem:[%s174 + $0x1ae8] sm:$0xff] %v1897
                %v1899 = vld [vmem:[%s173 + $0x3580] sm:$0xff]
                %1900 = vst [vmem:[%s174 + $0x1af0] sm:$0xff] %v1899
                %v1901 = vld [vmem:[%s173 + $0x3588] sm:$0xff]
                %1902 = vst [vmem:[%s174 + $0x1af8] sm:$0xff] %v1901
                %v1903 = vld [vmem:[%s173 + $0x3590] sm:$0xff]
                %1904 = vst [vmem:[%s174 + $0x1b00] sm:$0xff] %v1903
                %v1905 = vld [vmem:[%s173 + $0x3598] sm:$0xff]
                %1906 = vst [vmem:[%s174 + $0x1b08] sm:$0xff] %v1905
                %v1907 = vld [vmem:[%s173 + $0x35a0] sm:$0xff]
                %1908 = vst [vmem:[%s174 + $0x1b10] sm:$0xff] %v1907
                %v1909 = vld [vmem:[%s173 + $0x3630] sm:$0xff]
                %1910 = vst [vmem:[%s174 + $0x1b18] sm:$0xff] %v1909
                %v1911 = vld [vmem:[%s173 + $0x3638] sm:$0xff]
                %1912 = vst [vmem:[%s174 + $0x1b20] sm:$0xff] %v1911
                %v1913 = vld [vmem:[%s173 + $0x3640] sm:$0xff]
                %1914 = vst [vmem:[%s174 + $0x1b28] sm:$0xff] %v1913
                %v1915 = vld [vmem:[%s173 + $0x3648] sm:$0xff]
                %1916 = vst [vmem:[%s174 + $0x1b30] sm:$0xff] %v1915
                %v1917 = vld [vmem:[%s173 + $0x3650] sm:$0xff]
                %1918 = vst [vmem:[%s174 + $0x1b38] sm:$0xff] %v1917
                %v1919 = vld [vmem:[%s173 + $0x3658] sm:$0xff]
                %1920 = vst [vmem:[%s174 + $0x1b40] sm:$0xff] %v1919
                %v1921 = vld [vmem:[%s173 + $0x3660] sm:$0xff]
                %1922 = vst [vmem:[%s174 + $0x1b48] sm:$0xff] %v1921
                %v1923 = vld [vmem:[%s173 + $0x3668] sm:$0xff]
                %1924 = vst [vmem:[%s174 + $0x1b50] sm:$0xff] %v1923
                %v1925 = vld [vmem:[%s173 + $0x3670] sm:$0xff]
                %1926 = vst [vmem:[%s174 + $0x1b58] sm:$0xff] %v1925
                %v1927 = vld [vmem:[%s173 + $0x3678] sm:$0xff]
                %1928 = vst [vmem:[%s174 + $0x1b60] sm:$0xff] %v1927
                %v1929 = vld [vmem:[%s173 + $0x3680] sm:$0xff]
                %1930 = vst [vmem:[%s174 + $0x1b68] sm:$0xff] %v1929
                %v1931 = vld [vmem:[%s173 + $0x3688] sm:$0xff]
                %1932 = vst [vmem:[%s174 + $0x1b70] sm:$0xff] %v1931
                %v1933 = vld [vmem:[%s173 + $0x3690] sm:$0xff]
                %1934 = vst [vmem:[%s174 + $0x1b78] sm:$0xff] %v1933
                %v1935 = vld [vmem:[%s173 + $0x3698] sm:$0xff]
                %1936 = vst [vmem:[%s174 + $0x1b80] sm:$0xff] %v1935
                %v1937 = vld [vmem:[%s173 + $0x36a0] sm:$0xff]
                %1938 = vst [vmem:[%s174 + $0x1b88] sm:$0xff] %v1937
                %v1939 = vld [vmem:[%s173 + $0x36a8] sm:$0xff]
                %1940 = vst [vmem:[%s174 + $0x1b90] sm:$0xff] %v1939
                %v1941 = vld [vmem:[%s173 + $0x36b0] sm:$0xff]
                %1942 = vst [vmem:[%s174 + $0x1b98] sm:$0xff] %v1941
              $region45: #{policy_actor_forward.4} parent=39 // loop_footer
                %s172 = sadd.s32 1, %s168
              $region46: #{policy_actor_forward.4} parent=39 // loop_footer_branch
                %167 = sbr.rel target = $region42
              $region47: #{policy_actor_forward.4} parent=39 // loop_exit
                _
            $region40: #{policy_actor_forward.4} parent=35 // pred_fallthru
              _
            // Predicated region
            $region48: #{policy_actor_forward.4} parent=35 // pred_check
              _
            $region49: #{policy_actor_forward.4} parent=35 // pred_check_branch
              %1944 = sbr.rel target = $region51
            $region50: #{policy_actor_forward.4} parent=35 // pred_region
              _
            $region51: #{policy_actor_forward.4} parent=35 // pred_fallthru
              _
          $region36: #{policy_actor_forward.4} parent=31 // pred_fallthru
            _
          %1945 = vnop
        $region32: #{policy_actor_forward.4} parent=27 // pred_fallthru
          _
      $region28: #{policy_actor_forward.4} parent=5 // pred_fallthru
        _
      %p1946 = scmp.le.s32.totalorder 1, %s10
      %p1947 = scmp.lt.s32.totalorder %s10, 3
      %p1948 = pnand %p1946, %p1947
      %p1949 = pneg %p1948
      // Predicated region
      $region52: #{policy_actor_forward.4} parent=5 // pred_check
        _
      $region53: #{policy_actor_forward.4} parent=5 // pred_check_branch
        %1951 = sbr.rel (%p1948) target = $region55
      $region54: #{policy_actor_forward.4} parent=5 // pred_region
        %s1952 = ssub.s32 %s10, 1
        %s1953 = sand.u32 %s23, 1
        %s1954 = sand.u32 %s23, 1
        %s1955 = smul.addr %s1954, 7072
        %s1956 = scalar_lea.vmem [#allocation2], %s1955
        // Predicated region
        $region56: #{policy_actor_forward.4} parent=54 // pred_check
          %p1957 = pneg %p36
        $region57: #{policy_actor_forward.4} parent=54 // pred_check_branch
          %1959 = sbr.rel (%p1957) target = $region59
        $region58: #{policy_actor_forward.4} parent=54 // pred_region
          _
        $region59: #{policy_actor_forward.4} parent=54 // pred_fallthru
          _
        %s1960 = sand.u32 %s23, 1
        %s1961 = sand.u32 %s23, 1
        %s1962 = smul.addr %s1961, 7072
        %s1963 = scalar_lea.vmem [#allocation2], %s1962
        %p1964 = pneg %p36
        %p1965 = pneg %p33
        %p1966 = pneg %p57
        %p1967 = pneg %p54
        %p1968 = pneg %p78
        %p1969 = pneg %p75
        %p1970 = pneg %p99
        %p1971 = pneg %p96
        %p1972 = pneg %p125
        %p1973 = pneg %p122
        %s1974 = smul.u32 17, %s15
        %p1975 = scmp.lt.s32.totalorder %s1974, 33
        %s1976 = scalar_select %p1975, %s1974, 33
        %s1977 = smul.addr %s1976, 8
        %s1978 = scalar_lea.vmem %s4, %s1977
        %s1979 = smul.u32 17, %s15
        %s1980 = smul.u32 17, %s15
        %p1981 = scmp.lt.s32.totalorder %s1980, 33
        %s1982 = scalar_select %p1981, %s1980, 33
        %s1983 = smul.addr %s1982, 8
        %s1984 = scalar_lea.vmem %s4, %s1983
        %s1985 = smul.u32 17, %s15
        %v1986 = vld [vmem:[%s1] sm:$0xff]
        %v1987 = vld [vmem:[%s1956] sm:$0xff]
        %v1988 = vld [vmem:[%s1956 + $0x8] sm:$0xff]
        %v1989 = vld [vmem:[%s1956 + $0x10] sm:$0xff]
        %v1990 = vld [vmem:[%s1956 + $0x18] sm:$0xff]
        %v1991 = vld [vmem:[%s1956 + $0x20] sm:$0xff]
        %v1992 = vld [vmem:[%s1956 + $0x28] sm:$0xff]
        %v1993 = vld [vmem:[%s1956 + $0x30] sm:$0xff]
        %v1994 = vld [vmem:[%s1956 + $0x38] sm:$0xff]
        %v1995 = vld [vmem:[%s1956 + $0x40] sm:$0xff]
        %v1996 = vld [vmem:[%s1956 + $0x48] sm:$0xff]
        %v1997 = vld [vmem:[%s1956 + $0x50] sm:$0xff]
        %v1998 = vld [vmem:[%s1956 + $0x58] sm:$0xff]
        %v1999 = vld [vmem:[%s1956 + $0x60] sm:$0xff]
        %v2000 = vld [vmem:[%s1956 + $0x68] sm:$0xff]
        %v2001 = vld [vmem:[%s1956 + $0x70] sm:$0xff]
        %v2002 = vld [vmem:[%s1956 + $0x78] sm:$0xff]
        %v2003 = vld [vmem:[%s1956 + $0x80] sm:$0xff]
        %v2004 = vld [vmem:[%s1956 + $0x88] sm:$0xff]
        %v2005 = vld [vmem:[%s1956 + $0x90] sm:$0xff]
        %v2006 = vld [vmem:[%s1956 + $0x98] sm:$0xff]
        %v2007 = vld [vmem:[%s1956 + $0xa0] sm:$0xff]
        %v2008 = vld [vmem:[%s1956 + $0xa8] sm:$0xff]
        %v2009 = vld [vmem:[%s1956 + $0xb0] sm:$0xff]
        %v2010 = vld [vmem:[%s1956 + $0xb8] sm:$0xff]
        %v2011 = vld [vmem:[%s1956 + $0xc0] sm:$0xff]
        %v2012 = vld [vmem:[%s1956 + $0xc8] sm:$0xff]
        %v2013 = vld [vmem:[%s1956 + $0xd0] sm:$0xff]
        %v2014 = vld [vmem:[%s1956 + $0xd8] sm:$0xff]
        %v2015 = vld [vmem:[%s1956 + $0xe0] sm:$0xff]
        %v2016 = vld [vmem:[%s1956 + $0xe8] sm:$0xff]
        %v2017 = vld [vmem:[%s1956 + $0xf0] sm:$0xff]
        %v2018 = vld [vmem:[%s1956 + $0xf8] sm:$0xff]
        %v2019 = vld [vmem:[%s1956 + $0x100] sm:$0xff]
        %v2020 = vld [vmem:[%s1956 + $0x108] sm:$0xff]
        %v2021 = vld [vmem:[%s1956 + $0x110] sm:$0xff]
        %v2022 = vld [vmem:[%s1956 + $0x118] sm:$0xff]
        %v2023 = vld [vmem:[%s1956 + $0x120] sm:$0xff]
        %v2024 = vld [vmem:[%s1956 + $0x128] sm:$0xff]
        %v2025 = vld [vmem:[%s1956 + $0x130] sm:$0xff]
        %v2026 = vld [vmem:[%s1956 + $0x138] sm:$0xff]
        %v2027 = vld [vmem:[%s1956 + $0x140] sm:$0xff]
        %v2028 = vld [vmem:[%s1956 + $0x148] sm:$0xff]
        %v2029 = vld [vmem:[%s1956 + $0x150] sm:$0xff]
        %v2030 = vld [vmem:[%s1956 + $0x158] sm:$0xff]
        %v2031 = vld [vmem:[%s1956 + $0x160] sm:$0xff]
        %v2032 = vld [vmem:[%s1956 + $0x168] sm:$0xff]
        %v2033 = vld [vmem:[%s1956 + $0x170] sm:$0xff]
        %v2034 = vld [vmem:[%s1956 + $0x178] sm:$0xff]
        %v2035 = vld [vmem:[%s1956 + $0x180] sm:$0xff]
        %v2036 = vld [vmem:[%s1956 + $0x188] sm:$0xff]
        %v2037 = vld [vmem:[%s1956 + $0x190] sm:$0xff]
        %v2038 = vld [vmem:[%s1956 + $0x198] sm:$0xff]
        %v2039 = vld [vmem:[%s1956 + $0x1a0] sm:$0xff]
        %v2040 = vld [vmem:[%s1956 + $0x1a8] sm:$0xff]
        %v2041 = vld [vmem:[%s1956 + $0x1b0] sm:$0xff]
        %v2042 = vld [vmem:[%s1956 + $0x1b8] sm:$0xff]
        %v2043 = vld [vmem:[%s1956 + $0x1c0] sm:$0xff]
        %v2044 = vld [vmem:[%s1956 + $0x1c8] sm:$0xff]
        %v2045 = vld [vmem:[%s1956 + $0x1d0] sm:$0xff]
        %v2046 = vld [vmem:[%s1956 + $0x1d8] sm:$0xff]
        %v2047 = vld [vmem:[%s1956 + $0x1e0] sm:$0xff]
        %v2048 = vld [vmem:[%s1956 + $0x1e8] sm:$0xff]
        %v2049 = vld [vmem:[%s1956 + $0x1f0] sm:$0xff]
        %v2050 = vld [vmem:[%s1956 + $0x1f8] sm:$0xff]
        %v2051 = vld [vmem:[%s1956 + $0x200] sm:$0xff]
        %v2052 = vld [vmem:[%s1956 + $0x208] sm:$0xff]
        %v2053 = vld [vmem:[%s1956 + $0x210] sm:$0xff]
        %v2054 = vld [vmem:[%s1956 + $0x218] sm:$0xff]
        %v2055 = vld [vmem:[%s1956 + $0x220] sm:$0xff]
        %v2056 = vld [vmem:[%s1956 + $0x228] sm:$0xff]
        %v2057 = vld [vmem:[%s1956 + $0x230] sm:$0xff]
        %v2058 = vld [vmem:[%s1956 + $0x238] sm:$0xff]
        %v2059 = vld [vmem:[%s1956 + $0x240] sm:$0xff]
        %v2060 = vld [vmem:[%s1956 + $0x248] sm:$0xff]
        %v2061 = vld [vmem:[%s1956 + $0x250] sm:$0xff]
        %v2062 = vld [vmem:[%s1956 + $0x258] sm:$0xff]
        %v2063 = vld [vmem:[%s1956 + $0x260] sm:$0xff]
        %v2064 = vld [vmem:[%s1956 + $0x268] sm:$0xff]
        %v2065 = vld [vmem:[%s1956 + $0x270] sm:$0xff]
        %v2066 = vld [vmem:[%s1956 + $0x278] sm:$0xff]
        %v2067 = vld [vmem:[%s1956 + $0x280] sm:$0xff]
        %v2068 = vld [vmem:[%s1956 + $0x288] sm:$0xff]
        %v2069 = vld [vmem:[%s1956 + $0x290] sm:$0xff]
        %v2070 = vld [vmem:[%s1956 + $0x298] sm:$0xff]
        %v2071 = vld [vmem:[%s1956 + $0x2a0] sm:$0xff]
        %v2072 = vld [vmem:[%s1956 + $0x2a8] sm:$0xff]
        %v2073 = vld [vmem:[%s1956 + $0x2b0] sm:$0xff]
        %v2074 = vld [vmem:[%s1956 + $0x2b8] sm:$0xff]
        %v2075 = vld [vmem:[%s1956 + $0x2c0] sm:$0xff]
        %v2076 = vld [vmem:[%s1956 + $0x2c8] sm:$0xff]
        %v2077 = vld [vmem:[%s1956 + $0x2d0] sm:$0xff]
        %v2078 = vld [vmem:[%s1956 + $0x2d8] sm:$0xff]
        %v2079 = vld [vmem:[%s1956 + $0x2e0] sm:$0xff]
        %v2080 = vld [vmem:[%s1956 + $0x2e8] sm:$0xff]
        %v2081 = vld [vmem:[%s1956 + $0x2f0] sm:$0xff]
        %v2082 = vld [vmem:[%s1956 + $0x2f8] sm:$0xff]
        %v2083 = vld [vmem:[%s1956 + $0x300] sm:$0xff]
        %v2084 = vld [vmem:[%s1956 + $0x308] sm:$0xff]
        %v2085 = vld [vmem:[%s1956 + $0x310] sm:$0xff]
        %v2086 = vld [vmem:[%s1956 + $0x318] sm:$0xff]
        %v2087 = vld [vmem:[%s1956 + $0x320] sm:$0xff]
        %v2088 = vld [vmem:[%s1956 + $0x328] sm:$0xff]
        %v2089 = vld [vmem:[%s1956 + $0x330] sm:$0xff]
        %v2090 = vld [vmem:[%s1956 + $0x338] sm:$0xff]
        %v2091 = vld [vmem:[%s1956 + $0x340] sm:$0xff]
        %v2092 = vld [vmem:[%s1956 + $0x348] sm:$0xff]
        %v2093 = vld [vmem:[%s1956 + $0x350] sm:$0xff]
        %v2094 = vld [vmem:[%s1956 + $0x358] sm:$0xff]
        %v2095 = vld [vmem:[%s1956 + $0x360] sm:$0xff]
        %v2096 = vld [vmem:[%s1956 + $0x368] sm:$0xff]
        %v2097 = vld [vmem:[%s1956 + $0x370] sm:$0xff]
        %v2098 = vld [vmem:[%s1956 + $0x378] sm:$0xff]
        %v2099 = vld [vmem:[%s1956 + $0x380] sm:$0xff]
        %v2100 = vld [vmem:[%s1956 + $0x388] sm:$0xff]
        %v2101 = vld [vmem:[%s1956 + $0x390] sm:$0xff]
        %v2102 = vld [vmem:[%s1956 + $0x398] sm:$0xff]
        %v2103 = vld [vmem:[%s1956 + $0x3a0] sm:$0xff]
        %v2104 = vld [vmem:[%s1956 + $0x3a8] sm:$0xff]
        %v2105 = vld [vmem:[%s1956 + $0x3b0] sm:$0xff]
        %v2106 = vld [vmem:[%s1956 + $0x3b8] sm:$0xff]
        %v2107 = vld [vmem:[%s1956 + $0x3c0] sm:$0xff]
        %v2108 = vld [vmem:[%s1956 + $0x3c8] sm:$0xff]
        %v2109 = vld [vmem:[%s1956 + $0x3d0] sm:$0xff]
        %v2110 = vld [vmem:[%s1956 + $0x3d8] sm:$0xff]
        %v2111 = vld [vmem:[%s1956 + $0x3e0] sm:$0xff]
        %v2112 = vld [vmem:[%s1956 + $0x3e8] sm:$0xff]
        %v2113 = vld [vmem:[%s1956 + $0x3f0] sm:$0xff]
        %v2114 = vld [vmem:[%s1956 + $0x3f8] sm:$0xff]
        %v2115 = vld [vmem:[%s1956 + $0x400] sm:$0xff]
        %v2116 = vld [vmem:[%s1956 + $0x408] sm:$0xff]
        %v2117 = vld [vmem:[%s1956 + $0x410] sm:$0xff]
        %v2118 = vld [vmem:[%s1956 + $0x418] sm:$0xff]
        %v2119 = vld [vmem:[%s1956 + $0x420] sm:$0xff]
        %v2120 = vld [vmem:[%s1956 + $0x428] sm:$0xff]
        %v2121 = vld [vmem:[%s1956 + $0x430] sm:$0xff]
        %v2122 = vld [vmem:[%s1956 + $0x438] sm:$0xff]
        %v2123 = vld [vmem:[%s1956 + $0x440] sm:$0xff]
        %v2124 = vld [vmem:[%s1956 + $0x448] sm:$0xff]
        %v2125 = vld [vmem:[%s1956 + $0x450] sm:$0xff]
        %v2126 = vld [vmem:[%s1956 + $0x458] sm:$0xff]
        %v2127 = vld [vmem:[%s1956 + $0x460] sm:$0xff]
        %v2128 = vld [vmem:[%s1956 + $0x468] sm:$0xff]
        %v2129 = vld [vmem:[%s1956 + $0x470] sm:$0xff]
        %v2130 = vld [vmem:[%s1956 + $0x478] sm:$0xff]
        %v2131 = vld [vmem:[%s1956 + $0x480] sm:$0xff]
        %v2132 = vld [vmem:[%s1956 + $0x488] sm:$0xff]
        %v2133 = vld [vmem:[%s1956 + $0x490] sm:$0xff]
        %v2134 = vld [vmem:[%s1956 + $0x498] sm:$0xff]
        %v2135 = vld [vmem:[%s1956 + $0x4a0] sm:$0xff]
        %v2136 = vld [vmem:[%s1956 + $0x4a8] sm:$0xff]
        %v2137 = vld [vmem:[%s1956 + $0x4b0] sm:$0xff]
        %v2138 = vld [vmem:[%s1956 + $0x4b8] sm:$0xff]
        %v2139 = vld [vmem:[%s1956 + $0x4c0] sm:$0xff]
        %v2140 = vld [vmem:[%s1956 + $0x4c8] sm:$0xff]
        %v2141 = vld [vmem:[%s1956 + $0x4d0] sm:$0xff]
        %v2142 = vld [vmem:[%s1956 + $0x4d8] sm:$0xff]
        %v2143 = vld [vmem:[%s1956 + $0x4e0] sm:$0xff]
        %v2144 = vld [vmem:[%s1956 + $0x4e8] sm:$0xff]
        %v2145 = vld [vmem:[%s1956 + $0x4f0] sm:$0xff]
        %v2146 = vld [vmem:[%s1956 + $0x4f8] sm:$0xff]
        %v2147 = vld [vmem:[%s1956 + $0x500] sm:$0xff]
        %v2148 = vld [vmem:[%s1956 + $0x508] sm:$0xff]
        %v2149 = vld [vmem:[%s1956 + $0x510] sm:$0xff]
        %v2150 = vld [vmem:[%s1956 + $0x518] sm:$0xff]
        %v2151 = vld [vmem:[%s1956 + $0x520] sm:$0xff]
        %v2152 = vld [vmem:[%s1956 + $0x528] sm:$0xff]
        %v2153 = vld [vmem:[%s1956 + $0x530] sm:$0xff]
        %v2154 = vld [vmem:[%s1956 + $0x538] sm:$0xff]
        %v2155 = vld [vmem:[%s1956 + $0x540] sm:$0xff]
        %v2156 = vld [vmem:[%s1956 + $0x548] sm:$0xff]
        %v2157 = vld [vmem:[%s1956 + $0x550] sm:$0xff]
        %v2158 = vld [vmem:[%s1956 + $0x558] sm:$0xff]
        %v2159 = vld [vmem:[%s1956 + $0x560] sm:$0xff]
        %v2160 = vld [vmem:[%s1956 + $0x568] sm:$0xff]
        %v2161 = vld [vmem:[%s1956 + $0x570] sm:$0xff]
        %v2162 = vld [vmem:[%s1956 + $0x578] sm:$0xff]
        %v2163 = vld [vmem:[%s1956 + $0x580] sm:$0xff]
        %v2164 = vld [vmem:[%s1956 + $0x588] sm:$0xff]
        %v2165 = vld [vmem:[%s1956 + $0x590] sm:$0xff]
        %v2166 = vld [vmem:[%s1956 + $0x598] sm:$0xff]
        %v2167 = vld [vmem:[%s1956 + $0x5a0] sm:$0xff]
        %v2168 = vld [vmem:[%s1956 + $0x5a8] sm:$0xff]
        %v2169 = vld [vmem:[%s1956 + $0x5b0] sm:$0xff]
        %v2170 = vld [vmem:[%s1956 + $0x5b8] sm:$0xff]
        %v2171 = vld [vmem:[%s1956 + $0x5c0] sm:$0xff]
        %v2172 = vld [vmem:[%s1956 + $0x5c8] sm:$0xff]
        %v2173 = vld [vmem:[%s1956 + $0x5d0] sm:$0xff]
        %v2174 = vld [vmem:[%s1956 + $0x5d8] sm:$0xff]
        %v2175 = vld [vmem:[%s1956 + $0x5e0] sm:$0xff]
        %v2176 = vld [vmem:[%s1956 + $0x5e8] sm:$0xff]
        %v2177 = vld [vmem:[%s1956 + $0x5f0] sm:$0xff]
        %v2178 = vld [vmem:[%s1956 + $0x5f8] sm:$0xff]
        %v2179 = vld [vmem:[%s1956 + $0x600] sm:$0xff]
        %v2180 = vld [vmem:[%s1956 + $0x608] sm:$0xff]
        %v2181 = vld [vmem:[%s1956 + $0x610] sm:$0xff]
        %v2182 = vld [vmem:[%s1956 + $0x618] sm:$0xff]
        %v2183 = vld [vmem:[%s1956 + $0x620] sm:$0xff]
        %v2184 = vld [vmem:[%s1956 + $0x628] sm:$0xff]
        %v2185 = vld [vmem:[%s1956 + $0x630] sm:$0xff]
        %v2186 = vld [vmem:[%s1956 + $0x638] sm:$0xff]
        %v2187 = vld [vmem:[%s1956 + $0x640] sm:$0xff]
        %v2188 = vld [vmem:[%s1956 + $0x648] sm:$0xff]
        %v2189 = vld [vmem:[%s1956 + $0x650] sm:$0xff]
        %v2190 = vld [vmem:[%s1956 + $0x658] sm:$0xff]
        %v2191 = vld [vmem:[%s1956 + $0x660] sm:$0xf]
        %v2192 = vld [vmem:[%s1956 + $0x668] sm:$0xf]
        %v2193 = vld [vmem:[%s1956 + $0x670] sm:$0xf]
        %v2194 = vld [vmem:[%s1956 + $0x678] sm:$0xf]
        %v2195 = vld [vmem:[%s1956 + $0x680] sm:$0xf]
        %v2196 = vld [vmem:[%s1956 + $0x688] sm:$0xf]
        %v2197 = vld [vmem:[%s1956 + $0x690] sm:$0xf]
        %v2198 = vld [vmem:[%s1956 + $0x698] sm:$0xf]
        %v2199 = vld [vmem:[%s1956 + $0x6a0] sm:$0xf]
        %v2200 = vld [vmem:[%s1956 + $0x6a8] sm:$0xf]
        %v2201 = vld [vmem:[%s1956 + $0x6b0] sm:$0xf]
        %v2202 = vld [vmem:[%s1956 + $0x6b8] sm:$0xf]
        %v2203 = vld [vmem:[%s1956 + $0x6c0] sm:$0xf]
        %v2204 = vld [vmem:[%s1956 + $0x6c8] sm:$0xf]
        %v2205 = vld [vmem:[%s1956 + $0x6d0] sm:$0xf]
        %v2206 = vld [vmem:[%s1956 + $0x6d8] sm:$0xf]
        %v2207 = vld [vmem:[%s1956 + $0x6e0] sm:$0xf]
        %vm2208 = vcmask 818176
        %v2210 = vsel %vm2208, %v1986, 0
        %vm2212 = vcmask 1043456
        %v2214 = vsel %vm2212, %v2191, 0
        %v2217 = vsel %vm2212, %v2192, 0
        %v2220 = vsel %vm2212, %v2193, 0
        %v2223 = vsel %vm2212, %v2194, 0
        %v2226 = vsel %vm2212, %v2195, 0
        %v2229 = vsel %vm2212, %v2196, 0
        %v2232 = vsel %vm2212, %v2197, 0
        %v2235 = vsel %vm2212, %v2198, 0
        %v2238 = vsel %vm2212, %v2199, 0
        %v2241 = vsel %vm2212, %v2200, 0
        %v2244 = vsel %vm2212, %v2201, 0
        %v2247 = vsel %vm2212, %v2202, 0
        %v2250 = vsel %vm2212, %v2203, 0
        %v2253 = vsel %vm2212, %v2204, 0
        %v2256 = vsel %vm2212, %v2205, 0
        %v2259 = vsel %vm2212, %v2206, 0
        %v2262 = vsel %vm2212, %v2207, 0
        %2264 = vmatprep.subr.mxu0 %v1988
        %2265 = vmatpush1.msra.mxu0 %v1987
        %2266 = vmatprep.subr.mxu0 %v2005
        %2267 = vmatpush1.msra.mxu0 %v2004
        %2268 = vmatprep.subr.mxu0 %v2022
        %2269 = vmatpush1.msra.mxu0 %v2021
        %2270 = vmatprep.subr.mxu0 %v2039
        %2271 = vmatpush1.msra.mxu0 %v2038
        %2272 = vmatprep.subr.mxu0 %v2056
        %2273 = vmatpush1.msra.mxu0 %v2055
        %2274 = vmatprep.subr.mxu0 %v2073
        %2275 = vmatpush1.msra.mxu0 %v2072
        %2276 = vmatprep.subr.mxu0 %v2090
        %2277 = vmatpush1.msra.mxu0 %v2089
        %2278 = vmatprep.subr.mxu0 %v2107
        %2279 = vmatpush1.msra.mxu0 %v2106
        %2280 = vmatprep.subr.mxu0 %v2124
        %2281 = vmatpush1.msra.mxu0 %v2123
        %2282 = vmatprep.subr.mxu0 %v2141
        %2283 = vmatpush1.msra.mxu0 %v2140
        %2284 = vmatprep.subr.mxu0 %v2158
        %2285 = vmatpush1.msra.mxu0 %v2157
        %2286 = vmatprep.subr.mxu0 %v2175
        %2287 = vmatpush1.msra.mxu0 %v2174
        %2288 = vmatprep.subr.mxu0 %v2217
        %2289 = vmatpush1.msra.mxu0 %v2214
        %2290 = vmatprep.subr.mxu0 0.0
        %2291 = vmatpush1.msra.mxu0 0.0
        %2292 = vmatprep.subr.mxu0 0.0
        %2293 = vmatpush1.msra.mxu0 0.0
        %2294 = vmatprep.subr.mxu0 0.0
        %2295 = vmatpush1.msra.mxu0 0.0
        %2296 = vmatprep.subr.mxu0 0.0
        %2297 = vmatpush1.msra.mxu0 0.0
        %2298 = vmatprep.subr.mxu0 0.0
        %2299 = vmatpush1.msra.mxu0 0.0
        %2300 = vmatprep.subr.mxu0 0.0
        %2301 = vmatpush1.msra.mxu0 0.0
        %2302 = vmatprep.subr.mxu0 0.0
        %2303 = vmatpush1.msra.mxu0 0.0
        %2304 = vmatprep.subr.mxu0 0.0
        %2305 = vmatpush1.msra.mxu0 0.0
        %2306 = vmatprep.subr.mxu0 0.0
        %2307 = vmatpush1.msra.mxu0 0.0
        %2308 = vmatprep.subr.mxu0 0.0
        %2309 = vmatpush1.msra.mxu0 0.0
        %2310 = vmatprep.subr.mxu0 0.0
        %2311 = vmatpush1.msra.mxu0 0.0
        %2312 = vmatprep.subr.mxu0 0.0
        %2313 = vmatpush1.msra.mxu0 0.0
        %2314 = vmatprep.subr.mxu0 0.0
        %2315 = vmatpush1.msra.mxu0 0.0
        %2316 = vmatprep.subr.mxu0 0.0
        %2317 = vmatpush1.msra.mxu0 0.0
        %2318 = vmatprep.subr.mxu0 0.0
        %2319 = vmatpush1.msra.mxu0 0.0
        %2320 = vmatprep.subr.mxu0 0.0
        %2321 = vmatpush1.msra.mxu0 0.0
        %2322 = vmatprep.subr.mxu0 0.0
        %2323 = vmatpush1.msra.mxu0 0.0
        %2324 = vmatprep.subr.mxu0 0.0
        %2325 = vmatpush1.msra.mxu0 0.0
        %2326 = vmatprep.subr.mxu0 0.0
        %2327 = vmatpush1.msra.mxu0 0.0
        %2328 = vmatprep.mubr.f32.mxu0 0.0
        %2329 = vmatmul.mubr.f32.gmra.mrb[0].mxu0 %v2210
        %v2330 = vpop.f32.mrb[0].mxu0
        %v2331 = vadd.f32 0.0, %v2330
        %v2332 = vpop.f32.mrb[0].mxu0
        %v2333 = vadd.f32 0.0, %v2332
        %2334 = vdwg.mxu0
        %2335 = vmatprep.subr.mxu0 %v1990
        %2336 = vmatpush1.msra.mxu0 %v1989
        %2337 = vmatprep.subr.mxu0 %v2007
        %2338 = vmatpush1.msra.mxu0 %v2006
        %2339 = vmatprep.subr.mxu0 %v2024
        %2340 = vmatpush1.msra.mxu0 %v2023
        %2341 = vmatprep.subr.mxu0 %v2041
        %2342 = vmatpush1.msra.mxu0 %v2040
        %2343 = vmatprep.subr.mxu0 %v2058
        %2344 = vmatpush1.msra.mxu0 %v2057
        %2345 = vmatprep.subr.mxu0 %v2075
        %2346 = vmatpush1.msra.mxu0 %v2074
        %2347 = vmatprep.subr.mxu0 %v2092
        %2348 = vmatpush1.msra.mxu0 %v2091
        %2349 = vmatprep.subr.mxu0 %v2109
        %2350 = vmatpush1.msra.mxu0 %v2108
        %2351 = vmatprep.subr.mxu0 %v2126
        %2352 = vmatpush1.msra.mxu0 %v2125
        %2353 = vmatprep.subr.mxu0 %v2143
        %2354 = vmatpush1.msra.mxu0 %v2142
        %2355 = vmatprep.subr.mxu0 %v2160
        %2356 = vmatpush1.msra.mxu0 %v2159
        %2357 = vmatprep.subr.mxu0 %v2177
        %2358 = vmatpush1.msra.mxu0 %v2176
        %2359 = vmatprep.subr.mxu0 %v2223
        %2360 = vmatpush1.msra.mxu0 %v2220
        %2361 = vmatprep.subr.mxu0 0.0
        %2362 = vmatpush1.msra.mxu0 0.0
        %2363 = vmatprep.subr.mxu0 0.0
        %2364 = vmatpush1.msra.mxu0 0.0
        %2365 = vmatprep.subr.mxu0 0.0
        %2366 = vmatpush1.msra.mxu0 0.0
        %2367 = vmatprep.subr.mxu0 0.0
        %2368 = vmatpush1.msra.mxu0 0.0
        %2369 = vmatprep.subr.mxu0 0.0
        %2370 = vmatpush1.msra.mxu0 0.0
        %2371 = vmatprep.subr.mxu0 0.0
        %2372 = vmatpush1.msra.mxu0 0.0
        %2373 = vmatprep.subr.mxu0 0.0
        %2374 = vmatpush1.msra.mxu0 0.0
        %2375 = vmatprep.subr.mxu0 0.0
        %2376 = vmatpush1.msra.mxu0 0.0
        %2377 = vmatprep.subr.mxu0 0.0
        %2378 = vmatpush1.msra.mxu0 0.0
        %2379 = vmatprep.subr.mxu0 0.0
        %2380 = vmatpush1.msra.mxu0 0.0
        %2381 = vmatprep.subr.mxu0 0.0
        %2382 = vmatpush1.msra.mxu0 0.0
        %2383 = vmatprep.subr.mxu0 0.0
        %2384 = vmatpush1.msra.mxu0 0.0
        %2385 = vmatprep.subr.mxu0 0.0
        %2386 = vmatpush1.msra.mxu0 0.0
        %2387 = vmatprep.subr.mxu0 0.0
        %2388 = vmatpush1.msra.mxu0 0.0
        %2389 = vmatprep.subr.mxu0 0.0
        %2390 = vmatpush1.msra.mxu0 0.0
        %2391 = vmatprep.subr.mxu0 0.0
        %2392 = vmatpush1.msra.mxu0 0.0
        %2393 = vmatprep.subr.mxu0 0.0
        %2394 = vmatpush1.msra.mxu0 0.0
        %2395 = vmatprep.subr.mxu0 0.0
        %2396 = vmatpush1.msra.mxu0 0.0
        %2397 = vmatprep.subr.mxu0 0.0
        %2398 = vmatpush1.msra.mxu0 0.0
        %2399 = vmatprep.mubr.f32.mxu0 0.0
        %2400 = vmatmul.mubr.f32.gmra.mrb[0].mxu0 %v2210
        %v2401 = vpop.f32.mrb[0].mxu0
        %v2402 = vadd.f32 0.0, %v2401
        %v2403 = vpop.f32.mrb[0].mxu0
        %v2404 = vadd.f32 0.0, %v2403
        %2405 = vdwg.mxu0
        %2406 = vmatprep.subr.mxu0 %v1992
        %2407 = vmatpush1.msra.mxu0 %v1991
        %2408 = vmatprep.subr.mxu0 %v2009
        %2409 = vmatpush1.msra.mxu0 %v2008
        %2410 = vmatprep.subr.mxu0 %v2026
        %2411 = vmatpush1.msra.mxu0 %v2025
        %2412 = vmatprep.subr.mxu0 %v2043
        %2413 = vmatpush1.msra.mxu0 %v2042
        %2414 = vmatprep.subr.mxu0 %v2060
        %2415 = vmatpush1.msra.mxu0 %v2059
        %2416 = vmatprep.subr.mxu0 %v2077
        %2417 = vmatpush1.msra.mxu0 %v2076
        %2418 = vmatprep.subr.mxu0 %v2094
        %2419 = vmatpush1.msra.mxu0 %v2093
        %2420 = vmatprep.subr.mxu0 %v2111
        %2421 = vmatpush1.msra.mxu0 %v2110
        %2422 = vmatprep.subr.mxu0 %v2128
        %2423 = vmatpush1.msra.mxu0 %v2127
        %2424 = vmatprep.subr.mxu0 %v2145
        %2425 = vmatpush1.msra.mxu0 %v2144
        %2426 = vmatprep.subr.mxu0 %v2162
        %2427 = vmatpush1.msra.mxu0 %v2161
        %2428 = vmatprep.subr.mxu0 %v2179
        %2429 = vmatpush1.msra.mxu0 %v2178
        %2430 = vmatprep.subr.mxu0 %v2229
        %2431 = vmatpush1.msra.mxu0 %v2226
        %2432 = vmatprep.subr.mxu0 0.0
        %2433 = vmatpush1.msra.mxu0 0.0
        %2434 = vmatprep.subr.mxu0 0.0
        %2435 = vmatpush1.msra.mxu0 0.0
        %2436 = vmatprep.subr.mxu0 0.0
        %2437 = vmatpush1.msra.mxu0 0.0
        %2438 = vmatprep.subr.mxu0 0.0
        %2439 = vmatpush1.msra.mxu0 0.0
        %2440 = vmatprep.subr.mxu0 0.0
        %2441 = vmatpush1.msra.mxu0 0.0
        %2442 = vmatprep.subr.mxu0 0.0
        %2443 = vmatpush1.msra.mxu0 0.0
        %2444 = vmatprep.subr.mxu0 0.0
        %2445 = vmatpush1.msra.mxu0 0.0
        %2446 = vmatprep.subr.mxu0 0.0
        %2447 = vmatpush1.msra.mxu0 0.0
        %2448 = vmatprep.subr.mxu0 0.0
        %2449 = vmatpush1.msra.mxu0 0.0
        %2450 = vmatprep.subr.mxu0 0.0
        %2451 = vmatpush1.msra.mxu0 0.0
        %2452 = vmatprep.subr.mxu0 0.0
        %2453 = vmatpush1.msra.mxu0 0.0
        %2454 = vmatprep.subr.mxu0 0.0
        %2455 = vmatpush1.msra.mxu0 0.0
        %2456 = vmatprep.subr.mxu0 0.0
        %2457 = vmatpush1.msra.mxu0 0.0
        %2458 = vmatprep.subr.mxu0 0.0
        %2459 = vmatpush1.msra.mxu0 0.0
        %2460 = vmatprep.subr.mxu0 0.0
        %2461 = vmatpush1.msra.mxu0 0.0
        %2462 = vmatprep.subr.mxu0 0.0
        %2463 = vmatpush1.msra.mxu0 0.0
        %2464 = vmatprep.subr.mxu0 0.0
        %2465 = vmatpush1.msra.mxu0 0.0
        %2466 = vmatprep.subr.mxu0 0.0
        %2467 = vmatpush1.msra.mxu0 0.0
        %2468 = vmatprep.subr.mxu0 0.0
        %2469 = vmatpush1.msra.mxu0 0.0
        %2470 = vmatprep.mubr.f32.mxu0 0.0
        %2471 = vmatmul.mubr.f32.gmra.mrb[0].mxu0 %v2210
        %v2472 = vpop.f32.mrb[0].mxu0
        %v2473 = vadd.f32 0.0, %v2472
        %v2474 = vpop.f32.mrb[0].mxu0
        %v2475 = vadd.f32 0.0, %v2474
        %2476 = vdwg.mxu0
        %2477 = vmatprep.subr.mxu0 %v1994
        %2478 = vmatpush1.msra.mxu0 %v1993
        %2479 = vmatprep.subr.mxu0 %v2011
        %2480 = vmatpush1.msra.mxu0 %v2010
        %2481 = vmatprep.subr.mxu0 %v2028
        %2482 = vmatpush1.msra.mxu0 %v2027
        %2483 = vmatprep.subr.mxu0 %v2045
        %2484 = vmatpush1.msra.mxu0 %v2044
        %2485 = vmatprep.subr.mxu0 %v2062
        %2486 = vmatpush1.msra.mxu0 %v2061
        %2487 = vmatprep.subr.mxu0 %v2079
        %2488 = vmatpush1.msra.mxu0 %v2078
        %2489 = vmatprep.subr.mxu0 %v2096
        %2490 = vmatpush1.msra.mxu0 %v2095
        %2491 = vmatprep.subr.mxu0 %v2113
        %2492 = vmatpush1.msra.mxu0 %v2112
        %2493 = vmatprep.subr.mxu0 %v2130
        %2494 = vmatpush1.msra.mxu0 %v2129
        %2495 = vmatprep.subr.mxu0 %v2147
        %2496 = vmatpush1.msra.mxu0 %v2146
        %2497 = vmatprep.subr.mxu0 %v2164
        %2498 = vmatpush1.msra.mxu0 %v2163
        %2499 = vmatprep.subr.mxu0 %v2181
        %2500 = vmatpush1.msra.mxu0 %v2180
        %2501 = vmatprep.subr.mxu0 %v2235
        %2502 = vmatpush1.msra.mxu0 %v2232
        %2503 = vmatprep.subr.mxu0 0.0
        %2504 = vmatpush1.msra.mxu0 0.0
        %2505 = vmatprep.subr.mxu0 0.0
        %2506 = vmatpush1.msra.mxu0 0.0
        %2507 = vmatprep.subr.mxu0 0.0
        %2508 = vmatpush1.msra.mxu0 0.0
        %2509 = vmatprep.subr.mxu0 0.0
        %2510 = vmatpush1.msra.mxu0 0.0
        %2511 = vmatprep.subr.mxu0 0.0
        %2512 = vmatpush1.msra.mxu0 0.0
        %2513 = vmatprep.subr.mxu0 0.0
        %2514 = vmatpush1.msra.mxu0 0.0
        %2515 = vmatprep.subr.mxu0 0.0
        %2516 = vmatpush1.msra.mxu0 0.0
        %2517 = vmatprep.subr.mxu0 0.0
        %2518 = vmatpush1.msra.mxu0 0.0
        %2519 = vmatprep.subr.mxu0 0.0
        %2520 = vmatpush1.msra.mxu0 0.0
        %2521 = vmatprep.subr.mxu0 0.0
        %2522 = vmatpush1.msra.mxu0 0.0
        %2523 = vmatprep.subr.mxu0 0.0
        %2524 = vmatpush1.msra.mxu0 0.0
        %2525 = vmatprep.subr.mxu0 0.0
        %2526 = vmatpush1.msra.mxu0 0.0
        %2527 = vmatprep.subr.mxu0 0.0
        %2528 = vmatpush1.msra.mxu0 0.0
        %2529 = vmatprep.subr.mxu0 0.0
        %2530 = vmatpush1.msra.mxu0 0.0
        %2531 = vmatprep.subr.mxu0 0.0
        %2532 = vmatpush1.msra.mxu0 0.0
        %2533 = vmatprep.subr.mxu0 0.0
        %2534 = vmatpush1.msra.mxu0 0.0
        %2535 = vmatprep.subr.mxu0 0.0
        %2536 = vmatpush1.msra.mxu0 0.0
        %2537 = vmatprep.subr.mxu0 0.0
        %2538 = vmatpush1.msra.mxu0 0.0
        %2539 = vmatprep.subr.mxu0 0.0
        %2540 = vmatpush1.msra.mxu0 0.0
        %2541 = vmatprep.mubr.f32.mxu0 0.0
        %2542 = vmatmul.mubr.f32.gmra.mrb[0].mxu0 %v2210
        %v2543 = vpop.f32.mrb[0].mxu0
        %v2544 = vadd.f32 0.0, %v2543
        %v2545 = vpop.f32.mrb[0].mxu0
        %v2546 = vadd.f32 0.0, %v2545
        %2547 = vdwg.mxu0
        %2548 = vmatprep.subr.mxu0 %v1996
        %2549 = vmatpush1.msra.mxu0 %v1995
        %2550 = vmatprep.subr.mxu0 %v2013
        %2551 = vmatpush1.msra.mxu0 %v2012
        %2552 = vmatprep.subr.mxu0 %v2030
        %2553 = vmatpush1.msra.mxu0 %v2029
        %2554 = vmatprep.subr.mxu0 %v2047
        %2555 = vmatpush1.msra.mxu0 %v2046
        %2556 = vmatprep.subr.mxu0 %v2064
        %2557 = vmatpush1.msra.mxu0 %v2063
        %2558 = vmatprep.subr.mxu0 %v2081
        %2559 = vmatpush1.msra.mxu0 %v2080
        %2560 = vmatprep.subr.mxu0 %v2098
        %2561 = vmatpush1.msra.mxu0 %v2097
        %2562 = vmatprep.subr.mxu0 %v2115
        %2563 = vmatpush1.msra.mxu0 %v2114
        %2564 = vmatprep.subr.mxu0 %v2132
        %2565 = vmatpush1.msra.mxu0 %v2131
        %2566 = vmatprep.subr.mxu0 %v2149
        %2567 = vmatpush1.msra.mxu0 %v2148
        %2568 = vmatprep.subr.mxu0 %v2166
        %2569 = vmatpush1.msra.mxu0 %v2165
        %2570 = vmatprep.subr.mxu0 %v2183
        %2571 = vmatpush1.msra.mxu0 %v2182
        %2572 = vmatprep.subr.mxu0 %v2241
        %2573 = vmatpush1.msra.mxu0 %v2238
        %2574 = vmatprep.subr.mxu0 0.0
        %2575 = vmatpush1.msra.mxu0 0.0
        %2576 = vmatprep.subr.mxu0 0.0
        %2577 = vmatpush1.msra.mxu0 0.0
        %2578 = vmatprep.subr.mxu0 0.0
        %2579 = vmatpush1.msra.mxu0 0.0
        %2580 = vmatprep.subr.mxu0 0.0
        %2581 = vmatpush1.msra.mxu0 0.0
        %2582 = vmatprep.subr.mxu0 0.0
        %2583 = vmatpush1.msra.mxu0 0.0
        %2584 = vmatprep.subr.mxu0 0.0
        %2585 = vmatpush1.msra.mxu0 0.0
        %2586 = vmatprep.subr.mxu0 0.0
        %2587 = vmatpush1.msra.mxu0 0.0
        %2588 = vmatprep.subr.mxu0 0.0
        %2589 = vmatpush1.msra.mxu0 0.0
        %2590 = vmatprep.subr.mxu0 0.0
        %2591 = vmatpush1.msra.mxu0 0.0
        %2592 = vmatprep.subr.mxu0 0.0
        %2593 = vmatpush1.msra.mxu0 0.0
        %2594 = vmatprep.subr.mxu0 0.0
        %2595 = vmatpush1.msra.mxu0 0.0
        %2596 = vmatprep.subr.mxu0 0.0
        %2597 = vmatpush1.msra.mxu0 0.0
        %2598 = vmatprep.subr.mxu0 0.0
        %2599 = vmatpush1.msra.mxu0 0.0
        %2600 = vmatprep.subr.mxu0 0.0
        %2601 = vmatpush1.msra.mxu0 0.0
        %2602 = vmatprep.subr.mxu0 0.0
        %2603 = vmatpush1.msra.mxu0 0.0
        %2604 = vmatprep.subr.mxu0 0.0
        %2605 = vmatpush1.msra.mxu0 0.0
        %2606 = vmatprep.subr.mxu0 0.0
        %2607 = vmatpush1.msra.mxu0 0.0
        %2608 = vmatprep.subr.mxu0 0.0
        %2609 = vmatpush1.msra.mxu0 0.0
        %2610 = vmatprep.subr.mxu0 0.0
        %2611 = vmatpush1.msra.mxu0 0.0
        %2612 = vmatprep.mubr.f32.mxu0 0.0
        %2613 = vmatmul.mubr.f32.gmra.mrb[0].mxu0 %v2210
        %v2614 = vpop.f32.mrb[0].mxu0
        %v2615 = vadd.f32 0.0, %v2614
        %v2616 = vpop.f32.mrb[0].mxu0
        %v2617 = vadd.f32 0.0, %v2616
        %2618 = vdwg.mxu0
        %2619 = vmatprep.subr.mxu0 %v1998
        %2620 = vmatpush1.msra.mxu0 %v1997
        %2621 = vmatprep.subr.mxu0 %v2015
        %2622 = vmatpush1.msra.mxu0 %v2014
        %2623 = vmatprep.subr.mxu0 %v2032
        %2624 = vmatpush1.msra.mxu0 %v2031
        %2625 = vmatprep.subr.mxu0 %v2049
        %2626 = vmatpush1.msra.mxu0 %v2048
        %2627 = vmatprep.subr.mxu0 %v2066
        %2628 = vmatpush1.msra.mxu0 %v2065
        %2629 = vmatprep.subr.mxu0 %v2083
        %2630 = vmatpush1.msra.mxu0 %v2082
        %2631 = vmatprep.subr.mxu0 %v2100
        %2632 = vmatpush1.msra.mxu0 %v2099
        %2633 = vmatprep.subr.mxu0 %v2117
        %2634 = vmatpush1.msra.mxu0 %v2116
        %2635 = vmatprep.subr.mxu0 %v2134
        %2636 = vmatpush1.msra.mxu0 %v2133
        %2637 = vmatprep.subr.mxu0 %v2151
        %2638 = vmatpush1.msra.mxu0 %v2150
        %2639 = vmatprep.subr.mxu0 %v2168
        %2640 = vmatpush1.msra.mxu0 %v2167
        %2641 = vmatprep.subr.mxu0 %v2185
        %2642 = vmatpush1.msra.mxu0 %v2184
        %2643 = vmatprep.subr.mxu0 %v2247
        %2644 = vmatpush1.msra.mxu0 %v2244
        %2645 = vmatprep.subr.mxu0 0.0
        %2646 = vmatpush1.msra.mxu0 0.0
        %2647 = vmatprep.subr.mxu0 0.0
        %2648 = vmatpush1.msra.mxu0 0.0
        %2649 = vmatprep.subr.mxu0 0.0
        %2650 = vmatpush1.msra.mxu0 0.0
        %2651 = vmatprep.subr.mxu0 0.0
        %2652 = vmatpush1.msra.mxu0 0.0
        %2653 = vmatprep.subr.mxu0 0.0
        %2654 = vmatpush1.msra.mxu0 0.0
        %2655 = vmatprep.subr.mxu0 0.0
        %2656 = vmatpush1.msra.mxu0 0.0
        %2657 = vmatprep.subr.mxu0 0.0
        %2658 = vmatpush1.msra.mxu0 0.0
        %2659 = vmatprep.subr.mxu0 0.0
        %2660 = vmatpush1.msra.mxu0 0.0
        %2661 = vmatprep.subr.mxu0 0.0
        %2662 = vmatpush1.msra.mxu0 0.0
        %2663 = vmatprep.subr.mxu0 0.0
        %2664 = vmatpush1.msra.mxu0 0.0
        %2665 = vmatprep.subr.mxu0 0.0
        %2666 = vmatpush1.msra.mxu0 0.0
        %2667 = vmatprep.subr.mxu0 0.0
        %2668 = vmatpush1.msra.mxu0 0.0
        %2669 = vmatprep.subr.mxu0 0.0
        %2670 = vmatpush1.msra.mxu0 0.0
        %2671 = vmatprep.subr.mxu0 0.0
        %2672 = vmatpush1.msra.mxu0 0.0
        %2673 = vmatprep.subr.mxu0 0.0
        %2674 = vmatpush1.msra.mxu0 0.0
        %2675 = vmatprep.subr.mxu0 0.0
        %2676 = vmatpush1.msra.mxu0 0.0
        %2677 = vmatprep.subr.mxu0 0.0
        %2678 = vmatpush1.msra.mxu0 0.0
        %2679 = vmatprep.subr.mxu0 0.0
        %2680 = vmatpush1.msra.mxu0 0.0
        %2681 = vmatprep.subr.mxu0 0.0
        %2682 = vmatpush1.msra.mxu0 0.0
        %2683 = vmatprep.mubr.f32.mxu0 0.0
        %2684 = vmatmul.mubr.f32.gmra.mrb[0].mxu0 %v2210
        %v2685 = vpop.f32.mrb[0].mxu0
        %v2686 = vadd.f32 0.0, %v2685
        %v2687 = vpop.f32.mrb[0].mxu0
        %v2688 = vadd.f32 0.0, %v2687
        %2689 = vdwg.mxu0
        %2690 = vmatprep.subr.mxu0 %v2000
        %2691 = vmatpush1.msra.mxu0 %v1999
        %2692 = vmatprep.subr.mxu0 %v2017
        %2693 = vmatpush1.msra.mxu0 %v2016
        %2694 = vmatprep.subr.mxu0 %v2034
        %2695 = vmatpush1.msra.mxu0 %v2033
        %2696 = vmatprep.subr.mxu0 %v2051
        %2697 = vmatpush1.msra.mxu0 %v2050
        %2698 = vmatprep.subr.mxu0 %v2068
        %2699 = vmatpush1.msra.mxu0 %v2067
        %2700 = vmatprep.subr.mxu0 %v2085
        %2701 = vmatpush1.msra.mxu0 %v2084
        %2702 = vmatprep.subr.mxu0 %v2102
        %2703 = vmatpush1.msra.mxu0 %v2101
        %2704 = vmatprep.subr.mxu0 %v2119
        %2705 = vmatpush1.msra.mxu0 %v2118
        %2706 = vmatprep.subr.mxu0 %v2136
        %2707 = vmatpush1.msra.mxu0 %v2135
        %2708 = vmatprep.subr.mxu0 %v2153
        %2709 = vmatpush1.msra.mxu0 %v2152
        %2710 = vmatprep.subr.mxu0 %v2170
        %2711 = vmatpush1.msra.mxu0 %v2169
        %2712 = vmatprep.subr.mxu0 %v2187
        %2713 = vmatpush1.msra.mxu0 %v2186
        %2714 = vmatprep.subr.mxu0 %v2253
        %2715 = vmatpush1.msra.mxu0 %v2250
        %2716 = vmatprep.subr.mxu0 0.0
        %2717 = vmatpush1.msra.mxu0 0.0
        %2718 = vmatprep.subr.mxu0 0.0
        %2719 = vmatpush1.msra.mxu0 0.0
        %2720 = vmatprep.subr.mxu0 0.0
        %2721 = vmatpush1.msra.mxu0 0.0
        %2722 = vmatprep.subr.mxu0 0.0
        %2723 = vmatpush1.msra.mxu0 0.0
        %2724 = vmatprep.subr.mxu0 0.0
        %2725 = vmatpush1.msra.mxu0 0.0
        %2726 = vmatprep.subr.mxu0 0.0
        %2727 = vmatpush1.msra.mxu0 0.0
        %2728 = vmatprep.subr.mxu0 0.0
        %2729 = vmatpush1.msra.mxu0 0.0
        %2730 = vmatprep.subr.mxu0 0.0
        %2731 = vmatpush1.msra.mxu0 0.0
        %2732 = vmatprep.subr.mxu0 0.0
        %2733 = vmatpush1.msra.mxu0 0.0
        %2734 = vmatprep.subr.mxu0 0.0
        %2735 = vmatpush1.msra.mxu0 0.0
        %2736 = vmatprep.subr.mxu0 0.0
        %2737 = vmatpush1.msra.mxu0 0.0
        %2738 = vmatprep.subr.mxu0 0.0
        %2739 = vmatpush1.msra.mxu0 0.0
        %2740 = vmatprep.subr.mxu0 0.0
        %2741 = vmatpush1.msra.mxu0 0.0
        %2742 = vmatprep.subr.mxu0 0.0
        %2743 = vmatpush1.msra.mxu0 0.0
        %2744 = vmatprep.subr.mxu0 0.0
        %2745 = vmatpush1.msra.mxu0 0.0
        %2746 = vmatprep.subr.mxu0 0.0
        %2747 = vmatpush1.msra.mxu0 0.0
        %2748 = vmatprep.subr.mxu0 0.0
        %2749 = vmatpush1.msra.mxu0 0.0
        %2750 = vmatprep.subr.mxu0 0.0
        %2751 = vmatpush1.msra.mxu0 0.0
        %2752 = vmatprep.subr.mxu0 0.0
        %2753 = vmatpush1.msra.mxu0 0.0
        %2754 = vmatprep.mubr.f32.mxu0 0.0
        %2755 = vmatmul.mubr.f32.gmra.mrb[0].mxu0 %v2210
        %v2756 = vpop.f32.mrb[0].mxu0
        %v2757 = vadd.f32 0.0, %v2756
        %v2758 = vpop.f32.mrb[0].mxu0
        %v2759 = vadd.f32 0.0, %v2758
        %2760 = vdwg.mxu0
        %2761 = vmatprep.subr.mxu0 %v2002
        %2762 = vmatpush1.msra.mxu0 %v2001
        %2763 = vmatprep.subr.mxu0 %v2019
        %2764 = vmatpush1.msra.mxu0 %v2018
        %2765 = vmatprep.subr.mxu0 %v2036
        %2766 = vmatpush1.msra.mxu0 %v2035
        %2767 = vmatprep.subr.mxu0 %v2053
        %2768 = vmatpush1.msra.mxu0 %v2052
        %2769 = vmatprep.subr.mxu0 %v2070
        %2770 = vmatpush1.msra.mxu0 %v2069
        %2771 = vmatprep.subr.mxu0 %v2087
        %2772 = vmatpush1.msra.mxu0 %v2086
        %2773 = vmatprep.subr.mxu0 %v2104
        %2774 = vmatpush1.msra.mxu0 %v2103
        %2775 = vmatprep.subr.mxu0 %v2121
        %2776 = vmatpush1.msra.mxu0 %v2120
        %2777 = vmatprep.subr.mxu0 %v2138
        %2778 = vmatpush1.msra.mxu0 %v2137
        %2779 = vmatprep.subr.mxu0 %v2155
        %2780 = vmatpush1.msra.mxu0 %v2154
        %2781 = vmatprep.subr.mxu0 %v2172
        %2782 = vmatpush1.msra.mxu0 %v2171
        %2783 = vmatprep.subr.mxu0 %v2189
        %2784 = vmatpush1.msra.mxu0 %v2188
        %2785 = vmatprep.subr.mxu0 %v2259
        %2786 = vmatpush1.msra.mxu0 %v2256
        %2787 = vmatprep.subr.mxu0 0.0
        %2788 = vmatpush1.msra.mxu0 0.0
        %2789 = vmatprep.subr.mxu0 0.0
        %2790 = vmatpush1.msra.mxu0 0.0
        %2791 = vmatprep.subr.mxu0 0.0
        %2792 = vmatpush1.msra.mxu0 0.0
        %2793 = vmatprep.subr.mxu0 0.0
        %2794 = vmatpush1.msra.mxu0 0.0
        %2795 = vmatprep.subr.mxu0 0.0
        %2796 = vmatpush1.msra.mxu0 0.0
        %2797 = vmatprep.subr.mxu0 0.0
        %2798 = vmatpush1.msra.mxu0 0.0
        %2799 = vmatprep.subr.mxu0 0.0
        %2800 = vmatpush1.msra.mxu0 0.0
        %2801 = vmatprep.subr.mxu0 0.0
        %2802 = vmatpush1.msra.mxu0 0.0
        %2803 = vmatprep.subr.mxu0 0.0
        %2804 = vmatpush1.msra.mxu0 0.0
        %2805 = vmatprep.subr.mxu0 0.0
        %2806 = vmatpush1.msra.mxu0 0.0
        %2807 = vmatprep.subr.mxu0 0.0
        %2808 = vmatpush1.msra.mxu0 0.0
        %2809 = vmatprep.subr.mxu0 0.0
        %2810 = vmatpush1.msra.mxu0 0.0
        %2811 = vmatprep.subr.mxu0 0.0
        %2812 = vmatpush1.msra.mxu0 0.0
        %2813 = vmatprep.subr.mxu0 0.0
        %2814 = vmatpush1.msra.mxu0 0.0
        %2815 = vmatprep.subr.mxu0 0.0
        %2816 = vmatpush1.msra.mxu0 0.0
        %2817 = vmatprep.subr.mxu0 0.0
        %2818 = vmatpush1.msra.mxu0 0.0
        %2819 = vmatprep.subr.mxu0 0.0
        %2820 = vmatpush1.msra.mxu0 0.0
        %2821 = vmatprep.subr.mxu0 0.0
        %2822 = vmatpush1.msra.mxu0 0.0
        %2823 = vmatprep.subr.mxu0 0.0
        %2824 = vmatpush1.msra.mxu0 0.0
        %2825 = vmatprep.mubr.f32.mxu0 0.0
        %2826 = vmatmul.mubr.f32.gmra.mrb[0].mxu0 %v2210
        %v2827 = vpop.f32.mrb[0].mxu0
        %v2828 = vadd.f32 0.0, %v2827
        %v2829 = vpop.f32.mrb[0].mxu0
        %v2830 = vadd.f32 0.0, %v2829
        %2831 = vdwg.mxu0
        %2832 = vmatprep.subr.mxu0 0.0
        %2833 = vmatpush1.msra.mxu0 %v2003
        %2834 = vmatprep.subr.mxu0 0.0
        %2835 = vmatpush1.msra.mxu0 %v2020
        %2836 = vmatprep.subr.mxu0 0.0
        %2837 = vmatpush1.msra.mxu0 %v2037
        %2838 = vmatprep.subr.mxu0 0.0
        %2839 = vmatpush1.msra.mxu0 %v2054
        %2840 = vmatprep.subr.mxu0 0.0
        %2841 = vmatpush1.msra.mxu0 %v2071
        %2842 = vmatprep.subr.mxu0 0.0
        %2843 = vmatpush1.msra.mxu0 %v2088
        %2844 = vmatprep.subr.mxu0 0.0
        %2845 = vmatpush1.msra.mxu0 %v2105
        %2846 = vmatprep.subr.mxu0 0.0
        %2847 = vmatpush1.msra.mxu0 %v2122
        %2848 = vmatprep.subr.mxu0 0.0
        %2849 = vmatpush1.msra.mxu0 %v2139
        %2850 = vmatprep.subr.mxu0 0.0
        %2851 = vmatpush1.msra.mxu0 %v2156
        %2852 = vmatprep.subr.mxu0 0.0
        %2853 = vmatpush1.msra.mxu0 %v2173
        %2854 = vmatprep.subr.mxu0 0.0
        %2855 = vmatpush1.msra.mxu0 %v2190
        %2856 = vmatprep.subr.mxu0 0.0
        %2857 = vmatpush1.msra.mxu0 %v2262
        %2858 = vmatprep.subr.mxu0 0.0
        %2859 = vmatpush1.msra.mxu0 0.0
        %2860 = vmatprep.subr.mxu0 0.0
        %2861 = vmatpush1.msra.mxu0 0.0
        %2862 = vmatprep.subr.mxu0 0.0
        %2863 = vmatpush1.msra.mxu0 0.0
        %2864 = vmatprep.subr.mxu0 0.0
        %2865 = vmatpush1.msra.mxu0 0.0
        %2866 = vmatprep.subr.mxu0 0.0
        %2867 = vmatpush1.msra.mxu0 0.0
        %2868 = vmatprep.subr.mxu0 0.0
        %2869 = vmatpush1.msra.mxu0 0.0
        %2870 = vmatprep.subr.mxu0 0.0
        %2871 = vmatpush1.msra.mxu0 0.0
        %2872 = vmatprep.subr.mxu0 0.0
        %2873 = vmatpush1.msra.mxu0 0.0
        %2874 = vmatprep.subr.mxu0 0.0
        %2875 = vmatpush1.msra.mxu0 0.0
        %2876 = vmatprep.subr.mxu0 0.0
        %2877 = vmatpush1.msra.mxu0 0.0
        %2878 = vmatprep.subr.mxu0 0.0
        %2879 = vmatpush1.msra.mxu0 0.0
        %2880 = vmatprep.subr.mxu0 0.0
        %2881 = vmatpush1.msra.mxu0 0.0
        %2882 = vmatprep.subr.mxu0 0.0
        %2883 = vmatpush1.msra.mxu0 0.0
        %2884 = vmatprep.subr.mxu0 0.0
        %2885 = vmatpush1.msra.mxu0 0.0
        %2886 = vmatprep.subr.mxu0 0.0
        %2887 = vmatpush1.msra.mxu0 0.0
        %2888 = vmatprep.subr.mxu0 0.0
        %2889 = vmatpush1.msra.mxu0 0.0
        %2890 = vmatprep.subr.mxu0 0.0
        %2891 = vmatpush1.msra.mxu0 0.0
        %2892 = vmatprep.subr.mxu0 0.0
        %2893 = vmatpush1.msra.mxu0 0.0
        %2894 = vmatprep.subr.mxu0 0.0
        %2895 = vmatpush1.msra.mxu0 0.0
        %2896 = vmatprep.mubr.f32.mxu0 0.0
        %2897 = vmatmul.mubr.f32.gmra.mrb[0].mxu0 %v2210
        %v2898 = vpop.f32.mrb[0].mxu0
        %v2899 = vadd.f32 0.0, %v2898
        %v2900 = vpop.f32.mrb[0].mxu0
        %2901 = vdwg.mxu0
        %s2902 = scalar_lea.vmem %s1956, 1768 [#allocation2]
        %v2903 = vld [vmem:[%s2902] sm:$0xff]
        %v2904 = vld [vmem:[%s2902 + $0x8] sm:$0xff]
        %v2905 = vld [vmem:[%s2902 + $0x10] sm:$0xff]
        %v2906 = vld [vmem:[%s2902 + $0x18] sm:$0xff]
        %v2907 = vld [vmem:[%s2902 + $0x20] sm:$0xff]
        %v2908 = vld [vmem:[%s2902 + $0x28] sm:$0xff]
        %v2909 = vld [vmem:[%s2902 + $0x30] sm:$0xff]
        %v2910 = vld [vmem:[%s2902 + $0x38] sm:$0xff]
        %v2911 = vld [vmem:[%s2902 + $0x40] sm:$0xff]
        %v2912 = vld [vmem:[%s2902 + $0x48] sm:$0xff]
        %v2913 = vld [vmem:[%s2902 + $0x50] sm:$0xff]
        %v2914 = vld [vmem:[%s2902 + $0x58] sm:$0xff]
        %v2915 = vld [vmem:[%s2902 + $0x60] sm:$0xff]
        %v2916 = vld [vmem:[%s2902 + $0x68] sm:$0xff]
        %v2917 = vld [vmem:[%s2902 + $0x70] sm:$0xff]
        %v2918 = vld [vmem:[%s2902 + $0x78] sm:$0xff]
        %v2919 = vld [vmem:[%s2902 + $0x80] sm:$0xff]
        %v2920 = vld [vmem:[%s2902 + $0x88] sm:$0xff]
        %v2921 = vld [vmem:[%s2902 + $0x90] sm:$0xff]
        %v2922 = vld [vmem:[%s2902 + $0x98] sm:$0xff]
        %v2923 = vld [vmem:[%s2902 + $0xa0] sm:$0xff]
        %v2924 = vld [vmem:[%s2902 + $0xa8] sm:$0xff]
        %v2925 = vld [vmem:[%s2902 + $0xb0] sm:$0xff]
        %v2926 = vld [vmem:[%s2902 + $0xb8] sm:$0xff]
        %v2927 = vld [vmem:[%s2902 + $0xc0] sm:$0xff]
        %v2928 = vld [vmem:[%s2902 + $0xc8] sm:$0xff]
        %v2929 = vld [vmem:[%s2902 + $0xd0] sm:$0xff]
        %v2930 = vld [vmem:[%s2902 + $0xd8] sm:$0xff]
        %v2931 = vld [vmem:[%s2902 + $0xe0] sm:$0xff]
        %v2932 = vld [vmem:[%s2902 + $0xe8] sm:$0xff]
        %v2933 = vld [vmem:[%s2902 + $0xf0] sm:$0xff]
        %v2934 = vld [vmem:[%s2902 + $0xf8] sm:$0xff]
        %v2935 = vld [vmem:[%s2902 + $0x100] sm:$0xff]
        %v2936 = vld [vmem:[%s2902 + $0x108] sm:$0xff]
        %v2937 = vld [vmem:[%s2902 + $0x110] sm:$0xff]
        %v2938 = vld [vmem:[%s2902 + $0x118] sm:$0xff]
        %v2939 = vld [vmem:[%s2902 + $0x120] sm:$0xff]
        %v2940 = vld [vmem:[%s2902 + $0x128] sm:$0xff]
        %v2941 = vld [vmem:[%s2902 + $0x130] sm:$0xff]
        %v2942 = vld [vmem:[%s2902 + $0x138] sm:$0xff]
        %v2943 = vld [vmem:[%s2902 + $0x140] sm:$0xff]
        %v2944 = vld [vmem:[%s2902 + $0x148] sm:$0xff]
        %v2945 = vld [vmem:[%s2902 + $0x150] sm:$0xff]
        %v2946 = vld [vmem:[%s2902 + $0x158] sm:$0xff]
        %v2947 = vld [vmem:[%s2902 + $0x160] sm:$0xff]
        %v2948 = vld [vmem:[%s2902 + $0x168] sm:$0xff]
        %v2949 = vld [vmem:[%s2902 + $0x170] sm:$0xff]
        %v2950 = vld [vmem:[%s2902 + $0x178] sm:$0xff]
        %v2951 = vld [vmem:[%s2902 + $0x180] sm:$0xff]
        %v2952 = vld [vmem:[%s2902 + $0x188] sm:$0xff]
        %v2953 = vld [vmem:[%s2902 + $0x190] sm:$0xff]
        %v2954 = vld [vmem:[%s2902 + $0x198] sm:$0xff]
        %v2955 = vld [vmem:[%s2902 + $0x1a0] sm:$0xff]
        %v2956 = vld [vmem:[%s2902 + $0x1a8] sm:$0xff]
        %v2957 = vld [vmem:[%s2902 + $0x1b0] sm:$0xff]
        %v2958 = vld [vmem:[%s2902 + $0x1b8] sm:$0xff]
        %v2959 = vld [vmem:[%s2902 + $0x1c0] sm:$0xff]
        %v2960 = vld [vmem:[%s2902 + $0x1c8] sm:$0xff]
        %v2961 = vld [vmem:[%s2902 + $0x1d0] sm:$0xff]
        %v2962 = vld [vmem:[%s2902 + $0x1d8] sm:$0xff]
        %v2963 = vld [vmem:[%s2902 + $0x1e0] sm:$0xff]
        %v2964 = vld [vmem:[%s2902 + $0x1e8] sm:$0xff]
        %v2965 = vld [vmem:[%s2902 + $0x1f0] sm:$0xff]
        %v2966 = vld [vmem:[%s2902 + $0x1f8] sm:$0xff]
        %v2967 = vld [vmem:[%s2902 + $0x200] sm:$0xff]
        %v2968 = vld [vmem:[%s2902 + $0x208] sm:$0xff]
        %v2969 = vld [vmem:[%s2902 + $0x210] sm:$0xff]
        %v2970 = vld [vmem:[%s2902 + $0x218] sm:$0xff]
        %v2971 = vld [vmem:[%s2902 + $0x220] sm:$0xff]
        %v2972 = vld [vmem:[%s2902 + $0x228] sm:$0xff]
        %v2973 = vld [vmem:[%s2902 + $0x230] sm:$0xff]
        %v2974 = vld [vmem:[%s2902 + $0x238] sm:$0xff]
        %v2975 = vld [vmem:[%s2902 + $0x240] sm:$0xff]
        %v2976 = vld [vmem:[%s2902 + $0x248] sm:$0xff]
        %v2977 = vld [vmem:[%s2902 + $0x250] sm:$0xff]
        %v2978 = vld [vmem:[%s2902 + $0x258] sm:$0xff]
        %v2979 = vld [vmem:[%s2902 + $0x260] sm:$0xff]
        %v2980 = vld [vmem:[%s2902 + $0x268] sm:$0xff]
        %v2981 = vld [vmem:[%s2902 + $0x270] sm:$0xff]
        %v2982 = vld [vmem:[%s2902 + $0x278] sm:$0xff]
        %v2983 = vld [vmem:[%s2902 + $0x280] sm:$0xff]
        %v2984 = vld [vmem:[%s2902 + $0x288] sm:$0xff]
        %v2985 = vld [vmem:[%s2902 + $0x290] sm:$0xff]
        %v2986 = vld [vmem:[%s2902 + $0x298] sm:$0xff]
        %v2987 = vld [vmem:[%s2902 + $0x2a0] sm:$0xff]
        %v2988 = vld [vmem:[%s2902 + $0x2a8] sm:$0xff]
        %v2989 = vld [vmem:[%s2902 + $0x2b0] sm:$0xff]
        %v2990 = vld [vmem:[%s2902 + $0x2b8] sm:$0xff]
        %v2991 = vld [vmem:[%s2902 + $0x2c0] sm:$0xff]
        %v2992 = vld [vmem:[%s2902 + $0x2c8] sm:$0xff]
        %v2993 = vld [vmem:[%s2902 + $0x2d0] sm:$0xff]
        %v2994 = vld [vmem:[%s2902 + $0x2d8] sm:$0xff]
        %v2995 = vld [vmem:[%s2902 + $0x2e0] sm:$0xff]
        %v2996 = vld [vmem:[%s2902 + $0x2e8] sm:$0xff]
        %v2997 = vld [vmem:[%s2902 + $0x2f0] sm:$0xff]
        %v2998 = vld [vmem:[%s2902 + $0x2f8] sm:$0xff]
        %v2999 = vld [vmem:[%s2902 + $0x300] sm:$0xff]
        %v3000 = vld [vmem:[%s2902 + $0x308] sm:$0xff]
        %v3001 = vld [vmem:[%s2902 + $0x310] sm:$0xff]
        %v3002 = vld [vmem:[%s2902 + $0x318] sm:$0xff]
        %v3003 = vld [vmem:[%s2902 + $0x320] sm:$0xff]
        %v3004 = vld [vmem:[%s2902 + $0x328] sm:$0xff]
        %v3005 = vld [vmem:[%s2902 + $0x330] sm:$0xff]
        %v3006 = vld [vmem:[%s2902 + $0x338] sm:$0xff]
        %v3007 = vld [vmem:[%s2902 + $0x340] sm:$0xff]
        %v3008 = vld [vmem:[%s2902 + $0x348] sm:$0xff]
        %v3009 = vld [vmem:[%s2902 + $0x350] sm:$0xff]
        %v3010 = vld [vmem:[%s2902 + $0x358] sm:$0xff]
        %v3011 = vld [vmem:[%s2902 + $0x360] sm:$0xff]
        %v3012 = vld [vmem:[%s2902 + $0x368] sm:$0xff]
        %v3013 = vld [vmem:[%s2902 + $0x370] sm:$0xff]
        %v3014 = vld [vmem:[%s2902 + $0x378] sm:$0xff]
        %v3015 = vld [vmem:[%s2902 + $0x380] sm:$0xff]
        %v3016 = vld [vmem:[%s2902 + $0x388] sm:$0xff]
        %v3017 = vld [vmem:[%s2902 + $0x390] sm:$0xff]
        %v3018 = vld [vmem:[%s2902 + $0x398] sm:$0xff]
        %v3019 = vld [vmem:[%s2902 + $0x3a0] sm:$0xff]
        %v3020 = vld [vmem:[%s2902 + $0x3a8] sm:$0xff]
        %v3021 = vld [vmem:[%s2902 + $0x3b0] sm:$0xff]
        %v3022 = vld [vmem:[%s2902 + $0x3b8] sm:$0xff]
        %v3023 = vld [vmem:[%s2902 + $0x3c0] sm:$0xff]
        %v3024 = vld [vmem:[%s2902 + $0x3c8] sm:$0xff]
        %v3025 = vld [vmem:[%s2902 + $0x3d0] sm:$0xff]
        %v3026 = vld [vmem:[%s2902 + $0x3d8] sm:$0xff]
        %v3027 = vld [vmem:[%s2902 + $0x3e0] sm:$0xff]
        %v3028 = vld [vmem:[%s2902 + $0x3e8] sm:$0xff]
        %v3029 = vld [vmem:[%s2902 + $0x3f0] sm:$0xff]
        %v3030 = vld [vmem:[%s2902 + $0x3f8] sm:$0xff]
        %v3031 = vld [vmem:[%s2902 + $0x400] sm:$0xff]
        %v3032 = vld [vmem:[%s2902 + $0x408] sm:$0xff]
        %v3033 = vld [vmem:[%s2902 + $0x410] sm:$0xff]
        %v3034 = vld [vmem:[%s2902 + $0x418] sm:$0xff]
        %v3035 = vld [vmem:[%s2902 + $0x420] sm:$0xff]
        %v3036 = vld [vmem:[%s2902 + $0x428] sm:$0xff]
        %v3037 = vld [vmem:[%s2902 + $0x430] sm:$0xff]
        %v3038 = vld [vmem:[%s2902 + $0x438] sm:$0xff]
        %v3039 = vld [vmem:[%s2902 + $0x440] sm:$0xff]
        %v3040 = vld [vmem:[%s2902 + $0x448] sm:$0xff]
        %v3041 = vld [vmem:[%s2902 + $0x450] sm:$0xff]
        %v3042 = vld [vmem:[%s2902 + $0x458] sm:$0xff]
        %v3043 = vld [vmem:[%s2902 + $0x460] sm:$0xff]
        %v3044 = vld [vmem:[%s2902 + $0x468] sm:$0xff]
        %v3045 = vld [vmem:[%s2902 + $0x470] sm:$0xff]
        %v3046 = vld [vmem:[%s2902 + $0x478] sm:$0xff]
        %v3047 = vld [vmem:[%s2902 + $0x480] sm:$0xff]
        %v3048 = vld [vmem:[%s2902 + $0x488] sm:$0xff]
        %v3049 = vld [vmem:[%s2902 + $0x490] sm:$0xff]
        %v3050 = vld [vmem:[%s2902 + $0x498] sm:$0xff]
        %v3051 = vld [vmem:[%s2902 + $0x4a0] sm:$0xff]
        %v3052 = vld [vmem:[%s2902 + $0x4a8] sm:$0xff]
        %v3053 = vld [vmem:[%s2902 + $0x4b0] sm:$0xff]
        %v3054 = vld [vmem:[%s2902 + $0x4b8] sm:$0xff]
        %v3055 = vld [vmem:[%s2902 + $0x4c0] sm:$0xff]
        %v3056 = vld [vmem:[%s2902 + $0x4c8] sm:$0xff]
        %v3057 = vld [vmem:[%s2902 + $0x4d0] sm:$0xff]
        %v3058 = vld [vmem:[%s2902 + $0x4d8] sm:$0xff]
        %v3059 = vld [vmem:[%s2902 + $0x4e0] sm:$0xff]
        %v3060 = vld [vmem:[%s2902 + $0x4e8] sm:$0xff]
        %v3061 = vld [vmem:[%s2902 + $0x4f0] sm:$0xff]
        %v3062 = vld [vmem:[%s2902 + $0x4f8] sm:$0xff]
        %v3063 = vld [vmem:[%s2902 + $0x500] sm:$0xff]
        %v3064 = vld [vmem:[%s2902 + $0x508] sm:$0xff]
        %v3065 = vld [vmem:[%s2902 + $0x510] sm:$0xff]
        %v3066 = vld [vmem:[%s2902 + $0x518] sm:$0xff]
        %v3067 = vld [vmem:[%s2902 + $0x520] sm:$0xff]
        %v3068 = vld [vmem:[%s2902 + $0x528] sm:$0xff]
        %v3069 = vld [vmem:[%s2902 + $0x530] sm:$0xff]
        %v3070 = vld [vmem:[%s2902 + $0x538] sm:$0xff]
        %v3071 = vld [vmem:[%s2902 + $0x540] sm:$0xff]
        %v3072 = vld [vmem:[%s2902 + $0x548] sm:$0xff]
        %v3073 = vld [vmem:[%s2902 + $0x550] sm:$0xff]
        %v3074 = vld [vmem:[%s2902 + $0x558] sm:$0xff]
        %v3075 = vld [vmem:[%s2902 + $0x560] sm:$0xff]
        %v3076 = vld [vmem:[%s2902 + $0x568] sm:$0xff]
        %v3077 = vld [vmem:[%s2902 + $0x570] sm:$0xff]
        %v3078 = vld [vmem:[%s2902 + $0x578] sm:$0xff]
        %v3079 = vld [vmem:[%s2902 + $0x580] sm:$0xff]
        %v3080 = vld [vmem:[%s2902 + $0x588] sm:$0xff]
        %v3081 = vld [vmem:[%s2902 + $0x590] sm:$0xff]
        %v3082 = vld [vmem:[%s2902 + $0x598] sm:$0xff]
        %v3083 = vld [vmem:[%s2902 + $0x5a0] sm:$0xff]
        %v3084 = vld [vmem:[%s2902 + $0x5a8] sm:$0xff]
        %v3085 = vld [vmem:[%s2902 + $0x5b0] sm:$0xff]
        %v3086 = vld [vmem:[%s2902 + $0x5b8] sm:$0xff]
        %v3087 = vld [vmem:[%s2902 + $0x5c0] sm:$0xff]
        %v3088 = vld [vmem:[%s2902 + $0x5c8] sm:$0xff]
        %v3089 = vld [vmem:[%s2902 + $0x5d0] sm:$0xff]
        %v3090 = vld [vmem:[%s2902 + $0x5d8] sm:$0xff]
        %v3091 = vld [vmem:[%s2902 + $0x5e0] sm:$0xff]
        %v3092 = vld [vmem:[%s2902 + $0x5e8] sm:$0xff]
        %v3093 = vld [vmem:[%s2902 + $0x5f0] sm:$0xff]
        %v3094 = vld [vmem:[%s2902 + $0x5f8] sm:$0xff]
        %v3095 = vld [vmem:[%s2902 + $0x600] sm:$0xff]
        %v3096 = vld [vmem:[%s2902 + $0x608] sm:$0xff]
        %v3097 = vld [vmem:[%s2902 + $0x610] sm:$0xff]
        %v3098 = vld [vmem:[%s2902 + $0x618] sm:$0xff]
        %v3099 = vld [vmem:[%s2902 + $0x620] sm:$0xff]
        %v3100 = vld [vmem:[%s2902 + $0x628] sm:$0xff]
        %v3101 = vld [vmem:[%s2902 + $0x630] sm:$0xff]
        %v3102 = vld [vmem:[%s2902 + $0x638] sm:$0xff]
        %v3103 = vld [vmem:[%s2902 + $0x640] sm:$0xff]
        %v3104 = vld [vmem:[%s2902 + $0x648] sm:$0xff]
        %v3105 = vld [vmem:[%s2902 + $0x650] sm:$0xff]
        %v3106 = vld [vmem:[%s2902 + $0x658] sm:$0xff]
        %v3107 = vld [vmem:[%s2902 + $0x660] sm:$0xf]
        %v3108 = vld [vmem:[%s2902 + $0x668] sm:$0xf]
        %v3109 = vld [vmem:[%s2902 + $0x670] sm:$0xf]
        %v3110 = vld [vmem:[%s2902 + $0x678] sm:$0xf]
        %v3111 = vld [vmem:[%s2902 + $0x680] sm:$0xf]
        %v3112 = vld [vmem:[%s2902 + $0x688] sm:$0xf]
        %v3113 = vld [vmem:[%s2902 + $0x690] sm:$0xf]
        %v3114 = vld [vmem:[%s2902 + $0x698] sm:$0xf]
        %v3115 = vld [vmem:[%s2902 + $0x6a0] sm:$0xf]
        %v3116 = vld [vmem:[%s2902 + $0x6a8] sm:$0xf]
        %v3117 = vld [vmem:[%s2902 + $0x6b0] sm:$0xf]
        %v3118 = vld [vmem:[%s2902 + $0x6b8] sm:$0xf]
        %v3119 = vld [vmem:[%s2902 + $0x6c0] sm:$0xf]
        %v3120 = vld [vmem:[%s2902 + $0x6c8] sm:$0xf]
        %v3121 = vld [vmem:[%s2902 + $0x6d0] sm:$0xf]
        %v3122 = vld [vmem:[%s2902 + $0x6d8] sm:$0xf]
        %v3123 = vld [vmem:[%s2902 + $0x6e0] sm:$0xf]
        %v3125 = vsel %vm2212, %v3107, 0
        %v3128 = vsel %vm2212, %v3108, 0
        %v3131 = vsel %vm2212, %v3109, 0
        %v3134 = vsel %vm2212, %v3110, 0
        %v3137 = vsel %vm2212, %v3111, 0
        %v3140 = vsel %vm2212, %v3112, 0
        %v3143 = vsel %vm2212, %v3113, 0
        %v3146 = vsel %vm2212, %v3114, 0
        %v3149 = vsel %vm2212, %v3115, 0
        %v3152 = vsel %vm2212, %v3116, 0
        %v3155 = vsel %vm2212, %v3117, 0
        %v3158 = vsel %vm2212, %v3118, 0
        %v3161 = vsel %vm2212, %v3119, 0
        %v3164 = vsel %vm2212, %v3120, 0
        %v3167 = vsel %vm2212, %v3121, 0
        %v3170 = vsel %vm2212, %v3122, 0
        %v3173 = vsel %vm2212, %v3123, 0
        %3175 = vmatprep.subr.mxu0 %v2904
        %3176 = vmatpush1.msra.mxu0 %v2903
        %3177 = vmatprep.subr.mxu0 %v2921
        %3178 = vmatpush1.msra.mxu0 %v2920
        %3179 = vmatprep.subr.mxu0 %v2938
        %3180 = vmatpush1.msra.mxu0 %v2937
        %3181 = vmatprep.subr.mxu0 %v2955
        %3182 = vmatpush1.msra.mxu0 %v2954
        %3183 = vmatprep.subr.mxu0 %v2972
        %3184 = vmatpush1.msra.mxu0 %v2971
        %3185 = vmatprep.subr.mxu0 %v2989
        %3186 = vmatpush1.msra.mxu0 %v2988
        %3187 = vmatprep.subr.mxu0 %v3006
        %3188 = vmatpush1.msra.mxu0 %v3005
        %3189 = vmatprep.subr.mxu0 %v3023
        %3190 = vmatpush1.msra.mxu0 %v3022
        %3191 = vmatprep.subr.mxu0 %v3040
        %3192 = vmatpush1.msra.mxu0 %v3039
        %3193 = vmatprep.subr.mxu0 %v3057
        %3194 = vmatpush1.msra.mxu0 %v3056
        %3195 = vmatprep.subr.mxu0 %v3074
        %3196 = vmatpush1.msra.mxu0 %v3073
        %3197 = vmatprep.subr.mxu0 %v3091
        %3198 = vmatpush1.msra.mxu0 %v3090
        %3199 = vmatprep.subr.mxu0 %v3128
        %3200 = vmatpush1.msra.mxu0 %v3125
        %3201 = vmatprep.subr.mxu0 0.0
        %3202 = vmatpush1.msra.mxu0 0.0
        %3203 = vmatprep.subr.mxu0 0.0
        %3204 = vmatpush1.msra.mxu0 0.0
        %3205 = vmatprep.subr.mxu0 0.0
        %3206 = vmatpush1.msra.mxu0 0.0
        %3207 = vmatprep.subr.mxu0 0.0
        %3208 = vmatpush1.msra.mxu0 0.0
        %3209 = vmatprep.subr.mxu0 0.0
        %3210 = vmatpush1.msra.mxu0 0.0
        %3211 = vmatprep.subr.mxu0 0.0
        %3212 = vmatpush1.msra.mxu0 0.0
        %3213 = vmatprep.subr.mxu0 0.0
        %3214 = vmatpush1.msra.mxu0 0.0
        %3215 = vmatprep.subr.mxu0 0.0
        %3216 = vmatpush1.msra.mxu0 0.0
        %3217 = vmatprep.subr.mxu0 0.0
        %3218 = vmatpush1.msra.mxu0 0.0
        %3219 = vmatprep.subr.mxu0 0.0
        %3220 = vmatpush1.msra.mxu0 0.0
        %3221 = vmatprep.subr.mxu0 0.0
        %3222 = vmatpush1.msra.mxu0 0.0
        %3223 = vmatprep.subr.mxu0 0.0
        %3224 = vmatpush1.msra.mxu0 0.0
        %3225 = vmatprep.subr.mxu0 0.0
        %3226 = vmatpush1.msra.mxu0 0.0
        %3227 = vmatprep.subr.mxu0 0.0
        %3228 = vmatpush1.msra.mxu0 0.0
        %3229 = vmatprep.subr.mxu0 0.0
        %3230 = vmatpush1.msra.mxu0 0.0
        %3231 = vmatprep.subr.mxu0 0.0
        %3232 = vmatpush1.msra.mxu0 0.0
        %3233 = vmatprep.subr.mxu0 0.0
        %3234 = vmatpush1.msra.mxu0 0.0
        %3235 = vmatprep.subr.mxu0 0.0
        %3236 = vmatpush1.msra.mxu0 0.0
        %3237 = vmatprep.subr.mxu0 0.0
        %3238 = vmatpush1.msra.mxu0 0.0
        %3239 = vmatprep.mubr.f32.mxu0 0.0
        %3240 = vmatmul.mubr.f32.gmra.mrb[0].mxu0 %v2210
        %v3241 = vpop.f32.mrb[0].mxu0
        %v3242 = vadd.f32 0.0, %v3241
        %v3243 = vpop.f32.mrb[0].mxu0
        %v3244 = vadd.f32 0.0, %v3243
        %3245 = vdwg.mxu0
        %3246 = vmatprep.subr.mxu0 %v2906
        %3247 = vmatpush1.msra.mxu0 %v2905
        %3248 = vmatprep.subr.mxu0 %v2923
        %3249 = vmatpush1.msra.mxu0 %v2922
        %3250 = vmatprep.subr.mxu0 %v2940
        %3251 = vmatpush1.msra.mxu0 %v2939
        %3252 = vmatprep.subr.mxu0 %v2957
        %3253 = vmatpush1.msra.mxu0 %v2956
        %3254 = vmatprep.subr.mxu0 %v2974
        %3255 = vmatpush1.msra.mxu0 %v2973
        %3256 = vmatprep.subr.mxu0 %v2991
        %3257 = vmatpush1.msra.mxu0 %v2990
        %3258 = vmatprep.subr.mxu0 %v3008
        %3259 = vmatpush1.msra.mxu0 %v3007
        %3260 = vmatprep.subr.mxu0 %v3025
        %3261 = vmatpush1.msra.mxu0 %v3024
        %3262 = vmatprep.subr.mxu0 %v3042
        %3263 = vmatpush1.msra.mxu0 %v3041
        %3264 = vmatprep.subr.mxu0 %v3059
        %3265 = vmatpush1.msra.mxu0 %v3058
        %3266 = vmatprep.subr.mxu0 %v3076
        %3267 = vmatpush1.msra.mxu0 %v3075
        %3268 = vmatprep.subr.mxu0 %v3093
        %3269 = vmatpush1.msra.mxu0 %v3092
        %3270 = vmatprep.subr.mxu0 %v3134
        %3271 = vmatpush1.msra.mxu0 %v3131
        %3272 = vmatprep.subr.mxu0 0.0
        %3273 = vmatpush1.msra.mxu0 0.0
        %3274 = vmatprep.subr.mxu0 0.0
        %3275 = vmatpush1.msra.mxu0 0.0
        %3276 = vmatprep.subr.mxu0 0.0
        %3277 = vmatpush1.msra.mxu0 0.0
        %3278 = vmatprep.subr.mxu0 0.0
        %3279 = vmatpush1.msra.mxu0 0.0
        %3280 = vmatprep.subr.mxu0 0.0
        %3281 = vmatpush1.msra.mxu0 0.0
        %3282 = vmatprep.subr.mxu0 0.0
        %3283 = vmatpush1.msra.mxu0 0.0
        %3284 = vmatprep.subr.mxu0 0.0
        %3285 = vmatpush1.msra.mxu0 0.0
        %3286 = vmatprep.subr.mxu0 0.0
        %3287 = vmatpush1.msra.mxu0 0.0
        %3288 = vmatprep.subr.mxu0 0.0
        %3289 = vmatpush1.msra.mxu0 0.0
        %3290 = vmatprep.subr.mxu0 0.0
        %3291 = vmatpush1.msra.mxu0 0.0
        %3292 = vmatprep.subr.mxu0 0.0
        %3293 = vmatpush1.msra.mxu0 0.0
        %3294 = vmatprep.subr.mxu0 0.0
        %3295 = vmatpush1.msra.mxu0 0.0
        %3296 = vmatprep.subr.mxu0 0.0
        %3297 = vmatpush1.msra.mxu0 0.0
        %3298 = vmatprep.subr.mxu0 0.0
        %3299 = vmatpush1.msra.mxu0 0.0
        %3300 = vmatprep.subr.mxu0 0.0
        %3301 = vmatpush1.msra.mxu0 0.0
        %3302 = vmatprep.subr.mxu0 0.0
        %3303 = vmatpush1.msra.mxu0 0.0
        %3304 = vmatprep.subr.mxu0 0.0
        %3305 = vmatpush1.msra.mxu0 0.0
        %3306 = vmatprep.subr.mxu0 0.0
        %3307 = vmatpush1.msra.mxu0 0.0
        %3308 = vmatprep.subr.mxu0 0.0
        %3309 = vmatpush1.msra.mxu0 0.0
        %3310 = vmatprep.mubr.f32.mxu0 0.0
        %3311 = vmatmul.mubr.f32.gmra.mrb[0].mxu0 %v2210
        %v3312 = vpop.f32.mrb[0].mxu0
        %v3313 = vadd.f32 0.0, %v3312
        %v3314 = vpop.f32.mrb[0].mxu0
        %v3315 = vadd.f32 0.0, %v3314
        %3316 = vdwg.mxu0
        %3317 = vmatprep.subr.mxu0 %v2908
        %3318 = vmatpush1.msra.mxu0 %v2907
        %3319 = vmatprep.subr.mxu0 %v2925
        %3320 = vmatpush1.msra.mxu0 %v2924
        %3321 = vmatprep.subr.mxu0 %v2942
        %3322 = vmatpush1.msra.mxu0 %v2941
        %3323 = vmatprep.subr.mxu0 %v2959
        %3324 = vmatpush1.msra.mxu0 %v2958
        %3325 = vmatprep.subr.mxu0 %v2976
        %3326 = vmatpush1.msra.mxu0 %v2975
        %3327 = vmatprep.subr.mxu0 %v2993
        %3328 = vmatpush1.msra.mxu0 %v2992
        %3329 = vmatprep.subr.mxu0 %v3010
        %3330 = vmatpush1.msra.mxu0 %v3009
        %3331 = vmatprep.subr.mxu0 %v3027
        %3332 = vmatpush1.msra.mxu0 %v3026
        %3333 = vmatprep.subr.mxu0 %v3044
        %3334 = vmatpush1.msra.mxu0 %v3043
        %3335 = vmatprep.subr.mxu0 %v3061
        %3336 = vmatpush1.msra.mxu0 %v3060
        %3337 = vmatprep.subr.mxu0 %v3078
        %3338 = vmatpush1.msra.mxu0 %v3077
        %3339 = vmatprep.subr.mxu0 %v3095
        %3340 = vmatpush1.msra.mxu0 %v3094
        %3341 = vmatprep.subr.mxu0 %v3140
        %3342 = vmatpush1.msra.mxu0 %v3137
        %3343 = vmatprep.subr.mxu0 0.0
        %3344 = vmatpush1.msra.mxu0 0.0
        %3345 = vmatprep.subr.mxu0 0.0
        %3346 = vmatpush1.msra.mxu0 0.0
        %3347 = vmatprep.subr.mxu0 0.0
        %3348 = vmatpush1.msra.mxu0 0.0
        %3349 = vmatprep.subr.mxu0 0.0
        %3350 = vmatpush1.msra.mxu0 0.0
        %3351 = vmatprep.subr.mxu0 0.0
        %3352 = vmatpush1.msra.mxu0 0.0
        %3353 = vmatprep.subr.mxu0 0.0
        %3354 = vmatpush1.msra.mxu0 0.0
        %3355 = vmatprep.subr.mxu0 0.0
        %3356 = vmatpush1.msra.mxu0 0.0
        %3357 = vmatprep.subr.mxu0 0.0
        %3358 = vmatpush1.msra.mxu0 0.0
        %3359 = vmatprep.subr.mxu0 0.0
        %3360 = vmatpush1.msra.mxu0 0.0
        %3361 = vmatprep.subr.mxu0 0.0
        %3362 = vmatpush1.msra.mxu0 0.0
        %3363 = vmatprep.subr.mxu0 0.0
        %3364 = vmatpush1.msra.mxu0 0.0
        %3365 = vmatprep.subr.mxu0 0.0
        %3366 = vmatpush1.msra.mxu0 0.0
        %3367 = vmatprep.subr.mxu0 0.0
        %3368 = vmatpush1.msra.mxu0 0.0
        %3369 = vmatprep.subr.mxu0 0.0
        %3370 = vmatpush1.msra.mxu0 0.0
        %3371 = vmatprep.subr.mxu0 0.0
        %3372 = vmatpush1.msra.mxu0 0.0
        %3373 = vmatprep.subr.mxu0 0.0
        %3374 = vmatpush1.msra.mxu0 0.0
        %3375 = vmatprep.subr.mxu0 0.0
        %3376 = vmatpush1.msra.mxu0 0.0
        %3377 = vmatprep.subr.mxu0 0.0
        %3378 = vmatpush1.msra.mxu0 0.0
        %3379 = vmatprep.subr.mxu0 0.0
        %3380 = vmatpush1.msra.mxu0 0.0
        %3381 = vmatprep.mubr.f32.mxu0 0.0
        %3382 = vmatmul.mubr.f32.gmra.mrb[0].mxu0 %v2210
        %v3383 = vpop.f32.mrb[0].mxu0
        %v3384 = vadd.f32 0.0, %v3383
        %v3385 = vpop.f32.mrb[0].mxu0
        %v3386 = vadd.f32 0.0, %v3385
        %3387 = vdwg.mxu0
        %3388 = vmatprep.subr.mxu0 %v2910
        %3389 = vmatpush1.msra.mxu0 %v2909
        %3390 = vmatprep.subr.mxu0 %v2927
        %3391 = vmatpush1.msra.mxu0 %v2926
        %3392 = vmatprep.subr.mxu0 %v2944
        %3393 = vmatpush1.msra.mxu0 %v2943
        %3394 = vmatprep.subr.mxu0 %v2961
        %3395 = vmatpush1.msra.mxu0 %v2960
        %3396 = vmatprep.subr.mxu0 %v2978
        %3397 = vmatpush1.msra.mxu0 %v2977
        %3398 = vmatprep.subr.mxu0 %v2995
        %3399 = vmatpush1.msra.mxu0 %v2994
        %3400 = vmatprep.subr.mxu0 %v3012
        %3401 = vmatpush1.msra.mxu0 %v3011
        %3402 = vmatprep.subr.mxu0 %v3029
        %3403 = vmatpush1.msra.mxu0 %v3028
        %3404 = vmatprep.subr.mxu0 %v3046
        %3405 = vmatpush1.msra.mxu0 %v3045
        %3406 = vmatprep.subr.mxu0 %v3063
        %3407 = vmatpush1.msra.mxu0 %v3062
        %3408 = vmatprep.subr.mxu0 %v3080
        %3409 = vmatpush1.msra.mxu0 %v3079
        %3410 = vmatprep.subr.mxu0 %v3097
        %3411 = vmatpush1.msra.mxu0 %v3096
        %3412 = vmatprep.subr.mxu0 %v3146
        %3413 = vmatpush1.msra.mxu0 %v3143
        %3414 = vmatprep.subr.mxu0 0.0
        %3415 = vmatpush1.msra.mxu0 0.0
        %3416 = vmatprep.subr.mxu0 0.0
        %3417 = vmatpush1.msra.mxu0 0.0
        %3418 = vmatprep.subr.mxu0 0.0
        %3419 = vmatpush1.msra.mxu0 0.0
        %3420 = vmatprep.subr.mxu0 0.0
        %3421 = vmatpush1.msra.mxu0 0.0
        %3422 = vmatprep.subr.mxu0 0.0
        %3423 = vmatpush1.msra.mxu0 0.0
        %3424 = vmatprep.subr.mxu0 0.0
        %3425 = vmatpush1.msra.mxu0 0.0
        %3426 = vmatprep.subr.mxu0 0.0
        %3427 = vmatpush1.msra.mxu0 0.0
        %3428 = vmatprep.subr.mxu0 0.0
        %3429 = vmatpush1.msra.mxu0 0.0
        %3430 = vmatprep.subr.mxu0 0.0
        %3431 = vmatpush1.msra.mxu0 0.0
        %3432 = vmatprep.subr.mxu0 0.0
        %3433 = vmatpush1.msra.mxu0 0.0
        %3434 = vmatprep.subr.mxu0 0.0
        %3435 = vmatpush1.msra.mxu0 0.0
        %3436 = vmatprep.subr.mxu0 0.0
        %3437 = vmatpush1.msra.mxu0 0.0
        %3438 = vmatprep.subr.mxu0 0.0
        %3439 = vmatpush1.msra.mxu0 0.0
        %3440 = vmatprep.subr.mxu0 0.0
        %3441 = vmatpush1.msra.mxu0 0.0
        %3442 = vmatprep.subr.mxu0 0.0
        %3443 = vmatpush1.msra.mxu0 0.0
        %3444 = vmatprep.subr.mxu0 0.0
        %3445 = vmatpush1.msra.mxu0 0.0
        %3446 = vmatprep.subr.mxu0 0.0
        %3447 = vmatpush1.msra.mxu0 0.0
        %3448 = vmatprep.subr.mxu0 0.0
        %3449 = vmatpush1.msra.mxu0 0.0
        %3450 = vmatprep.subr.mxu0 0.0
        %3451 = vmatpush1.msra.mxu0 0.0
        %3452 = vmatprep.mubr.f32.mxu0 0.0
        %3453 = vmatmul.mubr.f32.gmra.mrb[0].mxu0 %v2210
        %v3454 = vpop.f32.mrb[0].mxu0
        %v3455 = vadd.f32 0.0, %v3454
        %v3456 = vpop.f32.mrb[0].mxu0
        %v3457 = vadd.f32 0.0, %v3456
        %3458 = vdwg.mxu0
        %3459 = vmatprep.subr.mxu0 %v2912
        %3460 = vmatpush1.msra.mxu0 %v2911
        %3461 = vmatprep.subr.mxu0 %v2929
        %3462 = vmatpush1.msra.mxu0 %v2928
        %3463 = vmatprep.subr.mxu0 %v2946
        %3464 = vmatpush1.msra.mxu0 %v2945
        %3465 = vmatprep.subr.mxu0 %v2963
        %3466 = vmatpush1.msra.mxu0 %v2962
        %3467 = vmatprep.subr.mxu0 %v2980
        %3468 = vmatpush1.msra.mxu0 %v2979
        %3469 = vmatprep.subr.mxu0 %v2997
        %3470 = vmatpush1.msra.mxu0 %v2996
        %3471 = vmatprep.subr.mxu0 %v3014
        %3472 = vmatpush1.msra.mxu0 %v3013
        %3473 = vmatprep.subr.mxu0 %v3031
        %3474 = vmatpush1.msra.mxu0 %v3030
        %3475 = vmatprep.subr.mxu0 %v3048
        %3476 = vmatpush1.msra.mxu0 %v3047
        %3477 = vmatprep.subr.mxu0 %v3065
        %3478 = vmatpush1.msra.mxu0 %v3064
        %3479 = vmatprep.subr.mxu0 %v3082
        %3480 = vmatpush1.msra.mxu0 %v3081
        %3481 = vmatprep.subr.mxu0 %v3099
        %3482 = vmatpush1.msra.mxu0 %v3098
        %3483 = vmatprep.subr.mxu0 %v3152
        %3484 = vmatpush1.msra.mxu0 %v3149
        %3485 = vmatprep.subr.mxu0 0.0
        %3486 = vmatpush1.msra.mxu0 0.0
        %3487 = vmatprep.subr.mxu0 0.0
        %3488 = vmatpush1.msra.mxu0 0.0
        %3489 = vmatprep.subr.mxu0 0.0
        %3490 = vmatpush1.msra.mxu0 0.0
        %3491 = vmatprep.subr.mxu0 0.0
        %3492 = vmatpush1.msra.mxu0 0.0
        %3493 = vmatprep.subr.mxu0 0.0
        %3494 = vmatpush1.msra.mxu0 0.0
        %3495 = vmatprep.subr.mxu0 0.0
        %3496 = vmatpush1.msra.mxu0 0.0
        %3497 = vmatprep.subr.mxu0 0.0
        %3498 = vmatpush1.msra.mxu0 0.0
        %3499 = vmatprep.subr.mxu0 0.0
        %3500 = vmatpush1.msra.mxu0 0.0
        %3501 = vmatprep.subr.mxu0 0.0
        %3502 = vmatpush1.msra.mxu0 0.0
        %3503 = vmatprep.subr.mxu0 0.0
        %3504 = vmatpush1.msra.mxu0 0.0
        %3505 = vmatprep.subr.mxu0 0.0
        %3506 = vmatpush1.msra.mxu0 0.0
        %3507 = vmatprep.subr.mxu0 0.0
        %3508 = vmatpush1.msra.mxu0 0.0
        %3509 = vmatprep.subr.mxu0 0.0
        %3510 = vmatpush1.msra.mxu0 0.0
        %3511 = vmatprep.subr.mxu0 0.0
        %3512 = vmatpush1.msra.mxu0 0.0
        %3513 = vmatprep.subr.mxu0 0.0
        %3514 = vmatpush1.msra.mxu0 0.0
        %3515 = vmatprep.subr.mxu0 0.0
        %3516 = vmatpush1.msra.mxu0 0.0
        %3517 = vmatprep.subr.mxu0 0.0
        %3518 = vmatpush1.msra.mxu0 0.0
        %3519 = vmatprep.subr.mxu0 0.0
        %3520 = vmatpush1.msra.mxu0 0.0
        %3521 = vmatprep.subr.mxu0 0.0
        %3522 = vmatpush1.msra.mxu0 0.0
        %3523 = vmatprep.mubr.f32.mxu0 0.0
        %3524 = vmatmul.mubr.f32.gmra.mrb[0].mxu0 %v2210
        %v3525 = vpop.f32.mrb[0].mxu0
        %v3526 = vadd.f32 0.0, %v3525
        %v3527 = vpop.f32.mrb[0].mxu0
        %v3528 = vadd.f32 0.0, %v3527
        %3529 = vdwg.mxu0
        %3530 = vmatprep.subr.mxu0 %v2914
        %3531 = vmatpush1.msra.mxu0 %v2913
        %3532 = vmatprep.subr.mxu0 %v2931
        %3533 = vmatpush1.msra.mxu0 %v2930
        %3534 = vmatprep.subr.mxu0 %v2948
        %3535 = vmatpush1.msra.mxu0 %v2947
        %3536 = vmatprep.subr.mxu0 %v2965
        %3537 = vmatpush1.msra.mxu0 %v2964
        %3538 = vmatprep.subr.mxu0 %v2982
        %3539 = vmatpush1.msra.mxu0 %v2981
        %3540 = vmatprep.subr.mxu0 %v2999
        %3541 = vmatpush1.msra.mxu0 %v2998
        %3542 = vmatprep.subr.mxu0 %v3016
        %3543 = vmatpush1.msra.mxu0 %v3015
        %3544 = vmatprep.subr.mxu0 %v3033
        %3545 = vmatpush1.msra.mxu0 %v3032
        %3546 = vmatprep.subr.mxu0 %v3050
        %3547 = vmatpush1.msra.mxu0 %v3049
        %3548 = vmatprep.subr.mxu0 %v3067
        %3549 = vmatpush1.msra.mxu0 %v3066
        %3550 = vmatprep.subr.mxu0 %v3084
        %3551 = vmatpush1.msra.mxu0 %v3083
        %3552 = vmatprep.subr.mxu0 %v3101
        %3553 = vmatpush1.msra.mxu0 %v3100
        %3554 = vmatprep.subr.mxu0 %v3158
        %3555 = vmatpush1.msra.mxu0 %v3155
        %3556 = vmatprep.subr.mxu0 0.0
        %3557 = vmatpush1.msra.mxu0 0.0
        %3558 = vmatprep.subr.mxu0 0.0
        %3559 = vmatpush1.msra.mxu0 0.0
        %3560 = vmatprep.subr.mxu0 0.0
        %3561 = vmatpush1.msra.mxu0 0.0
        %3562 = vmatprep.subr.mxu0 0.0
        %3563 = vmatpush1.msra.mxu0 0.0
        %3564 = vmatprep.subr.mxu0 0.0
        %3565 = vmatpush1.msra.mxu0 0.0
        %3566 = vmatprep.subr.mxu0 0.0
        %3567 = vmatpush1.msra.mxu0 0.0
        %3568 = vmatprep.subr.mxu0 0.0
        %3569 = vmatpush1.msra.mxu0 0.0
        %3570 = vmatprep.subr.mxu0 0.0
        %3571 = vmatpush1.msra.mxu0 0.0
        %3572 = vmatprep.subr.mxu0 0.0
        %3573 = vmatpush1.msra.mxu0 0.0
        %3574 = vmatprep.subr.mxu0 0.0
        %3575 = vmatpush1.msra.mxu0 0.0
        %3576 = vmatprep.subr.mxu0 0.0
        %3577 = vmatpush1.msra.mxu0 0.0
        %3578 = vmatprep.subr.mxu0 0.0
        %3579 = vmatpush1.msra.mxu0 0.0
        %3580 = vmatprep.subr.mxu0 0.0
        %3581 = vmatpush1.msra.mxu0 0.0
        %3582 = vmatprep.subr.mxu0 0.0
        %3583 = vmatpush1.msra.mxu0 0.0
        %3584 = vmatprep.subr.mxu0 0.0
        %3585 = vmatpush1.msra.mxu0 0.0
        %3586 = vmatprep.subr.mxu0 0.0
        %3587 = vmatpush1.msra.mxu0 0.0
        %3588 = vmatprep.subr.mxu0 0.0
        %3589 = vmatpush1.msra.mxu0 0.0
        %3590 = vmatprep.subr.mxu0 0.0
        %3591 = vmatpush1.msra.mxu0 0.0
        %3592 = vmatprep.subr.mxu0 0.0
        %3593 = vmatpush1.msra.mxu0 0.0
        %3594 = vmatprep.mubr.f32.mxu0 0.0
        %3595 = vmatmul.mubr.f32.gmra.mrb[0].mxu0 %v2210
        %v3596 = vpop.f32.mrb[0].mxu0
        %v3597 = vadd.f32 0.0, %v3596
        %v3598 = vpop.f32.mrb[0].mxu0
        %v3599 = vadd.f32 0.0, %v3598
        %3600 = vdwg.mxu0
        %3601 = vmatprep.subr.mxu0 %v2916
        %3602 = vmatpush1.msra.mxu0 %v2915
        %3603 = vmatprep.subr.mxu0 %v2933
        %3604 = vmatpush1.msra.mxu0 %v2932
        %3605 = vmatprep.subr.mxu0 %v2950
        %3606 = vmatpush1.msra.mxu0 %v2949
        %3607 = vmatprep.subr.mxu0 %v2967
        %3608 = vmatpush1.msra.mxu0 %v2966
        %3609 = vmatprep.subr.mxu0 %v2984
        %3610 = vmatpush1.msra.mxu0 %v2983
        %3611 = vmatprep.subr.mxu0 %v3001
        %3612 = vmatpush1.msra.mxu0 %v3000
        %3613 = vmatprep.subr.mxu0 %v3018
        %3614 = vmatpush1.msra.mxu0 %v3017
        %3615 = vmatprep.subr.mxu0 %v3035
        %3616 = vmatpush1.msra.mxu0 %v3034
        %3617 = vmatprep.subr.mxu0 %v3052
        %3618 = vmatpush1.msra.mxu0 %v3051
        %3619 = vmatprep.subr.mxu0 %v3069
        %3620 = vmatpush1.msra.mxu0 %v3068
        %3621 = vmatprep.subr.mxu0 %v3086
        %3622 = vmatpush1.msra.mxu0 %v3085
        %3623 = vmatprep.subr.mxu0 %v3103
        %3624 = vmatpush1.msra.mxu0 %v3102
        %3625 = vmatprep.subr.mxu0 %v3164
        %3626 = vmatpush1.msra.mxu0 %v3161
        %3627 = vmatprep.subr.mxu0 0.0
        %3628 = vmatpush1.msra.mxu0 0.0
        %3629 = vmatprep.subr.mxu0 0.0
        %3630 = vmatpush1.msra.mxu0 0.0
        %3631 = vmatprep.subr.mxu0 0.0
        %3632 = vmatpush1.msra.mxu0 0.0
        %3633 = vmatprep.subr.mxu0 0.0
        %3634 = vmatpush1.msra.mxu0 0.0
        %3635 = vmatprep.subr.mxu0 0.0
        %3636 = vmatpush1.msra.mxu0 0.0
        %3637 = vmatprep.subr.mxu0 0.0
        %3638 = vmatpush1.msra.mxu0 0.0
        %3639 = vmatprep.subr.mxu0 0.0
        %3640 = vmatpush1.msra.mxu0 0.0
        %3641 = vmatprep.subr.mxu0 0.0
        %3642 = vmatpush1.msra.mxu0 0.0
        %3643 = vmatprep.subr.mxu0 0.0
        %3644 = vmatpush1.msra.mxu0 0.0
        %3645 = vmatprep.subr.mxu0 0.0
        %3646 = vmatpush1.msra.mxu0 0.0
        %3647 = vmatprep.subr.mxu0 0.0
        %3648 = vmatpush1.msra.mxu0 0.0
        %3649 = vmatprep.subr.mxu0 0.0
        %3650 = vmatpush1.msra.mxu0 0.0
        %3651 = vmatprep.subr.mxu0 0.0
        %3652 = vmatpush1.msra.mxu0 0.0
        %3653 = vmatprep.subr.mxu0 0.0
        %3654 = vmatpush1.msra.mxu0 0.0
        %3655 = vmatprep.subr.mxu0 0.0
        %3656 = vmatpush1.msra.mxu0 0.0
        %3657 = vmatprep.subr.mxu0 0.0
        %3658 = vmatpush1.msra.mxu0 0.0
        %3659 = vmatprep.subr.mxu0 0.0
        %3660 = vmatpush1.msra.mxu0 0.0
        %3661 = vmatprep.subr.mxu0 0.0
        %3662 = vmatpush1.msra.mxu0 0.0
        %3663 = vmatprep.subr.mxu0 0.0
        %3664 = vmatpush1.msra.mxu0 0.0
        %3665 = vmatprep.mubr.f32.mxu0 0.0
        %3666 = vmatmul.mubr.f32.gmra.mrb[0].mxu0 %v2210
        %v3667 = vpop.f32.mrb[0].mxu0
        %v3668 = vadd.f32 0.0, %v3667
        %v3669 = vpop.f32.mrb[0].mxu0
        %v3670 = vadd.f32 0.0, %v3669
        %3671 = vdwg.mxu0
        %3672 = vmatprep.subr.mxu0 %v2918
        %3673 = vmatpush1.msra.mxu0 %v2917
        %3674 = vmatprep.subr.mxu0 %v2935
        %3675 = vmatpush1.msra.mxu0 %v2934
        %3676 = vmatprep.subr.mxu0 %v2952
        %3677 = vmatpush1.msra.mxu0 %v2951
        %3678 = vmatprep.subr.mxu0 %v2969
        %3679 = vmatpush1.msra.mxu0 %v2968
        %3680 = vmatprep.subr.mxu0 %v2986
        %3681 = vmatpush1.msra.mxu0 %v2985
        %3682 = vmatprep.subr.mxu0 %v3003
        %3683 = vmatpush1.msra.mxu0 %v3002
        %3684 = vmatprep.subr.mxu0 %v3020
        %3685 = vmatpush1.msra.mxu0 %v3019
        %3686 = vmatprep.subr.mxu0 %v3037
        %3687 = vmatpush1.msra.mxu0 %v3036
        %3688 = vmatprep.subr.mxu0 %v3054
        %3689 = vmatpush1.msra.mxu0 %v3053
        %3690 = vmatprep.subr.mxu0 %v3071
        %3691 = vmatpush1.msra.mxu0 %v3070
        %3692 = vmatprep.subr.mxu0 %v3088
        %3693 = vmatpush1.msra.mxu0 %v3087
        %3694 = vmatprep.subr.mxu0 %v3105
        %3695 = vmatpush1.msra.mxu0 %v3104
        %3696 = vmatprep.subr.mxu0 %v3170
        %3697 = vmatpush1.msra.mxu0 %v3167
        %3698 = vmatprep.subr.mxu0 0.0
        %3699 = vmatpush1.msra.mxu0 0.0
        %3700 = vmatprep.subr.mxu0 0.0
        %3701 = vmatpush1.msra.mxu0 0.0
        %3702 = vmatprep.subr.mxu0 0.0
        %3703 = vmatpush1.msra.mxu0 0.0
        %3704 = vmatprep.subr.mxu0 0.0
        %3705 = vmatpush1.msra.mxu0 0.0
        %3706 = vmatprep.subr.mxu0 0.0
        %3707 = vmatpush1.msra.mxu0 0.0
        %3708 = vmatprep.subr.mxu0 0.0
        %3709 = vmatpush1.msra.mxu0 0.0
        %3710 = vmatprep.subr.mxu0 0.0
        %3711 = vmatpush1.msra.mxu0 0.0
        %3712 = vmatprep.subr.mxu0 0.0
        %3713 = vmatpush1.msra.mxu0 0.0
        %3714 = vmatprep.subr.mxu0 0.0
        %3715 = vmatpush1.msra.mxu0 0.0
        %3716 = vmatprep.subr.mxu0 0.0
        %3717 = vmatpush1.msra.mxu0 0.0
        %3718 = vmatprep.subr.mxu0 0.0
        %3719 = vmatpush1.msra.mxu0 0.0
        %3720 = vmatprep.subr.mxu0 0.0
        %3721 = vmatpush1.msra.mxu0 0.0
        %3722 = vmatprep.subr.mxu0 0.0
        %3723 = vmatpush1.msra.mxu0 0.0
        %3724 = vmatprep.subr.mxu0 0.0
        %3725 = vmatpush1.msra.mxu0 0.0
        %3726 = vmatprep.subr.mxu0 0.0
        %3727 = vmatpush1.msra.mxu0 0.0
        %3728 = vmatprep.subr.mxu0 0.0
        %3729 = vmatpush1.msra.mxu0 0.0
        %3730 = vmatprep.subr.mxu0 0.0
        %3731 = vmatpush1.msra.mxu0 0.0
        %3732 = vmatprep.subr.mxu0 0.0
        %3733 = vmatpush1.msra.mxu0 0.0
        %3734 = vmatprep.subr.mxu0 0.0
        %3735 = vmatpush1.msra.mxu0 0.0
        %3736 = vmatprep.mubr.f32.mxu0 0.0
        %3737 = vmatmul.mubr.f32.gmra.mrb[0].mxu0 %v2210
        %v3738 = vpop.f32.mrb[0].mxu0
        %v3739 = vadd.f32 0.0, %v3738
        %v3740 = vpop.f32.mrb[0].mxu0
        %v3741 = vadd.f32 0.0, %v3740
        %3742 = vdwg.mxu0
        %3743 = vmatprep.subr.mxu0 0.0
        %3744 = vmatpush1.msra.mxu0 %v2919
        %3745 = vmatprep.subr.mxu0 0.0
        %3746 = vmatpush1.msra.mxu0 %v2936
        %3747 = vmatprep.subr.mxu0 0.0
        %3748 = vmatpush1.msra.mxu0 %v2953
        %3749 = vmatprep.subr.mxu0 0.0
        %3750 = vmatpush1.msra.mxu0 %v2970
        %3751 = vmatprep.subr.mxu0 0.0
        %3752 = vmatpush1.msra.mxu0 %v2987
        %3753 = vmatprep.subr.mxu0 0.0
        %3754 = vmatpush1.msra.mxu0 %v3004
        %3755 = vmatprep.subr.mxu0 0.0
        %3756 = vmatpush1.msra.mxu0 %v3021
        %3757 = vmatprep.subr.mxu0 0.0
        %3758 = vmatpush1.msra.mxu0 %v3038
        %3759 = vmatprep.subr.mxu0 0.0
        %3760 = vmatpush1.msra.mxu0 %v3055
        %3761 = vmatprep.subr.mxu0 0.0
        %3762 = vmatpush1.msra.mxu0 %v3072
        %3763 = vmatprep.subr.mxu0 0.0
        %3764 = vmatpush1.msra.mxu0 %v3089
        %3765 = vmatprep.subr.mxu0 0.0
        %3766 = vmatpush1.msra.mxu0 %v3106
        %3767 = vmatprep.subr.mxu0 0.0
        %3768 = vmatpush1.msra.mxu0 %v3173
        %3769 = vmatprep.subr.mxu0 0.0
        %3770 = vmatpush1.msra.mxu0 0.0
        %3771 = vmatprep.subr.mxu0 0.0
        %3772 = vmatpush1.msra.mxu0 0.0
        %3773 = vmatprep.subr.mxu0 0.0
        %3774 = vmatpush1.msra.mxu0 0.0
        %3775 = vmatprep.subr.mxu0 0.0
        %3776 = vmatpush1.msra.mxu0 0.0
        %3777 = vmatprep.subr.mxu0 0.0
        %3778 = vmatpush1.msra.mxu0 0.0
        %3779 = vmatprep.subr.mxu0 0.0
        %3780 = vmatpush1.msra.mxu0 0.0
        %3781 = vmatprep.subr.mxu0 0.0
        %3782 = vmatpush1.msra.mxu0 0.0
        %3783 = vmatprep.subr.mxu0 0.0
        %3784 = vmatpush1.msra.mxu0 0.0
        %3785 = vmatprep.subr.mxu0 0.0
        %3786 = vmatpush1.msra.mxu0 0.0
        %3787 = vmatprep.subr.mxu0 0.0
        %3788 = vmatpush1.msra.mxu0 0.0
        %3789 = vmatprep.subr.mxu0 0.0
        %3790 = vmatpush1.msra.mxu0 0.0
        %3791 = vmatprep.subr.mxu0 0.0
        %3792 = vmatpush1.msra.mxu0 0.0
        %3793 = vmatprep.subr.mxu0 0.0
        %3794 = vmatpush1.msra.mxu0 0.0
        %3795 = vmatprep.subr.mxu0 0.0
        %3796 = vmatpush1.msra.mxu0 0.0
        %3797 = vmatprep.subr.mxu0 0.0
        %3798 = vmatpush1.msra.mxu0 0.0
        %3799 = vmatprep.subr.mxu0 0.0
        %3800 = vmatpush1.msra.mxu0 0.0
        %3801 = vmatprep.subr.mxu0 0.0
        %3802 = vmatpush1.msra.mxu0 0.0
        %3803 = vmatprep.subr.mxu0 0.0
        %3804 = vmatpush1.msra.mxu0 0.0
        %3805 = vmatprep.subr.mxu0 0.0
        %3806 = vmatpush1.msra.mxu0 0.0
        %3807 = vmatprep.mubr.f32.mxu0 0.0
        %3808 = vmatmul.mubr.f32.gmra.mrb[0].mxu0 %v2210
        %v3809 = vpop.f32.mrb[0].mxu0
        %v3810 = vadd.f32 0.0, %v3809
        %v3811 = vpop.f32.mrb[0].mxu0
        %3812 = vdwg.mxu0
        %v3813 = vmax.f32 %v2331, %v3242
        %v3814 = vmax.f32 %v2333, %v3244
        %v3815 = vmax.f32 %v2402, %v3313
        %v3816 = vmax.f32 %v2404, %v3315
        %v3817 = vmax.f32 %v2473, %v3384
        %v3818 = vmax.f32 %v2475, %v3386
        %v3819 = vmax.f32 %v2544, %v3455
        %v3820 = vmax.f32 %v2546, %v3457
        %v3821 = vmax.f32 %v2615, %v3526
        %v3822 = vmax.f32 %v2617, %v3528
        %v3823 = vmax.f32 %v2686, %v3597
        %v3824 = vmax.f32 %v2688, %v3599
        %v3825 = vmax.f32 %v2757, %v3668
        %v3826 = vmax.f32 %v2759, %v3670
        %v3827 = vmax.f32 %v2828, %v3739
        %v3828 = vmax.f32 %v2830, %v3741
        %v3829 = vmax.f32 %v2899, %v3810
        %s3830 = scalar_lea.vmem %s1956, 3536 [#allocation2]
        %v3831 = vld [vmem:[%s3830] sm:$0xff]
        %v3832 = vld [vmem:[%s3830 + $0x8] sm:$0xff]
        %v3833 = vld [vmem:[%s3830 + $0x10] sm:$0xff]
        %v3834 = vld [vmem:[%s3830 + $0x18] sm:$0xff]
        %v3835 = vld [vmem:[%s3830 + $0x20] sm:$0xff]
        %v3836 = vld [vmem:[%s3830 + $0x28] sm:$0xff]
        %v3837 = vld [vmem:[%s3830 + $0x30] sm:$0xff]
        %v3838 = vld [vmem:[%s3830 + $0x38] sm:$0xff]
        %v3839 = vld [vmem:[%s3830 + $0x40] sm:$0xff]
        %v3840 = vld [vmem:[%s3830 + $0x48] sm:$0xff]
        %v3841 = vld [vmem:[%s3830 + $0x50] sm:$0xff]
        %v3842 = vld [vmem:[%s3830 + $0x58] sm:$0xff]
        %v3843 = vld [vmem:[%s3830 + $0x60] sm:$0xff]
        %v3844 = vld [vmem:[%s3830 + $0x68] sm:$0xff]
        %v3845 = vld [vmem:[%s3830 + $0x70] sm:$0xff]
        %v3846 = vld [vmem:[%s3830 + $0x78] sm:$0xff]
        %v3847 = vld [vmem:[%s3830 + $0x80] sm:$0xff]
        %v3848 = vld [vmem:[%s3830 + $0x88] sm:$0xff]
        %v3849 = vld [vmem:[%s3830 + $0x90] sm:$0xff]
        %v3850 = vld [vmem:[%s3830 + $0x98] sm:$0xff]
        %v3851 = vld [vmem:[%s3830 + $0xa0] sm:$0xff]
        %v3852 = vld [vmem:[%s3830 + $0xa8] sm:$0xff]
        %v3853 = vld [vmem:[%s3830 + $0xb0] sm:$0xff]
        %v3854 = vld [vmem:[%s3830 + $0xb8] sm:$0xff]
        %v3855 = vld [vmem:[%s3830 + $0xc0] sm:$0xff]
        %v3856 = vld [vmem:[%s3830 + $0xc8] sm:$0xff]
        %v3857 = vld [vmem:[%s3830 + $0xd0] sm:$0xff]
        %v3858 = vld [vmem:[%s3830 + $0xd8] sm:$0xff]
        %v3859 = vld [vmem:[%s3830 + $0xe0] sm:$0xff]
        %v3860 = vld [vmem:[%s3830 + $0xe8] sm:$0xff]
        %v3861 = vld [vmem:[%s3830 + $0xf0] sm:$0xff]
        %v3862 = vld [vmem:[%s3830 + $0xf8] sm:$0xff]
        %v3863 = vld [vmem:[%s3830 + $0x100] sm:$0xff]
        %v3864 = vld [vmem:[%s3830 + $0x108] sm:$0xff]
        %v3865 = vld [vmem:[%s3830 + $0x110] sm:$0xff]
        %v3866 = vld [vmem:[%s3830 + $0x118] sm:$0xff]
        %v3867 = vld [vmem:[%s3830 + $0x120] sm:$0xff]
        %v3868 = vld [vmem:[%s3830 + $0x128] sm:$0xff]
        %v3869 = vld [vmem:[%s3830 + $0x130] sm:$0xff]
        %v3870 = vld [vmem:[%s3830 + $0x138] sm:$0xff]
        %v3871 = vld [vmem:[%s3830 + $0x140] sm:$0xff]
        %v3872 = vld [vmem:[%s3830 + $0x148] sm:$0xff]
        %v3873 = vld [vmem:[%s3830 + $0x150] sm:$0xff]
        %v3874 = vld [vmem:[%s3830 + $0x158] sm:$0xff]
        %v3875 = vld [vmem:[%s3830 + $0x160] sm:$0xff]
        %v3876 = vld [vmem:[%s3830 + $0x168] sm:$0xff]
        %v3877 = vld [vmem:[%s3830 + $0x170] sm:$0xff]
        %v3878 = vld [vmem:[%s3830 + $0x178] sm:$0xff]
        %v3879 = vld [vmem:[%s3830 + $0x180] sm:$0xff]
        %v3880 = vld [vmem:[%s3830 + $0x188] sm:$0xff]
        %v3881 = vld [vmem:[%s3830 + $0x190] sm:$0xff]
        %v3882 = vld [vmem:[%s3830 + $0x198] sm:$0xff]
        %v3883 = vld [vmem:[%s3830 + $0x1a0] sm:$0xff]
        %v3884 = vld [vmem:[%s3830 + $0x1a8] sm:$0xff]
        %v3885 = vld [vmem:[%s3830 + $0x1b0] sm:$0xff]
        %v3886 = vld [vmem:[%s3830 + $0x1b8] sm:$0xff]
        %v3887 = vld [vmem:[%s3830 + $0x1c0] sm:$0xff]
        %v3888 = vld [vmem:[%s3830 + $0x1c8] sm:$0xff]
        %v3889 = vld [vmem:[%s3830 + $0x1d0] sm:$0xff]
        %v3890 = vld [vmem:[%s3830 + $0x1d8] sm:$0xff]
        %v3891 = vld [vmem:[%s3830 + $0x1e0] sm:$0xff]
        %v3892 = vld [vmem:[%s3830 + $0x1e8] sm:$0xff]
        %v3893 = vld [vmem:[%s3830 + $0x1f0] sm:$0xff]
        %v3894 = vld [vmem:[%s3830 + $0x1f8] sm:$0xff]
        %v3895 = vld [vmem:[%s3830 + $0x200] sm:$0xff]
        %v3896 = vld [vmem:[%s3830 + $0x208] sm:$0xff]
        %v3897 = vld [vmem:[%s3830 + $0x210] sm:$0xff]
        %v3898 = vld [vmem:[%s3830 + $0x218] sm:$0xff]
        %v3899 = vld [vmem:[%s3830 + $0x220] sm:$0xff]
        %v3900 = vld [vmem:[%s3830 + $0x228] sm:$0xff]
        %v3901 = vld [vmem:[%s3830 + $0x230] sm:$0xff]
        %v3902 = vld [vmem:[%s3830 + $0x238] sm:$0xff]
        %v3903 = vld [vmem:[%s3830 + $0x240] sm:$0xff]
        %v3904 = vld [vmem:[%s3830 + $0x248] sm:$0xff]
        %v3905 = vld [vmem:[%s3830 + $0x250] sm:$0xff]
        %v3906 = vld [vmem:[%s3830 + $0x258] sm:$0xff]
        %v3907 = vld [vmem:[%s3830 + $0x260] sm:$0xff]
        %v3908 = vld [vmem:[%s3830 + $0x268] sm:$0xff]
        %v3909 = vld [vmem:[%s3830 + $0x270] sm:$0xff]
        %v3910 = vld [vmem:[%s3830 + $0x278] sm:$0xff]
        %v3911 = vld [vmem:[%s3830 + $0x280] sm:$0xff]
        %v3912 = vld [vmem:[%s3830 + $0x288] sm:$0xff]
        %v3913 = vld [vmem:[%s3830 + $0x290] sm:$0xff]
        %v3914 = vld [vmem:[%s3830 + $0x298] sm:$0xff]
        %v3915 = vld [vmem:[%s3830 + $0x2a0] sm:$0xff]
        %v3916 = vld [vmem:[%s3830 + $0x2a8] sm:$0xff]
        %v3917 = vld [vmem:[%s3830 + $0x2b0] sm:$0xff]
        %v3918 = vld [vmem:[%s3830 + $0x2b8] sm:$0xff]
        %v3919 = vld [vmem:[%s3830 + $0x2c0] sm:$0xff]
        %v3920 = vld [vmem:[%s3830 + $0x2c8] sm:$0xff]
        %v3921 = vld [vmem:[%s3830 + $0x2d0] sm:$0xff]
        %v3922 = vld [vmem:[%s3830 + $0x2d8] sm:$0xff]
        %v3923 = vld [vmem:[%s3830 + $0x2e0] sm:$0xff]
        %v3924 = vld [vmem:[%s3830 + $0x2e8] sm:$0xff]
        %v3925 = vld [vmem:[%s3830 + $0x2f0] sm:$0xff]
        %v3926 = vld [vmem:[%s3830 + $0x2f8] sm:$0xff]
        %v3927 = vld [vmem:[%s3830 + $0x300] sm:$0xff]
        %v3928 = vld [vmem:[%s3830 + $0x308] sm:$0xff]
        %v3929 = vld [vmem:[%s3830 + $0x310] sm:$0xff]
        %v3930 = vld [vmem:[%s3830 + $0x318] sm:$0xff]
        %v3931 = vld [vmem:[%s3830 + $0x320] sm:$0xff]
        %v3932 = vld [vmem:[%s3830 + $0x328] sm:$0xff]
        %v3933 = vld [vmem:[%s3830 + $0x330] sm:$0xff]
        %v3934 = vld [vmem:[%s3830 + $0x338] sm:$0xff]
        %v3935 = vld [vmem:[%s3830 + $0x340] sm:$0xff]
        %v3936 = vld [vmem:[%s3830 + $0x348] sm:$0xff]
        %v3937 = vld [vmem:[%s3830 + $0x350] sm:$0xff]
        %v3938 = vld [vmem:[%s3830 + $0x358] sm:$0xff]
        %v3939 = vld [vmem:[%s3830 + $0x360] sm:$0xff]
        %v3940 = vld [vmem:[%s3830 + $0x368] sm:$0xff]
        %v3941 = vld [vmem:[%s3830 + $0x370] sm:$0xff]
        %v3942 = vld [vmem:[%s3830 + $0x378] sm:$0xff]
        %v3943 = vld [vmem:[%s3830 + $0x380] sm:$0xff]
        %v3944 = vld [vmem:[%s3830 + $0x388] sm:$0xff]
        %v3945 = vld [vmem:[%s3830 + $0x390] sm:$0xff]
        %v3946 = vld [vmem:[%s3830 + $0x398] sm:$0xff]
        %v3947 = vld [vmem:[%s3830 + $0x3a0] sm:$0xff]
        %v3948 = vld [vmem:[%s3830 + $0x3a8] sm:$0xff]
        %v3949 = vld [vmem:[%s3830 + $0x3b0] sm:$0xff]
        %v3950 = vld [vmem:[%s3830 + $0x3b8] sm:$0xff]
        %v3951 = vld [vmem:[%s3830 + $0x3c0] sm:$0xff]
        %v3952 = vld [vmem:[%s3830 + $0x3c8] sm:$0xff]
        %v3953 = vld [vmem:[%s3830 + $0x3d0] sm:$0xff]
        %v3954 = vld [vmem:[%s3830 + $0x3d8] sm:$0xff]
        %v3955 = vld [vmem:[%s3830 + $0x3e0] sm:$0xff]
        %v3956 = vld [vmem:[%s3830 + $0x3e8] sm:$0xff]
        %v3957 = vld [vmem:[%s3830 + $0x3f0] sm:$0xff]
        %v3958 = vld [vmem:[%s3830 + $0x3f8] sm:$0xff]
        %v3959 = vld [vmem:[%s3830 + $0x400] sm:$0xff]
        %v3960 = vld [vmem:[%s3830 + $0x408] sm:$0xff]
        %v3961 = vld [vmem:[%s3830 + $0x410] sm:$0xff]
        %v3962 = vld [vmem:[%s3830 + $0x418] sm:$0xff]
        %v3963 = vld [vmem:[%s3830 + $0x420] sm:$0xff]
        %v3964 = vld [vmem:[%s3830 + $0x428] sm:$0xff]
        %v3965 = vld [vmem:[%s3830 + $0x430] sm:$0xff]
        %v3966 = vld [vmem:[%s3830 + $0x438] sm:$0xff]
        %v3967 = vld [vmem:[%s3830 + $0x440] sm:$0xff]
        %v3968 = vld [vmem:[%s3830 + $0x448] sm:$0xff]
        %v3969 = vld [vmem:[%s3830 + $0x450] sm:$0xff]
        %v3970 = vld [vmem:[%s3830 + $0x458] sm:$0xff]
        %v3971 = vld [vmem:[%s3830 + $0x460] sm:$0xff]
        %v3972 = vld [vmem:[%s3830 + $0x468] sm:$0xff]
        %v3973 = vld [vmem:[%s3830 + $0x470] sm:$0xff]
        %v3974 = vld [vmem:[%s3830 + $0x478] sm:$0xff]
        %v3975 = vld [vmem:[%s3830 + $0x480] sm:$0xff]
        %v3976 = vld [vmem:[%s3830 + $0x488] sm:$0xff]
        %v3977 = vld [vmem:[%s3830 + $0x490] sm:$0xff]
        %v3978 = vld [vmem:[%s3830 + $0x498] sm:$0xff]
        %v3979 = vld [vmem:[%s3830 + $0x4a0] sm:$0xff]
        %v3980 = vld [vmem:[%s3830 + $0x4a8] sm:$0xff]
        %v3981 = vld [vmem:[%s3830 + $0x4b0] sm:$0xff]
        %v3982 = vld [vmem:[%s3830 + $0x4b8] sm:$0xff]
        %v3983 = vld [vmem:[%s3830 + $0x4c0] sm:$0xff]
        %v3984 = vld [vmem:[%s3830 + $0x4c8] sm:$0xff]
        %v3985 = vld [vmem:[%s3830 + $0x4d0] sm:$0xff]
        %v3986 = vld [vmem:[%s3830 + $0x4d8] sm:$0xff]
        %v3987 = vld [vmem:[%s3830 + $0x4e0] sm:$0xff]
        %v3988 = vld [vmem:[%s3830 + $0x4e8] sm:$0xff]
        %v3989 = vld [vmem:[%s3830 + $0x4f0] sm:$0xff]
        %v3990 = vld [vmem:[%s3830 + $0x4f8] sm:$0xff]
        %v3991 = vld [vmem:[%s3830 + $0x500] sm:$0xff]
        %v3992 = vld [vmem:[%s3830 + $0x508] sm:$0xff]
        %v3993 = vld [vmem:[%s3830 + $0x510] sm:$0xff]
        %v3994 = vld [vmem:[%s3830 + $0x518] sm:$0xff]
        %v3995 = vld [vmem:[%s3830 + $0x520] sm:$0xff]
        %v3996 = vld [vmem:[%s3830 + $0x528] sm:$0xff]
        %v3997 = vld [vmem:[%s3830 + $0x530] sm:$0xff]
        %v3998 = vld [vmem:[%s3830 + $0x538] sm:$0xff]
        %v3999 = vld [vmem:[%s3830 + $0x540] sm:$0xff]
        %v4000 = vld [vmem:[%s3830 + $0x548] sm:$0xff]
        %v4001 = vld [vmem:[%s3830 + $0x550] sm:$0xff]
        %v4002 = vld [vmem:[%s3830 + $0x558] sm:$0xff]
        %v4003 = vld [vmem:[%s3830 + $0x560] sm:$0xff]
        %v4004 = vld [vmem:[%s3830 + $0x568] sm:$0xff]
        %v4005 = vld [vmem:[%s3830 + $0x570] sm:$0xff]
        %v4006 = vld [vmem:[%s3830 + $0x578] sm:$0xff]
        %v4007 = vld [vmem:[%s3830 + $0x580] sm:$0xff]
        %v4008 = vld [vmem:[%s3830 + $0x588] sm:$0xff]
        %v4009 = vld [vmem:[%s3830 + $0x590] sm:$0xff]
        %v4010 = vld [vmem:[%s3830 + $0x598] sm:$0xff]
        %v4011 = vld [vmem:[%s3830 + $0x5a0] sm:$0xff]
        %v4012 = vld [vmem:[%s3830 + $0x5a8] sm:$0xff]
        %v4013 = vld [vmem:[%s3830 + $0x5b0] sm:$0xff]
        %v4014 = vld [vmem:[%s3830 + $0x5b8] sm:$0xff]
        %v4015 = vld [vmem:[%s3830 + $0x5c0] sm:$0xff]
        %v4016 = vld [vmem:[%s3830 + $0x5c8] sm:$0xff]
        %v4017 = vld [vmem:[%s3830 + $0x5d0] sm:$0xff]
        %v4018 = vld [vmem:[%s3830 + $0x5d8] sm:$0xff]
        %v4019 = vld [vmem:[%s3830 + $0x5e0] sm:$0xff]
        %v4020 = vld [vmem:[%s3830 + $0x5e8] sm:$0xff]
        %v4021 = vld [vmem:[%s3830 + $0x5f0] sm:$0xff]
        %v4022 = vld [vmem:[%s3830 + $0x5f8] sm:$0xff]
        %v4023 = vld [vmem:[%s3830 + $0x600] sm:$0xff]
        %v4024 = vld [vmem:[%s3830 + $0x608] sm:$0xff]
        %v4025 = vld [vmem:[%s3830 + $0x610] sm:$0xff]
        %v4026 = vld [vmem:[%s3830 + $0x618] sm:$0xff]
        %v4027 = vld [vmem:[%s3830 + $0x620] sm:$0xff]
        %v4028 = vld [vmem:[%s3830 + $0x628] sm:$0xff]
        %v4029 = vld [vmem:[%s3830 + $0x630] sm:$0xff]
        %v4030 = vld [vmem:[%s3830 + $0x638] sm:$0xff]
        %v4031 = vld [vmem:[%s3830 + $0x640] sm:$0xff]
        %v4032 = vld [vmem:[%s3830 + $0x648] sm:$0xff]
        %v4033 = vld [vmem:[%s3830 + $0x650] sm:$0xff]
        %v4034 = vld [vmem:[%s3830 + $0x658] sm:$0xff]
        %v4035 = vld [vmem:[%s3830 + $0x660] sm:$0xf]
        %v4036 = vld [vmem:[%s3830 + $0x668] sm:$0xf]
        %v4037 = vld [vmem:[%s3830 + $0x670] sm:$0xf]
        %v4038 = vld [vmem:[%s3830 + $0x678] sm:$0xf]
        %v4039 = vld [vmem:[%s3830 + $0x680] sm:$0xf]
        %v4040 = vld [vmem:[%s3830 + $0x688] sm:$0xf]
        %v4041 = vld [vmem:[%s3830 + $0x690] sm:$0xf]
        %v4042 = vld [vmem:[%s3830 + $0x698] sm:$0xf]
        %v4043 = vld [vmem:[%s3830 + $0x6a0] sm:$0xf]
        %v4044 = vld [vmem:[%s3830 + $0x6a8] sm:$0xf]
        %v4045 = vld [vmem:[%s3830 + $0x6b0] sm:$0xf]
        %v4046 = vld [vmem:[%s3830 + $0x6b8] sm:$0xf]
        %v4047 = vld [vmem:[%s3830 + $0x6c0] sm:$0xf]
        %v4048 = vld [vmem:[%s3830 + $0x6c8] sm:$0xf]
        %v4049 = vld [vmem:[%s3830 + $0x6d0] sm:$0xf]
        %v4050 = vld [vmem:[%s3830 + $0x6d8] sm:$0xf]
        %v4051 = vld [vmem:[%s3830 + $0x6e0] sm:$0xf]
        %v4053 = vsel %vm2212, %v4035, 0
        %v4056 = vsel %vm2212, %v4036, 0
        %v4059 = vsel %vm2212, %v4037, 0
        %v4062 = vsel %vm2212, %v4038, 0
        %v4065 = vsel %vm2212, %v4039, 0
        %v4068 = vsel %vm2212, %v4040, 0
        %v4071 = vsel %vm2212, %v4041, 0
        %v4074 = vsel %vm2212, %v4042, 0
        %v4077 = vsel %vm2212, %v4043, 0
        %v4080 = vsel %vm2212, %v4044, 0
        %v4083 = vsel %vm2212, %v4045, 0
        %v4086 = vsel %vm2212, %v4046, 0
        %v4089 = vsel %vm2212, %v4047, 0
        %v4092 = vsel %vm2212, %v4048, 0
        %v4095 = vsel %vm2212, %v4049, 0
        %v4098 = vsel %vm2212, %v4050, 0
        %v4101 = vsel %vm2212, %v4051, 0
        %4103 = vmatprep.subr.mxu0 %v3832
        %4104 = vmatpush1.msra.mxu0 %v3831
        %4105 = vmatprep.subr.mxu0 %v3849
        %4106 = vmatpush1.msra.mxu0 %v3848
        %4107 = vmatprep.subr.mxu0 %v3866
        %4108 = vmatpush1.msra.mxu0 %v3865
        %4109 = vmatprep.subr.mxu0 %v3883
        %4110 = vmatpush1.msra.mxu0 %v3882
        %4111 = vmatprep.subr.mxu0 %v3900
        %4112 = vmatpush1.msra.mxu0 %v3899
        %4113 = vmatprep.subr.mxu0 %v3917
        %4114 = vmatpush1.msra.mxu0 %v3916
        %4115 = vmatprep.subr.mxu0 %v3934
        %4116 = vmatpush1.msra.mxu0 %v3933
        %4117 = vmatprep.subr.mxu0 %v3951
        %4118 = vmatpush1.msra.mxu0 %v3950
        %4119 = vmatprep.subr.mxu0 %v3968
        %4120 = vmatpush1.msra.mxu0 %v3967
        %4121 = vmatprep.subr.mxu0 %v3985
        %4122 = vmatpush1.msra.mxu0 %v3984
        %4123 = vmatprep.subr.mxu0 %v4002
        %4124 = vmatpush1.msra.mxu0 %v4001
        %4125 = vmatprep.subr.mxu0 %v4019
        %4126 = vmatpush1.msra.mxu0 %v4018
        %4127 = vmatprep.subr.mxu0 %v4056
        %4128 = vmatpush1.msra.mxu0 %v4053
        %4129 = vmatprep.subr.mxu0 0.0
        %4130 = vmatpush1.msra.mxu0 0.0
        %4131 = vmatprep.subr.mxu0 0.0
        %4132 = vmatpush1.msra.mxu0 0.0
        %4133 = vmatprep.subr.mxu0 0.0
        %4134 = vmatpush1.msra.mxu0 0.0
        %4135 = vmatprep.subr.mxu0 0.0
        %4136 = vmatpush1.msra.mxu0 0.0
        %4137 = vmatprep.subr.mxu0 0.0
        %4138 = vmatpush1.msra.mxu0 0.0
        %4139 = vmatprep.subr.mxu0 0.0
        %4140 = vmatpush1.msra.mxu0 0.0
        %4141 = vmatprep.subr.mxu0 0.0
        %4142 = vmatpush1.msra.mxu0 0.0
        %4143 = vmatprep.subr.mxu0 0.0
        %4144 = vmatpush1.msra.mxu0 0.0
        %4145 = vmatprep.subr.mxu0 0.0
        %4146 = vmatpush1.msra.mxu0 0.0
        %4147 = vmatprep.subr.mxu0 0.0
        %4148 = vmatpush1.msra.mxu0 0.0
        %4149 = vmatprep.subr.mxu0 0.0
        %4150 = vmatpush1.msra.mxu0 0.0
        %4151 = vmatprep.subr.mxu0 0.0
        %4152 = vmatpush1.msra.mxu0 0.0
        %4153 = vmatprep.subr.mxu0 0.0
        %4154 = vmatpush1.msra.mxu0 0.0
        %4155 = vmatprep.subr.mxu0 0.0
        %4156 = vmatpush1.msra.mxu0 0.0
        %4157 = vmatprep.subr.mxu0 0.0
        %4158 = vmatpush1.msra.mxu0 0.0
        %4159 = vmatprep.subr.mxu0 0.0
        %4160 = vmatpush1.msra.mxu0 0.0
        %4161 = vmatprep.subr.mxu0 0.0
        %4162 = vmatpush1.msra.mxu0 0.0
        %4163 = vmatprep.subr.mxu0 0.0
        %4164 = vmatpush1.msra.mxu0 0.0
        %4165 = vmatprep.subr.mxu0 0.0
        %4166 = vmatpush1.msra.mxu0 0.0
        %4167 = vmatprep.mubr.f32.mxu0 0.0
        %4168 = vmatmul.mubr.f32.gmra.mrb[0].mxu0 %v2210
        %v4169 = vpop.f32.mrb[0].mxu0
        %v4170 = vadd.f32 0.0, %v4169
        %v4171 = vpop.f32.mrb[0].mxu0
        %v4172 = vadd.f32 0.0, %v4171
        %4173 = vdwg.mxu0
        %4174 = vmatprep.subr.mxu0 %v3834
        %4175 = vmatpush1.msra.mxu0 %v3833
        %4176 = vmatprep.subr.mxu0 %v3851
        %4177 = vmatpush1.msra.mxu0 %v3850
        %4178 = vmatprep.subr.mxu0 %v3868
        %4179 = vmatpush1.msra.mxu0 %v3867
        %4180 = vmatprep.subr.mxu0 %v3885
        %4181 = vmatpush1.msra.mxu0 %v3884
        %4182 = vmatprep.subr.mxu0 %v3902
        %4183 = vmatpush1.msra.mxu0 %v3901
        %4184 = vmatprep.subr.mxu0 %v3919
        %4185 = vmatpush1.msra.mxu0 %v3918
        %4186 = vmatprep.subr.mxu0 %v3936
        %4187 = vmatpush1.msra.mxu0 %v3935
        %4188 = vmatprep.subr.mxu0 %v3953
        %4189 = vmatpush1.msra.mxu0 %v3952
        %4190 = vmatprep.subr.mxu0 %v3970
        %4191 = vmatpush1.msra.mxu0 %v3969
        %4192 = vmatprep.subr.mxu0 %v3987
        %4193 = vmatpush1.msra.mxu0 %v3986
        %4194 = vmatprep.subr.mxu0 %v4004
        %4195 = vmatpush1.msra.mxu0 %v4003
        %4196 = vmatprep.subr.mxu0 %v4021
        %4197 = vmatpush1.msra.mxu0 %v4020
        %4198 = vmatprep.subr.mxu0 %v4062
        %4199 = vmatpush1.msra.mxu0 %v4059
        %4200 = vmatprep.subr.mxu0 0.0
        %4201 = vmatpush1.msra.mxu0 0.0
        %4202 = vmatprep.subr.mxu0 0.0
        %4203 = vmatpush1.msra.mxu0 0.0
        %4204 = vmatprep.subr.mxu0 0.0
        %4205 = vmatpush1.msra.mxu0 0.0
        %4206 = vmatprep.subr.mxu0 0.0
        %4207 = vmatpush1.msra.mxu0 0.0
        %4208 = vmatprep.subr.mxu0 0.0
        %4209 = vmatpush1.msra.mxu0 0.0
        %4210 = vmatprep.subr.mxu0 0.0
        %4211 = vmatpush1.msra.mxu0 0.0
        %4212 = vmatprep.subr.mxu0 0.0
        %4213 = vmatpush1.msra.mxu0 0.0
        %4214 = vmatprep.subr.mxu0 0.0
        %4215 = vmatpush1.msra.mxu0 0.0
        %4216 = vmatprep.subr.mxu0 0.0
        %4217 = vmatpush1.msra.mxu0 0.0
        %4218 = vmatprep.subr.mxu0 0.0
        %4219 = vmatpush1.msra.mxu0 0.0
        %4220 = vmatprep.subr.mxu0 0.0
        %4221 = vmatpush1.msra.mxu0 0.0
        %4222 = vmatprep.subr.mxu0 0.0
        %4223 = vmatpush1.msra.mxu0 0.0
        %4224 = vmatprep.subr.mxu0 0.0
        %4225 = vmatpush1.msra.mxu0 0.0
        %4226 = vmatprep.subr.mxu0 0.0
        %4227 = vmatpush1.msra.mxu0 0.0
        %4228 = vmatprep.subr.mxu0 0.0
        %4229 = vmatpush1.msra.mxu0 0.0
        %4230 = vmatprep.subr.mxu0 0.0
        %4231 = vmatpush1.msra.mxu0 0.0
        %4232 = vmatprep.subr.mxu0 0.0
        %4233 = vmatpush1.msra.mxu0 0.0
        %4234 = vmatprep.subr.mxu0 0.0
        %4235 = vmatpush1.msra.mxu0 0.0
        %4236 = vmatprep.subr.mxu0 0.0
        %4237 = vmatpush1.msra.mxu0 0.0
        %4238 = vmatprep.mubr.f32.mxu0 0.0
        %4239 = vmatmul.mubr.f32.gmra.mrb[0].mxu0 %v2210
        %v4240 = vpop.f32.mrb[0].mxu0
        %v4241 = vadd.f32 0.0, %v4240
        %v4242 = vpop.f32.mrb[0].mxu0
        %v4243 = vadd.f32 0.0, %v4242
        %4244 = vdwg.mxu0
        %4245 = vmatprep.subr.mxu0 %v3836
        %4246 = vmatpush1.msra.mxu0 %v3835
        %4247 = vmatprep.subr.mxu0 %v3853
        %4248 = vmatpush1.msra.mxu0 %v3852
        %4249 = vmatprep.subr.mxu0 %v3870
        %4250 = vmatpush1.msra.mxu0 %v3869
        %4251 = vmatprep.subr.mxu0 %v3887
        %4252 = vmatpush1.msra.mxu0 %v3886
        %4253 = vmatprep.subr.mxu0 %v3904
        %4254 = vmatpush1.msra.mxu0 %v3903
        %4255 = vmatprep.subr.mxu0 %v3921
        %4256 = vmatpush1.msra.mxu0 %v3920
        %4257 = vmatprep.subr.mxu0 %v3938
        %4258 = vmatpush1.msra.mxu0 %v3937
        %4259 = vmatprep.subr.mxu0 %v3955
        %4260 = vmatpush1.msra.mxu0 %v3954
        %4261 = vmatprep.subr.mxu0 %v3972
        %4262 = vmatpush1.msra.mxu0 %v3971
        %4263 = vmatprep.subr.mxu0 %v3989
        %4264 = vmatpush1.msra.mxu0 %v3988
        %4265 = vmatprep.subr.mxu0 %v4006
        %4266 = vmatpush1.msra.mxu0 %v4005
        %4267 = vmatprep.subr.mxu0 %v4023
        %4268 = vmatpush1.msra.mxu0 %v4022
        %4269 = vmatprep.subr.mxu0 %v4068
        %4270 = vmatpush1.msra.mxu0 %v4065
        %4271 = vmatprep.subr.mxu0 0.0
        %4272 = vmatpush1.msra.mxu0 0.0
        %4273 = vmatprep.subr.mxu0 0.0
        %4274 = vmatpush1.msra.mxu0 0.0
        %4275 = vmatprep.subr.mxu0 0.0
        %4276 = vmatpush1.msra.mxu0 0.0
        %4277 = vmatprep.subr.mxu0 0.0
        %4278 = vmatpush1.msra.mxu0 0.0
        %4279 = vmatprep.subr.mxu0 0.0
        %4280 = vmatpush1.msra.mxu0 0.0
        %4281 = vmatprep.subr.mxu0 0.0
        %4282 = vmatpush1.msra.mxu0 0.0
        %4283 = vmatprep.subr.mxu0 0.0
        %4284 = vmatpush1.msra.mxu0 0.0
        %4285 = vmatprep.subr.mxu0 0.0
        %4286 = vmatpush1.msra.mxu0 0.0
        %4287 = vmatprep.subr.mxu0 0.0
        %4288 = vmatpush1.msra.mxu0 0.0
        %4289 = vmatprep.subr.mxu0 0.0
        %4290 = vmatpush1.msra.mxu0 0.0
        %4291 = vmatprep.subr.mxu0 0.0
        %4292 = vmatpush1.msra.mxu0 0.0
        %4293 = vmatprep.subr.mxu0 0.0
        %4294 = vmatpush1.msra.mxu0 0.0
        %4295 = vmatprep.subr.mxu0 0.0
        %4296 = vmatpush1.msra.mxu0 0.0
        %4297 = vmatprep.subr.mxu0 0.0
        %4298 = vmatpush1.msra.mxu0 0.0
        %4299 = vmatprep.subr.mxu0 0.0
        %4300 = vmatpush1.msra.mxu0 0.0
        %4301 = vmatprep.subr.mxu0 0.0
        %4302 = vmatpush1.msra.mxu0 0.0
        %4303 = vmatprep.subr.mxu0 0.0
        %4304 = vmatpush1.msra.mxu0 0.0
        %4305 = vmatprep.subr.mxu0 0.0
        %4306 = vmatpush1.msra.mxu0 0.0
        %4307 = vmatprep.subr.mxu0 0.0
        %4308 = vmatpush1.msra.mxu0 0.0
        %4309 = vmatprep.mubr.f32.mxu0 0.0
        %4310 = vmatmul.mubr.f32.gmra.mrb[0].mxu0 %v2210
        %v4311 = vpop.f32.mrb[0].mxu0
        %v4312 = vadd.f32 0.0, %v4311
        %v4313 = vpop.f32.mrb[0].mxu0
        %v4314 = vadd.f32 0.0, %v4313
        %4315 = vdwg.mxu0
        %4316 = vmatprep.subr.mxu0 %v3838
        %4317 = vmatpush1.msra.mxu0 %v3837
        %4318 = vmatprep.subr.mxu0 %v3855
        %4319 = vmatpush1.msra.mxu0 %v3854
        %4320 = vmatprep.subr.mxu0 %v3872
        %4321 = vmatpush1.msra.mxu0 %v3871
        %4322 = vmatprep.subr.mxu0 %v3889
        %4323 = vmatpush1.msra.mxu0 %v3888
        %4324 = vmatprep.subr.mxu0 %v3906
        %4325 = vmatpush1.msra.mxu0 %v3905
        %4326 = vmatprep.subr.mxu0 %v3923
        %4327 = vmatpush1.msra.mxu0 %v3922
        %4328 = vmatprep.subr.mxu0 %v3940
        %4329 = vmatpush1.msra.mxu0 %v3939
        %4330 = vmatprep.subr.mxu0 %v3957
        %4331 = vmatpush1.msra.mxu0 %v3956
        %4332 = vmatprep.subr.mxu0 %v3974
        %4333 = vmatpush1.msra.mxu0 %v3973
        %4334 = vmatprep.subr.mxu0 %v3991
        %4335 = vmatpush1.msra.mxu0 %v3990
        %4336 = vmatprep.subr.mxu0 %v4008
        %4337 = vmatpush1.msra.mxu0 %v4007
        %4338 = vmatprep.subr.mxu0 %v4025
        %4339 = vmatpush1.msra.mxu0 %v4024
        %4340 = vmatprep.subr.mxu0 %v4074
        %4341 = vmatpush1.msra.mxu0 %v4071
        %4342 = vmatprep.subr.mxu0 0.0
        %4343 = vmatpush1.msra.mxu0 0.0
        %4344 = vmatprep.subr.mxu0 0.0
        %4345 = vmatpush1.msra.mxu0 0.0
        %4346 = vmatprep.subr.mxu0 0.0
        %4347 = vmatpush1.msra.mxu0 0.0
        %4348 = vmatprep.subr.mxu0 0.0
        %4349 = vmatpush1.msra.mxu0 0.0
        %4350 = vmatprep.subr.mxu0 0.0
        %4351 = vmatpush1.msra.mxu0 0.0
        %4352 = vmatprep.subr.mxu0 0.0
        %4353 = vmatpush1.msra.mxu0 0.0
        %4354 = vmatprep.subr.mxu0 0.0
        %4355 = vmatpush1.msra.mxu0 0.0
        %4356 = vmatprep.subr.mxu0 0.0
        %4357 = vmatpush1.msra.mxu0 0.0
        %4358 = vmatprep.subr.mxu0 0.0
        %4359 = vmatpush1.msra.mxu0 0.0
        %4360 = vmatprep.subr.mxu0 0.0
        %4361 = vmatpush1.msra.mxu0 0.0
        %4362 = vmatprep.subr.mxu0 0.0
        %4363 = vmatpush1.msra.mxu0 0.0
        %4364 = vmatprep.subr.mxu0 0.0
        %4365 = vmatpush1.msra.mxu0 0.0
        %4366 = vmatprep.subr.mxu0 0.0
        %4367 = vmatpush1.msra.mxu0 0.0
        %4368 = vmatprep.subr.mxu0 0.0
        %4369 = vmatpush1.msra.mxu0 0.0
        %4370 = vmatprep.subr.mxu0 0.0
        %4371 = vmatpush1.msra.mxu0 0.0
        %4372 = vmatprep.subr.mxu0 0.0
        %4373 = vmatpush1.msra.mxu0 0.0
        %4374 = vmatprep.subr.mxu0 0.0
        %4375 = vmatpush1.msra.mxu0 0.0
        %4376 = vmatprep.subr.mxu0 0.0
        %4377 = vmatpush1.msra.mxu0 0.0
        %4378 = vmatprep.subr.mxu0 0.0
        %4379 = vmatpush1.msra.mxu0 0.0
        %4380 = vmatprep.mubr.f32.mxu0 0.0
        %4381 = vmatmul.mubr.f32.gmra.mrb[0].mxu0 %v2210
        %v4382 = vpop.f32.mrb[0].mxu0
        %v4383 = vadd.f32 0.0, %v4382
        %v4384 = vpop.f32.mrb[0].mxu0
        %v4385 = vadd.f32 0.0, %v4384
        %4386 = vdwg.mxu0
        %4387 = vmatprep.subr.mxu0 %v3840
        %4388 = vmatpush1.msra.mxu0 %v3839
        %4389 = vmatprep.subr.mxu0 %v3857
        %4390 = vmatpush1.msra.mxu0 %v3856
        %4391 = vmatprep.subr.mxu0 %v3874
        %4392 = vmatpush1.msra.mxu0 %v3873
        %4393 = vmatprep.subr.mxu0 %v3891
        %4394 = vmatpush1.msra.mxu0 %v3890
        %4395 = vmatprep.subr.mxu0 %v3908
        %4396 = vmatpush1.msra.mxu0 %v3907
        %4397 = vmatprep.subr.mxu0 %v3925
        %4398 = vmatpush1.msra.mxu0 %v3924
        %4399 = vmatprep.subr.mxu0 %v3942
        %4400 = vmatpush1.msra.mxu0 %v3941
        %4401 = vmatprep.subr.mxu0 %v3959
        %4402 = vmatpush1.msra.mxu0 %v3958
        %4403 = vmatprep.subr.mxu0 %v3976
        %4404 = vmatpush1.msra.mxu0 %v3975
        %4405 = vmatprep.subr.mxu0 %v3993
        %4406 = vmatpush1.msra.mxu0 %v3992
        %4407 = vmatprep.subr.mxu0 %v4010
        %4408 = vmatpush1.msra.mxu0 %v4009
        %4409 = vmatprep.subr.mxu0 %v4027
        %4410 = vmatpush1.msra.mxu0 %v4026
        %4411 = vmatprep.subr.mxu0 %v4080
        %4412 = vmatpush1.msra.mxu0 %v4077
        %4413 = vmatprep.subr.mxu0 0.0
        %4414 = vmatpush1.msra.mxu0 0.0
        %4415 = vmatprep.subr.mxu0 0.0
        %4416 = vmatpush1.msra.mxu0 0.0
        %4417 = vmatprep.subr.mxu0 0.0
        %4418 = vmatpush1.msra.mxu0 0.0
        %4419 = vmatprep.subr.mxu0 0.0
        %4420 = vmatpush1.msra.mxu0 0.0
        %4421 = vmatprep.subr.mxu0 0.0
        %4422 = vmatpush1.msra.mxu0 0.0
        %4423 = vmatprep.subr.mxu0 0.0
        %4424 = vmatpush1.msra.mxu0 0.0
        %4425 = vmatprep.subr.mxu0 0.0
        %4426 = vmatpush1.msra.mxu0 0.0
        %4427 = vmatprep.subr.mxu0 0.0
        %4428 = vmatpush1.msra.mxu0 0.0
        %4429 = vmatprep.subr.mxu0 0.0
        %4430 = vmatpush1.msra.mxu0 0.0
        %4431 = vmatprep.subr.mxu0 0.0
        %4432 = vmatpush1.msra.mxu0 0.0
        %4433 = vmatprep.subr.mxu0 0.0
        %4434 = vmatpush1.msra.mxu0 0.0
        %4435 = vmatprep.subr.mxu0 0.0
        %4436 = vmatpush1.msra.mxu0 0.0
        %4437 = vmatprep.subr.mxu0 0.0
        %4438 = vmatpush1.msra.mxu0 0.0
        %4439 = vmatprep.subr.mxu0 0.0
        %4440 = vmatpush1.msra.mxu0 0.0
        %4441 = vmatprep.subr.mxu0 0.0
        %4442 = vmatpush1.msra.mxu0 0.0
        %4443 = vmatprep.subr.mxu0 0.0
        %4444 = vmatpush1.msra.mxu0 0.0
        %4445 = vmatprep.subr.mxu0 0.0
        %4446 = vmatpush1.msra.mxu0 0.0
        %4447 = vmatprep.subr.mxu0 0.0
        %4448 = vmatpush1.msra.mxu0 0.0
        %4449 = vmatprep.subr.mxu0 0.0
        %4450 = vmatpush1.msra.mxu0 0.0
        %4451 = vmatprep.mubr.f32.mxu0 0.0
        %4452 = vmatmul.mubr.f32.gmra.mrb[0].mxu0 %v2210
        %v4453 = vpop.f32.mrb[0].mxu0
        %v4454 = vadd.f32 0.0, %v4453
        %v4455 = vpop.f32.mrb[0].mxu0
        %v4456 = vadd.f32 0.0, %v4455
        %4457 = vdwg.mxu0
        %4458 = vmatprep.subr.mxu0 %v3842
        %4459 = vmatpush1.msra.mxu0 %v3841
        %4460 = vmatprep.subr.mxu0 %v3859
        %4461 = vmatpush1.msra.mxu0 %v3858
        %4462 = vmatprep.subr.mxu0 %v3876
        %4463 = vmatpush1.msra.mxu0 %v3875
        %4464 = vmatprep.subr.mxu0 %v3893
        %4465 = vmatpush1.msra.mxu0 %v3892
        %4466 = vmatprep.subr.mxu0 %v3910
        %4467 = vmatpush1.msra.mxu0 %v3909
        %4468 = vmatprep.subr.mxu0 %v3927
        %4469 = vmatpush1.msra.mxu0 %v3926
        %4470 = vmatprep.subr.mxu0 %v3944
        %4471 = vmatpush1.msra.mxu0 %v3943
        %4472 = vmatprep.subr.mxu0 %v3961
        %4473 = vmatpush1.msra.mxu0 %v3960
        %4474 = vmatprep.subr.mxu0 %v3978
        %4475 = vmatpush1.msra.mxu0 %v3977
        %4476 = vmatprep.subr.mxu0 %v3995
        %4477 = vmatpush1.msra.mxu0 %v3994
        %4478 = vmatprep.subr.mxu0 %v4012
        %4479 = vmatpush1.msra.mxu0 %v4011
        %4480 = vmatprep.subr.mxu0 %v4029
        %4481 = vmatpush1.msra.mxu0 %v4028
        %4482 = vmatprep.subr.mxu0 %v4086
        %4483 = vmatpush1.msra.mxu0 %v4083
        %4484 = vmatprep.subr.mxu0 0.0
        %4485 = vmatpush1.msra.mxu0 0.0
        %4486 = vmatprep.subr.mxu0 0.0
        %4487 = vmatpush1.msra.mxu0 0.0
        %4488 = vmatprep.subr.mxu0 0.0
        %4489 = vmatpush1.msra.mxu0 0.0
        %4490 = vmatprep.subr.mxu0 0.0
        %4491 = vmatpush1.msra.mxu0 0.0
        %4492 = vmatprep.subr.mxu0 0.0
        %4493 = vmatpush1.msra.mxu0 0.0
        %4494 = vmatprep.subr.mxu0 0.0
        %4495 = vmatpush1.msra.mxu0 0.0
        %4496 = vmatprep.subr.mxu0 0.0
        %4497 = vmatpush1.msra.mxu0 0.0
        %4498 = vmatprep.subr.mxu0 0.0
        %4499 = vmatpush1.msra.mxu0 0.0
        %4500 = vmatprep.subr.mxu0 0.0
        %4501 = vmatpush1.msra.mxu0 0.0
        %4502 = vmatprep.subr.mxu0 0.0
        %4503 = vmatpush1.msra.mxu0 0.0
        %4504 = vmatprep.subr.mxu0 0.0
        %4505 = vmatpush1.msra.mxu0 0.0
        %4506 = vmatprep.subr.mxu0 0.0
        %4507 = vmatpush1.msra.mxu0 0.0
        %4508 = vmatprep.subr.mxu0 0.0
        %4509 = vmatpush1.msra.mxu0 0.0
        %4510 = vmatprep.subr.mxu0 0.0
        %4511 = vmatpush1.msra.mxu0 0.0
        %4512 = vmatprep.subr.mxu0 0.0
        %4513 = vmatpush1.msra.mxu0 0.0
        %4514 = vmatprep.subr.mxu0 0.0
        %4515 = vmatpush1.msra.mxu0 0.0
        %4516 = vmatprep.subr.mxu0 0.0
        %4517 = vmatpush1.msra.mxu0 0.0
        %4518 = vmatprep.subr.mxu0 0.0
        %4519 = vmatpush1.msra.mxu0 0.0
        %4520 = vmatprep.subr.mxu0 0.0
        %4521 = vmatpush1.msra.mxu0 0.0
        %4522 = vmatprep.mubr.f32.mxu0 0.0
        %4523 = vmatmul.mubr.f32.gmra.mrb[0].mxu0 %v2210
        %v4524 = vpop.f32.mrb[0].mxu0
        %v4525 = vadd.f32 0.0, %v4524
        %v4526 = vpop.f32.mrb[0].mxu0
        %v4527 = vadd.f32 0.0, %v4526
        %4528 = vdwg.mxu0
        %4529 = vmatprep.subr.mxu0 %v3844
        %4530 = vmatpush1.msra.mxu0 %v3843
        %4531 = vmatprep.subr.mxu0 %v3861
        %4532 = vmatpush1.msra.mxu0 %v3860
        %4533 = vmatprep.subr.mxu0 %v3878
        %4534 = vmatpush1.msra.mxu0 %v3877
        %4535 = vmatprep.subr.mxu0 %v3895
        %4536 = vmatpush1.msra.mxu0 %v3894
        %4537 = vmatprep.subr.mxu0 %v3912
        %4538 = vmatpush1.msra.mxu0 %v3911
        %4539 = vmatprep.subr.mxu0 %v3929
        %4540 = vmatpush1.msra.mxu0 %v3928
        %4541 = vmatprep.subr.mxu0 %v3946
        %4542 = vmatpush1.msra.mxu0 %v3945
        %4543 = vmatprep.subr.mxu0 %v3963
        %4544 = vmatpush1.msra.mxu0 %v3962
        %4545 = vmatprep.subr.mxu0 %v3980
        %4546 = vmatpush1.msra.mxu0 %v3979
        %4547 = vmatprep.subr.mxu0 %v3997
        %4548 = vmatpush1.msra.mxu0 %v3996
        %4549 = vmatprep.subr.mxu0 %v4014
        %4550 = vmatpush1.msra.mxu0 %v4013
        %4551 = vmatprep.subr.mxu0 %v4031
        %4552 = vmatpush1.msra.mxu0 %v4030
        %4553 = vmatprep.subr.mxu0 %v4092
        %4554 = vmatpush1.msra.mxu0 %v4089
        %4555 = vmatprep.subr.mxu0 0.0
        %4556 = vmatpush1.msra.mxu0 0.0
        %4557 = vmatprep.subr.mxu0 0.0
        %4558 = vmatpush1.msra.mxu0 0.0
        %4559 = vmatprep.subr.mxu0 0.0
        %4560 = vmatpush1.msra.mxu0 0.0
        %4561 = vmatprep.subr.mxu0 0.0
        %4562 = vmatpush1.msra.mxu0 0.0
        %4563 = vmatprep.subr.mxu0 0.0
        %4564 = vmatpush1.msra.mxu0 0.0
        %4565 = vmatprep.subr.mxu0 0.0
        %4566 = vmatpush1.msra.mxu0 0.0
        %4567 = vmatprep.subr.mxu0 0.0
        %4568 = vmatpush1.msra.mxu0 0.0
        %4569 = vmatprep.subr.mxu0 0.0
        %4570 = vmatpush1.msra.mxu0 0.0
        %4571 = vmatprep.subr.mxu0 0.0
        %4572 = vmatpush1.msra.mxu0 0.0
        %4573 = vmatprep.subr.mxu0 0.0
        %4574 = vmatpush1.msra.mxu0 0.0
        %4575 = vmatprep.subr.mxu0 0.0
        %4576 = vmatpush1.msra.mxu0 0.0
        %4577 = vmatprep.subr.mxu0 0.0
        %4578 = vmatpush1.msra.mxu0 0.0
        %4579 = vmatprep.subr.mxu0 0.0
        %4580 = vmatpush1.msra.mxu0 0.0
        %4581 = vmatprep.subr.mxu0 0.0
        %4582 = vmatpush1.msra.mxu0 0.0
        %4583 = vmatprep.subr.mxu0 0.0
        %4584 = vmatpush1.msra.mxu0 0.0
        %4585 = vmatprep.subr.mxu0 0.0
        %4586 = vmatpush1.msra.mxu0 0.0
        %4587 = vmatprep.subr.mxu0 0.0
        %4588 = vmatpush1.msra.mxu0 0.0
        %4589 = vmatprep.subr.mxu0 0.0
        %4590 = vmatpush1.msra.mxu0 0.0
        %4591 = vmatprep.subr.mxu0 0.0
        %4592 = vmatpush1.msra.mxu0 0.0
        %4593 = vmatprep.mubr.f32.mxu0 0.0
        %4594 = vmatmul.mubr.f32.gmra.mrb[0].mxu0 %v2210
        %v4595 = vpop.f32.mrb[0].mxu0
        %v4596 = vadd.f32 0.0, %v4595
        %v4597 = vpop.f32.mrb[0].mxu0
        %v4598 = vadd.f32 0.0, %v4597
        %4599 = vdwg.mxu0
        %4600 = vmatprep.subr.mxu0 %v3846
        %4601 = vmatpush1.msra.mxu0 %v3845
        %4602 = vmatprep.subr.mxu0 %v3863
        %4603 = vmatpush1.msra.mxu0 %v3862
        %4604 = vmatprep.subr.mxu0 %v3880
        %4605 = vmatpush1.msra.mxu0 %v3879
        %4606 = vmatprep.subr.mxu0 %v3897
        %4607 = vmatpush1.msra.mxu0 %v3896
        %4608 = vmatprep.subr.mxu0 %v3914
        %4609 = vmatpush1.msra.mxu0 %v3913
        %4610 = vmatprep.subr.mxu0 %v3931
        %4611 = vmatpush1.msra.mxu0 %v3930
        %4612 = vmatprep.subr.mxu0 %v3948
        %4613 = vmatpush1.msra.mxu0 %v3947
        %4614 = vmatprep.subr.mxu0 %v3965
        %4615 = vmatpush1.msra.mxu0 %v3964
        %4616 = vmatprep.subr.mxu0 %v3982
        %4617 = vmatpush1.msra.mxu0 %v3981
        %4618 = vmatprep.subr.mxu0 %v3999
        %4619 = vmatpush1.msra.mxu0 %v3998
        %4620 = vmatprep.subr.mxu0 %v4016
        %4621 = vmatpush1.msra.mxu0 %v4015
        %4622 = vmatprep.subr.mxu0 %v4033
        %4623 = vmatpush1.msra.mxu0 %v4032
        %4624 = vmatprep.subr.mxu0 %v4098
        %4625 = vmatpush1.msra.mxu0 %v4095
        %4626 = vmatprep.subr.mxu0 0.0
        %4627 = vmatpush1.msra.mxu0 0.0
        %4628 = vmatprep.subr.mxu0 0.0
        %4629 = vmatpush1.msra.mxu0 0.0
        %4630 = vmatprep.subr.mxu0 0.0
        %4631 = vmatpush1.msra.mxu0 0.0
        %4632 = vmatprep.subr.mxu0 0.0
        %4633 = vmatpush1.msra.mxu0 0.0
        %4634 = vmatprep.subr.mxu0 0.0
        %4635 = vmatpush1.msra.mxu0 0.0
        %4636 = vmatprep.subr.mxu0 0.0
        %4637 = vmatpush1.msra.mxu0 0.0
        %4638 = vmatprep.subr.mxu0 0.0
        %4639 = vmatpush1.msra.mxu0 0.0
        %4640 = vmatprep.subr.mxu0 0.0
        %4641 = vmatpush1.msra.mxu0 0.0
        %4642 = vmatprep.subr.mxu0 0.0
        %4643 = vmatpush1.msra.mxu0 0.0
        %4644 = vmatprep.subr.mxu0 0.0
        %4645 = vmatpush1.msra.mxu0 0.0
        %4646 = vmatprep.subr.mxu0 0.0
        %4647 = vmatpush1.msra.mxu0 0.0
        %4648 = vmatprep.subr.mxu0 0.0
        %4649 = vmatpush1.msra.mxu0 0.0
        %4650 = vmatprep.subr.mxu0 0.0
        %4651 = vmatpush1.msra.mxu0 0.0
        %4652 = vmatprep.subr.mxu0 0.0
        %4653 = vmatpush1.msra.mxu0 0.0
        %4654 = vmatprep.subr.mxu0 0.0
        %4655 = vmatpush1.msra.mxu0 0.0
        %4656 = vmatprep.subr.mxu0 0.0
        %4657 = vmatpush1.msra.mxu0 0.0
        %4658 = vmatprep.subr.mxu0 0.0
        %4659 = vmatpush1.msra.mxu0 0.0
        %4660 = vmatprep.subr.mxu0 0.0
        %4661 = vmatpush1.msra.mxu0 0.0
        %4662 = vmatprep.subr.mxu0 0.0
        %4663 = vmatpush1.msra.mxu0 0.0
        %4664 = vmatprep.mubr.f32.mxu0 0.0
        %4665 = vmatmul.mubr.f32.gmra.mrb[0].mxu0 %v2210
        %v4666 = vpop.f32.mrb[0].mxu0
        %v4667 = vadd.f32 0.0, %v4666
        %v4668 = vpop.f32.mrb[0].mxu0
        %v4669 = vadd.f32 0.0, %v4668
        %4670 = vdwg.mxu0
        %4671 = vmatprep.subr.mxu0 0.0
        %4672 = vmatpush1.msra.mxu0 %v3847
        %4673 = vmatprep.subr.mxu0 0.0
        %4674 = vmatpush1.msra.mxu0 %v3864
        %4675 = vmatprep.subr.mxu0 0.0
        %4676 = vmatpush1.msra.mxu0 %v3881
        %4677 = vmatprep.subr.mxu0 0.0
        %4678 = vmatpush1.msra.mxu0 %v3898
        %4679 = vmatprep.subr.mxu0 0.0
        %4680 = vmatpush1.msra.mxu0 %v3915
        %4681 = vmatprep.subr.mxu0 0.0
        %4682 = vmatpush1.msra.mxu0 %v3932
        %4683 = vmatprep.subr.mxu0 0.0
        %4684 = vmatpush1.msra.mxu0 %v3949
        %4685 = vmatprep.subr.mxu0 0.0
        %4686 = vmatpush1.msra.mxu0 %v3966
        %4687 = vmatprep.subr.mxu0 0.0
        %4688 = vmatpush1.msra.mxu0 %v3983
        %4689 = vmatprep.subr.mxu0 0.0
        %4690 = vmatpush1.msra.mxu0 %v4000
        %4691 = vmatprep.subr.mxu0 0.0
        %4692 = vmatpush1.msra.mxu0 %v4017
        %4693 = vmatprep.subr.mxu0 0.0
        %4694 = vmatpush1.msra.mxu0 %v4034
        %4695 = vmatprep.subr.mxu0 0.0
        %4696 = vmatpush1.msra.mxu0 %v4101
        %4697 = vmatprep.subr.mxu0 0.0
        %4698 = vmatpush1.msra.mxu0 0.0
        %4699 = vmatprep.subr.mxu0 0.0
        %4700 = vmatpush1.msra.mxu0 0.0
        %4701 = vmatprep.subr.mxu0 0.0
        %4702 = vmatpush1.msra.mxu0 0.0
        %4703 = vmatprep.subr.mxu0 0.0
        %4704 = vmatpush1.msra.mxu0 0.0
        %4705 = vmatprep.subr.mxu0 0.0
        %4706 = vmatpush1.msra.mxu0 0.0
        %4707 = vmatprep.subr.mxu0 0.0
        %4708 = vmatpush1.msra.mxu0 0.0
        %4709 = vmatprep.subr.mxu0 0.0
        %4710 = vmatpush1.msra.mxu0 0.0
        %4711 = vmatprep.subr.mxu0 0.0
        %4712 = vmatpush1.msra.mxu0 0.0
        %4713 = vmatprep.subr.mxu0 0.0
        %4714 = vmatpush1.msra.mxu0 0.0
        %4715 = vmatprep.subr.mxu0 0.0
        %4716 = vmatpush1.msra.mxu0 0.0
        %4717 = vmatprep.subr.mxu0 0.0
        %4718 = vmatpush1.msra.mxu0 0.0
        %4719 = vmatprep.subr.mxu0 0.0
        %4720 = vmatpush1.msra.mxu0 0.0
        %4721 = vmatprep.subr.mxu0 0.0
        %4722 = vmatpush1.msra.mxu0 0.0
        %4723 = vmatprep.subr.mxu0 0.0
        %4724 = vmatpush1.msra.mxu0 0.0
        %4725 = vmatprep.subr.mxu0 0.0
        %4726 = vmatpush1.msra.mxu0 0.0
        %4727 = vmatprep.subr.mxu0 0.0
        %4728 = vmatpush1.msra.mxu0 0.0
        %4729 = vmatprep.subr.mxu0 0.0
        %4730 = vmatpush1.msra.mxu0 0.0
        %4731 = vmatprep.subr.mxu0 0.0
        %4732 = vmatpush1.msra.mxu0 0.0
        %4733 = vmatprep.subr.mxu0 0.0
        %4734 = vmatpush1.msra.mxu0 0.0
        %4735 = vmatprep.mubr.f32.mxu0 0.0
        %4736 = vmatmul.mubr.f32.gmra.mrb[0].mxu0 %v2210
        %v4737 = vpop.f32.mrb[0].mxu0
        %v4738 = vadd.f32 0.0, %v4737
        %v4739 = vpop.f32.mrb[0].mxu0
        %4740 = vdwg.mxu0
        %v4741 = vmax.f32 %v3813, %v4170
        %v4742 = vmax.f32 %v3814, %v4172
        %v4743 = vmax.f32 %v3815, %v4241
        %v4744 = vmax.f32 %v3816, %v4243
        %v4745 = vmax.f32 %v3817, %v4312
        %v4746 = vmax.f32 %v3818, %v4314
        %v4747 = vmax.f32 %v3819, %v4383
        %v4748 = vmax.f32 %v3820, %v4385
        %v4749 = vmax.f32 %v3821, %v4454
        %v4750 = vmax.f32 %v3822, %v4456
        %v4751 = vmax.f32 %v3823, %v4525
        %v4752 = vmax.f32 %v3824, %v4527
        %v4753 = vmax.f32 %v3825, %v4596
        %v4754 = vmax.f32 %v3826, %v4598
        %v4755 = vmax.f32 %v3827, %v4667
        %v4756 = vmax.f32 %v3828, %v4669
        %v4757 = vmax.f32 %v3829, %v4738
        %s4758 = scalar_lea.vmem %s1956, 5304 [#allocation2]
        %v4759 = vld [vmem:[%s4758] sm:$0xff]
        %v4760 = vld [vmem:[%s4758 + $0x8] sm:$0xff]
        %v4761 = vld [vmem:[%s4758 + $0x10] sm:$0xff]
        %v4762 = vld [vmem:[%s4758 + $0x18] sm:$0xff]
        %v4763 = vld [vmem:[%s4758 + $0x20] sm:$0xff]
        %v4764 = vld [vmem:[%s4758 + $0x28] sm:$0xff]
        %v4765 = vld [vmem:[%s4758 + $0x30] sm:$0xff]
        %v4766 = vld [vmem:[%s4758 + $0x38] sm:$0xff]
        %v4767 = vld [vmem:[%s4758 + $0x40] sm:$0xff]
        %v4768 = vld [vmem:[%s4758 + $0x48] sm:$0xff]
        %v4769 = vld [vmem:[%s4758 + $0x50] sm:$0xff]
        %v4770 = vld [vmem:[%s4758 + $0x58] sm:$0xff]
        %v4771 = vld [vmem:[%s4758 + $0x60] sm:$0xff]
        %v4772 = vld [vmem:[%s4758 + $0x68] sm:$0xff]
        %v4773 = vld [vmem:[%s4758 + $0x70] sm:$0xff]
        %v4774 = vld [vmem:[%s4758 + $0x78] sm:$0xff]
        %v4775 = vld [vmem:[%s4758 + $0x80] sm:$0xff]
        %v4776 = vld [vmem:[%s4758 + $0x88] sm:$0xff]
        %v4777 = vld [vmem:[%s4758 + $0x90] sm:$0xff]
        %v4778 = vld [vmem:[%s4758 + $0x98] sm:$0xff]
        %v4779 = vld [vmem:[%s4758 + $0xa0] sm:$0xff]
        %v4780 = vld [vmem:[%s4758 + $0xa8] sm:$0xff]
        %v4781 = vld [vmem:[%s4758 + $0xb0] sm:$0xff]
        %v4782 = vld [vmem:[%s4758 + $0xb8] sm:$0xff]
        %v4783 = vld [vmem:[%s4758 + $0xc0] sm:$0xff]
        %v4784 = vld [vmem:[%s4758 + $0xc8] sm:$0xff]
        %v4785 = vld [vmem:[%s4758 + $0xd0] sm:$0xff]
        %v4786 = vld [vmem:[%s4758 + $0xd8] sm:$0xff]
        %v4787 = vld [vmem:[%s4758 + $0xe0] sm:$0xff]
        %v4788 = vld [vmem:[%s4758 + $0xe8] sm:$0xff]
        %v4789 = vld [vmem:[%s4758 + $0xf0] sm:$0xff]
        %v4790 = vld [vmem:[%s4758 + $0xf8] sm:$0xff]
        %v4791 = vld [vmem:[%s4758 + $0x100] sm:$0xff]
        %v4792 = vld [vmem:[%s4758 + $0x108] sm:$0xff]
        %v4793 = vld [vmem:[%s4758 + $0x110] sm:$0xff]
        %v4794 = vld [vmem:[%s4758 + $0x118] sm:$0xff]
        %v4795 = vld [vmem:[%s4758 + $0x120] sm:$0xff]
        %v4796 = vld [vmem:[%s4758 + $0x128] sm:$0xff]
        %v4797 = vld [vmem:[%s4758 + $0x130] sm:$0xff]
        %v4798 = vld [vmem:[%s4758 + $0x138] sm:$0xff]
        %v4799 = vld [vmem:[%s4758 + $0x140] sm:$0xff]
        %v4800 = vld [vmem:[%s4758 + $0x148] sm:$0xff]
        %v4801 = vld [vmem:[%s4758 + $0x150] sm:$0xff]
        %v4802 = vld [vmem:[%s4758 + $0x158] sm:$0xff]
        %v4803 = vld [vmem:[%s4758 + $0x160] sm:$0xff]
        %v4804 = vld [vmem:[%s4758 + $0x168] sm:$0xff]
        %v4805 = vld [vmem:[%s4758 + $0x170] sm:$0xff]
        %v4806 = vld [vmem:[%s4758 + $0x178] sm:$0xff]
        %v4807 = vld [vmem:[%s4758 + $0x180] sm:$0xff]
        %v4808 = vld [vmem:[%s4758 + $0x188] sm:$0xff]
        %v4809 = vld [vmem:[%s4758 + $0x190] sm:$0xff]
        %v4810 = vld [vmem:[%s4758 + $0x198] sm:$0xff]
        %v4811 = vld [vmem:[%s4758 + $0x1a0] sm:$0xff]
        %v4812 = vld [vmem:[%s4758 + $0x1a8] sm:$0xff]
        %v4813 = vld [vmem:[%s4758 + $0x1b0] sm:$0xff]
        %v4814 = vld [vmem:[%s4758 + $0x1b8] sm:$0xff]
        %v4815 = vld [vmem:[%s4758 + $0x1c0] sm:$0xff]
        %v4816 = vld [vmem:[%s4758 + $0x1c8] sm:$0xff]
        %v4817 = vld [vmem:[%s4758 + $0x1d0] sm:$0xff]
        %v4818 = vld [vmem:[%s4758 + $0x1d8] sm:$0xff]
        %v4819 = vld [vmem:[%s4758 + $0x1e0] sm:$0xff]
        %v4820 = vld [vmem:[%s4758 + $0x1e8] sm:$0xff]
        %v4821 = vld [vmem:[%s4758 + $0x1f0] sm:$0xff]
        %v4822 = vld [vmem:[%s4758 + $0x1f8] sm:$0xff]
        %v4823 = vld [vmem:[%s4758 + $0x200] sm:$0xff]
        %v4824 = vld [vmem:[%s4758 + $0x208] sm:$0xff]
        %v4825 = vld [vmem:[%s4758 + $0x210] sm:$0xff]
        %v4826 = vld [vmem:[%s4758 + $0x218] sm:$0xff]
        %v4827 = vld [vmem:[%s4758 + $0x220] sm:$0xff]
        %v4828 = vld [vmem:[%s4758 + $0x228] sm:$0xff]
        %v4829 = vld [vmem:[%s4758 + $0x230] sm:$0xff]
        %v4830 = vld [vmem:[%s4758 + $0x238] sm:$0xff]
        %v4831 = vld [vmem:[%s4758 + $0x240] sm:$0xff]
        %v4832 = vld [vmem:[%s4758 + $0x248] sm:$0xff]
        %v4833 = vld [vmem:[%s4758 + $0x250] sm:$0xff]
        %v4834 = vld [vmem:[%s4758 + $0x258] sm:$0xff]
        %v4835 = vld [vmem:[%s4758 + $0x260] sm:$0xff]
        %v4836 = vld [vmem:[%s4758 + $0x268] sm:$0xff]
        %v4837 = vld [vmem:[%s4758 + $0x270] sm:$0xff]
        %v4838 = vld [vmem:[%s4758 + $0x278] sm:$0xff]
        %v4839 = vld [vmem:[%s4758 + $0x280] sm:$0xff]
        %v4840 = vld [vmem:[%s4758 + $0x288] sm:$0xff]
        %v4841 = vld [vmem:[%s4758 + $0x290] sm:$0xff]
        %v4842 = vld [vmem:[%s4758 + $0x298] sm:$0xff]
        %v4843 = vld [vmem:[%s4758 + $0x2a0] sm:$0xff]
        %v4844 = vld [vmem:[%s4758 + $0x2a8] sm:$0xff]
        %v4845 = vld [vmem:[%s4758 + $0x2b0] sm:$0xff]
        %v4846 = vld [vmem:[%s4758 + $0x2b8] sm:$0xff]
        %v4847 = vld [vmem:[%s4758 + $0x2c0] sm:$0xff]
        %v4848 = vld [vmem:[%s4758 + $0x2c8] sm:$0xff]
        %v4849 = vld [vmem:[%s4758 + $0x2d0] sm:$0xff]
        %v4850 = vld [vmem:[%s4758 + $0x2d8] sm:$0xff]
        %v4851 = vld [vmem:[%s4758 + $0x2e0] sm:$0xff]
        %v4852 = vld [vmem:[%s4758 + $0x2e8] sm:$0xff]
        %v4853 = vld [vmem:[%s4758 + $0x2f0] sm:$0xff]
        %v4854 = vld [vmem:[%s4758 + $0x2f8] sm:$0xff]
        %v4855 = vld [vmem:[%s4758 + $0x300] sm:$0xff]
        %v4856 = vld [vmem:[%s4758 + $0x308] sm:$0xff]
        %v4857 = vld [vmem:[%s4758 + $0x310] sm:$0xff]
        %v4858 = vld [vmem:[%s4758 + $0x318] sm:$0xff]
        %v4859 = vld [vmem:[%s4758 + $0x320] sm:$0xff]
        %v4860 = vld [vmem:[%s4758 + $0x328] sm:$0xff]
        %v4861 = vld [vmem:[%s4758 + $0x330] sm:$0xff]
        %v4862 = vld [vmem:[%s4758 + $0x338] sm:$0xff]
        %v4863 = vld [vmem:[%s4758 + $0x340] sm:$0xff]
        %v4864 = vld [vmem:[%s4758 + $0x348] sm:$0xff]
        %v4865 = vld [vmem:[%s4758 + $0x350] sm:$0xff]
        %v4866 = vld [vmem:[%s4758 + $0x358] sm:$0xff]
        %v4867 = vld [vmem:[%s4758 + $0x360] sm:$0xff]
        %v4868 = vld [vmem:[%s4758 + $0x368] sm:$0xff]
        %v4869 = vld [vmem:[%s4758 + $0x370] sm:$0xff]
        %v4870 = vld [vmem:[%s4758 + $0x378] sm:$0xff]
        %v4871 = vld [vmem:[%s4758 + $0x380] sm:$0xff]
        %v4872 = vld [vmem:[%s4758 + $0x388] sm:$0xff]
        %v4873 = vld [vmem:[%s4758 + $0x390] sm:$0xff]
        %v4874 = vld [vmem:[%s4758 + $0x398] sm:$0xff]
        %v4875 = vld [vmem:[%s4758 + $0x3a0] sm:$0xff]
        %v4876 = vld [vmem:[%s4758 + $0x3a8] sm:$0xff]
        %v4877 = vld [vmem:[%s4758 + $0x3b0] sm:$0xff]
        %v4878 = vld [vmem:[%s4758 + $0x3b8] sm:$0xff]
        %v4879 = vld [vmem:[%s4758 + $0x3c0] sm:$0xff]
        %v4880 = vld [vmem:[%s4758 + $0x3c8] sm:$0xff]
        %v4881 = vld [vmem:[%s4758 + $0x3d0] sm:$0xff]
        %v4882 = vld [vmem:[%s4758 + $0x3d8] sm:$0xff]
        %v4883 = vld [vmem:[%s4758 + $0x3e0] sm:$0xff]
        %v4884 = vld [vmem:[%s4758 + $0x3e8] sm:$0xff]
        %v4885 = vld [vmem:[%s4758 + $0x3f0] sm:$0xff]
        %v4886 = vld [vmem:[%s4758 + $0x3f8] sm:$0xff]
        %v4887 = vld [vmem:[%s4758 + $0x400] sm:$0xff]
        %v4888 = vld [vmem:[%s4758 + $0x408] sm:$0xff]
        %v4889 = vld [vmem:[%s4758 + $0x410] sm:$0xff]
        %v4890 = vld [vmem:[%s4758 + $0x418] sm:$0xff]
        %v4891 = vld [vmem:[%s4758 + $0x420] sm:$0xff]
        %v4892 = vld [vmem:[%s4758 + $0x428] sm:$0xff]
        %v4893 = vld [vmem:[%s4758 + $0x430] sm:$0xff]
        %v4894 = vld [vmem:[%s4758 + $0x438] sm:$0xff]
        %v4895 = vld [vmem:[%s4758 + $0x440] sm:$0xff]
        %v4896 = vld [vmem:[%s4758 + $0x448] sm:$0xff]
        %v4897 = vld [vmem:[%s4758 + $0x450] sm:$0xff]
        %v4898 = vld [vmem:[%s4758 + $0x458] sm:$0xff]
        %v4899 = vld [vmem:[%s4758 + $0x460] sm:$0xff]
        %v4900 = vld [vmem:[%s4758 + $0x468] sm:$0xff]
        %v4901 = vld [vmem:[%s4758 + $0x470] sm:$0xff]
        %v4902 = vld [vmem:[%s4758 + $0x478] sm:$0xff]
        %v4903 = vld [vmem:[%s4758 + $0x480] sm:$0xff]
        %v4904 = vld [vmem:[%s4758 + $0x488] sm:$0xff]
        %v4905 = vld [vmem:[%s4758 + $0x490] sm:$0xff]
        %v4906 = vld [vmem:[%s4758 + $0x498] sm:$0xff]
        %v4907 = vld [vmem:[%s4758 + $0x4a0] sm:$0xff]
        %v4908 = vld [vmem:[%s4758 + $0x4a8] sm:$0xff]
        %v4909 = vld [vmem:[%s4758 + $0x4b0] sm:$0xff]
        %v4910 = vld [vmem:[%s4758 + $0x4b8] sm:$0xff]
        %v4911 = vld [vmem:[%s4758 + $0x4c0] sm:$0xff]
        %v4912 = vld [vmem:[%s4758 + $0x4c8] sm:$0xff]
        %v4913 = vld [vmem:[%s4758 + $0x4d0] sm:$0xff]
        %v4914 = vld [vmem:[%s4758 + $0x4d8] sm:$0xff]
        %v4915 = vld [vmem:[%s4758 + $0x4e0] sm:$0xff]
        %v4916 = vld [vmem:[%s4758 + $0x4e8] sm:$0xff]
        %v4917 = vld [vmem:[%s4758 + $0x4f0] sm:$0xff]
        %v4918 = vld [vmem:[%s4758 + $0x4f8] sm:$0xff]
        %v4919 = vld [vmem:[%s4758 + $0x500] sm:$0xff]
        %v4920 = vld [vmem:[%s4758 + $0x508] sm:$0xff]
        %v4921 = vld [vmem:[%s4758 + $0x510] sm:$0xff]
        %v4922 = vld [vmem:[%s4758 + $0x518] sm:$0xff]
        %v4923 = vld [vmem:[%s4758 + $0x520] sm:$0xff]
        %v4924 = vld [vmem:[%s4758 + $0x528] sm:$0xff]
        %v4925 = vld [vmem:[%s4758 + $0x530] sm:$0xff]
        %v4926 = vld [vmem:[%s4758 + $0x538] sm:$0xff]
        %v4927 = vld [vmem:[%s4758 + $0x540] sm:$0xff]
        %v4928 = vld [vmem:[%s4758 + $0x548] sm:$0xff]
        %v4929 = vld [vmem:[%s4758 + $0x550] sm:$0xff]
        %v4930 = vld [vmem:[%s4758 + $0x558] sm:$0xff]
        %v4931 = vld [vmem:[%s4758 + $0x560] sm:$0xff]
        %v4932 = vld [vmem:[%s4758 + $0x568] sm:$0xff]
        %v4933 = vld [vmem:[%s4758 + $0x570] sm:$0xff]
        %v4934 = vld [vmem:[%s4758 + $0x578] sm:$0xff]
        %v4935 = vld [vmem:[%s4758 + $0x580] sm:$0xff]
        %v4936 = vld [vmem:[%s4758 + $0x588] sm:$0xff]
        %v4937 = vld [vmem:[%s4758 + $0x590] sm:$0xff]
        %v4938 = vld [vmem:[%s4758 + $0x598] sm:$0xff]
        %v4939 = vld [vmem:[%s4758 + $0x5a0] sm:$0xff]
        %v4940 = vld [vmem:[%s4758 + $0x5a8] sm:$0xff]
        %v4941 = vld [vmem:[%s4758 + $0x5b0] sm:$0xff]
        %v4942 = vld [vmem:[%s4758 + $0x5b8] sm:$0xff]
        %v4943 = vld [vmem:[%s4758 + $0x5c0] sm:$0xff]
        %v4944 = vld [vmem:[%s4758 + $0x5c8] sm:$0xff]
        %v4945 = vld [vmem:[%s4758 + $0x5d0] sm:$0xff]
        %v4946 = vld [vmem:[%s4758 + $0x5d8] sm:$0xff]
        %v4947 = vld [vmem:[%s4758 + $0x5e0] sm:$0xff]
        %v4948 = vld [vmem:[%s4758 + $0x5e8] sm:$0xff]
        %v4949 = vld [vmem:[%s4758 + $0x5f0] sm:$0xff]
        %v4950 = vld [vmem:[%s4758 + $0x5f8] sm:$0xff]
        %v4951 = vld [vmem:[%s4758 + $0x600] sm:$0xff]
        %v4952 = vld [vmem:[%s4758 + $0x608] sm:$0xff]
        %v4953 = vld [vmem:[%s4758 + $0x610] sm:$0xff]
        %v4954 = vld [vmem:[%s4758 + $0x618] sm:$0xff]
        %v4955 = vld [vmem:[%s4758 + $0x620] sm:$0xff]
        %v4956 = vld [vmem:[%s4758 + $0x628] sm:$0xff]
        %v4957 = vld [vmem:[%s4758 + $0x630] sm:$0xff]
        %v4958 = vld [vmem:[%s4758 + $0x638] sm:$0xff]
        %v4959 = vld [vmem:[%s4758 + $0x640] sm:$0xff]
        %v4960 = vld [vmem:[%s4758 + $0x648] sm:$0xff]
        %v4961 = vld [vmem:[%s4758 + $0x650] sm:$0xff]
        %v4962 = vld [vmem:[%s4758 + $0x658] sm:$0xff]
        %v4963 = vld [vmem:[%s4758 + $0x660] sm:$0xf]
        %v4964 = vld [vmem:[%s4758 + $0x668] sm:$0xf]
        %v4965 = vld [vmem:[%s4758 + $0x670] sm:$0xf]
        %v4966 = vld [vmem:[%s4758 + $0x678] sm:$0xf]
        %v4967 = vld [vmem:[%s4758 + $0x680] sm:$0xf]
        %v4968 = vld [vmem:[%s4758 + $0x688] sm:$0xf]
        %v4969 = vld [vmem:[%s4758 + $0x690] sm:$0xf]
        %v4970 = vld [vmem:[%s4758 + $0x698] sm:$0xf]
        %v4971 = vld [vmem:[%s4758 + $0x6a0] sm:$0xf]
        %v4972 = vld [vmem:[%s4758 + $0x6a8] sm:$0xf]
        %v4973 = vld [vmem:[%s4758 + $0x6b0] sm:$0xf]
        %v4974 = vld [vmem:[%s4758 + $0x6b8] sm:$0xf]
        %v4975 = vld [vmem:[%s4758 + $0x6c0] sm:$0xf]
        %v4976 = vld [vmem:[%s4758 + $0x6c8] sm:$0xf]
        %v4977 = vld [vmem:[%s4758 + $0x6d0] sm:$0xf]
        %v4978 = vld [vmem:[%s4758 + $0x6d8] sm:$0xf]
        %v4979 = vld [vmem:[%s4758 + $0x6e0] sm:$0xf]
        %v4981 = vsel %vm2212, %v4963, 0
        %v4984 = vsel %vm2212, %v4964, 0
        %v4987 = vsel %vm2212, %v4965, 0
        %v4990 = vsel %vm2212, %v4966, 0
        %v4993 = vsel %vm2212, %v4967, 0
        %v4996 = vsel %vm2212, %v4968, 0
        %v4999 = vsel %vm2212, %v4969, 0
        %v5002 = vsel %vm2212, %v4970, 0
        %v5005 = vsel %vm2212, %v4971, 0
        %v5008 = vsel %vm2212, %v4972, 0
        %v5011 = vsel %vm2212, %v4973, 0
        %v5014 = vsel %vm2212, %v4974, 0
        %v5017 = vsel %vm2212, %v4975, 0
        %v5020 = vsel %vm2212, %v4976, 0
        %v5023 = vsel %vm2212, %v4977, 0
        %v5026 = vsel %vm2212, %v4978, 0
        %v5029 = vsel %vm2212, %v4979, 0
        %5031 = vmatprep.subr.mxu0 %v4760
        %5032 = vmatpush1.msra.mxu0 %v4759
        %5033 = vmatprep.subr.mxu0 %v4777
        %5034 = vmatpush1.msra.mxu0 %v4776
        %5035 = vmatprep.subr.mxu0 %v4794
        %5036 = vmatpush1.msra.mxu0 %v4793
        %5037 = vmatprep.subr.mxu0 %v4811
        %5038 = vmatpush1.msra.mxu0 %v4810
        %5039 = vmatprep.subr.mxu0 %v4828
        %5040 = vmatpush1.msra.mxu0 %v4827
        %5041 = vmatprep.subr.mxu0 %v4845
        %5042 = vmatpush1.msra.mxu0 %v4844
        %5043 = vmatprep.subr.mxu0 %v4862
        %5044 = vmatpush1.msra.mxu0 %v4861
        %5045 = vmatprep.subr.mxu0 %v4879
        %5046 = vmatpush1.msra.mxu0 %v4878
        %5047 = vmatprep.subr.mxu0 %v4896
        %5048 = vmatpush1.msra.mxu0 %v4895
        %5049 = vmatprep.subr.mxu0 %v4913
        %5050 = vmatpush1.msra.mxu0 %v4912
        %5051 = vmatprep.subr.mxu0 %v4930
        %5052 = vmatpush1.msra.mxu0 %v4929
        %5053 = vmatprep.subr.mxu0 %v4947
        %5054 = vmatpush1.msra.mxu0 %v4946
        %5055 = vmatprep.subr.mxu0 %v4984
        %5056 = vmatpush1.msra.mxu0 %v4981
        %5057 = vmatprep.subr.mxu0 0.0
        %5058 = vmatpush1.msra.mxu0 0.0
        %5059 = vmatprep.subr.mxu0 0.0
        %5060 = vmatpush1.msra.mxu0 0.0
        %5061 = vmatprep.subr.mxu0 0.0
        %5062 = vmatpush1.msra.mxu0 0.0
        %5063 = vmatprep.subr.mxu0 0.0
        %5064 = vmatpush1.msra.mxu0 0.0
        %5065 = vmatprep.subr.mxu0 0.0
        %5066 = vmatpush1.msra.mxu0 0.0
        %5067 = vmatprep.subr.mxu0 0.0
        %5068 = vmatpush1.msra.mxu0 0.0
        %5069 = vmatprep.subr.mxu0 0.0
        %5070 = vmatpush1.msra.mxu0 0.0
        %5071 = vmatprep.subr.mxu0 0.0
        %5072 = vmatpush1.msra.mxu0 0.0
        %5073 = vmatprep.subr.mxu0 0.0
        %5074 = vmatpush1.msra.mxu0 0.0
        %5075 = vmatprep.subr.mxu0 0.0
        %5076 = vmatpush1.msra.mxu0 0.0
        %5077 = vmatprep.subr.mxu0 0.0
        %5078 = vmatpush1.msra.mxu0 0.0
        %5079 = vmatprep.subr.mxu0 0.0
        %5080 = vmatpush1.msra.mxu0 0.0
        %5081 = vmatprep.subr.mxu0 0.0
        %5082 = vmatpush1.msra.mxu0 0.0
        %5083 = vmatprep.subr.mxu0 0.0
        %5084 = vmatpush1.msra.mxu0 0.0
        %5085 = vmatprep.subr.mxu0 0.0
        %5086 = vmatpush1.msra.mxu0 0.0
        %5087 = vmatprep.subr.mxu0 0.0
        %5088 = vmatpush1.msra.mxu0 0.0
        %5089 = vmatprep.subr.mxu0 0.0
        %5090 = vmatpush1.msra.mxu0 0.0
        %5091 = vmatprep.subr.mxu0 0.0
        %5092 = vmatpush1.msra.mxu0 0.0
        %5093 = vmatprep.subr.mxu0 0.0
        %5094 = vmatpush1.msra.mxu0 0.0
        %5095 = vmatprep.mubr.f32.mxu0 0.0
        %5096 = vmatmul.mubr.f32.gmra.mrb[0].mxu0 %v2210
        %v5097 = vpop.f32.mrb[0].mxu0
        %v5098 = vadd.f32 0.0, %v5097
        %v5099 = vpop.f32.mrb[0].mxu0
        %v5100 = vadd.f32 0.0, %v5099
        %5101 = vdwg.mxu0
        %5102 = vmatprep.subr.mxu0 %v4762
        %5103 = vmatpush1.msra.mxu0 %v4761
        %5104 = vmatprep.subr.mxu0 %v4779
        %5105 = vmatpush1.msra.mxu0 %v4778
        %5106 = vmatprep.subr.mxu0 %v4796
        %5107 = vmatpush1.msra.mxu0 %v4795
        %5108 = vmatprep.subr.mxu0 %v4813
        %5109 = vmatpush1.msra.mxu0 %v4812
        %5110 = vmatprep.subr.mxu0 %v4830
        %5111 = vmatpush1.msra.mxu0 %v4829
        %5112 = vmatprep.subr.mxu0 %v4847
        %5113 = vmatpush1.msra.mxu0 %v4846
        %5114 = vmatprep.subr.mxu0 %v4864
        %5115 = vmatpush1.msra.mxu0 %v4863
        %5116 = vmatprep.subr.mxu0 %v4881
        %5117 = vmatpush1.msra.mxu0 %v4880
        %5118 = vmatprep.subr.mxu0 %v4898
        %5119 = vmatpush1.msra.mxu0 %v4897
        %5120 = vmatprep.subr.mxu0 %v4915
        %5121 = vmatpush1.msra.mxu0 %v4914
        %5122 = vmatprep.subr.mxu0 %v4932
        %5123 = vmatpush1.msra.mxu0 %v4931
        %5124 = vmatprep.subr.mxu0 %v4949
        %5125 = vmatpush1.msra.mxu0 %v4948
        %5126 = vmatprep.subr.mxu0 %v4990
        %5127 = vmatpush1.msra.mxu0 %v4987
        %5128 = vmatprep.subr.mxu0 0.0
        %5129 = vmatpush1.msra.mxu0 0.0
        %5130 = vmatprep.subr.mxu0 0.0
        %5131 = vmatpush1.msra.mxu0 0.0
        %5132 = vmatprep.subr.mxu0 0.0
        %5133 = vmatpush1.msra.mxu0 0.0
        %5134 = vmatprep.subr.mxu0 0.0
        %5135 = vmatpush1.msra.mxu0 0.0
        %5136 = vmatprep.subr.mxu0 0.0
        %5137 = vmatpush1.msra.mxu0 0.0
        %5138 = vmatprep.subr.mxu0 0.0
        %5139 = vmatpush1.msra.mxu0 0.0
        %5140 = vmatprep.subr.mxu0 0.0
        %5141 = vmatpush1.msra.mxu0 0.0
        %5142 = vmatprep.subr.mxu0 0.0
        %5143 = vmatpush1.msra.mxu0 0.0
        %5144 = vmatprep.subr.mxu0 0.0
        %5145 = vmatpush1.msra.mxu0 0.0
        %5146 = vmatprep.subr.mxu0 0.0
        %5147 = vmatpush1.msra.mxu0 0.0
        %5148 = vmatprep.subr.mxu0 0.0
        %5149 = vmatpush1.msra.mxu0 0.0
        %5150 = vmatprep.subr.mxu0 0.0
        %5151 = vmatpush1.msra.mxu0 0.0
        %5152 = vmatprep.subr.mxu0 0.0
        %5153 = vmatpush1.msra.mxu0 0.0
        %5154 = vmatprep.subr.mxu0 0.0
        %5155 = vmatpush1.msra.mxu0 0.0
        %5156 = vmatprep.subr.mxu0 0.0
        %5157 = vmatpush1.msra.mxu0 0.0
        %5158 = vmatprep.subr.mxu0 0.0
        %5159 = vmatpush1.msra.mxu0 0.0
        %5160 = vmatprep.subr.mxu0 0.0
        %5161 = vmatpush1.msra.mxu0 0.0
        %5162 = vmatprep.subr.mxu0 0.0
        %5163 = vmatpush1.msra.mxu0 0.0
        %5164 = vmatprep.subr.mxu0 0.0
        %5165 = vmatpush1.msra.mxu0 0.0
        %5166 = vmatprep.mubr.f32.mxu0 0.0
        %5167 = vmatmul.mubr.f32.gmra.mrb[0].mxu0 %v2210
        %v5168 = vpop.f32.mrb[0].mxu0
        %v5169 = vadd.f32 0.0, %v5168
        %v5170 = vpop.f32.mrb[0].mxu0
        %v5171 = vadd.f32 0.0, %v5170
        %5172 = vdwg.mxu0
        %5173 = vmatprep.subr.mxu0 %v4764
        %5174 = vmatpush1.msra.mxu0 %v4763
        %5175 = vmatprep.subr.mxu0 %v4781
        %5176 = vmatpush1.msra.mxu0 %v4780
        %5177 = vmatprep.subr.mxu0 %v4798
        %5178 = vmatpush1.msra.mxu0 %v4797
        %5179 = vmatprep.subr.mxu0 %v4815
        %5180 = vmatpush1.msra.mxu0 %v4814
        %5181 = vmatprep.subr.mxu0 %v4832
        %5182 = vmatpush1.msra.mxu0 %v4831
        %5183 = vmatprep.subr.mxu0 %v4849
        %5184 = vmatpush1.msra.mxu0 %v4848
        %5185 = vmatprep.subr.mxu0 %v4866
        %5186 = vmatpush1.msra.mxu0 %v4865
        %5187 = vmatprep.subr.mxu0 %v4883
        %5188 = vmatpush1.msra.mxu0 %v4882
        %5189 = vmatprep.subr.mxu0 %v4900
        %5190 = vmatpush1.msra.mxu0 %v4899
        %5191 = vmatprep.subr.mxu0 %v4917
        %5192 = vmatpush1.msra.mxu0 %v4916
        %5193 = vmatprep.subr.mxu0 %v4934
        %5194 = vmatpush1.msra.mxu0 %v4933
        %5195 = vmatprep.subr.mxu0 %v4951
        %5196 = vmatpush1.msra.mxu0 %v4950
        %5197 = vmatprep.subr.mxu0 %v4996
        %5198 = vmatpush1.msra.mxu0 %v4993
        %5199 = vmatprep.subr.mxu0 0.0
        %5200 = vmatpush1.msra.mxu0 0.0
        %5201 = vmatprep.subr.mxu0 0.0
        %5202 = vmatpush1.msra.mxu0 0.0
        %5203 = vmatprep.subr.mxu0 0.0
        %5204 = vmatpush1.msra.mxu0 0.0
        %5205 = vmatprep.subr.mxu0 0.0
        %5206 = vmatpush1.msra.mxu0 0.0
        %5207 = vmatprep.subr.mxu0 0.0
        %5208 = vmatpush1.msra.mxu0 0.0
        %5209 = vmatprep.subr.mxu0 0.0
        %5210 = vmatpush1.msra.mxu0 0.0
        %5211 = vmatprep.subr.mxu0 0.0
        %5212 = vmatpush1.msra.mxu0 0.0
        %5213 = vmatprep.subr.mxu0 0.0
        %5214 = vmatpush1.msra.mxu0 0.0
        %5215 = vmatprep.subr.mxu0 0.0
        %5216 = vmatpush1.msra.mxu0 0.0
        %5217 = vmatprep.subr.mxu0 0.0
        %5218 = vmatpush1.msra.mxu0 0.0
        %5219 = vmatprep.subr.mxu0 0.0
        %5220 = vmatpush1.msra.mxu0 0.0
        %5221 = vmatprep.subr.mxu0 0.0
        %5222 = vmatpush1.msra.mxu0 0.0
        %5223 = vmatprep.subr.mxu0 0.0
        %5224 = vmatpush1.msra.mxu0 0.0
        %5225 = vmatprep.subr.mxu0 0.0
        %5226 = vmatpush1.msra.mxu0 0.0
        %5227 = vmatprep.subr.mxu0 0.0
        %5228 = vmatpush1.msra.mxu0 0.0
        %5229 = vmatprep.subr.mxu0 0.0
        %5230 = vmatpush1.msra.mxu0 0.0
        %5231 = vmatprep.subr.mxu0 0.0
        %5232 = vmatpush1.msra.mxu0 0.0
        %5233 = vmatprep.subr.mxu0 0.0
        %5234 = vmatpush1.msra.mxu0 0.0
        %5235 = vmatprep.subr.mxu0 0.0
        %5236 = vmatpush1.msra.mxu0 0.0
        %5237 = vmatprep.mubr.f32.mxu0 0.0
        %5238 = vmatmul.mubr.f32.gmra.mrb[0].mxu0 %v2210
        %v5239 = vpop.f32.mrb[0].mxu0
        %v5240 = vadd.f32 0.0, %v5239
        %v5241 = vpop.f32.mrb[0].mxu0
        %v5242 = vadd.f32 0.0, %v5241
        %5243 = vdwg.mxu0
        %5244 = vmatprep.subr.mxu0 %v4766
        %5245 = vmatpush1.msra.mxu0 %v4765
        %5246 = vmatprep.subr.mxu0 %v4783
        %5247 = vmatpush1.msra.mxu0 %v4782
        %5248 = vmatprep.subr.mxu0 %v4800
        %5249 = vmatpush1.msra.mxu0 %v4799
        %5250 = vmatprep.subr.mxu0 %v4817
        %5251 = vmatpush1.msra.mxu0 %v4816
        %5252 = vmatprep.subr.mxu0 %v4834
        %5253 = vmatpush1.msra.mxu0 %v4833
        %5254 = vmatprep.subr.mxu0 %v4851
        %5255 = vmatpush1.msra.mxu0 %v4850
        %5256 = vmatprep.subr.mxu0 %v4868
        %5257 = vmatpush1.msra.mxu0 %v4867
        %5258 = vmatprep.subr.mxu0 %v4885
        %5259 = vmatpush1.msra.mxu0 %v4884
        %5260 = vmatprep.subr.mxu0 %v4902
        %5261 = vmatpush1.msra.mxu0 %v4901
        %5262 = vmatprep.subr.mxu0 %v4919
        %5263 = vmatpush1.msra.mxu0 %v4918
        %5264 = vmatprep.subr.mxu0 %v4936
        %5265 = vmatpush1.msra.mxu0 %v4935
        %5266 = vmatprep.subr.mxu0 %v4953
        %5267 = vmatpush1.msra.mxu0 %v4952
        %5268 = vmatprep.subr.mxu0 %v5002
        %5269 = vmatpush1.msra.mxu0 %v4999
        %5270 = vmatprep.subr.mxu0 0.0
        %5271 = vmatpush1.msra.mxu0 0.0
        %5272 = vmatprep.subr.mxu0 0.0
        %5273 = vmatpush1.msra.mxu0 0.0
        %5274 = vmatprep.subr.mxu0 0.0
        %5275 = vmatpush1.msra.mxu0 0.0
        %5276 = vmatprep.subr.mxu0 0.0
        %5277 = vmatpush1.msra.mxu0 0.0
        %5278 = vmatprep.subr.mxu0 0.0
        %5279 = vmatpush1.msra.mxu0 0.0
        %5280 = vmatprep.subr.mxu0 0.0
        %5281 = vmatpush1.msra.mxu0 0.0
        %5282 = vmatprep.subr.mxu0 0.0
        %5283 = vmatpush1.msra.mxu0 0.0
        %5284 = vmatprep.subr.mxu0 0.0
        %5285 = vmatpush1.msra.mxu0 0.0
        %5286 = vmatprep.subr.mxu0 0.0
        %5287 = vmatpush1.msra.mxu0 0.0
        %5288 = vmatprep.subr.mxu0 0.0
        %5289 = vmatpush1.msra.mxu0 0.0
        %5290 = vmatprep.subr.mxu0 0.0
        %5291 = vmatpush1.msra.mxu0 0.0
        %5292 = vmatprep.subr.mxu0 0.0
        %5293 = vmatpush1.msra.mxu0 0.0
        %5294 = vmatprep.subr.mxu0 0.0
        %5295 = vmatpush1.msra.mxu0 0.0
        %5296 = vmatprep.subr.mxu0 0.0
        %5297 = vmatpush1.msra.mxu0 0.0
        %5298 = vmatprep.subr.mxu0 0.0
        %5299 = vmatpush1.msra.mxu0 0.0
        %5300 = vmatprep.subr.mxu0 0.0
        %5301 = vmatpush1.msra.mxu0 0.0
        %5302 = vmatprep.subr.mxu0 0.0
        %5303 = vmatpush1.msra.mxu0 0.0
        %5304 = vmatprep.subr.mxu0 0.0
        %5305 = vmatpush1.msra.mxu0 0.0
        %5306 = vmatprep.subr.mxu0 0.0
        %5307 = vmatpush1.msra.mxu0 0.0
        %5308 = vmatprep.mubr.f32.mxu0 0.0
        %5309 = vmatmul.mubr.f32.gmra.mrb[0].mxu0 %v2210
        %v5310 = vpop.f32.mrb[0].mxu0
        %v5311 = vadd.f32 0.0, %v5310
        %v5312 = vpop.f32.mrb[0].mxu0
        %v5313 = vadd.f32 0.0, %v5312
        %5314 = vdwg.mxu0
        %5315 = vmatprep.subr.mxu0 %v4768
        %5316 = vmatpush1.msra.mxu0 %v4767
        %5317 = vmatprep.subr.mxu0 %v4785
        %5318 = vmatpush1.msra.mxu0 %v4784
        %5319 = vmatprep.subr.mxu0 %v4802
        %5320 = vmatpush1.msra.mxu0 %v4801
        %5321 = vmatprep.subr.mxu0 %v4819
        %5322 = vmatpush1.msra.mxu0 %v4818
        %5323 = vmatprep.subr.mxu0 %v4836
        %5324 = vmatpush1.msra.mxu0 %v4835
        %5325 = vmatprep.subr.mxu0 %v4853
        %5326 = vmatpush1.msra.mxu0 %v4852
        %5327 = vmatprep.subr.mxu0 %v4870
        %5328 = vmatpush1.msra.mxu0 %v4869
        %5329 = vmatprep.subr.mxu0 %v4887
        %5330 = vmatpush1.msra.mxu0 %v4886
        %5331 = vmatprep.subr.mxu0 %v4904
        %5332 = vmatpush1.msra.mxu0 %v4903
        %5333 = vmatprep.subr.mxu0 %v4921
        %5334 = vmatpush1.msra.mxu0 %v4920
        %5335 = vmatprep.subr.mxu0 %v4938
        %5336 = vmatpush1.msra.mxu0 %v4937
        %5337 = vmatprep.subr.mxu0 %v4955
        %5338 = vmatpush1.msra.mxu0 %v4954
        %5339 = vmatprep.subr.mxu0 %v5008
        %5340 = vmatpush1.msra.mxu0 %v5005
        %5341 = vmatprep.subr.mxu0 0.0
        %5342 = vmatpush1.msra.mxu0 0.0
        %5343 = vmatprep.subr.mxu0 0.0
        %5344 = vmatpush1.msra.mxu0 0.0
        %5345 = vmatprep.subr.mxu0 0.0
        %5346 = vmatpush1.msra.mxu0 0.0
        %5347 = vmatprep.subr.mxu0 0.0
        %5348 = vmatpush1.msra.mxu0 0.0
        %5349 = vmatprep.subr.mxu0 0.0
        %5350 = vmatpush1.msra.mxu0 0.0
        %5351 = vmatprep.subr.mxu0 0.0
        %5352 = vmatpush1.msra.mxu0 0.0
        %5353 = vmatprep.subr.mxu0 0.0
        %5354 = vmatpush1.msra.mxu0 0.0
        %5355 = vmatprep.subr.mxu0 0.0
        %5356 = vmatpush1.msra.mxu0 0.0
        %5357 = vmatprep.subr.mxu0 0.0
        %5358 = vmatpush1.msra.mxu0 0.0
        %5359 = vmatprep.subr.mxu0 0.0
        %5360 = vmatpush1.msra.mxu0 0.0
        %5361 = vmatprep.subr.mxu0 0.0
        %5362 = vmatpush1.msra.mxu0 0.0
        %5363 = vmatprep.subr.mxu0 0.0
        %5364 = vmatpush1.msra.mxu0 0.0
        %5365 = vmatprep.subr.mxu0 0.0
        %5366 = vmatpush1.msra.mxu0 0.0
        %5367 = vmatprep.subr.mxu0 0.0
        %5368 = vmatpush1.msra.mxu0 0.0
        %5369 = vmatprep.subr.mxu0 0.0
        %5370 = vmatpush1.msra.mxu0 0.0
        %5371 = vmatprep.subr.mxu0 0.0
        %5372 = vmatpush1.msra.mxu0 0.0
        %5373 = vmatprep.subr.mxu0 0.0
        %5374 = vmatpush1.msra.mxu0 0.0
        %5375 = vmatprep.subr.mxu0 0.0
        %5376 = vmatpush1.msra.mxu0 0.0
        %5377 = vmatprep.subr.mxu0 0.0
        %5378 = vmatpush1.msra.mxu0 0.0
        %5379 = vmatprep.mubr.f32.mxu0 0.0
        %5380 = vmatmul.mubr.f32.gmra.mrb[0].mxu0 %v2210
        %v5381 = vpop.f32.mrb[0].mxu0
        %v5382 = vadd.f32 0.0, %v5381
        %v5383 = vpop.f32.mrb[0].mxu0
        %v5384 = vadd.f32 0.0, %v5383
        %5385 = vdwg.mxu0
        %5386 = vmatprep.subr.mxu0 %v4770
        %5387 = vmatpush1.msra.mxu0 %v4769
        %5388 = vmatprep.subr.mxu0 %v4787
        %5389 = vmatpush1.msra.mxu0 %v4786
        %5390 = vmatprep.subr.mxu0 %v4804
        %5391 = vmatpush1.msra.mxu0 %v4803
        %5392 = vmatprep.subr.mxu0 %v4821
        %5393 = vmatpush1.msra.mxu0 %v4820
        %5394 = vmatprep.subr.mxu0 %v4838
        %5395 = vmatpush1.msra.mxu0 %v4837
        %5396 = vmatprep.subr.mxu0 %v4855
        %5397 = vmatpush1.msra.mxu0 %v4854
        %5398 = vmatprep.subr.mxu0 %v4872
        %5399 = vmatpush1.msra.mxu0 %v4871
        %5400 = vmatprep.subr.mxu0 %v4889
        %5401 = vmatpush1.msra.mxu0 %v4888
        %5402 = vmatprep.subr.mxu0 %v4906
        %5403 = vmatpush1.msra.mxu0 %v4905
        %5404 = vmatprep.subr.mxu0 %v4923
        %5405 = vmatpush1.msra.mxu0 %v4922
        %5406 = vmatprep.subr.mxu0 %v4940
        %5407 = vmatpush1.msra.mxu0 %v4939
        %5408 = vmatprep.subr.mxu0 %v4957
        %5409 = vmatpush1.msra.mxu0 %v4956
        %5410 = vmatprep.subr.mxu0 %v5014
        %5411 = vmatpush1.msra.mxu0 %v5011
        %5412 = vmatprep.subr.mxu0 0.0
        %5413 = vmatpush1.msra.mxu0 0.0
        %5414 = vmatprep.subr.mxu0 0.0
        %5415 = vmatpush1.msra.mxu0 0.0
        %5416 = vmatprep.subr.mxu0 0.0
        %5417 = vmatpush1.msra.mxu0 0.0
        %5418 = vmatprep.subr.mxu0 0.0
        %5419 = vmatpush1.msra.mxu0 0.0
        %5420 = vmatprep.subr.mxu0 0.0
        %5421 = vmatpush1.msra.mxu0 0.0
        %5422 = vmatprep.subr.mxu0 0.0
        %5423 = vmatpush1.msra.mxu0 0.0
        %5424 = vmatprep.subr.mxu0 0.0
        %5425 = vmatpush1.msra.mxu0 0.0
        %5426 = vmatprep.subr.mxu0 0.0
        %5427 = vmatpush1.msra.mxu0 0.0
        %5428 = vmatprep.subr.mxu0 0.0
        %5429 = vmatpush1.msra.mxu0 0.0
        %5430 = vmatprep.subr.mxu0 0.0
        %5431 = vmatpush1.msra.mxu0 0.0
        %5432 = vmatprep.subr.mxu0 0.0
        %5433 = vmatpush1.msra.mxu0 0.0
        %5434 = vmatprep.subr.mxu0 0.0
        %5435 = vmatpush1.msra.mxu0 0.0
        %5436 = vmatprep.subr.mxu0 0.0
        %5437 = vmatpush1.msra.mxu0 0.0
        %5438 = vmatprep.subr.mxu0 0.0
        %5439 = vmatpush1.msra.mxu0 0.0
        %5440 = vmatprep.subr.mxu0 0.0
        %5441 = vmatpush1.msra.mxu0 0.0
        %5442 = vmatprep.subr.mxu0 0.0
        %5443 = vmatpush1.msra.mxu0 0.0
        %5444 = vmatprep.subr.mxu0 0.0
        %5445 = vmatpush1.msra.mxu0 0.0
        %5446 = vmatprep.subr.mxu0 0.0
        %5447 = vmatpush1.msra.mxu0 0.0
        %5448 = vmatprep.subr.mxu0 0.0
        %5449 = vmatpush1.msra.mxu0 0.0
        %5450 = vmatprep.mubr.f32.mxu0 0.0
        %5451 = vmatmul.mubr.f32.gmra.mrb[0].mxu0 %v2210
        %v5452 = vpop.f32.mrb[0].mxu0
        %v5453 = vadd.f32 0.0, %v5452
        %v5454 = vpop.f32.mrb[0].mxu0
        %v5455 = vadd.f32 0.0, %v5454
        %5456 = vdwg.mxu0
        %5457 = vmatprep.subr.mxu0 %v4772
        %5458 = vmatpush1.msra.mxu0 %v4771
        %5459 = vmatprep.subr.mxu0 %v4789
        %5460 = vmatpush1.msra.mxu0 %v4788
        %5461 = vmatprep.subr.mxu0 %v4806
        %5462 = vmatpush1.msra.mxu0 %v4805
        %5463 = vmatprep.subr.mxu0 %v4823
        %5464 = vmatpush1.msra.mxu0 %v4822
        %5465 = vmatprep.subr.mxu0 %v4840
        %5466 = vmatpush1.msra.mxu0 %v4839
        %5467 = vmatprep.subr.mxu0 %v4857
        %5468 = vmatpush1.msra.mxu0 %v4856
        %5469 = vmatprep.subr.mxu0 %v4874
        %5470 = vmatpush1.msra.mxu0 %v4873
        %5471 = vmatprep.subr.mxu0 %v4891
        %5472 = vmatpush1.msra.mxu0 %v4890
        %5473 = vmatprep.subr.mxu0 %v4908
        %5474 = vmatpush1.msra.mxu0 %v4907
        %5475 = vmatprep.subr.mxu0 %v4925
        %5476 = vmatpush1.msra.mxu0 %v4924
        %5477 = vmatprep.subr.mxu0 %v4942
        %5478 = vmatpush1.msra.mxu0 %v4941
        %5479 = vmatprep.subr.mxu0 %v4959
        %5480 = vmatpush1.msra.mxu0 %v4958
        %5481 = vmatprep.subr.mxu0 %v5020
        %5482 = vmatpush1.msra.mxu0 %v5017
        %5483 = vmatprep.subr.mxu0 0.0
        %5484 = vmatpush1.msra.mxu0 0.0
        %5485 = vmatprep.subr.mxu0 0.0
        %5486 = vmatpush1.msra.mxu0 0.0
        %5487 = vmatprep.subr.mxu0 0.0
        %5488 = vmatpush1.msra.mxu0 0.0
        %5489 = vmatprep.subr.mxu0 0.0
        %5490 = vmatpush1.msra.mxu0 0.0
        %5491 = vmatprep.subr.mxu0 0.0
        %5492 = vmatpush1.msra.mxu0 0.0
        %5493 = vmatprep.subr.mxu0 0.0
        %5494 = vmatpush1.msra.mxu0 0.0
        %5495 = vmatprep.subr.mxu0 0.0
        %5496 = vmatpush1.msra.mxu0 0.0
        %5497 = vmatprep.subr.mxu0 0.0
        %5498 = vmatpush1.msra.mxu0 0.0
        %5499 = vmatprep.subr.mxu0 0.0
        %5500 = vmatpush1.msra.mxu0 0.0
        %5501 = vmatprep.subr.mxu0 0.0
        %5502 = vmatpush1.msra.mxu0 0.0
        %5503 = vmatprep.subr.mxu0 0.0
        %5504 = vmatpush1.msra.mxu0 0.0
        %5505 = vmatprep.subr.mxu0 0.0
        %5506 = vmatpush1.msra.mxu0 0.0
        %5507 = vmatprep.subr.mxu0 0.0
        %5508 = vmatpush1.msra.mxu0 0.0
        %5509 = vmatprep.subr.mxu0 0.0
        %5510 = vmatpush1.msra.mxu0 0.0
        %5511 = vmatprep.subr.mxu0 0.0
        %5512 = vmatpush1.msra.mxu0 0.0
        %5513 = vmatprep.subr.mxu0 0.0
        %5514 = vmatpush1.msra.mxu0 0.0
        %5515 = vmatprep.subr.mxu0 0.0
        %5516 = vmatpush1.msra.mxu0 0.0
        %5517 = vmatprep.subr.mxu0 0.0
        %5518 = vmatpush1.msra.mxu0 0.0
        %5519 = vmatprep.subr.mxu0 0.0
        %5520 = vmatpush1.msra.mxu0 0.0
        %5521 = vmatprep.mubr.f32.mxu0 0.0
        %5522 = vmatmul.mubr.f32.gmra.mrb[0].mxu0 %v2210
        %v5523 = vpop.f32.mrb[0].mxu0
        %v5524 = vadd.f32 0.0, %v5523
        %v5525 = vpop.f32.mrb[0].mxu0
        %v5526 = vadd.f32 0.0, %v5525
        %5527 = vdwg.mxu0
        %5528 = vmatprep.subr.mxu0 %v4774
        %5529 = vmatpush1.msra.mxu0 %v4773
        %5530 = vmatprep.subr.mxu0 %v4791
        %5531 = vmatpush1.msra.mxu0 %v4790
        %5532 = vmatprep.subr.mxu0 %v4808
        %5533 = vmatpush1.msra.mxu0 %v4807
        %5534 = vmatprep.subr.mxu0 %v4825
        %5535 = vmatpush1.msra.mxu0 %v4824
        %5536 = vmatprep.subr.mxu0 %v4842
        %5537 = vmatpush1.msra.mxu0 %v4841
        %5538 = vmatprep.subr.mxu0 %v4859
        %5539 = vmatpush1.msra.mxu0 %v4858
        %5540 = vmatprep.subr.mxu0 %v4876
        %5541 = vmatpush1.msra.mxu0 %v4875
        %5542 = vmatprep.subr.mxu0 %v4893
        %5543 = vmatpush1.msra.mxu0 %v4892
        %5544 = vmatprep.subr.mxu0 %v4910
        %5545 = vmatpush1.msra.mxu0 %v4909
        %5546 = vmatprep.subr.mxu0 %v4927
        %5547 = vmatpush1.msra.mxu0 %v4926
        %5548 = vmatprep.subr.mxu0 %v4944
        %5549 = vmatpush1.msra.mxu0 %v4943
        %5550 = vmatprep.subr.mxu0 %v4961
        %5551 = vmatpush1.msra.mxu0 %v4960
        %5552 = vmatprep.subr.mxu0 %v5026
        %5553 = vmatpush1.msra.mxu0 %v5023
        %5554 = vmatprep.subr.mxu0 0.0
        %5555 = vmatpush1.msra.mxu0 0.0
        %5556 = vmatprep.subr.mxu0 0.0
        %5557 = vmatpush1.msra.mxu0 0.0
        %5558 = vmatprep.subr.mxu0 0.0
        %5559 = vmatpush1.msra.mxu0 0.0
        %5560 = vmatprep.subr.mxu0 0.0
        %5561 = vmatpush1.msra.mxu0 0.0
        %5562 = vmatprep.subr.mxu0 0.0
        %5563 = vmatpush1.msra.mxu0 0.0
        %5564 = vmatprep.subr.mxu0 0.0
        %5565 = vmatpush1.msra.mxu0 0.0
        %5566 = vmatprep.subr.mxu0 0.0
        %5567 = vmatpush1.msra.mxu0 0.0
        %5568 = vmatprep.subr.mxu0 0.0
        %5569 = vmatpush1.msra.mxu0 0.0
        %5570 = vmatprep.subr.mxu0 0.0
        %5571 = vmatpush1.msra.mxu0 0.0
        %5572 = vmatprep.subr.mxu0 0.0
        %5573 = vmatpush1.msra.mxu0 0.0
        %5574 = vmatprep.subr.mxu0 0.0
        %5575 = vmatpush1.msra.mxu0 0.0
        %5576 = vmatprep.subr.mxu0 0.0
        %5577 = vmatpush1.msra.mxu0 0.0
        %5578 = vmatprep.subr.mxu0 0.0
        %5579 = vmatpush1.msra.mxu0 0.0
        %5580 = vmatprep.subr.mxu0 0.0
        %5581 = vmatpush1.msra.mxu0 0.0
        %5582 = vmatprep.subr.mxu0 0.0
        %5583 = vmatpush1.msra.mxu0 0.0
        %5584 = vmatprep.subr.mxu0 0.0
        %5585 = vmatpush1.msra.mxu0 0.0
        %5586 = vmatprep.subr.mxu0 0.0
        %5587 = vmatpush1.msra.mxu0 0.0
        %5588 = vmatprep.subr.mxu0 0.0
        %5589 = vmatpush1.msra.mxu0 0.0
        %5590 = vmatprep.subr.mxu0 0.0
        %5591 = vmatpush1.msra.mxu0 0.0
        %5592 = vmatprep.mubr.f32.mxu0 0.0
        %5593 = vmatmul.mubr.f32.gmra.mrb[0].mxu0 %v2210
        %v5594 = vpop.f32.mrb[0].mxu0
        %v5595 = vadd.f32 0.0, %v5594
        %v5596 = vpop.f32.mrb[0].mxu0
        %v5597 = vadd.f32 0.0, %v5596
        %5598 = vdwg.mxu0
        %5599 = vmatprep.subr.mxu0 0.0
        %5600 = vmatpush1.msra.mxu0 %v4775
        %5601 = vmatprep.subr.mxu0 0.0
        %5602 = vmatpush1.msra.mxu0 %v4792
        %5603 = vmatprep.subr.mxu0 0.0
        %5604 = vmatpush1.msra.mxu0 %v4809
        %5605 = vmatprep.subr.mxu0 0.0
        %5606 = vmatpush1.msra.mxu0 %v4826
        %5607 = vmatprep.subr.mxu0 0.0
        %5608 = vmatpush1.msra.mxu0 %v4843
        %5609 = vmatprep.subr.mxu0 0.0
        %5610 = vmatpush1.msra.mxu0 %v4860
        %5611 = vmatprep.subr.mxu0 0.0
        %5612 = vmatpush1.msra.mxu0 %v4877
        %5613 = vmatprep.subr.mxu0 0.0
        %5614 = vmatpush1.msra.mxu0 %v4894
        %5615 = vmatprep.subr.mxu0 0.0
        %5616 = vmatpush1.msra.mxu0 %v4911
        %5617 = vmatprep.subr.mxu0 0.0
        %5618 = vmatpush1.msra.mxu0 %v4928
        %5619 = vmatprep.subr.mxu0 0.0
        %5620 = vmatpush1.msra.mxu0 %v4945
        %5621 = vmatprep.subr.mxu0 0.0
        %5622 = vmatpush1.msra.mxu0 %v4962
        %5623 = vmatprep.subr.mxu0 0.0
        %5624 = vmatpush1.msra.mxu0 %v5029
        %5625 = vmatprep.subr.mxu0 0.0
        %5626 = vmatpush1.msra.mxu0 0.0
        %5627 = vmatprep.subr.mxu0 0.0
        %5628 = vmatpush1.msra.mxu0 0.0
        %5629 = vmatprep.subr.mxu0 0.0
        %5630 = vmatpush1.msra.mxu0 0.0
        %5631 = vmatprep.subr.mxu0 0.0
        %5632 = vmatpush1.msra.mxu0 0.0
        %5633 = vmatprep.subr.mxu0 0.0
        %5634 = vmatpush1.msra.mxu0 0.0
        %5635 = vmatprep.subr.mxu0 0.0
        %5636 = vmatpush1.msra.mxu0 0.0
        %5637 = vmatprep.subr.mxu0 0.0
        %5638 = vmatpush1.msra.mxu0 0.0
        %5639 = vmatprep.subr.mxu0 0.0
        %5640 = vmatpush1.msra.mxu0 0.0
        %5641 = vmatprep.subr.mxu0 0.0
        %5642 = vmatpush1.msra.mxu0 0.0
        %5643 = vmatprep.subr.mxu0 0.0
        %5644 = vmatpush1.msra.mxu0 0.0
        %5645 = vmatprep.subr.mxu0 0.0
        %5646 = vmatpush1.msra.mxu0 0.0
        %5647 = vmatprep.subr.mxu0 0.0
        %5648 = vmatpush1.msra.mxu0 0.0
        %5649 = vmatprep.subr.mxu0 0.0
        %5650 = vmatpush1.msra.mxu0 0.0
        %5651 = vmatprep.subr.mxu0 0.0
        %5652 = vmatpush1.msra.mxu0 0.0
        %5653 = vmatprep.subr.mxu0 0.0
        %5654 = vmatpush1.msra.mxu0 0.0
        %5655 = vmatprep.subr.mxu0 0.0
        %5656 = vmatpush1.msra.mxu0 0.0
        %5657 = vmatprep.subr.mxu0 0.0
        %5658 = vmatpush1.msra.mxu0 0.0
        %5659 = vmatprep.subr.mxu0 0.0
        %5660 = vmatpush1.msra.mxu0 0.0
        %5661 = vmatprep.subr.mxu0 0.0
        %5662 = vmatpush1.msra.mxu0 0.0
        %5663 = vmatprep.mubr.f32.mxu0 0.0
        %5664 = vmatmul.mubr.f32.gmra.mrb[0].mxu0 %v2210
        %v5665 = vpop.f32.mrb[0].mxu0
        %v5666 = vadd.f32 0.0, %v5665
        %v5667 = vpop.f32.mrb[0].mxu0
        %5668 = vdwg.mxu0
        %v5669 = vmax.f32 %v4741, %v5098
        %v5670 = vmax.f32 %v4742, %v5100
        %v5671 = vmax.f32 %v4743, %v5169
        %v5672 = vmax.f32 %v4744, %v5171
        %v5673 = vmax.f32 %v4745, %v5240
        %v5674 = vmax.f32 %v4746, %v5242
        %v5675 = vmax.f32 %v4747, %v5311
        %v5676 = vmax.f32 %v4748, %v5313
        %v5677 = vmax.f32 %v4749, %v5382
        %v5678 = vmax.f32 %v4750, %v5384
        %v5679 = vmax.f32 %v4751, %v5453
        %v5680 = vmax.f32 %v4752, %v5455
        %v5681 = vmax.f32 %v4753, %v5524
        %v5682 = vmax.f32 %v4754, %v5526
        %v5683 = vmax.f32 %v4755, %v5595
        %v5684 = vmax.f32 %v4756, %v5597
        %v5685 = vmax.f32 %v4757, %v5666
        %v5686 = vld [vmem:[%s2] sm:$0xff]
        %5688 = vset.pattern.permute.xlu0 0
        %5689 = vperm.xlu0 %5688, %v5686
        %v5690 = vpop.permute.xlu0 %5689
        %v5692 = vmul.f32 %v5669, %v5690
        %v5693 = vmul.f32 %v5670, %v5690
        %v5694 = vmul.f32 %v5671, %v5690
        %v5695 = vmul.f32 %v5672, %v5690
        %v5696 = vmul.f32 %v5673, %v5690
        %v5697 = vmul.f32 %v5674, %v5690
        %v5698 = vmul.f32 %v5675, %v5690
        %v5699 = vmul.f32 %v5676, %v5690
        %v5700 = vmul.f32 %v5677, %v5690
        %v5701 = vmul.f32 %v5678, %v5690
        %v5702 = vmul.f32 %v5679, %v5690
        %v5703 = vmul.f32 %v5680, %v5690
        %v5704 = vmul.f32 %v5681, %v5690
        %v5705 = vmul.f32 %v5682, %v5690
        %v5706 = vmul.f32 %v5683, %v5690
        %v5707 = vmul.f32 %v5684, %v5690
        %v5708 = vmul.f32 %v5685, %v5690
        %v5709 = vld [vmem:[%s3] sm:$0xff]
        %5711 = vset.pattern.permute.xlu0 0
        %5712 = vperm.xlu0 %5711, %v5709
        %v5713 = vpop.permute.xlu0 %5712
        %v5715 = vadd.f32 %v5692, %v5713
        %v5716 = vadd.f32 %v5693, %v5713
        %v5717 = vadd.f32 %v5694, %v5713
        %v5718 = vadd.f32 %v5695, %v5713
        %v5719 = vadd.f32 %v5696, %v5713
        %v5720 = vadd.f32 %v5697, %v5713
        %v5721 = vadd.f32 %v5698, %v5713
        %v5722 = vadd.f32 %v5699, %v5713
        %v5723 = vadd.f32 %v5700, %v5713
        %v5724 = vadd.f32 %v5701, %v5713
        %v5725 = vadd.f32 %v5702, %v5713
        %v5726 = vadd.f32 %v5703, %v5713
        %v5727 = vadd.f32 %v5704, %v5713
        %v5728 = vadd.f32 %v5705, %v5713
        %v5729 = vadd.f32 %v5706, %v5713
        %v5730 = vadd.f32 %v5707, %v5713
        %v5731 = vadd.f32 %v5708, %v5713
        %v5732 = vtanh.pop %v5715
        %v5733 = vtanh.pop %v5716
        %v5734 = vtanh.pop %v5717
        %v5735 = vtanh.pop %v5718
        %v5736 = vtanh.pop %v5719
        %v5737 = vtanh.pop %v5720
        %v5738 = vtanh.pop %v5721
        %v5739 = vtanh.pop %v5722
        %v5740 = vtanh.pop %v5723
        %v5741 = vtanh.pop %v5724
        %v5742 = vtanh.pop %v5725
        %v5743 = vtanh.pop %v5726
        %v5744 = vtanh.pop %v5727
        %v5745 = vtanh.pop %v5728
        %v5746 = vtanh.pop %v5729
        %v5747 = vtanh.pop %v5730
        %v5748 = vtanh.pop %v5731
        %5749 = vst [vmem:[%s1984] sm:$0xff] %v5732
        %5750 = vst [vmem:[%s1984 + $0x8] sm:$0xff] %v5733
        %5751 = vst [vmem:[%s1984 + $0x10] sm:$0xff] %v5734
        %5752 = vst [vmem:[%s1984 + $0x18] sm:$0xff] %v5735
        %5753 = vst [vmem:[%s1984 + $0x20] sm:$0xff] %v5736
        %5754 = vst [vmem:[%s1984 + $0x28] sm:$0xff] %v5737
        %5755 = vst [vmem:[%s1984 + $0x30] sm:$0xff] %v5738
        %5756 = vst [vmem:[%s1984 + $0x38] sm:$0xff] %v5739
        %5757 = vst [vmem:[%s1984 + $0x40] sm:$0xff] %v5740
        %5758 = vst [vmem:[%s1984 + $0x48] sm:$0xff] %v5741
        %5759 = vst [vmem:[%s1984 + $0x50] sm:$0xff] %v5742
        %5760 = vst [vmem:[%s1984 + $0x58] sm:$0xff] %v5743
        %5761 = vst [vmem:[%s1984 + $0x60] sm:$0xff] %v5744
        %5762 = vst [vmem:[%s1984 + $0x68] sm:$0xff] %v5745
        %5763 = vst [vmem:[%s1984 + $0x70] sm:$0xff] %v5746
        %5764 = vst [vmem:[%s1984 + $0x78] sm:$0xff] %v5747
        %5765 = vst [vmem:[%s1984 + $0x80] sm:$0xff] %v5748
        %s5766 = smul.u32 17, %s15
        %p5767 = scmp.lt.s32.totalorder %s5766, 33
        %s5768 = scalar_select %p5767, %s5766, 33
        %s5769 = smul.addr %s5768, 8
        %s5770 = scalar_lea.vmem %s4, %s5769
        // Predicated region
        $region60: #{policy_actor_forward.4} parent=54 // pred_check
          %p5771 = pneg %p122
        $region61: #{policy_actor_forward.4} parent=54 // pred_check_branch
          %5773 = sbr.rel (%p5771) target = $region63
        $region62: #{policy_actor_forward.4} parent=54 // pred_region
          %s5774 = smul.u32 17, %s15
        $region63: #{policy_actor_forward.4} parent=54 // pred_fallthru
          _
      $region55: #{policy_actor_forward.4} parent=5 // pred_fallthru
        _
      %p5775 = scmp.le.s32.totalorder 2, %s10
      // Predicated region
      $region64: #{policy_actor_forward.4} parent=5 // pred_check
        %p5776 = pneg %p5775
      $region65: #{policy_actor_forward.4} parent=5 // pred_check_branch
        %5778 = sbr.rel (%p5776) target = $region67
      $region66: #{policy_actor_forward.4} parent=5 // pred_region
        %s5779 = ssub.s32 %s10, 2
        // Predicated region
        $region68: #{policy_actor_forward.4} parent=66 // pred_check
          %p5780 = pneg %p128
        $region69: #{policy_actor_forward.4} parent=66 // pred_check_branch
          %5782 = sbr.rel (%p5780) target = $region71
        $region70: #{policy_actor_forward.4} parent=66 // pred_region
          %s5783 = smul.u32 17, %s16
          %p5784 = scmp.lt.s32.totalorder %s5783, 33
          %s5785 = scalar_select %p5784, %s5783, 33
          %s5786 = smul.addr %s5785, 8
          %s5787 = scalar_lea.vmem %s4, %s5786
        $region71: #{policy_actor_forward.4} parent=66 // pred_fallthru
          _
      $region67: #{policy_actor_forward.4} parent=5 // pred_fallthru
        _
    $region6: #{policy_actor_forward.4} parent=1 // loop_footer
      %s14 = sadd.s32 1, %s10
    $region7: #{policy_actor_forward.4} parent=1 // loop_footer_branch
      %9 = sbr.rel target = $region3
    $region8: #{policy_actor_forward.4} parent=1 // loop_exit
      _

// kernel: policy_actor_forward.5
$region0: #{policy_actor_forward.5}
  #allocation0 [shape = 'u32[]', space=smem, size = 0x4, offset = 0x4, fixed_abs, tag = 'smem constant byte address 0x4 - core index']
  #allocation1 [shape = 'u32[144,128]{1,0:T(1,128)}', space=vmem, size = 0x12000, scoped, tag = 'internal scratch']
  %s0 = inlined_call_operand.vmem [shape: f32[4,72,968], index: 0, kind: input, shape index: {}]
  %s1 = inlined_call_operand.vmem [shape: f32[12,72], index: 1, kind: input, shape index: {}]
  %s2 = inlined_call_operand.vmem [shape: f32[12,1], index: 2, kind: input, shape index: {}]
  %s3 = inlined_call_operand.vmem [shape: f32[12,1], index: 3, kind: input, shape index: {}]
  %s4 = inlined_call_operand.vmem [shape: f32[12,968], index: 4, kind: output, shape index: {}]
  %s5 = sld [smem:[#allocation0]]
  $region26: #{policy_actor_forward.5} parent=0
    _
  %s7 = ssub.s32 1, %s5
  %s8 = scalar_select 0, %s7, %s5
  // Predicated region
  $region2: #{policy_actor_forward.5} parent=0 // pred_check
    _
  $region3: #{policy_actor_forward.5} parent=0 // pred_check_branch
    %10 = sbr.rel (0) target = $region5
  $region4: #{policy_actor_forward.5} parent=0 // pred_region
    _
  $region5: #{policy_actor_forward.5} parent=0 // pred_fallthru
    _
  // Predicated region
  $region6: #{policy_actor_forward.5} parent=0 // pred_check
    _
  $region7: #{policy_actor_forward.5} parent=0 // pred_check_branch
    %12 = sbr.rel (0) target = $region9
  $region8: #{policy_actor_forward.5} parent=0 // pred_region
    _
  $region9: #{policy_actor_forward.5} parent=0 // pred_fallthru
    _
  // Predicated region
  $region10: #{policy_actor_forward.5} parent=0 // pred_check
    _
  $region11: #{policy_actor_forward.5} parent=0 // pred_check_branch
    %14 = sbr.rel (0) target = $region13
  $region12: #{policy_actor_forward.5} parent=0 // pred_region
    _
  $region13: #{policy_actor_forward.5} parent=0 // pred_fallthru
    _
  // Predicated region
  $region14: #{policy_actor_forward.5} parent=0 // pred_check
    _
  $region15: #{policy_actor_forward.5} parent=0 // pred_check_branch
    %16 = sbr.rel (0) target = $region17
  $region16: #{policy_actor_forward.5} parent=0 // pred_region
    _
  $region17: #{policy_actor_forward.5} parent=0 // pred_fallthru
    _
  %v17 = vld [vmem:[%s1] sm:$0xff]
  %v18 = vld [vmem:[%s1 + $0x8] sm:$0xf]
  %v19 = vld [vmem:[%s0] sm:$0xff]
  %v20 = vld [vmem:[%s0 + $0x8] sm:$0xff]
  %v21 = vld [vmem:[%s0 + $0x10] sm:$0xff]
  %v22 = vld [vmem:[%s0 + $0x18] sm:$0xff]
  %v23 = vld [vmem:[%s0 + $0x20] sm:$0xff]
  %v24 = vld [vmem:[%s0 + $0x28] sm:$0xff]
  %v25 = vld [vmem:[%s0 + $0x30] sm:$0xff]
  %v26 = vld [vmem:[%s0 + $0x38] sm:$0xff]
  %v27 = vld [vmem:[%s0 + $0x40] sm:$0xff]
  %v28 = vld [vmem:[%s0 + $0x48] sm:$0xff]
  %v29 = vld [vmem:[%s0 + $0x50] sm:$0xff]
  %v30 = vld [vmem:[%s0 + $0x58] sm:$0xff]
  %v31 = vld [vmem:[%s0 + $0x60] sm:$0xff]
  %v32 = vld [vmem:[%s0 + $0x68] sm:$0xff]
  %v33 = vld [vmem:[%s0 + $0x70] sm:$0xff]
  %v34 = vld [vmem:[%s0 + $0x78] sm:$0xff]
  %v35 = vld [vmem:[%s0 + $0x80] sm:$0xff]
  %v36 = vld [vmem:[%s0 + $0x88] sm:$0xff]
  %v37 = vld [vmem:[%s0 + $0x90] sm:$0xff]
  %v38 = vld [vmem:[%s0 + $0x98] sm:$0xff]
  %v39 = vld [vmem:[%s0 + $0xa0] sm:$0xff]
  %v40 = vld [vmem:[%s0 + $0xa8] sm:$0xff]
  %v41 = vld [vmem:[%s0 + $0xb0] sm:$0xff]
  %v42 = vld [vmem:[%s0 + $0xb8] sm:$0xff]
  %v43 = vld [vmem:[%s0 + $0xc0] sm:$0xff]
  %v44 = vld [vmem:[%s0 + $0xc8] sm:$0xff]
  %v45 = vld [vmem:[%s0 + $0xd0] sm:$0xff]
  %v46 = vld [vmem:[%s0 + $0xd8] sm:$0xff]
  %v47 = vld [vmem:[%s0 + $0xe0] sm:$0xff]
  %v48 = vld [vmem:[%s0 + $0xe8] sm:$0xff]
  %v49 = vld [vmem:[%s0 + $0xf0] sm:$0xff]
  %v50 = vld [vmem:[%s0 + $0xf8] sm:$0xff]
  %v51 = vld [vmem:[%s0 + $0x100] sm:$0xff]
  %v52 = vld [vmem:[%s0 + $0x108] sm:$0xff]
  %v53 = vld [vmem:[%s0 + $0x110] sm:$0xff]
  %v54 = vld [vmem:[%s0 + $0x118] sm:$0xff]
  %v55 = vld [vmem:[%s0 + $0x120] sm:$0xff]
  %v56 = vld [vmem:[%s0 + $0x128] sm:$0xff]
  %v57 = vld [vmem:[%s0 + $0x130] sm:$0xff]
  %v58 = vld [vmem:[%s0 + $0x138] sm:$0xff]
  %v59 = vld [vmem:[%s0 + $0x140] sm:$0xff]
  %v60 = vld [vmem:[%s0 + $0x148] sm:$0xff]
  %v61 = vld [vmem:[%s0 + $0x150] sm:$0xff]
  %v62 = vld [vmem:[%s0 + $0x158] sm:$0xff]
  %v63 = vld [vmem:[%s0 + $0x160] sm:$0xff]
  %v64 = vld [vmem:[%s0 + $0x168] sm:$0xff]
  %v65 = vld [vmem:[%s0 + $0x170] sm:$0xff]
  %v66 = vld [vmem:[%s0 + $0x178] sm:$0xff]
  %v67 = vld [vmem:[%s0 + $0x180] sm:$0xff]
  %v68 = vld [vmem:[%s0 + $0x188] sm:$0xff]
  %v69 = vld [vmem:[%s0 + $0x190] sm:$0xff]
  %v70 = vld [vmem:[%s0 + $0x198] sm:$0xff]
  %v71 = vld [vmem:[%s0 + $0x1a0] sm:$0xff]
  %v72 = vld [vmem:[%s0 + $0x1a8] sm:$0xff]
  %v73 = vld [vmem:[%s0 + $0x1b0] sm:$0xff]
  %v74 = vld [vmem:[%s0 + $0x1b8] sm:$0xff]
  %v75 = vld [vmem:[%s0 + $0x1c0] sm:$0xff]
  %v76 = vld [vmem:[%s0 + $0x1c8] sm:$0xff]
  %v77 = vld [vmem:[%s0 + $0x1d0] sm:$0xff]
  %v78 = vld [vmem:[%s0 + $0x1d8] sm:$0xff]
  %v79 = vld [vmem:[%s0 + $0x1e0] sm:$0xff]
  %v80 = vld [vmem:[%s0 + $0x1e8] sm:$0xff]
  %v81 = vld [vmem:[%s0 + $0x1f0] sm:$0xff]
  %v82 = vld [vmem:[%s0 + $0x1f8] sm:$0xff]
  %v83 = vld [vmem:[%s0 + $0x200] sm:$0xff]
  %v84 = vld [vmem:[%s0 + $0x208] sm:$0xff]
  %v85 = vld [vmem:[%s0 + $0x210] sm:$0xff]
  %v86 = vld [vmem:[%s0 + $0x218] sm:$0xff]
  %v87 = vld [vmem:[%s0 + $0x220] sm:$0xff]
  %v88 = vld [vmem:[%s0 + $0x228] sm:$0xff]
  %v89 = vld [vmem:[%s0 + $0x230] sm:$0xff]
  %v90 = vld [vmem:[%s0 + $0x238] sm:$0xff]
  %vm91 = vcmask 588800
  %v93 = vsel %vm91, %v17, 0
  %v96 = vsel %vm91, %v18, 0
  %98 = vmatprep.subr.mxu0 %v20
  %99 = vmatpush1.msra.mxu0 %v19
  %100 = vmatprep.subr.mxu0 %v28
  %101 = vmatpush1.msra.mxu0 %v27
  %102 = vmatprep.subr.mxu0 %v36
  %103 = vmatpush1.msra.mxu0 %v35
  %104 = vmatprep.subr.mxu0 %v44
  %105 = vmatpush1.msra.mxu0 %v43
  %106 = vmatprep.subr.mxu0 %v52
  %107 = vmatpush1.msra.mxu0 %v51
  %108 = vmatprep.subr.mxu0 %v60
  %109 = vmatpush1.msra.mxu0 %v59
  %110 = vmatprep.subr.mxu0 %v68
  %111 = vmatpush1.msra.mxu0 %v67
  %112 = vmatprep.subr.mxu0 %v76
  %113 = vmatpush1.msra.mxu0 %v75
  %114 = vmatprep.subr.mxu0 %v84
  %115 = vmatpush1.msra.mxu0 %v83
  %116 = vmatprep.subr.mxu0 0.0
  %117 = vmatpush1.msra.mxu0 0.0
  %118 = vmatprep.subr.mxu0 0.0
  %119 = vmatpush1.msra.mxu0 0.0
  %120 = vmatprep.subr.mxu0 0.0
  %121 = vmatpush1.msra.mxu0 0.0
  %122 = vmatprep.subr.mxu0 0.0
  %123 = vmatpush1.msra.mxu0 0.0
  %124 = vmatprep.subr.mxu0 0.0
  %125 = vmatpush1.msra.mxu0 0.0
  %126 = vmatprep.subr.mxu0 0.0
  %127 = vmatpush1.msra.mxu0 0.0
  %128 = vmatprep.subr.mxu0 0.0
  %129 = vmatpush1.msra.mxu0 0.0
  %130 = vmatprep.subr.mxu0 0.0
  %131 = vmatpush1.msra.mxu0 0.0
  %132 = vmatprep.subr.mxu0 0.0
  %133 = vmatpush1.msra.mxu0 0.0
  %134 = vmatprep.subr.mxu0 0.0
  %135 = vmatpush1.msra.mxu0 0.0
  %136 = vmatprep.subr.mxu0 0.0
  %137 = vmatpush1.msra.mxu0 0.0
  %138 = vmatprep.subr.mxu0 0.0
  %139 = vmatpush1.msra.mxu0 0.0
  %140 = vmatprep.subr.mxu0 0.0
  %141 = vmatpush1.msra.mxu0 0.0
  %142 = vmatprep.subr.mxu0 0.0
  %143 = vmatpush1.msra.mxu0 0.0
  %144 = vmatprep.subr.mxu0 0.0
  %145 = vmatpush1.msra.mxu0 0.0
  %146 = vmatprep.subr.mxu0 0.0
  %147 = vmatpush1.msra.mxu0 0.0
  %148 = vmatprep.subr.mxu0 0.0
  %149 = vmatpush1.msra.mxu0 0.0
  %150 = vmatprep.subr.mxu0 0.0
  %151 = vmatpush1.msra.mxu0 0.0
  %152 = vmatprep.subr.mxu0 0.0
  %153 = vmatpush1.msra.mxu0 0.0
  %154 = vmatprep.subr.mxu0 0.0
  %155 = vmatpush1.msra.mxu0 0.0
  %156 = vmatprep.subr.mxu0 0.0
  %157 = vmatpush1.msra.mxu0 0.0
  %158 = vmatprep.subr.mxu0 0.0
  %159 = vmatpush1.msra.mxu0 0.0
  %160 = vmatprep.subr.mxu0 0.0
  %161 = vmatpush1.msra.mxu0 0.0
  %162 = vmatprep.mubr.f32.mxu0 0.0
  %163 = vmatmul.mubr.f32.gmra.mrb[0].mxu0 %v93
  %v164 = vpop.f32.mrb[0].mxu0
  %v165 = vadd.f32 0.0, %v164
  %v166 = vpop.f32.mrb[0].mxu0
  %v167 = vadd.f32 0.0, %v166
  %168 = vmatprep.mubr.f32.mxu0 0.0
  %169 = vmatmul.mubr.f32.gmra.mrb[0].mxu0 %v96
  %v170 = vpop.f32.mrb[0].mxu0
  %v171 = vadd.f32 0.0, %v170
  %v172 = vpop.f32.mrb[0].mxu0
  %v173 = vadd.f32 0.0, %v172
  %174 = vdwg.mxu0
  %175 = vmatprep.subr.mxu0 %v22
  %176 = vmatpush1.msra.mxu0 %v21
  %177 = vmatprep.subr.mxu0 %v30
  %178 = vmatpush1.msra.mxu0 %v29
  %179 = vmatprep.subr.mxu0 %v38
  %180 = vmatpush1.msra.mxu0 %v37
  %181 = vmatprep.subr.mxu0 %v46
  %182 = vmatpush1.msra.mxu0 %v45
  %183 = vmatprep.subr.mxu0 %v54
  %184 = vmatpush1.msra.mxu0 %v53
  %185 = vmatprep.subr.mxu0 %v62
  %186 = vmatpush1.msra.mxu0 %v61
  %187 = vmatprep.subr.mxu0 %v70
  %188 = vmatpush1.msra.mxu0 %v69
  %189 = vmatprep.subr.mxu0 %v78
  %190 = vmatpush1.msra.mxu0 %v77
  %191 = vmatprep.subr.mxu0 %v86
  %192 = vmatpush1.msra.mxu0 %v85
  %193 = vmatprep.subr.mxu0 0.0
  %194 = vmatpush1.msra.mxu0 0.0
  %195 = vmatprep.subr.mxu0 0.0
  %196 = vmatpush1.msra.mxu0 0.0
  %197 = vmatprep.subr.mxu0 0.0
  %198 = vmatpush1.msra.mxu0 0.0
  %199 = vmatprep.subr.mxu0 0.0
  %200 = vmatpush1.msra.mxu0 0.0
  %201 = vmatprep.subr.mxu0 0.0
  %202 = vmatpush1.msra.mxu0 0.0
  %203 = vmatprep.subr.mxu0 0.0
  %204 = vmatpush1.msra.mxu0 0.0
  %205 = vmatprep.subr.mxu0 0.0
  %206 = vmatpush1.msra.mxu0 0.0
  %207 = vmatprep.subr.mxu0 0.0
  %208 = vmatpush1.msra.mxu0 0.0
  %209 = vmatprep.subr.mxu0 0.0
  %210 = vmatpush1.msra.mxu0 0.0
  %211 = vmatprep.subr.mxu0 0.0
  %212 = vmatpush1.msra.mxu0 0.0
  %213 = vmatprep.subr.mxu0 0.0
  %214 = vmatpush1.msra.mxu0 0.0
  %215 = vmatprep.subr.mxu0 0.0
  %216 = vmatpush1.msra.mxu0 0.0
  %217 = vmatprep.subr.mxu0 0.0
  %218 = vmatpush1.msra.mxu0 0.0
  %219 = vmatprep.subr.mxu0 0.0
  %220 = vmatpush1.msra.mxu0 0.0
  %221 = vmatprep.subr.mxu0 0.0
  %222 = vmatpush1.msra.mxu0 0.0
  %223 = vmatprep.subr.mxu0 0.0
  %224 = vmatpush1.msra.mxu0 0.0
  %225 = vmatprep.subr.mxu0 0.0
  %226 = vmatpush1.msra.mxu0 0.0
  %227 = vmatprep.subr.mxu0 0.0
  %228 = vmatpush1.msra.mxu0 0.0
  %229 = vmatprep.subr.mxu0 0.0
  %230 = vmatpush1.msra.mxu0 0.0
  %231 = vmatprep.subr.mxu0 0.0
  %232 = vmatpush1.msra.mxu0 0.0
  %233 = vmatprep.subr.mxu0 0.0
  %234 = vmatpush1.msra.mxu0 0.0
  %235 = vmatprep.subr.mxu0 0.0
  %236 = vmatpush1.msra.mxu0 0.0
  %237 = vmatprep.subr.mxu0 0.0
  %238 = vmatpush1.msra.mxu0 0.0
  %239 = vmatprep.mubr.f32.mxu0 0.0
  %240 = vmatmul.mubr.f32.gmra.mrb[0].mxu0 %v93
  %v241 = vpop.f32.mrb[0].mxu0
  %v242 = vadd.f32 0.0, %v241
  %v243 = vpop.f32.mrb[0].mxu0
  %v244 = vadd.f32 0.0, %v243
  %245 = vmatprep.mubr.f32.mxu0 0.0
  %246 = vmatmul.mubr.f32.gmra.mrb[0].mxu0 %v96
  %v247 = vpop.f32.mrb[0].mxu0
  %v248 = vadd.f32 0.0, %v247
  %v249 = vpop.f32.mrb[0].mxu0
  %v250 = vadd.f32 0.0, %v249
  %251 = vdwg.mxu0
  %252 = vmatprep.subr.mxu0 %v24
  %253 = vmatpush1.msra.mxu0 %v23
  %254 = vmatprep.subr.mxu0 %v32
  %255 = vmatpush1.msra.mxu0 %v31
  %256 = vmatprep.subr.mxu0 %v40
  %257 = vmatpush1.msra.mxu0 %v39
  %258 = vmatprep.subr.mxu0 %v48
  %259 = vmatpush1.msra.mxu0 %v47
  %260 = vmatprep.subr.mxu0 %v56
  %261 = vmatpush1.msra.mxu0 %v55
  %262 = vmatprep.subr.mxu0 %v64
  %263 = vmatpush1.msra.mxu0 %v63
  %264 = vmatprep.subr.mxu0 %v72
  %265 = vmatpush1.msra.mxu0 %v71
  %266 = vmatprep.subr.mxu0 %v80
  %267 = vmatpush1.msra.mxu0 %v79
  %268 = vmatprep.subr.mxu0 %v88
  %269 = vmatpush1.msra.mxu0 %v87
  %270 = vmatprep.subr.mxu0 0.0
  %271 = vmatpush1.msra.mxu0 0.0
  %272 = vmatprep.subr.mxu0 0.0
  %273 = vmatpush1.msra.mxu0 0.0
  %274 = vmatprep.subr.mxu0 0.0
  %275 = vmatpush1.msra.mxu0 0.0
  %276 = vmatprep.subr.mxu0 0.0
  %277 = vmatpush1.msra.mxu0 0.0
  %278 = vmatprep.subr.mxu0 0.0
  %279 = vmatpush1.msra.mxu0 0.0
  %280 = vmatprep.subr.mxu0 0.0
  %281 = vmatpush1.msra.mxu0 0.0
  %282 = vmatprep.subr.mxu0 0.0
  %283 = vmatpush1.msra.mxu0 0.0
  %284 = vmatprep.subr.mxu0 0.0
  %285 = vmatpush1.msra.mxu0 0.0
  %286 = vmatprep.subr.mxu0 0.0
  %287 = vmatpush1.msra.mxu0 0.0
  %288 = vmatprep.subr.mxu0 0.0
  %289 = vmatpush1.msra.mxu0 0.0
  %290 = vmatprep.subr.mxu0 0.0
  %291 = vmatpush1.msra.mxu0 0.0
  %292 = vmatprep.subr.mxu0 0.0
  %293 = vmatpush1.msra.mxu0 0.0
  %294 = vmatprep.subr.mxu0 0.0
  %295 = vmatpush1.msra.mxu0 0.0
  %296 = vmatprep.subr.mxu0 0.0
  %297 = vmatpush1.msra.mxu0 0.0
  %298 = vmatprep.subr.mxu0 0.0
  %299 = vmatpush1.msra.mxu0 0.0
  %300 = vmatprep.subr.mxu0 0.0
  %301 = vmatpush1.msra.mxu0 0.0
  %302 = vmatprep.subr.mxu0 0.0
  %303 = vmatpush1.msra.mxu0 0.0
  %304 = vmatprep.subr.mxu0 0.0
  %305 = vmatpush1.msra.mxu0 0.0
  %306 = vmatprep.subr.mxu0 0.0
  %307 = vmatpush1.msra.mxu0 0.0
  %308 = vmatprep.subr.mxu0 0.0
  %309 = vmatpush1.msra.mxu0 0.0
  %310 = vmatprep.subr.mxu0 0.0
  %311 = vmatpush1.msra.mxu0 0.0
  %312 = vmatprep.subr.mxu0 0.0
  %313 = vmatpush1.msra.mxu0 0.0
  %314 = vmatprep.subr.mxu0 0.0
  %315 = vmatpush1.msra.mxu0 0.0
  %316 = vmatprep.mubr.f32.mxu0 0.0
  %317 = vmatmul.mubr.f32.gmra.mrb[0].mxu0 %v93
  %v318 = vpop.f32.mrb[0].mxu0
  %v319 = vadd.f32 0.0, %v318
  %v320 = vpop.f32.mrb[0].mxu0
  %v321 = vadd.f32 0.0, %v320
  %322 = vmatprep.mubr.f32.mxu0 0.0
  %323 = vmatmul.mubr.f32.gmra.mrb[0].mxu0 %v96
  %v324 = vpop.f32.mrb[0].mxu0
  %v325 = vadd.f32 0.0, %v324
  %v326 = vpop.f32.mrb[0].mxu0
  %v327 = vadd.f32 0.0, %v326
  %328 = vdwg.mxu0
  %329 = vmatprep.subr.mxu0 %v26
  %330 = vmatpush1.msra.mxu0 %v25
  %331 = vmatprep.subr.mxu0 %v34
  %332 = vmatpush1.msra.mxu0 %v33
  %333 = vmatprep.subr.mxu0 %v42
  %334 = vmatpush1.msra.mxu0 %v41
  %335 = vmatprep.subr.mxu0 %v50
  %336 = vmatpush1.msra.mxu0 %v49
  %337 = vmatprep.subr.mxu0 %v58
  %338 = vmatpush1.msra.mxu0 %v57
  %339 = vmatprep.subr.mxu0 %v66
  %340 = vmatpush1.msra.mxu0 %v65
  %341 = vmatprep.subr.mxu0 %v74
  %342 = vmatpush1.msra.mxu0 %v73
  %343 = vmatprep.subr.mxu0 %v82
  %344 = vmatpush1.msra.mxu0 %v81
  %345 = vmatprep.subr.mxu0 %v90
  %346 = vmatpush1.msra.mxu0 %v89
  %347 = vmatprep.subr.mxu0 0.0
  %348 = vmatpush1.msra.mxu0 0.0
  %349 = vmatprep.subr.mxu0 0.0
  %350 = vmatpush1.msra.mxu0 0.0
  %351 = vmatprep.subr.mxu0 0.0
  %352 = vmatpush1.msra.mxu0 0.0
  %353 = vmatprep.subr.mxu0 0.0
  %354 = vmatpush1.msra.mxu0 0.0
  %355 = vmatprep.subr.mxu0 0.0
  %356 = vmatpush1.msra.mxu0 0.0
  %357 = vmatprep.subr.mxu0 0.0
  %358 = vmatpush1.msra.mxu0 0.0
  %359 = vmatprep.subr.mxu0 0.0
  %360 = vmatpush1.msra.mxu0 0.0
  %361 = vmatprep.subr.mxu0 0.0
  %362 = vmatpush1.msra.mxu0 0.0
  %363 = vmatprep.subr.mxu0 0.0
  %364 = vmatpush1.msra.mxu0 0.0
  %365 = vmatprep.subr.mxu0 0.0
  %366 = vmatpush1.msra.mxu0 0.0
  %367 = vmatprep.subr.mxu0 0.0
  %368 = vmatpush1.msra.mxu0 0.0
  %369 = vmatprep.subr.mxu0 0.0
  %370 = vmatpush1.msra.mxu0 0.0
  %371 = vmatprep.subr.mxu0 0.0
  %372 = vmatpush1.msra.mxu0 0.0
  %373 = vmatprep.subr.mxu0 0.0
  %374 = vmatpush1.msra.mxu0 0.0
  %375 = vmatprep.subr.mxu0 0.0
  %376 = vmatpush1.msra.mxu0 0.0
  %377 = vmatprep.subr.mxu0 0.0
  %378 = vmatpush1.msra.mxu0 0.0
  %379 = vmatprep.subr.mxu0 0.0
  %380 = vmatpush1.msra.mxu0 0.0
  %381 = vmatprep.subr.mxu0 0.0
  %382 = vmatpush1.msra.mxu0 0.0
  %383 = vmatprep.subr.mxu0 0.0
  %384 = vmatpush1.msra.mxu0 0.0
  %385 = vmatprep.subr.mxu0 0.0
  %386 = vmatpush1.msra.mxu0 0.0
  %387 = vmatprep.subr.mxu0 0.0
  %388 = vmatpush1.msra.mxu0 0.0
  %389 = vmatprep.subr.mxu0 0.0
  %390 = vmatpush1.msra.mxu0 0.0
  %391 = vmatprep.subr.mxu0 0.0
  %392 = vmatpush1.msra.mxu0 0.0
  %393 = vmatprep.mubr.f32.mxu0 0.0
  %394 = vmatmul.mubr.f32.gmra.mrb[0].mxu0 %v93
  %v395 = vpop.f32.mrb[0].mxu0
  %v396 = vadd.f32 0.0, %v395
  %v397 = vpop.f32.mrb[0].mxu0
  %v398 = vadd.f32 0.0, %v397
  %399 = vmatprep.mubr.f32.mxu0 0.0
  %400 = vmatmul.mubr.f32.gmra.mrb[0].mxu0 %v96
  %v401 = vpop.f32.mrb[0].mxu0
  %v402 = vadd.f32 0.0, %v401
  %v403 = vpop.f32.mrb[0].mxu0
  %v404 = vadd.f32 0.0, %v403
  %405 = vdwg.mxu0
  %s406 = scalar_lea.vmem %s0, 576
  %v407 = vld [vmem:[%s406] sm:$0xff]
  %v408 = vld [vmem:[%s406 + $0x8] sm:$0xff]
  %v409 = vld [vmem:[%s406 + $0x10] sm:$0xff]
  %v410 = vld [vmem:[%s406 + $0x18] sm:$0xff]
  %v411 = vld [vmem:[%s406 + $0x20] sm:$0xff]
  %v412 = vld [vmem:[%s406 + $0x28] sm:$0xff]
  %v413 = vld [vmem:[%s406 + $0x30] sm:$0xff]
  %v414 = vld [vmem:[%s406 + $0x38] sm:$0xff]
  %v415 = vld [vmem:[%s406 + $0x40] sm:$0xff]
  %v416 = vld [vmem:[%s406 + $0x48] sm:$0xff]
  %v417 = vld [vmem:[%s406 + $0x50] sm:$0xff]
  %v418 = vld [vmem:[%s406 + $0x58] sm:$0xff]
  %v419 = vld [vmem:[%s406 + $0x60] sm:$0xff]
  %v420 = vld [vmem:[%s406 + $0x68] sm:$0xff]
  %v421 = vld [vmem:[%s406 + $0x70] sm:$0xff]
  %v422 = vld [vmem:[%s406 + $0x78] sm:$0xff]
  %v423 = vld [vmem:[%s406 + $0x80] sm:$0xff]
  %v424 = vld [vmem:[%s406 + $0x88] sm:$0xff]
  %v425 = vld [vmem:[%s406 + $0x90] sm:$0xff]
  %v426 = vld [vmem:[%s406 + $0x98] sm:$0xff]
  %v427 = vld [vmem:[%s406 + $0xa0] sm:$0xff]
  %v428 = vld [vmem:[%s406 + $0xa8] sm:$0xff]
  %v429 = vld [vmem:[%s406 + $0xb0] sm:$0xff]
  %v430 = vld [vmem:[%s406 + $0xb8] sm:$0xff]
  %v431 = vld [vmem:[%s406 + $0xc0] sm:$0xff]
  %v432 = vld [vmem:[%s406 + $0xc8] sm:$0xff]
  %v433 = vld [vmem:[%s406 + $0xd0] sm:$0xff]
  %v434 = vld [vmem:[%s406 + $0xd8] sm:$0xff]
  %v435 = vld [vmem:[%s406 + $0xe0] sm:$0xff]
  %v436 = vld [vmem:[%s406 + $0xe8] sm:$0xff]
  %v437 = vld [vmem:[%s406 + $0xf0] sm:$0xff]
  %v438 = vld [vmem:[%s406 + $0xf8] sm:$0xff]
  %v439 = vld [vmem:[%s406 + $0x100] sm:$0xff]
  %v440 = vld [vmem:[%s406 + $0x108] sm:$0xff]
  %v441 = vld [vmem:[%s406 + $0x110] sm:$0xff]
  %v442 = vld [vmem:[%s406 + $0x118] sm:$0xff]
  %v443 = vld [vmem:[%s406 + $0x120] sm:$0xff]
  %v444 = vld [vmem:[%s406 + $0x128] sm:$0xff]
  %v445 = vld [vmem:[%s406 + $0x130] sm:$0xff]
  %v446 = vld [vmem:[%s406 + $0x138] sm:$0xff]
  %v447 = vld [vmem:[%s406 + $0x140] sm:$0xff]
  %v448 = vld [vmem:[%s406 + $0x148] sm:$0xff]
  %v449 = vld [vmem:[%s406 + $0x150] sm:$0xff]
  %v450 = vld [vmem:[%s406 + $0x158] sm:$0xff]
  %v451 = vld [vmem:[%s406 + $0x160] sm:$0xff]
  %v452 = vld [vmem:[%s406 + $0x168] sm:$0xff]
  %v453 = vld [vmem:[%s406 + $0x170] sm:$0xff]
  %v454 = vld [vmem:[%s406 + $0x178] sm:$0xff]
  %v455 = vld [vmem:[%s406 + $0x180] sm:$0xff]
  %v456 = vld [vmem:[%s406 + $0x188] sm:$0xff]
  %v457 = vld [vmem:[%s406 + $0x190] sm:$0xff]
  %v458 = vld [vmem:[%s406 + $0x198] sm:$0xff]
  %v459 = vld [vmem:[%s406 + $0x1a0] sm:$0xff]
  %v460 = vld [vmem:[%s406 + $0x1a8] sm:$0xff]
  %v461 = vld [vmem:[%s406 + $0x1b0] sm:$0xff]
  %v462 = vld [vmem:[%s406 + $0x1b8] sm:$0xff]
  %v463 = vld [vmem:[%s406 + $0x1c0] sm:$0xff]
  %v464 = vld [vmem:[%s406 + $0x1c8] sm:$0xff]
  %v465 = vld [vmem:[%s406 + $0x1d0] sm:$0xff]
  %v466 = vld [vmem:[%s406 + $0x1d8] sm:$0xff]
  %v467 = vld [vmem:[%s406 + $0x1e0] sm:$0xff]
  %v468 = vld [vmem:[%s406 + $0x1e8] sm:$0xff]
  %v469 = vld [vmem:[%s406 + $0x1f0] sm:$0xff]
  %v470 = vld [vmem:[%s406 + $0x1f8] sm:$0xff]
  %v471 = vld [vmem:[%s406 + $0x200] sm:$0xff]
  %v472 = vld [vmem:[%s406 + $0x208] sm:$0xff]
  %v473 = vld [vmem:[%s406 + $0x210] sm:$0xff]
  %v474 = vld [vmem:[%s406 + $0x218] sm:$0xff]
  %v475 = vld [vmem:[%s406 + $0x220] sm:$0xff]
  %v476 = vld [vmem:[%s406 + $0x228] sm:$0xff]
  %v477 = vld [vmem:[%s406 + $0x230] sm:$0xff]
  %v478 = vld [vmem:[%s406 + $0x238] sm:$0xff]
  %479 = vmatprep.subr.mxu0 %v408
  %480 = vmatpush1.msra.mxu0 %v407
  %481 = vmatprep.subr.mxu0 %v416
  %482 = vmatpush1.msra.mxu0 %v415
  %483 = vmatprep.subr.mxu0 %v424
  %484 = vmatpush1.msra.mxu0 %v423
  %485 = vmatprep.subr.mxu0 %v432
  %486 = vmatpush1.msra.mxu0 %v431
  %487 = vmatprep.subr.mxu0 %v440
  %488 = vmatpush1.msra.mxu0 %v439
  %489 = vmatprep.subr.mxu0 %v448
  %490 = vmatpush1.msra.mxu0 %v447
  %491 = vmatprep.subr.mxu0 %v456
  %492 = vmatpush1.msra.mxu0 %v455
  %493 = vmatprep.subr.mxu0 %v464
  %494 = vmatpush1.msra.mxu0 %v463
  %495 = vmatprep.subr.mxu0 %v472
  %496 = vmatpush1.msra.mxu0 %v471
  %497 = vmatprep.subr.mxu0 0.0
  %498 = vmatpush1.msra.mxu0 0.0
  %499 = vmatprep.subr.mxu0 0.0
  %500 = vmatpush1.msra.mxu0 0.0
  %501 = vmatprep.subr.mxu0 0.0
  %502 = vmatpush1.msra.mxu0 0.0
  %503 = vmatprep.subr.mxu0 0.0
  %504 = vmatpush1.msra.mxu0 0.0
  %505 = vmatprep.subr.mxu0 0.0
  %506 = vmatpush1.msra.mxu0 0.0
  %507 = vmatprep.subr.mxu0 0.0
  %508 = vmatpush1.msra.mxu0 0.0
  %509 = vmatprep.subr.mxu0 0.0
  %510 = vmatpush1.msra.mxu0 0.0
  %511 = vmatprep.subr.mxu0 0.0
  %512 = vmatpush1.msra.mxu0 0.0
  %513 = vmatprep.subr.mxu0 0.0
  %514 = vmatpush1.msra.mxu0 0.0
  %515 = vmatprep.subr.mxu0 0.0
  %516 = vmatpush1.msra.mxu0 0.0
  %517 = vmatprep.subr.mxu0 0.0
  %518 = vmatpush1.msra.mxu0 0.0
  %519 = vmatprep.subr.mxu0 0.0
  %520 = vmatpush1.msra.mxu0 0.0
  %521 = vmatprep.subr.mxu0 0.0
  %522 = vmatpush1.msra.mxu0 0.0
  %523 = vmatprep.subr.mxu0 0.0
  %524 = vmatpush1.msra.mxu0 0.0
  %525 = vmatprep.subr.mxu0 0.0
  %526 = vmatpush1.msra.mxu0 0.0
  %527 = vmatprep.subr.mxu0 0.0
  %528 = vmatpush1.msra.mxu0 0.0
  %529 = vmatprep.subr.mxu0 0.0
  %530 = vmatpush1.msra.mxu0 0.0
  %531 = vmatprep.subr.mxu0 0.0
  %532 = vmatpush1.msra.mxu0 0.0
  %533 = vmatprep.subr.mxu0 0.0
  %534 = vmatpush1.msra.mxu0 0.0
  %535 = vmatprep.subr.mxu0 0.0
  %536 = vmatpush1.msra.mxu0 0.0
  %537 = vmatprep.subr.mxu0 0.0
  %538 = vmatpush1.msra.mxu0 0.0
  %539 = vmatprep.subr.mxu0 0.0
  %540 = vmatpush1.msra.mxu0 0.0
  %541 = vmatprep.subr.mxu0 0.0
  %542 = vmatpush1.msra.mxu0 0.0
  %543 = vmatprep.mubr.f32.mxu0 0.0
  %544 = vmatmul.mubr.f32.gmra.mrb[0].mxu0 %v93
  %v545 = vpop.f32.mrb[0].mxu0
  %v546 = vadd.f32 0.0, %v545
  %v547 = vpop.f32.mrb[0].mxu0
  %v548 = vadd.f32 0.0, %v547
  %549 = vmatprep.mubr.f32.mxu0 0.0
  %550 = vmatmul.mubr.f32.gmra.mrb[0].mxu0 %v96
  %v551 = vpop.f32.mrb[0].mxu0
  %v552 = vadd.f32 0.0, %v551
  %v553 = vpop.f32.mrb[0].mxu0
  %v554 = vadd.f32 0.0, %v553
  %555 = vdwg.mxu0
  %556 = vmatprep.subr.mxu0 %v410
  %557 = vmatpush1.msra.mxu0 %v409
  %558 = vmatprep.subr.mxu0 %v418
  %559 = vmatpush1.msra.mxu0 %v417
  %560 = vmatprep.subr.mxu0 %v426
  %561 = vmatpush1.msra.mxu0 %v425
  %562 = vmatprep.subr.mxu0 %v434
  %563 = vmatpush1.msra.mxu0 %v433
  %564 = vmatprep.subr.mxu0 %v442
  %565 = vmatpush1.msra.mxu0 %v441
  %566 = vmatprep.subr.mxu0 %v450
  %567 = vmatpush1.msra.mxu0 %v449
  %568 = vmatprep.subr.mxu0 %v458
  %569 = vmatpush1.msra.mxu0 %v457
  %570 = vmatprep.subr.mxu0 %v466
  %571 = vmatpush1.msra.mxu0 %v465
  %572 = vmatprep.subr.mxu0 %v474
  %573 = vmatpush1.msra.mxu0 %v473
  %574 = vmatprep.subr.mxu0 0.0
  %575 = vmatpush1.msra.mxu0 0.0
  %576 = vmatprep.subr.mxu0 0.0
  %577 = vmatpush1.msra.mxu0 0.0
  %578 = vmatprep.subr.mxu0 0.0
  %579 = vmatpush1.msra.mxu0 0.0
  %580 = vmatprep.subr.mxu0 0.0
  %581 = vmatpush1.msra.mxu0 0.0
  %582 = vmatprep.subr.mxu0 0.0
  %583 = vmatpush1.msra.mxu0 0.0
  %584 = vmatprep.subr.mxu0 0.0
  %585 = vmatpush1.msra.mxu0 0.0
  %586 = vmatprep.subr.mxu0 0.0
  %587 = vmatpush1.msra.mxu0 0.0
  %588 = vmatprep.subr.mxu0 0.0
  %589 = vmatpush1.msra.mxu0 0.0
  %590 = vmatprep.subr.mxu0 0.0
  %591 = vmatpush1.msra.mxu0 0.0
  %592 = vmatprep.subr.mxu0 0.0
  %593 = vmatpush1.msra.mxu0 0.0
  %594 = vmatprep.subr.mxu0 0.0
  %595 = vmatpush1.msra.mxu0 0.0
  %596 = vmatprep.subr.mxu0 0.0
  %597 = vmatpush1.msra.mxu0 0.0
  %598 = vmatprep.subr.mxu0 0.0
  %599 = vmatpush1.msra.mxu0 0.0
  %600 = vmatprep.subr.mxu0 0.0
  %601 = vmatpush1.msra.mxu0 0.0
  %602 = vmatprep.subr.mxu0 0.0
  %603 = vmatpush1.msra.mxu0 0.0
  %604 = vmatprep.subr.mxu0 0.0
  %605 = vmatpush1.msra.mxu0 0.0
  %606 = vmatprep.subr.mxu0 0.0
  %607 = vmatpush1.msra.mxu0 0.0
  %608 = vmatprep.subr.mxu0 0.0
  %609 = vmatpush1.msra.mxu0 0.0
  %610 = vmatprep.subr.mxu0 0.0
  %611 = vmatpush1.msra.mxu0 0.0
  %612 = vmatprep.subr.mxu0 0.0
  %613 = vmatpush1.msra.mxu0 0.0
  %614 = vmatprep.subr.mxu0 0.0
  %615 = vmatpush1.msra.mxu0 0.0
  %616 = vmatprep.subr.mxu0 0.0
  %617 = vmatpush1.msra.mxu0 0.0
  %618 = vmatprep.subr.mxu0 0.0
  %619 = vmatpush1.msra.mxu0 0.0
  %620 = vmatprep.mubr.f32.mxu0 0.0
  %621 = vmatmul.mubr.f32.gmra.mrb[0].mxu0 %v93
  %v622 = vpop.f32.mrb[0].mxu0
  %v623 = vadd.f32 0.0, %v622
  %v624 = vpop.f32.mrb[0].mxu0
  %v625 = vadd.f32 0.0, %v624
  %626 = vmatprep.mubr.f32.mxu0 0.0
  %627 = vmatmul.mubr.f32.gmra.mrb[0].mxu0 %v96
  %v628 = vpop.f32.mrb[0].mxu0
  %v629 = vadd.f32 0.0, %v628
  %v630 = vpop.f32.mrb[0].mxu0
  %v631 = vadd.f32 0.0, %v630
  %632 = vdwg.mxu0
  %633 = vmatprep.subr.mxu0 %v412
  %634 = vmatpush1.msra.mxu0 %v411
  %635 = vmatprep.subr.mxu0 %v420
  %636 = vmatpush1.msra.mxu0 %v419
  %637 = vmatprep.subr.mxu0 %v428
  %638 = vmatpush1.msra.mxu0 %v427
  %639 = vmatprep.subr.mxu0 %v436
  %640 = vmatpush1.msra.mxu0 %v435
  %641 = vmatprep.subr.mxu0 %v444
  %642 = vmatpush1.msra.mxu0 %v443
  %643 = vmatprep.subr.mxu0 %v452
  %644 = vmatpush1.msra.mxu0 %v451
  %645 = vmatprep.subr.mxu0 %v460
  %646 = vmatpush1.msra.mxu0 %v459
  %647 = vmatprep.subr.mxu0 %v468
  %648 = vmatpush1.msra.mxu0 %v467
  %649 = vmatprep.subr.mxu0 %v476
  %650 = vmatpush1.msra.mxu0 %v475
  %651 = vmatprep.subr.mxu0 0.0
  %652 = vmatpush1.msra.mxu0 0.0
  %653 = vmatprep.subr.mxu0 0.0
  %654 = vmatpush1.msra.mxu0 0.0
  %655 = vmatprep.subr.mxu0 0.0
  %656 = vmatpush1.msra.mxu0 0.0
  %657 = vmatprep.subr.mxu0 0.0
  %658 = vmatpush1.msra.mxu0 0.0
  %659 = vmatprep.subr.mxu0 0.0
  %660 = vmatpush1.msra.mxu0 0.0
  %661 = vmatprep.subr.mxu0 0.0
  %662 = vmatpush1.msra.mxu0 0.0
  %663 = vmatprep.subr.mxu0 0.0
  %664 = vmatpush1.msra.mxu0 0.0
  %665 = vmatprep.subr.mxu0 0.0
  %666 = vmatpush1.msra.mxu0 0.0
  %667 = vmatprep.subr.mxu0 0.0
  %668 = vmatpush1.msra.mxu0 0.0
  %669 = vmatprep.subr.mxu0 0.0
  %670 = vmatpush1.msra.mxu0 0.0
  %671 = vmatprep.subr.mxu0 0.0
  %672 = vmatpush1.msra.mxu0 0.0
  %673 = vmatprep.subr.mxu0 0.0
  %674 = vmatpush1.msra.mxu0 0.0
  %675 = vmatprep.subr.mxu0 0.0
  %676 = vmatpush1.msra.mxu0 0.0
  %677 = vmatprep.subr.mxu0 0.0
  %678 = vmatpush1.msra.mxu0 0.0
  %679 = vmatprep.subr.mxu0 0.0
  %680 = vmatpush1.msra.mxu0 0.0
  %681 = vmatprep.subr.mxu0 0.0
  %682 = vmatpush1.msra.mxu0 0.0
  %683 = vmatprep.subr.mxu0 0.0
  %684 = vmatpush1.msra.mxu0 0.0
  %685 = vmatprep.subr.mxu0 0.0
  %686 = vmatpush1.msra.mxu0 0.0
  %687 = vmatprep.subr.mxu0 0.0
  %688 = vmatpush1.msra.mxu0 0.0
  %689 = vmatprep.subr.mxu0 0.0
  %690 = vmatpush1.msra.mxu0 0.0
  %691 = vmatprep.subr.mxu0 0.0
  %692 = vmatpush1.msra.mxu0 0.0
  %693 = vmatprep.subr.mxu0 0.0
  %694 = vmatpush1.msra.mxu0 0.0
  %695 = vmatprep.subr.mxu0 0.0
  %696 = vmatpush1.msra.mxu0 0.0
  %697 = vmatprep.mubr.f32.mxu0 0.0
  %698 = vmatmul.mubr.f32.gmra.mrb[0].mxu0 %v93
  %v699 = vpop.f32.mrb[0].mxu0
  %v700 = vadd.f32 0.0, %v699
  %v701 = vpop.f32.mrb[0].mxu0
  %v702 = vadd.f32 0.0, %v701
  %703 = vmatprep.mubr.f32.mxu0 0.0
  %704 = vmatmul.mubr.f32.gmra.mrb[0].mxu0 %v96
  %v705 = vpop.f32.mrb[0].mxu0
  %v706 = vadd.f32 0.0, %v705
  %v707 = vpop.f32.mrb[0].mxu0
  %v708 = vadd.f32 0.0, %v707
  %709 = vdwg.mxu0
  %710 = vmatprep.subr.mxu0 %v414
  %711 = vmatpush1.msra.mxu0 %v413
  %712 = vmatprep.subr.mxu0 %v422
  %713 = vmatpush1.msra.mxu0 %v421
  %714 = vmatprep.subr.mxu0 %v430
  %715 = vmatpush1.msra.mxu0 %v429
  %716 = vmatprep.subr.mxu0 %v438
  %717 = vmatpush1.msra.mxu0 %v437
  %718 = vmatprep.subr.mxu0 %v446
  %719 = vmatpush1.msra.mxu0 %v445
  %720 = vmatprep.subr.mxu0 %v454
  %721 = vmatpush1.msra.mxu0 %v453
  %722 = vmatprep.subr.mxu0 %v462
  %723 = vmatpush1.msra.mxu0 %v461
  %724 = vmatprep.subr.mxu0 %v470
  %725 = vmatpush1.msra.mxu0 %v469
  %726 = vmatprep.subr.mxu0 %v478
  %727 = vmatpush1.msra.mxu0 %v477
  %728 = vmatprep.subr.mxu0 0.0
  %729 = vmatpush1.msra.mxu0 0.0
  %730 = vmatprep.subr.mxu0 0.0
  %731 = vmatpush1.msra.mxu0 0.0
  %732 = vmatprep.subr.mxu0 0.0
  %733 = vmatpush1.msra.mxu0 0.0
  %734 = vmatprep.subr.mxu0 0.0
  %735 = vmatpush1.msra.mxu0 0.0
  %736 = vmatprep.subr.mxu0 0.0
  %737 = vmatpush1.msra.mxu0 0.0
  %738 = vmatprep.subr.mxu0 0.0
  %739 = vmatpush1.msra.mxu0 0.0
  %740 = vmatprep.subr.mxu0 0.0
  %741 = vmatpush1.msra.mxu0 0.0
  %742 = vmatprep.subr.mxu0 0.0
  %743 = vmatpush1.msra.mxu0 0.0
  %744 = vmatprep.subr.mxu0 0.0
  %745 = vmatpush1.msra.mxu0 0.0
  %746 = vmatprep.subr.mxu0 0.0
  %747 = vmatpush1.msra.mxu0 0.0
  %748 = vmatprep.subr.mxu0 0.0
  %749 = vmatpush1.msra.mxu0 0.0
  %750 = vmatprep.subr.mxu0 0.0
  %751 = vmatpush1.msra.mxu0 0.0
  %752 = vmatprep.subr.mxu0 0.0
  %753 = vmatpush1.msra.mxu0 0.0
  %754 = vmatprep.subr.mxu0 0.0
  %755 = vmatpush1.msra.mxu0 0.0
  %756 = vmatprep.subr.mxu0 0.0
  %757 = vmatpush1.msra.mxu0 0.0
  %758 = vmatprep.subr.mxu0 0.0
  %759 = vmatpush1.msra.mxu0 0.0
  %760 = vmatprep.subr.mxu0 0.0
  %761 = vmatpush1.msra.mxu0 0.0
  %762 = vmatprep.subr.mxu0 0.0
  %763 = vmatpush1.msra.mxu0 0.0
  %764 = vmatprep.subr.mxu0 0.0
  %765 = vmatpush1.msra.mxu0 0.0
  %766 = vmatprep.subr.mxu0 0.0
  %767 = vmatpush1.msra.mxu0 0.0
  %768 = vmatprep.subr.mxu0 0.0
  %769 = vmatpush1.msra.mxu0 0.0
  %770 = vmatprep.subr.mxu0 0.0
  %771 = vmatpush1.msra.mxu0 0.0
  %772 = vmatprep.subr.mxu0 0.0
  %773 = vmatpush1.msra.mxu0 0.0
  %774 = vmatprep.mubr.f32.mxu0 0.0
  %775 = vmatmul.mubr.f32.gmra.mrb[0].mxu0 %v93
  %v776 = vpop.f32.mrb[0].mxu0
  %v777 = vadd.f32 0.0, %v776
  %v778 = vpop.f32.mrb[0].mxu0
  %v779 = vadd.f32 0.0, %v778
  %780 = vmatprep.mubr.f32.mxu0 0.0
  %781 = vmatmul.mubr.f32.gmra.mrb[0].mxu0 %v96
  %v782 = vpop.f32.mrb[0].mxu0
  %v783 = vadd.f32 0.0, %v782
  %v784 = vpop.f32.mrb[0].mxu0
  %v785 = vadd.f32 0.0, %v784
  %786 = vdwg.mxu0
  %v787 = vmax.f32 %v165, %v546
  %v788 = vmax.f32 %v167, %v548
  %v789 = vmax.f32 %v242, %v623
  %v790 = vmax.f32 %v244, %v625
  %v791 = vmax.f32 %v319, %v700
  %v792 = vmax.f32 %v321, %v702
  %v793 = vmax.f32 %v396, %v777
  %v794 = vmax.f32 %v398, %v779
  %v795 = vmax.f32 %v171, %v552
  %v796 = vmax.f32 %v173, %v554
  %v797 = vmax.f32 %v248, %v629
  %v798 = vmax.f32 %v250, %v631
  %v799 = vmax.f32 %v325, %v706
  %v800 = vmax.f32 %v327, %v708
  %v801 = vmax.f32 %v402, %v783
  %v802 = vmax.f32 %v404, %v785
  %s803 = scalar_lea.vmem %s0, 1152
  %v804 = vld [vmem:[%s803] sm:$0xff]
  %v805 = vld [vmem:[%s803 + $0x8] sm:$0xff]
  %v806 = vld [vmem:[%s803 + $0x10] sm:$0xff]
  %v807 = vld [vmem:[%s803 + $0x18] sm:$0xff]
  %v808 = vld [vmem:[%s803 + $0x20] sm:$0xff]
  %v809 = vld [vmem:[%s803 + $0x28] sm:$0xff]
  %v810 = vld [vmem:[%s803 + $0x30] sm:$0xff]
  %v811 = vld [vmem:[%s803 + $0x38] sm:$0xff]
  %v812 = vld [vmem:[%s803 + $0x40] sm:$0xff]
  %v813 = vld [vmem:[%s803 + $0x48] sm:$0xff]
  %v814 = vld [vmem:[%s803 + $0x50] sm:$0xff]
  %v815 = vld [vmem:[%s803 + $0x58] sm:$0xff]
  %v816 = vld [vmem:[%s803 + $0x60] sm:$0xff]
  %v817 = vld [vmem:[%s803 + $0x68] sm:$0xff]
  %v818 = vld [vmem:[%s803 + $0x70] sm:$0xff]
  %v819 = vld [vmem:[%s803 + $0x78] sm:$0xff]
  %v820 = vld [vmem:[%s803 + $0x80] sm:$0xff]
  %v821 = vld [vmem:[%s803 + $0x88] sm:$0xff]
  %v822 = vld [vmem:[%s803 + $0x90] sm:$0xff]
  %v823 = vld [vmem:[%s803 + $0x98] sm:$0xff]
  %v824 = vld [vmem:[%s803 + $0xa0] sm:$0xff]
  %v825 = vld [vmem:[%s803 + $0xa8] sm:$0xff]
  %v826 = vld [vmem:[%s803 + $0xb0] sm:$0xff]
  %v827 = vld [vmem:[%s803 + $0xb8] sm:$0xff]
  %v828 = vld [vmem:[%s803 + $0xc0] sm:$0xff]
  %v829 = vld [vmem:[%s803 + $0xc8] sm:$0xff]
  %v830 = vld [vmem:[%s803 + $0xd0] sm:$0xff]
  %v831 = vld [vmem:[%s803 + $0xd8] sm:$0xff]
  %v832 = vld [vmem:[%s803 + $0xe0] sm:$0xff]
  %v833 = vld [vmem:[%s803 + $0xe8] sm:$0xff]
  %v834 = vld [vmem:[%s803 + $0xf0] sm:$0xff]
  %v835 = vld [vmem:[%s803 + $0xf8] sm:$0xff]
  %v836 = vld [vmem:[%s803 + $0x100] sm:$0xff]
  %v837 = vld [vmem:[%s803 + $0x108] sm:$0xff]
  %v838 = vld [vmem:[%s803 + $0x110] sm:$0xff]
  %v839 = vld [vmem:[%s803 + $0x118] sm:$0xff]
  %v840 = vld [vmem:[%s803 + $0x120] sm:$0xff]
  %v841 = vld [vmem:[%s803 + $0x128] sm:$0xff]
  %v842 = vld [vmem:[%s803 + $0x130] sm:$0xff]
  %v843 = vld [vmem:[%s803 + $0x138] sm:$0xff]
  %v844 = vld [vmem:[%s803 + $0x140] sm:$0xff]
  %v845 = vld [vmem:[%s803 + $0x148] sm:$0xff]
  %v846 = vld [vmem:[%s803 + $0x150] sm:$0xff]
  %v847 = vld [vmem:[%s803 + $0x158] sm:$0xff]
  %v848 = vld [vmem:[%s803 + $0x160] sm:$0xff]
  %v849 = vld [vmem:[%s803 + $0x168] sm:$0xff]
  %v850 = vld [vmem:[%s803 + $0x170] sm:$0xff]
  %v851 = vld [vmem:[%s803 + $0x178] sm:$0xff]
  %v852 = vld [vmem:[%s803 + $0x180] sm:$0xff]
  %v853 = vld [vmem:[%s803 + $0x188] sm:$0xff]
  %v854 = vld [vmem:[%s803 + $0x190] sm:$0xff]
  %v855 = vld [vmem:[%s803 + $0x198] sm:$0xff]
  %v856 = vld [vmem:[%s803 + $0x1a0] sm:$0xff]
  %v857 = vld [vmem:[%s803 + $0x1a8] sm:$0xff]
  %v858 = vld [vmem:[%s803 + $0x1b0] sm:$0xff]
  %v859 = vld [vmem:[%s803 + $0x1b8] sm:$0xff]
  %v860 = vld [vmem:[%s803 + $0x1c0] sm:$0xff]
  %v861 = vld [vmem:[%s803 + $0x1c8] sm:$0xff]
  %v862 = vld [vmem:[%s803 + $0x1d0] sm:$0xff]
  %v863 = vld [vmem:[%s803 + $0x1d8] sm:$0xff]
  %v864 = vld [vmem:[%s803 + $0x1e0] sm:$0xff]
  %v865 = vld [vmem:[%s803 + $0x1e8] sm:$0xff]
  %v866 = vld [vmem:[%s803 + $0x1f0] sm:$0xff]
  %v867 = vld [vmem:[%s803 + $0x1f8] sm:$0xff]
  %v868 = vld [vmem:[%s803 + $0x200] sm:$0xff]
  %v869 = vld [vmem:[%s803 + $0x208] sm:$0xff]
  %v870 = vld [vmem:[%s803 + $0x210] sm:$0xff]
  %v871 = vld [vmem:[%s803 + $0x218] sm:$0xff]
  %v872 = vld [vmem:[%s803 + $0x220] sm:$0xff]
  %v873 = vld [vmem:[%s803 + $0x228] sm:$0xff]
  %v874 = vld [vmem:[%s803 + $0x230] sm:$0xff]
  %v875 = vld [vmem:[%s803 + $0x238] sm:$0xff]
  %876 = vmatprep.subr.mxu0 %v805
  %877 = vmatpush1.msra.mxu0 %v804
  %878 = vmatprep.subr.mxu0 %v813
  %879 = vmatpush1.msra.mxu0 %v812
  %880 = vmatprep.subr.mxu0 %v821
  %881 = vmatpush1.msra.mxu0 %v820
  %882 = vmatprep.subr.mxu0 %v829
  %883 = vmatpush1.msra.mxu0 %v828
  %884 = vmatprep.subr.mxu0 %v837
  %885 = vmatpush1.msra.mxu0 %v836
  %886 = vmatprep.subr.mxu0 %v845
  %887 = vmatpush1.msra.mxu0 %v844
  %888 = vmatprep.subr.mxu0 %v853
  %889 = vmatpush1.msra.mxu0 %v852
  %890 = vmatprep.subr.mxu0 %v861
  %891 = vmatpush1.msra.mxu0 %v860
  %892 = vmatprep.subr.mxu0 %v869
  %893 = vmatpush1.msra.mxu0 %v868
  %894 = vmatprep.subr.mxu0 0.0
  %895 = vmatpush1.msra.mxu0 0.0
  %896 = vmatprep.subr.mxu0 0.0
  %897 = vmatpush1.msra.mxu0 0.0
  %898 = vmatprep.subr.mxu0 0.0
  %899 = vmatpush1.msra.mxu0 0.0
  %900 = vmatprep.subr.mxu0 0.0
  %901 = vmatpush1.msra.mxu0 0.0
  %902 = vmatprep.subr.mxu0 0.0
  %903 = vmatpush1.msra.mxu0 0.0
  %904 = vmatprep.subr.mxu0 0.0
  %905 = vmatpush1.msra.mxu0 0.0
  %906 = vmatprep.subr.mxu0 0.0
  %907 = vmatpush1.msra.mxu0 0.0
  %908 = vmatprep.subr.mxu0 0.0
  %909 = vmatpush1.msra.mxu0 0.0
  %910 = vmatprep.subr.mxu0 0.0
  %911 = vmatpush1.msra.mxu0 0.0
  %912 = vmatprep.subr.mxu0 0.0
  %913 = vmatpush1.msra.mxu0 0.0
  %914 = vmatprep.subr.mxu0 0.0
  %915 = vmatpush1.msra.mxu0 0.0
  %916 = vmatprep.subr.mxu0 0.0
  %917 = vmatpush1.msra.mxu0 0.0
  %918 = vmatprep.subr.mxu0 0.0
  %919 = vmatpush1.msra.mxu0 0.0
  %920 = vmatprep.subr.mxu0 0.0
  %921 = vmatpush1.msra.mxu0 0.0
  %922 = vmatprep.subr.mxu0 0.0
  %923 = vmatpush1.msra.mxu0 0.0
  %924 = vmatprep.subr.mxu0 0.0
  %925 = vmatpush1.msra.mxu0 0.0
  %926 = vmatprep.subr.mxu0 0.0
  %927 = vmatpush1.msra.mxu0 0.0
  %928 = vmatprep.subr.mxu0 0.0
  %929 = vmatpush1.msra.mxu0 0.0
  %930 = vmatprep.subr.mxu0 0.0
  %931 = vmatpush1.msra.mxu0 0.0
  %932 = vmatprep.subr.mxu0 0.0
  %933 = vmatpush1.msra.mxu0 0.0
  %934 = vmatprep.subr.mxu0 0.0
  %935 = vmatpush1.msra.mxu0 0.0
  %936 = vmatprep.subr.mxu0 0.0
  %937 = vmatpush1.msra.mxu0 0.0
  %938 = vmatprep.subr.mxu0 0.0
  %939 = vmatpush1.msra.mxu0 0.0
  %940 = vmatprep.mubr.f32.mxu0 0.0
  %941 = vmatmul.mubr.f32.gmra.mrb[0].mxu0 %v93
  %v942 = vpop.f32.mrb[0].mxu0
  %v943 = vadd.f32 0.0, %v942
  %v944 = vpop.f32.mrb[0].mxu0
  %v945 = vadd.f32 0.0, %v944
  %946 = vmatprep.mubr.f32.mxu0 0.0
  %947 = vmatmul.mubr.f32.gmra.mrb[0].mxu0 %v96
  %v948 = vpop.f32.mrb[0].mxu0
  %v949 = vadd.f32 0.0, %v948
  %v950 = vpop.f32.mrb[0].mxu0
  %v951 = vadd.f32 0.0, %v950
  %952 = vdwg.mxu0
  %953 = vmatprep.subr.mxu0 %v807
  %954 = vmatpush1.msra.mxu0 %v806
  %955 = vmatprep.subr.mxu0 %v815
  %956 = vmatpush1.msra.mxu0 %v814
  %957 = vmatprep.subr.mxu0 %v823
  %958 = vmatpush1.msra.mxu0 %v822
  %959 = vmatprep.subr.mxu0 %v831
  %960 = vmatpush1.msra.mxu0 %v830
  %961 = vmatprep.subr.mxu0 %v839
  %962 = vmatpush1.msra.mxu0 %v838
  %963 = vmatprep.subr.mxu0 %v847
  %964 = vmatpush1.msra.mxu0 %v846
  %965 = vmatprep.subr.mxu0 %v855
  %966 = vmatpush1.msra.mxu0 %v854
  %967 = vmatprep.subr.mxu0 %v863
  %968 = vmatpush1.msra.mxu0 %v862
  %969 = vmatprep.subr.mxu0 %v871
  %970 = vmatpush1.msra.mxu0 %v870
  %971 = vmatprep.subr.mxu0 0.0
  %972 = vmatpush1.msra.mxu0 0.0
  %973 = vmatprep.subr.mxu0 0.0
  %974 = vmatpush1.msra.mxu0 0.0
  %975 = vmatprep.subr.mxu0 0.0
  %976 = vmatpush1.msra.mxu0 0.0
  %977 = vmatprep.subr.mxu0 0.0
  %978 = vmatpush1.msra.mxu0 0.0
  %979 = vmatprep.subr.mxu0 0.0
  %980 = vmatpush1.msra.mxu0 0.0
  %981 = vmatprep.subr.mxu0 0.0
  %982 = vmatpush1.msra.mxu0 0.0
  %983 = vmatprep.subr.mxu0 0.0
  %984 = vmatpush1.msra.mxu0 0.0
  %985 = vmatprep.subr.mxu0 0.0
  %986 = vmatpush1.msra.mxu0 0.0
  %987 = vmatprep.subr.mxu0 0.0
  %988 = vmatpush1.msra.mxu0 0.0
  %989 = vmatprep.subr.mxu0 0.0
  %990 = vmatpush1.msra.mxu0 0.0
  %991 = vmatprep.subr.mxu0 0.0
  %992 = vmatpush1.msra.mxu0 0.0
  %993 = vmatprep.subr.mxu0 0.0
  %994 = vmatpush1.msra.mxu0 0.0
  %995 = vmatprep.subr.mxu0 0.0
  %996 = vmatpush1.msra.mxu0 0.0
  %997 = vmatprep.subr.mxu0 0.0
  %998 = vmatpush1.msra.mxu0 0.0
  %999 = vmatprep.subr.mxu0 0.0
  %1000 = vmatpush1.msra.mxu0 0.0
  %1001 = vmatprep.subr.mxu0 0.0
  %1002 = vmatpush1.msra.mxu0 0.0
  %1003 = vmatprep.subr.mxu0 0.0
  %1004 = vmatpush1.msra.mxu0 0.0
  %1005 = vmatprep.subr.mxu0 0.0
  %1006 = vmatpush1.msra.mxu0 0.0
  %1007 = vmatprep.subr.mxu0 0.0
  %1008 = vmatpush1.msra.mxu0 0.0
  %1009 = vmatprep.subr.mxu0 0.0
  %1010 = vmatpush1.msra.mxu0 0.0
  %1011 = vmatprep.subr.mxu0 0.0
  %1012 = vmatpush1.msra.mxu0 0.0
  %1013 = vmatprep.subr.mxu0 0.0
  %1014 = vmatpush1.msra.mxu0 0.0
  %1015 = vmatprep.subr.mxu0 0.0
  %1016 = vmatpush1.msra.mxu0 0.0
  %1017 = vmatprep.mubr.f32.mxu0 0.0
  %1018 = vmatmul.mubr.f32.gmra.mrb[0].mxu0 %v93
  %v1019 = vpop.f32.mrb[0].mxu0
  %v1020 = vadd.f32 0.0, %v1019
  %v1021 = vpop.f32.mrb[0].mxu0
  %v1022 = vadd.f32 0.0, %v1021
  %1023 = vmatprep.mubr.f32.mxu0 0.0
  %1024 = vmatmul.mubr.f32.gmra.mrb[0].mxu0 %v96
  %v1025 = vpop.f32.mrb[0].mxu0
  %v1026 = vadd.f32 0.0, %v1025
  %v1027 = vpop.f32.mrb[0].mxu0
  %v1028 = vadd.f32 0.0, %v1027
  %1029 = vdwg.mxu0
  %1030 = vmatprep.subr.mxu0 %v809
  %1031 = vmatpush1.msra.mxu0 %v808
  %1032 = vmatprep.subr.mxu0 %v817
  %1033 = vmatpush1.msra.mxu0 %v816
  %1034 = vmatprep.subr.mxu0 %v825
  %1035 = vmatpush1.msra.mxu0 %v824
  %1036 = vmatprep.subr.mxu0 %v833
  %1037 = vmatpush1.msra.mxu0 %v832
  %1038 = vmatprep.subr.mxu0 %v841
  %1039 = vmatpush1.msra.mxu0 %v840
  %1040 = vmatprep.subr.mxu0 %v849
  %1041 = vmatpush1.msra.mxu0 %v848
  %1042 = vmatprep.subr.mxu0 %v857
  %1043 = vmatpush1.msra.mxu0 %v856
  %1044 = vmatprep.subr.mxu0 %v865
  %1045 = vmatpush1.msra.mxu0 %v864
  %1046 = vmatprep.subr.mxu0 %v873
  %1047 = vmatpush1.msra.mxu0 %v872
  %1048 = vmatprep.subr.mxu0 0.0
  %1049 = vmatpush1.msra.mxu0 0.0
  %1050 = vmatprep.subr.mxu0 0.0
  %1051 = vmatpush1.msra.mxu0 0.0
  %1052 = vmatprep.subr.mxu0 0.0
  %1053 = vmatpush1.msra.mxu0 0.0
  %1054 = vmatprep.subr.mxu0 0.0
  %1055 = vmatpush1.msra.mxu0 0.0
  %1056 = vmatprep.subr.mxu0 0.0
  %1057 = vmatpush1.msra.mxu0 0.0
  %1058 = vmatprep.subr.mxu0 0.0
  %1059 = vmatpush1.msra.mxu0 0.0
  %1060 = vmatprep.subr.mxu0 0.0
  %1061 = vmatpush1.msra.mxu0 0.0
  %1062 = vmatprep.subr.mxu0 0.0
  %1063 = vmatpush1.msra.mxu0 0.0
  %1064 = vmatprep.subr.mxu0 0.0
  %1065 = vmatpush1.msra.mxu0 0.0
  %1066 = vmatprep.subr.mxu0 0.0
  %1067 = vmatpush1.msra.mxu0 0.0
  %1068 = vmatprep.subr.mxu0 0.0
  %1069 = vmatpush1.msra.mxu0 0.0
  %1070 = vmatprep.subr.mxu0 0.0
  %1071 = vmatpush1.msra.mxu0 0.0
  %1072 = vmatprep.subr.mxu0 0.0
  %1073 = vmatpush1.msra.mxu0 0.0
  %1074 = vmatprep.subr.mxu0 0.0
  %1075 = vmatpush1.msra.mxu0 0.0
  %1076 = vmatprep.subr.mxu0 0.0
  %1077 = vmatpush1.msra.mxu0 0.0
  %1078 = vmatprep.subr.mxu0 0.0
  %1079 = vmatpush1.msra.mxu0 0.0
  %1080 = vmatprep.subr.mxu0 0.0
  %1081 = vmatpush1.msra.mxu0 0.0
  %1082 = vmatprep.subr.mxu0 0.0
  %1083 = vmatpush1.msra.mxu0 0.0
  %1084 = vmatprep.subr.mxu0 0.0
  %1085 = vmatpush1.msra.mxu0 0.0
  %1086 = vmatprep.subr.mxu0 0.0
  %1087 = vmatpush1.msra.mxu0 0.0
  %1088 = vmatprep.subr.mxu0 0.0
  %1089 = vmatpush1.msra.mxu0 0.0
  %1090 = vmatprep.subr.mxu0 0.0
  %1091 = vmatpush1.msra.mxu0 0.0
  %1092 = vmatprep.subr.mxu0 0.0
  %1093 = vmatpush1.msra.mxu0 0.0
  %1094 = vmatprep.mubr.f32.mxu0 0.0
  %1095 = vmatmul.mubr.f32.gmra.mrb[0].mxu0 %v93
  %v1096 = vpop.f32.mrb[0].mxu0
  %v1097 = vadd.f32 0.0, %v1096
  %v1098 = vpop.f32.mrb[0].mxu0
  %v1099 = vadd.f32 0.0, %v1098
  %1100 = vmatprep.mubr.f32.mxu0 0.0
  %1101 = vmatmul.mubr.f32.gmra.mrb[0].mxu0 %v96
  %v1102 = vpop.f32.mrb[0].mxu0
  %v1103 = vadd.f32 0.0, %v1102
  %v1104 = vpop.f32.mrb[0].mxu0
  %v1105 = vadd.f32 0.0, %v1104
  %1106 = vdwg.mxu0
  %1107 = vmatprep.subr.mxu0 %v811
  %1108 = vmatpush1.msra.mxu0 %v810
  %1109 = vmatprep.subr.mxu0 %v819
  %1110 = vmatpush1.msra.mxu0 %v818
  %1111 = vmatprep.subr.mxu0 %v827
  %1112 = vmatpush1.msra.mxu0 %v826
  %1113 = vmatprep.subr.mxu0 %v835
  %1114 = vmatpush1.msra.mxu0 %v834
  %1115 = vmatprep.subr.mxu0 %v843
  %1116 = vmatpush1.msra.mxu0 %v842
  %1117 = vmatprep.subr.mxu0 %v851
  %1118 = vmatpush1.msra.mxu0 %v850
  %1119 = vmatprep.subr.mxu0 %v859
  %1120 = vmatpush1.msra.mxu0 %v858
  %1121 = vmatprep.subr.mxu0 %v867
  %1122 = vmatpush1.msra.mxu0 %v866
  %1123 = vmatprep.subr.mxu0 %v875
  %1124 = vmatpush1.msra.mxu0 %v874
  %1125 = vmatprep.subr.mxu0 0.0
  %1126 = vmatpush1.msra.mxu0 0.0
  %1127 = vmatprep.subr.mxu0 0.0
  %1128 = vmatpush1.msra.mxu0 0.0
  %1129 = vmatprep.subr.mxu0 0.0
  %1130 = vmatpush1.msra.mxu0 0.0
  %1131 = vmatprep.subr.mxu0 0.0
  %1132 = vmatpush1.msra.mxu0 0.0
  %1133 = vmatprep.subr.mxu0 0.0
  %1134 = vmatpush1.msra.mxu0 0.0
  %1135 = vmatprep.subr.mxu0 0.0
  %1136 = vmatpush1.msra.mxu0 0.0
  %1137 = vmatprep.subr.mxu0 0.0
  %1138 = vmatpush1.msra.mxu0 0.0
  %1139 = vmatprep.subr.mxu0 0.0
  %1140 = vmatpush1.msra.mxu0 0.0
  %1141 = vmatprep.subr.mxu0 0.0
  %1142 = vmatpush1.msra.mxu0 0.0
  %1143 = vmatprep.subr.mxu0 0.0
  %1144 = vmatpush1.msra.mxu0 0.0
  %1145 = vmatprep.subr.mxu0 0.0
  %1146 = vmatpush1.msra.mxu0 0.0
  %1147 = vmatprep.subr.mxu0 0.0
  %1148 = vmatpush1.msra.mxu0 0.0
  %1149 = vmatprep.subr.mxu0 0.0
  %1150 = vmatpush1.msra.mxu0 0.0
  %1151 = vmatprep.subr.mxu0 0.0
  %1152 = vmatpush1.msra.mxu0 0.0
  %1153 = vmatprep.subr.mxu0 0.0
  %1154 = vmatpush1.msra.mxu0 0.0
  %1155 = vmatprep.subr.mxu0 0.0
  %1156 = vmatpush1.msra.mxu0 0.0
  %1157 = vmatprep.subr.mxu0 0.0
  %1158 = vmatpush1.msra.mxu0 0.0
  %1159 = vmatprep.subr.mxu0 0.0
  %1160 = vmatpush1.msra.mxu0 0.0
  %1161 = vmatprep.subr.mxu0 0.0
  %1162 = vmatpush1.msra.mxu0 0.0
  %1163 = vmatprep.subr.mxu0 0.0
  %1164 = vmatpush1.msra.mxu0 0.0
  %1165 = vmatprep.subr.mxu0 0.0
  %1166 = vmatpush1.msra.mxu0 0.0
  %1167 = vmatprep.subr.mxu0 0.0
  %1168 = vmatpush1.msra.mxu0 0.0
  %1169 = vmatprep.subr.mxu0 0.0
  %1170 = vmatpush1.msra.mxu0 0.0
  %1171 = vmatprep.mubr.f32.mxu0 0.0
  %1172 = vmatmul.mubr.f32.gmra.mrb[0].mxu0 %v93
  %v1173 = vpop.f32.mrb[0].mxu0
  %v1174 = vadd.f32 0.0, %v1173
  %v1175 = vpop.f32.mrb[0].mxu0
  %v1176 = vadd.f32 0.0, %v1175
  %1177 = vmatprep.mubr.f32.mxu0 0.0
  %1178 = vmatmul.mubr.f32.gmra.mrb[0].mxu0 %v96
  %v1179 = vpop.f32.mrb[0].mxu0
  %v1180 = vadd.f32 0.0, %v1179
  %v1181 = vpop.f32.mrb[0].mxu0
  %v1182 = vadd.f32 0.0, %v1181
  %1183 = vdwg.mxu0
  %v1184 = vmax.f32 %v787, %v943
  %v1185 = vmax.f32 %v788, %v945
  %v1186 = vmax.f32 %v789, %v1020
  %v1187 = vmax.f32 %v790, %v1022
  %v1188 = vmax.f32 %v791, %v1097
  %v1189 = vmax.f32 %v792, %v1099
  %v1190 = vmax.f32 %v793, %v1174
  %v1191 = vmax.f32 %v794, %v1176
  %v1192 = vmax.f32 %v795, %v949
  %v1193 = vmax.f32 %v796, %v951
  %v1194 = vmax.f32 %v797, %v1026
  %v1195 = vmax.f32 %v798, %v1028
  %v1196 = vmax.f32 %v799, %v1103
  %v1197 = vmax.f32 %v800, %v1105
  %v1198 = vmax.f32 %v801, %v1180
  %v1199 = vmax.f32 %v802, %v1182
  %s1200 = scalar_lea.vmem %s0, 1728
  %v1201 = vld [vmem:[%s1200] sm:$0xff]
  %v1202 = vld [vmem:[%s1200 + $0x8] sm:$0xff]
  %v1203 = vld [vmem:[%s1200 + $0x10] sm:$0xff]
  %v1204 = vld [vmem:[%s1200 + $0x18] sm:$0xff]
  %v1205 = vld [vmem:[%s1200 + $0x20] sm:$0xff]
  %v1206 = vld [vmem:[%s1200 + $0x28] sm:$0xff]
  %v1207 = vld [vmem:[%s1200 + $0x30] sm:$0xff]
  %v1208 = vld [vmem:[%s1200 + $0x38] sm:$0xff]
  %v1209 = vld [vmem:[%s1200 + $0x40] sm:$0xff]
  %v1210 = vld [vmem:[%s1200 + $0x48] sm:$0xff]
  %v1211 = vld [vmem:[%s1200 + $0x50] sm:$0xff]
  %v1212 = vld [vmem:[%s1200 + $0x58] sm:$0xff]
  %v1213 = vld [vmem:[%s1200 + $0x60] sm:$0xff]
  %v1214 = vld [vmem:[%s1200 + $0x68] sm:$0xff]
  %v1215 = vld [vmem:[%s1200 + $0x70] sm:$0xff]
  %v1216 = vld [vmem:[%s1200 + $0x78] sm:$0xff]
  %v1217 = vld [vmem:[%s1200 + $0x80] sm:$0xff]
  %v1218 = vld [vmem:[%s1200 + $0x88] sm:$0xff]
  %v1219 = vld [vmem:[%s1200 + $0x90] sm:$0xff]
  %v1220 = vld [vmem:[%s1200 + $0x98] sm:$0xff]
  %v1221 = vld [vmem:[%s1200 + $0xa0] sm:$0xff]
  %v1222 = vld [vmem:[%s1200 + $0xa8] sm:$0xff]
  %v1223 = vld [vmem:[%s1200 + $0xb0] sm:$0xff]
  %v1224 = vld [vmem:[%s1200 + $0xb8] sm:$0xff]
  %v1225 = vld [vmem:[%s1200 + $0xc0] sm:$0xff]
  %v1226 = vld [vmem:[%s1200 + $0xc8] sm:$0xff]
  %v1227 = vld [vmem:[%s1200 + $0xd0] sm:$0xff]
  %v1228 = vld [vmem:[%s1200 + $0xd8] sm:$0xff]
  %v1229 = vld [vmem:[%s1200 + $0xe0] sm:$0xff]
  %v1230 = vld [vmem:[%s1200 + $0xe8] sm:$0xff]
  %v1231 = vld [vmem:[%s1200 + $0xf0] sm:$0xff]
  %v1232 = vld [vmem:[%s1200 + $0xf8] sm:$0xff]
  %v1233 = vld [vmem:[%s1200 + $0x100] sm:$0xff]
  %v1234 = vld [vmem:[%s1200 + $0x108] sm:$0xff]
  %v1235 = vld [vmem:[%s1200 + $0x110] sm:$0xff]
  %v1236 = vld [vmem:[%s1200 + $0x118] sm:$0xff]
  %v1237 = vld [vmem:[%s1200 + $0x120] sm:$0xff]
  %v1238 = vld [vmem:[%s1200 + $0x128] sm:$0xff]
  %v1239 = vld [vmem:[%s1200 + $0x130] sm:$0xff]
  %v1240 = vld [vmem:[%s1200 + $0x138] sm:$0xff]
  %v1241 = vld [vmem:[%s1200 + $0x140] sm:$0xff]
  %v1242 = vld [vmem:[%s1200 + $0x148] sm:$0xff]
  %v1243 = vld [vmem:[%s1200 + $0x150] sm:$0xff]
  %v1244 = vld [vmem:[%s1200 + $0x158] sm:$0xff]
  %v1245 = vld [vmem:[%s1200 + $0x160] sm:$0xff]
  %v1246 = vld [vmem:[%s1200 + $0x168] sm:$0xff]
  %v1247 = vld [vmem:[%s1200 + $0x170] sm:$0xff]
  %v1248 = vld [vmem:[%s1200 + $0x178] sm:$0xff]
  %v1249 = vld [vmem:[%s1200 + $0x180] sm:$0xff]
  %v1250 = vld [vmem:[%s1200 + $0x188] sm:$0xff]
  %v1251 = vld [vmem:[%s1200 + $0x190] sm:$0xff]
  %v1252 = vld [vmem:[%s1200 + $0x198] sm:$0xff]
  %v1253 = vld [vmem:[%s1200 + $0x1a0] sm:$0xff]
  %v1254 = vld [vmem:[%s1200 + $0x1a8] sm:$0xff]
  %v1255 = vld [vmem:[%s1200 + $0x1b0] sm:$0xff]
  %v1256 = vld [vmem:[%s1200 + $0x1b8] sm:$0xff]
  %v1257 = vld [vmem:[%s1200 + $0x1c0] sm:$0xff]
  %v1258 = vld [vmem:[%s1200 + $0x1c8] sm:$0xff]
  %v1259 = vld [vmem:[%s1200 + $0x1d0] sm:$0xff]
  %v1260 = vld [vmem:[%s1200 + $0x1d8] sm:$0xff]
  %v1261 = vld [vmem:[%s1200 + $0x1e0] sm:$0xff]
  %v1262 = vld [vmem:[%s1200 + $0x1e8] sm:$0xff]
  %v1263 = vld [vmem:[%s1200 + $0x1f0] sm:$0xff]
  %v1264 = vld [vmem:[%s1200 + $0x1f8] sm:$0xff]
  %v1265 = vld [vmem:[%s1200 + $0x200] sm:$0xff]
  %v1266 = vld [vmem:[%s1200 + $0x208] sm:$0xff]
  %v1267 = vld [vmem:[%s1200 + $0x210] sm:$0xff]
  %v1268 = vld [vmem:[%s1200 + $0x218] sm:$0xff]
  %v1269 = vld [vmem:[%s1200 + $0x220] sm:$0xff]
  %v1270 = vld [vmem:[%s1200 + $0x228] sm:$0xff]
  %v1271 = vld [vmem:[%s1200 + $0x230] sm:$0xff]
  %v1272 = vld [vmem:[%s1200 + $0x238] sm:$0xff]
  %1273 = vmatprep.subr.mxu0 %v1202
  %1274 = vmatpush1.msra.mxu0 %v1201
  %1275 = vmatprep.subr.mxu0 %v1210
  %1276 = vmatpush1.msra.mxu0 %v1209
  %1277 = vmatprep.subr.mxu0 %v1218
  %1278 = vmatpush1.msra.mxu0 %v1217
  %1279 = vmatprep.subr.mxu0 %v1226
  %1280 = vmatpush1.msra.mxu0 %v1225
  %1281 = vmatprep.subr.mxu0 %v1234
  %1282 = vmatpush1.msra.mxu0 %v1233
  %1283 = vmatprep.subr.mxu0 %v1242
  %1284 = vmatpush1.msra.mxu0 %v1241
  %1285 = vmatprep.subr.mxu0 %v1250
  %1286 = vmatpush1.msra.mxu0 %v1249
  %1287 = vmatprep.subr.mxu0 %v1258
  %1288 = vmatpush1.msra.mxu0 %v1257
  %1289 = vmatprep.subr.mxu0 %v1266
  %1290 = vmatpush1.msra.mxu0 %v1265
  %1291 = vmatprep.subr.mxu0 0.0
  %1292 = vmatpush1.msra.mxu0 0.0
  %1293 = vmatprep.subr.mxu0 0.0
  %1294 = vmatpush1.msra.mxu0 0.0
  %1295 = vmatprep.subr.mxu0 0.0
  %1296 = vmatpush1.msra.mxu0 0.0
  %1297 = vmatprep.subr.mxu0 0.0
  %1298 = vmatpush1.msra.mxu0 0.0
  %1299 = vmatprep.subr.mxu0 0.0
  %1300 = vmatpush1.msra.mxu0 0.0
  %1301 = vmatprep.subr.mxu0 0.0
  %1302 = vmatpush1.msra.mxu0 0.0
  %1303 = vmatprep.subr.mxu0 0.0
  %1304 = vmatpush1.msra.mxu0 0.0
  %1305 = vmatprep.subr.mxu0 0.0
  %1306 = vmatpush1.msra.mxu0 0.0
  %1307 = vmatprep.subr.mxu0 0.0
  %1308 = vmatpush1.msra.mxu0 0.0
  %1309 = vmatprep.subr.mxu0 0.0
  %1310 = vmatpush1.msra.mxu0 0.0
  %1311 = vmatprep.subr.mxu0 0.0
  %1312 = vmatpush1.msra.mxu0 0.0
  %1313 = vmatprep.subr.mxu0 0.0
  %1314 = vmatpush1.msra.mxu0 0.0
  %1315 = vmatprep.subr.mxu0 0.0
  %1316 = vmatpush1.msra.mxu0 0.0
  %1317 = vmatprep.subr.mxu0 0.0
  %1318 = vmatpush1.msra.mxu0 0.0
  %1319 = vmatprep.subr.mxu0 0.0
  %1320 = vmatpush1.msra.mxu0 0.0
  %1321 = vmatprep.subr.mxu0 0.0
  %1322 = vmatpush1.msra.mxu0 0.0
  %1323 = vmatprep.subr.mxu0 0.0
  %1324 = vmatpush1.msra.mxu0 0.0
  %1325 = vmatprep.subr.mxu0 0.0
  %1326 = vmatpush1.msra.mxu0 0.0
  %1327 = vmatprep.subr.mxu0 0.0
  %1328 = vmatpush1.msra.mxu0 0.0
  %1329 = vmatprep.subr.mxu0 0.0
  %1330 = vmatpush1.msra.mxu0 0.0
  %1331 = vmatprep.subr.mxu0 0.0
  %1332 = vmatpush1.msra.mxu0 0.0
  %1333 = vmatprep.subr.mxu0 0.0
  %1334 = vmatpush1.msra.mxu0 0.0
  %1335 = vmatprep.subr.mxu0 0.0
  %1336 = vmatpush1.msra.mxu0 0.0
  %1337 = vmatprep.mubr.f32.mxu0 0.0
  %1338 = vmatmul.mubr.f32.gmra.mrb[0].mxu0 %v93
  %v1339 = vpop.f32.mrb[0].mxu0
  %v1340 = vadd.f32 0.0, %v1339
  %v1341 = vpop.f32.mrb[0].mxu0
  %v1342 = vadd.f32 0.0, %v1341
  %1343 = vmatprep.mubr.f32.mxu0 0.0
  %1344 = vmatmul.mubr.f32.gmra.mrb[0].mxu0 %v96
  %v1345 = vpop.f32.mrb[0].mxu0
  %v1346 = vadd.f32 0.0, %v1345
  %v1347 = vpop.f32.mrb[0].mxu0
  %v1348 = vadd.f32 0.0, %v1347
  %1349 = vdwg.mxu0
  %1350 = vmatprep.subr.mxu0 %v1204
  %1351 = vmatpush1.msra.mxu0 %v1203
  %1352 = vmatprep.subr.mxu0 %v1212
  %1353 = vmatpush1.msra.mxu0 %v1211
  %1354 = vmatprep.subr.mxu0 %v1220
  %1355 = vmatpush1.msra.mxu0 %v1219
  %1356 = vmatprep.subr.mxu0 %v1228
  %1357 = vmatpush1.msra.mxu0 %v1227
  %1358 = vmatprep.subr.mxu0 %v1236
  %1359 = vmatpush1.msra.mxu0 %v1235
  %1360 = vmatprep.subr.mxu0 %v1244
  %1361 = vmatpush1.msra.mxu0 %v1243
  %1362 = vmatprep.subr.mxu0 %v1252
  %1363 = vmatpush1.msra.mxu0 %v1251
  %1364 = vmatprep.subr.mxu0 %v1260
  %1365 = vmatpush1.msra.mxu0 %v1259
  %1366 = vmatprep.subr.mxu0 %v1268
  %1367 = vmatpush1.msra.mxu0 %v1267
  %1368 = vmatprep.subr.mxu0 0.0
  %1369 = vmatpush1.msra.mxu0 0.0
  %1370 = vmatprep.subr.mxu0 0.0
  %1371 = vmatpush1.msra.mxu0 0.0
  %1372 = vmatprep.subr.mxu0 0.0
  %1373 = vmatpush1.msra.mxu0 0.0
  %1374 = vmatprep.subr.mxu0 0.0
  %1375 = vmatpush1.msra.mxu0 0.0
  %1376 = vmatprep.subr.mxu0 0.0
  %1377 = vmatpush1.msra.mxu0 0.0
  %1378 = vmatprep.subr.mxu0 0.0
  %1379 = vmatpush1.msra.mxu0 0.0
  %1380 = vmatprep.subr.mxu0 0.0
  %1381 = vmatpush1.msra.mxu0 0.0
  %1382 = vmatprep.subr.mxu0 0.0
  %1383 = vmatpush1.msra.mxu0 0.0
  %1384 = vmatprep.subr.mxu0 0.0
  %1385 = vmatpush1.msra.mxu0 0.0
  %1386 = vmatprep.subr.mxu0 0.0
  %1387 = vmatpush1.msra.mxu0 0.0
  %1388 = vmatprep.subr.mxu0 0.0
  %1389 = vmatpush1.msra.mxu0 0.0
  %1390 = vmatprep.subr.mxu0 0.0
  %1391 = vmatpush1.msra.mxu0 0.0
  %1392 = vmatprep.subr.mxu0 0.0
  %1393 = vmatpush1.msra.mxu0 0.0
  %1394 = vmatprep.subr.mxu0 0.0
  %1395 = vmatpush1.msra.mxu0 0.0
  %1396 = vmatprep.subr.mxu0 0.0
  %1397 = vmatpush1.msra.mxu0 0.0
  %1398 = vmatprep.subr.mxu0 0.0
  %1399 = vmatpush1.msra.mxu0 0.0
  %1400 = vmatprep.subr.mxu0 0.0
  %1401 = vmatpush1.msra.mxu0 0.0
  %1402 = vmatprep.subr.mxu0 0.0
  %1403 = vmatpush1.msra.mxu0 0.0
  %1404 = vmatprep.subr.mxu0 0.0
  %1405 = vmatpush1.msra.mxu0 0.0
  %1406 = vmatprep.subr.mxu0 0.0
  %1407 = vmatpush1.msra.mxu0 0.0
  %1408 = vmatprep.subr.mxu0 0.0
  %1409 = vmatpush1.msra.mxu0 0.0
  %1410 = vmatprep.subr.mxu0 0.0
  %1411 = vmatpush1.msra.mxu0 0.0
  %1412 = vmatprep.subr.mxu0 0.0
  %1413 = vmatpush1.msra.mxu0 0.0
  %1414 = vmatprep.mubr.f32.mxu0 0.0
  %1415 = vmatmul.mubr.f32.gmra.mrb[0].mxu0 %v93
  %v1416 = vpop.f32.mrb[0].mxu0
  %v1417 = vadd.f32 0.0, %v1416
  %v1418 = vpop.f32.mrb[0].mxu0
  %v1419 = vadd.f32 0.0, %v1418
  %1420 = vmatprep.mubr.f32.mxu0 0.0
  %1421 = vmatmul.mubr.f32.gmra.mrb[0].mxu0 %v96
  %v1422 = vpop.f32.mrb[0].mxu0
  %v1423 = vadd.f32 0.0, %v1422
  %v1424 = vpop.f32.mrb[0].mxu0
  %v1425 = vadd.f32 0.0, %v1424
  %1426 = vdwg.mxu0
  %1427 = vmatprep.subr.mxu0 %v1206
  %1428 = vmatpush1.msra.mxu0 %v1205
  %1429 = vmatprep.subr.mxu0 %v1214
  %1430 = vmatpush1.msra.mxu0 %v1213
  %1431 = vmatprep.subr.mxu0 %v1222
  %1432 = vmatpush1.msra.mxu0 %v1221
  %1433 = vmatprep.subr.mxu0 %v1230
  %1434 = vmatpush1.msra.mxu0 %v1229
  %1435 = vmatprep.subr.mxu0 %v1238
  %1436 = vmatpush1.msra.mxu0 %v1237
  %1437 = vmatprep.subr.mxu0 %v1246
  %1438 = vmatpush1.msra.mxu0 %v1245
  %1439 = vmatprep.subr.mxu0 %v1254
  %1440 = vmatpush1.msra.mxu0 %v1253
  %1441 = vmatprep.subr.mxu0 %v1262
  %1442 = vmatpush1.msra.mxu0 %v1261
  %1443 = vmatprep.subr.mxu0 %v1270
  %1444 = vmatpush1.msra.mxu0 %v1269
  %1445 = vmatprep.subr.mxu0 0.0
  %1446 = vmatpush1.msra.mxu0 0.0
  %1447 = vmatprep.subr.mxu0 0.0
  %1448 = vmatpush1.msra.mxu0 0.0
  %1449 = vmatprep.subr.mxu0 0.0
  %1450 = vmatpush1.msra.mxu0 0.0
  %1451 = vmatprep.subr.mxu0 0.0
  %1452 = vmatpush1.msra.mxu0 0.0
  %1453 = vmatprep.subr.mxu0 0.0
  %1454 = vmatpush1.msra.mxu0 0.0
  %1455 = vmatprep.subr.mxu0 0.0
  %1456 = vmatpush1.msra.mxu0 0.0
  %1457 = vmatprep.subr.mxu0 0.0
  %1458 = vmatpush1.msra.mxu0 0.0
  %1459 = vmatprep.subr.mxu0 0.0
  %1460 = vmatpush1.msra.mxu0 0.0
  %1461 = vmatprep.subr.mxu0 0.0
  %1462 = vmatpush1.msra.mxu0 0.0
  %1463 = vmatprep.subr.mxu0 0.0
  %1464 = vmatpush1.msra.mxu0 0.0
  %1465 = vmatprep.subr.mxu0 0.0
  %1466 = vmatpush1.msra.mxu0 0.0
  %1467 = vmatprep.subr.mxu0 0.0
  %1468 = vmatpush1.msra.mxu0 0.0
  %1469 = vmatprep.subr.mxu0 0.0
  %1470 = vmatpush1.msra.mxu0 0.0
  %1471 = vmatprep.subr.mxu0 0.0
  %1472 = vmatpush1.msra.mxu0 0.0
  %1473 = vmatprep.subr.mxu0 0.0
  %1474 = vmatpush1.msra.mxu0 0.0
  %1475 = vmatprep.subr.mxu0 0.0
  %1476 = vmatpush1.msra.mxu0 0.0
  %1477 = vmatprep.subr.mxu0 0.0
  %1478 = vmatpush1.msra.mxu0 0.0
  %1479 = vmatprep.subr.mxu0 0.0
  %1480 = vmatpush1.msra.mxu0 0.0
  %1481 = vmatprep.subr.mxu0 0.0
  %1482 = vmatpush1.msra.mxu0 0.0
  %1483 = vmatprep.subr.mxu0 0.0
  %1484 = vmatpush1.msra.mxu0 0.0
  %1485 = vmatprep.subr.mxu0 0.0
  %1486 = vmatpush1.msra.mxu0 0.0
  %1487 = vmatprep.subr.mxu0 0.0
  %1488 = vmatpush1.msra.mxu0 0.0
  %1489 = vmatprep.subr.mxu0 0.0
  %1490 = vmatpush1.msra.mxu0 0.0
  %1491 = vmatprep.mubr.f32.mxu0 0.0
  %1492 = vmatmul.mubr.f32.gmra.mrb[0].mxu0 %v93
  %v1493 = vpop.f32.mrb[0].mxu0
  %v1494 = vadd.f32 0.0, %v1493
  %v1495 = vpop.f32.mrb[0].mxu0
  %v1496 = vadd.f32 0.0, %v1495
  %1497 = vmatprep.mubr.f32.mxu0 0.0
  %1498 = vmatmul.mubr.f32.gmra.mrb[0].mxu0 %v96
  %v1499 = vpop.f32.mrb[0].mxu0
  %v1500 = vadd.f32 0.0, %v1499
  %v1501 = vpop.f32.mrb[0].mxu0
  %v1502 = vadd.f32 0.0, %v1501
  %1503 = vdwg.mxu0
  %1504 = vmatprep.subr.mxu0 %v1208
  %1505 = vmatpush1.msra.mxu0 %v1207
  %1506 = vmatprep.subr.mxu0 %v1216
  %1507 = vmatpush1.msra.mxu0 %v1215
  %1508 = vmatprep.subr.mxu0 %v1224
  %1509 = vmatpush1.msra.mxu0 %v1223
  %1510 = vmatprep.subr.mxu0 %v1232
  %1511 = vmatpush1.msra.mxu0 %v1231
  %1512 = vmatprep.subr.mxu0 %v1240
  %1513 = vmatpush1.msra.mxu0 %v1239
  %1514 = vmatprep.subr.mxu0 %v1248
  %1515 = vmatpush1.msra.mxu0 %v1247
  %1516 = vmatprep.subr.mxu0 %v1256
  %1517 = vmatpush1.msra.mxu0 %v1255
  %1518 = vmatprep.subr.mxu0 %v1264
  %1519 = vmatpush1.msra.mxu0 %v1263
  %1520 = vmatprep.subr.mxu0 %v1272
  %1521 = vmatpush1.msra.mxu0 %v1271
  %1522 = vmatprep.subr.mxu0 0.0
  %1523 = vmatpush1.msra.mxu0 0.0
  %1524 = vmatprep.subr.mxu0 0.0
  %1525 = vmatpush1.msra.mxu0 0.0
  %1526 = vmatprep.subr.mxu0 0.0
  %1527 = vmatpush1.msra.mxu0 0.0
  %1528 = vmatprep.subr.mxu0 0.0
  %1529 = vmatpush1.msra.mxu0 0.0
  %1530 = vmatprep.subr.mxu0 0.0
  %1531 = vmatpush1.msra.mxu0 0.0
  %1532 = vmatprep.subr.mxu0 0.0
  %1533 = vmatpush1.msra.mxu0 0.0
  %1534 = vmatprep.subr.mxu0 0.0
  %1535 = vmatpush1.msra.mxu0 0.0
  %1536 = vmatprep.subr.mxu0 0.0
  %1537 = vmatpush1.msra.mxu0 0.0
  %1538 = vmatprep.subr.mxu0 0.0
  %1539 = vmatpush1.msra.mxu0 0.0
  %1540 = vmatprep.subr.mxu0 0.0
  %1541 = vmatpush1.msra.mxu0 0.0
  %1542 = vmatprep.subr.mxu0 0.0
  %1543 = vmatpush1.msra.mxu0 0.0
  %1544 = vmatprep.subr.mxu0 0.0
  %1545 = vmatpush1.msra.mxu0 0.0
  %1546 = vmatprep.subr.mxu0 0.0
  %1547 = vmatpush1.msra.mxu0 0.0
  %1548 = vmatprep.subr.mxu0 0.0
  %1549 = vmatpush1.msra.mxu0 0.0
  %1550 = vmatprep.subr.mxu0 0.0
  %1551 = vmatpush1.msra.mxu0 0.0
  %1552 = vmatprep.subr.mxu0 0.0
  %1553 = vmatpush1.msra.mxu0 0.0
  %1554 = vmatprep.subr.mxu0 0.0
  %1555 = vmatpush1.msra.mxu0 0.0
  %1556 = vmatprep.subr.mxu0 0.0
  %1557 = vmatpush1.msra.mxu0 0.0
  %1558 = vmatprep.subr.mxu0 0.0
  %1559 = vmatpush1.msra.mxu0 0.0
  %1560 = vmatprep.subr.mxu0 0.0
  %1561 = vmatpush1.msra.mxu0 0.0
  %1562 = vmatprep.subr.mxu0 0.0
  %1563 = vmatpush1.msra.mxu0 0.0
  %1564 = vmatprep.subr.mxu0 0.0
  %1565 = vmatpush1.msra.mxu0 0.0
  %1566 = vmatprep.subr.mxu0 0.0
  %1567 = vmatpush1.msra.mxu0 0.0
  %1568 = vmatprep.mubr.f32.mxu0 0.0
  %1569 = vmatmul.mubr.f32.gmra.mrb[0].mxu0 %v93
  %v1570 = vpop.f32.mrb[0].mxu0
  %v1571 = vadd.f32 0.0, %v1570
  %v1572 = vpop.f32.mrb[0].mxu0
  %v1573 = vadd.f32 0.0, %v1572
  %1574 = vmatprep.mubr.f32.mxu0 0.0
  %1575 = vmatmul.mubr.f32.gmra.mrb[0].mxu0 %v96
  %v1576 = vpop.f32.mrb[0].mxu0
  %v1577 = vadd.f32 0.0, %v1576
  %v1578 = vpop.f32.mrb[0].mxu0
  %v1579 = vadd.f32 0.0, %v1578
  %1580 = vdwg.mxu0
  %v1581 = vmax.f32 %v1184, %v1340
  %v1582 = vmax.f32 %v1185, %v1342
  %v1583 = vmax.f32 %v1186, %v1417
  %v1584 = vmax.f32 %v1187, %v1419
  %v1585 = vmax.f32 %v1188, %v1494
  %v1586 = vmax.f32 %v1189, %v1496
  %v1587 = vmax.f32 %v1190, %v1571
  %v1588 = vmax.f32 %v1191, %v1573
  %v1589 = vmax.f32 %v1192, %v1346
  %v1590 = vmax.f32 %v1193, %v1348
  %v1591 = vmax.f32 %v1194, %v1423
  %v1592 = vmax.f32 %v1195, %v1425
  %v1593 = vmax.f32 %v1196, %v1500
  %v1594 = vmax.f32 %v1197, %v1502
  %v1595 = vmax.f32 %v1198, %v1577
  %v1596 = vmax.f32 %v1199, %v1579
  %v1597 = vld [vmem:[%s2] sm:$0xff]
  %v1598 = vld [vmem:[%s2 + $0x8] sm:$0xf]
  %1600 = vset.pattern.permute.xlu0 0
  %1601 = vperm.xlu0 %1600, %v1597
  %v1602 = vpop.permute.xlu0 %1601
  %1605 = vset.pattern.permute.xlu0 0
  %1606 = vperm.xlu0 %1605, %v1598
  %v1607 = vpop.permute.xlu0 %1606
  %v1609 = vmul.f32 %v1581, %v1602
  %v1610 = vmul.f32 %v1582, %v1602
  %v1611 = vmul.f32 %v1583, %v1602
  %v1612 = vmul.f32 %v1584, %v1602
  %v1613 = vmul.f32 %v1585, %v1602
  %v1614 = vmul.f32 %v1586, %v1602
  %v1615 = vmul.f32 %v1587, %v1602
  %v1616 = vmul.f32 %v1588, %v1602
  %v1617 = vmul.f32 %v1589, %v1607
  %v1618 = vmul.f32 %v1590, %v1607
  %v1619 = vmul.f32 %v1591, %v1607
  %v1620 = vmul.f32 %v1592, %v1607
  %v1621 = vmul.f32 %v1593, %v1607
  %v1622 = vmul.f32 %v1594, %v1607
  %v1623 = vmul.f32 %v1595, %v1607
  %v1624 = vmul.f32 %v1596, %v1607
  %v1625 = vld [vmem:[%s3] sm:$0xff]
  %v1626 = vld [vmem:[%s3 + $0x8] sm:$0xf]
  %1628 = vset.pattern.permute.xlu0 0
  %1629 = vperm.xlu0 %1628, %v1625
  %v1630 = vpop.permute.xlu0 %1629
  %1633 = vset.pattern.permute.xlu0 0
  %1634 = vperm.xlu0 %1633, %v1626
  %v1635 = vpop.permute.xlu0 %1634
  %v1637 = vadd.f32 %v1609, %v1630
  %v1638 = vadd.f32 %v1610, %v1630
  %v1639 = vadd.f32 %v1611, %v1630
  %v1640 = vadd.f32 %v1612, %v1630
  %v1641 = vadd.f32 %v1613, %v1630
  %v1642 = vadd.f32 %v1614, %v1630
  %v1643 = vadd.f32 %v1615, %v1630
  %v1644 = vadd.f32 %v1616, %v1630
  %v1645 = vadd.f32 %v1617, %v1635
  %v1646 = vadd.f32 %v1618, %v1635
  %v1647 = vadd.f32 %v1619, %v1635
  %v1648 = vadd.f32 %v1620, %v1635
  %v1649 = vadd.f32 %v1621, %v1635
  %v1650 = vadd.f32 %v1622, %v1635
  %v1651 = vadd.f32 %v1623, %v1635
  %v1652 = vadd.f32 %v1624, %v1635
  %v1653 = vtanh.pop %v1637
  %v1654 = vtanh.pop %v1638
  %v1655 = vtanh.pop %v1639
  %v1656 = vtanh.pop %v1640
  %v1657 = vtanh.pop %v1641
  %v1658 = vtanh.pop %v1642
  %v1659 = vtanh.pop %v1643
  %v1660 = vtanh.pop %v1644
  %v1661 = vtanh.pop %v1645
  %v1662 = vtanh.pop %v1646
  %v1663 = vtanh.pop %v1647
  %v1664 = vtanh.pop %v1648
  %v1665 = vtanh.pop %v1649
  %v1666 = vtanh.pop %v1650
  %v1667 = vtanh.pop %v1651
  %v1668 = vtanh.pop %v1652
  %1669 = vst [vmem:[%s4] sm:$0xff] %v1653
  %1670 = vst [vmem:[%s4 + $0x8] sm:$0xff] %v1654
  %1671 = vst [vmem:[%s4 + $0x10] sm:$0xff] %v1655
  %1672 = vst [vmem:[%s4 + $0x18] sm:$0xff] %v1656
  %1673 = vst [vmem:[%s4 + $0x20] sm:$0xff] %v1657
  %1674 = vst [vmem:[%s4 + $0x28] sm:$0xff] %v1658
  %1675 = vst [vmem:[%s4 + $0x30] sm:$0xff] %v1659
  %1676 = vst.msk [vmem:[%s4 + $0x38] sm:$0xff] %vm91, %v1660
  %1677 = vst [vmem:[%s4 + $0x40] sm:$0xf] %v1661
  %1678 = vst [vmem:[%s4 + $0x48] sm:$0xf] %v1662
  %1679 = vst [vmem:[%s4 + $0x50] sm:$0xf] %v1663
  %1680 = vst [vmem:[%s4 + $0x58] sm:$0xf] %v1664
  %1681 = vst [vmem:[%s4 + $0x60] sm:$0xf] %v1665
  %1682 = vst [vmem:[%s4 + $0x68] sm:$0xf] %v1666
  %1683 = vst [vmem:[%s4 + $0x70] sm:$0xf] %v1667
  %vm1684 = vcmask 584704
  %1685 = vst.msk [vmem:[%s4 + $0x78] sm:$0xf] %vm1684, %v1668
  // Predicated region
  $region18: #{policy_actor_forward.5} parent=0 // pred_check
    _
  $region19: #{policy_actor_forward.5} parent=0 // pred_check_branch
    %1687 = sbr.rel (0) target = $region21
  $region20: #{policy_actor_forward.5} parent=0 // pred_region
    _
  $region21: #{policy_actor_forward.5} parent=0 // pred_fallthru
    _
  // Predicated region
  $region22: #{policy_actor_forward.5} parent=0 // pred_check
    _
  $region23: #{policy_actor_forward.5} parent=0 // pred_check_branch
    %1689 = sbr.rel (0) target = $region25
  $region24: #{policy_actor_forward.5} parent=0 // pred_region
    _
  $region25: #{policy_actor_forward.5} parent=0 // pred_fallthru
    _

// kernel: policy_actor_forward.6
$region0: #{policy_actor_forward.6}
  #allocation0 [shape = 'u32[]', space=smem, size = 0x4, offset = 0x4, fixed_abs, tag = 'smem constant byte address 0x4 - core index']
  #allocation1 [shape = 'u32[144,128]{1,0:T(1,128)}', space=vmem, size = 0x12000, scoped, tag = 'internal scratch']
  %s0 = inlined_call_operand.vmem [shape: f32[4,108,200], index: 0, kind: input, shape index: {}]
  %s1 = inlined_call_operand.vmem [shape: f32[20,108], index: 1, kind: input, shape index: {}]
  %s2 = inlined_call_operand.vmem [shape: f32[20,1], index: 2, kind: input, shape index: {}]
  %s3 = inlined_call_operand.vmem [shape: f32[20,1], index: 3, kind: input, shape index: {}]
  %s4 = inlined_call_operand.vmem [shape: f32[20,200], index: 4, kind: output, shape index: {}]
  %s5 = sld [smem:[#allocation0]]
  $region26: #{policy_actor_forward.6} parent=0
    _
  %s7 = ssub.s32 1, %s5
  %s8 = scalar_select 0, %s7, %s5
  // Predicated region
  $region2: #{policy_actor_forward.6} parent=0 // pred_check
    _
  $region3: #{policy_actor_forward.6} parent=0 // pred_check_branch
    %10 = sbr.rel (0) target = $region5
  $region4: #{policy_actor_forward.6} parent=0 // pred_region
    _
  $region5: #{policy_actor_forward.6} parent=0 // pred_fallthru
    _
  // Predicated region
  $region6: #{policy_actor_forward.6} parent=0 // pred_check
    _
  $region7: #{policy_actor_forward.6} parent=0 // pred_check_branch
    %12 = sbr.rel (0) target = $region9
  $region8: #{policy_actor_forward.6} parent=0 // pred_region
    _
  $region9: #{policy_actor_forward.6} parent=0 // pred_fallthru
    _
  // Predicated region
  $region10: #{policy_actor_forward.6} parent=0 // pred_check
    _
  $region11: #{policy_actor_forward.6} parent=0 // pred_check_branch
    %14 = sbr.rel (0) target = $region13
  $region12: #{policy_actor_forward.6} parent=0 // pred_region
    _
  $region13: #{policy_actor_forward.6} parent=0 // pred_fallthru
    _
  // Predicated region
  $region14: #{policy_actor_forward.6} parent=0 // pred_check
    _
  $region15: #{policy_actor_forward.6} parent=0 // pred_check_branch
    %16 = sbr.rel (0) target = $region17
  $region16: #{policy_actor_forward.6} parent=0 // pred_region
    _
  $region17: #{policy_actor_forward.6} parent=0 // pred_fallthru
    _
  %v17 = vld [vmem:[%s1] sm:$0xff]
  %v18 = vld [vmem:[%s1 + $0x8] sm:$0xff]
  %v19 = vld [vmem:[%s1 + $0x10] sm:$0xf]
  %v20 = vld [vmem:[%s0] sm:$0xff]
  %v21 = vld [vmem:[%s0 + $0x8] sm:$0xff]
  %v22 = vld [vmem:[%s0 + $0x10] sm:$0xff]
  %v23 = vld [vmem:[%s0 + $0x18] sm:$0xff]
  %v24 = vld [vmem:[%s0 + $0x20] sm:$0xff]
  %v25 = vld [vmem:[%s0 + $0x28] sm:$0xff]
  %v26 = vld [vmem:[%s0 + $0x30] sm:$0xff]
  %v27 = vld [vmem:[%s0 + $0x38] sm:$0xff]
  %v28 = vld [vmem:[%s0 + $0x40] sm:$0xff]
  %v29 = vld [vmem:[%s0 + $0x48] sm:$0xff]
  %v30 = vld [vmem:[%s0 + $0x50] sm:$0xff]
  %v31 = vld [vmem:[%s0 + $0x58] sm:$0xff]
  %v32 = vld [vmem:[%s0 + $0x60] sm:$0xff]
  %v33 = vld [vmem:[%s0 + $0x68] sm:$0xff]
  %v34 = vld [vmem:[%s0 + $0x70] sm:$0xff]
  %v35 = vld [vmem:[%s0 + $0x78] sm:$0xff]
  %v36 = vld [vmem:[%s0 + $0x80] sm:$0xff]
  %v37 = vld [vmem:[%s0 + $0x88] sm:$0xff]
  %v38 = vld [vmem:[%s0 + $0x90] sm:$0xff]
  %v39 = vld [vmem:[%s0 + $0x98] sm:$0xff]
  %v40 = vld [vmem:[%s0 + $0xa0] sm:$0xff]
  %v41 = vld [vmem:[%s0 + $0xa8] sm:$0xff]
  %v42 = vld [vmem:[%s0 + $0xb0] sm:$0xff]
  %v43 = vld [vmem:[%s0 + $0xb8] sm:$0xff]
  %v44 = vld [vmem:[%s0 + $0xc0] sm:$0xff]
  %v45 = vld [vmem:[%s0 + $0xc8] sm:$0xff]
  %v46 = vld [vmem:[%s0 + $0xd0] sm:$0xf]
  %v47 = vld [vmem:[%s0 + $0xd8] sm:$0xf]
  %vm48 = vcmask 883712
  %v50 = vsel %vm48, %v17, 0
  %v53 = vsel %vm48, %v18, 0
  %v56 = vsel %vm48, %v19, 0
  %vm58 = vcmask 1043456
  %v60 = vsel %vm58, %v46, 0
  %v63 = vsel %vm58, %v47, 0
  %65 = vmatprep.subr.mxu0 %v21
  %66 = vmatpush1.msra.mxu0 %v20
  %67 = vmatprep.subr.mxu0 %v23
  %68 = vmatpush1.msra.mxu0 %v22
  %69 = vmatprep.subr.mxu0 %v25
  %70 = vmatpush1.msra.mxu0 %v24
  %71 = vmatprep.subr.mxu0 %v27
  %72 = vmatpush1.msra.mxu0 %v26
  %73 = vmatprep.subr.mxu0 %v29
  %74 = vmatpush1.msra.mxu0 %v28
  %75 = vmatprep.subr.mxu0 %v31
  %76 = vmatpush1.msra.mxu0 %v30
  %77 = vmatprep.subr.mxu0 %v33
  %78 = vmatpush1.msra.mxu0 %v32
  %79 = vmatprep.subr.mxu0 %v35
  %80 = vmatpush1.msra.mxu0 %v34
  %81 = vmatprep.subr.mxu0 %v37
  %82 = vmatpush1.msra.mxu0 %v36
  %83 = vmatprep.subr.mxu0 %v39
  %84 = vmatpush1.msra.mxu0 %v38
  %85 = vmatprep.subr.mxu0 %v41
  %86 = vmatpush1.msra.mxu0 %v40
  %87 = vmatprep.subr.mxu0 %v43
  %88 = vmatpush1.msra.mxu0 %v42
  %89 = vmatprep.subr.mxu0 %v45
  %90 = vmatpush1.msra.mxu0 %v44
  %91 = vmatprep.subr.mxu0 %v63
  %92 = vmatpush1.msra.mxu0 %v60
  %93 = vmatprep.subr.mxu0 0.0
  %94 = vmatpush1.msra.mxu0 0.0
  %95 = vmatprep.subr.mxu0 0.0
  %96 = vmatpush1.msra.mxu0 0.0
  %97 = vmatprep.subr.mxu0 0.0
  %98 = vmatpush1.msra.mxu0 0.0
  %99 = vmatprep.subr.mxu0 0.0
  %100 = vmatpush1.msra.mxu0 0.0
  %101 = vmatprep.subr.mxu0 0.0
  %102 = vmatpush1.msra.mxu0 0.0
  %103 = vmatprep.subr.mxu0 0.0
  %104 = vmatpush1.msra.mxu0 0.0
  %105 = vmatprep.subr.mxu0 0.0
  %106 = vmatpush1.msra.mxu0 0.0
  %107 = vmatprep.subr.mxu0 0.0
  %108 = vmatpush1.msra.mxu0 0.0
  %109 = vmatprep.subr.mxu0 0.0
  %110 = vmatpush1.msra.mxu0 0.0
  %111 = vmatprep.subr.mxu0 0.0
  %112 = vmatpush1.msra.mxu0 0.0
  %113 = vmatprep.subr.mxu0 0.0
  %114 = vmatpush1.msra.mxu0 0.0
  %115 = vmatprep.subr.mxu0 0.0
  %116 = vmatpush1.msra.mxu0 0.0
  %117 = vmatprep.subr.mxu0 0.0
  %118 = vmatpush1.msra.mxu0 0.0
  %119 = vmatprep.subr.mxu0 0.0
  %120 = vmatpush1.msra.mxu0 0.0
  %121 = vmatprep.subr.mxu0 0.0
  %122 = vmatpush1.msra.mxu0 0.0
  %123 = vmatprep.subr.mxu0 0.0
  %124 = vmatpush1.msra.mxu0 0.0
  %125 = vmatprep.subr.mxu0 0.0
  %126 = vmatpush1.msra.mxu0 0.0
  %127 = vmatprep.subr.mxu0 0.0
  %128 = vmatpush1.msra.mxu0 0.0
  %129 = vmatprep.mubr.f32.mxu0 0.0
  %130 = vmatmul.mubr.f32.gmra.mrb[0].mxu0 %v50
  %v131 = vpop.f32.mrb[0].mxu0
  %v132 = vadd.f32 0.0, %v131
  %v133 = vpop.f32.mrb[0].mxu0
  %v134 = vadd.f32 0.0, %v133
  %135 = vmatprep.mubr.f32.mxu0 0.0
  %136 = vmatmul.mubr.f32.gmra.mrb[0].mxu0 %v53
  %v137 = vpop.f32.mrb[0].mxu0
  %v138 = vadd.f32 0.0, %v137
  %v139 = vpop.f32.mrb[0].mxu0
  %v140 = vadd.f32 0.0, %v139
  %141 = vmatprep.mubr.f32.mxu0 0.0
  %142 = vmatmul.mubr.f32.gmra.mrb[0].mxu0 %v56
  %v143 = vpop.f32.mrb[0].mxu0
  %v144 = vadd.f32 0.0, %v143
  %v145 = vpop.f32.mrb[0].mxu0
  %v146 = vadd.f32 0.0, %v145
  %147 = vdwg.mxu0
  %s148 = scalar_lea.vmem %s0, 224
  %v149 = vld [vmem:[%s148] sm:$0xff]
  %v150 = vld [vmem:[%s148 + $0x8] sm:$0xff]
  %v151 = vld [vmem:[%s148 + $0x10] sm:$0xff]
  %v152 = vld [vmem:[%s148 + $0x18] sm:$0xff]
  %v153 = vld [vmem:[%s148 + $0x20] sm:$0xff]
  %v154 = vld [vmem:[%s148 + $0x28] sm:$0xff]
  %v155 = vld [vmem:[%s148 + $0x30] sm:$0xff]
  %v156 = vld [vmem:[%s148 + $0x38] sm:$0xff]
  %v157 = vld [vmem:[%s148 + $0x40] sm:$0xff]
  %v158 = vld [vmem:[%s148 + $0x48] sm:$0xff]
  %v159 = vld [vmem:[%s148 + $0x50] sm:$0xff]
  %v160 = vld [vmem:[%s148 + $0x58] sm:$0xff]
  %v161 = vld [vmem:[%s148 + $0x60] sm:$0xff]
  %v162 = vld [vmem:[%s148 + $0x68] sm:$0xff]
  %v163 = vld [vmem:[%s148 + $0x70] sm:$0xff]
  %v164 = vld [vmem:[%s148 + $0x78] sm:$0xff]
  %v165 = vld [vmem:[%s148 + $0x80] sm:$0xff]
  %v166 = vld [vmem:[%s148 + $0x88] sm:$0xff]
  %v167 = vld [vmem:[%s148 + $0x90] sm:$0xff]
  %v168 = vld [vmem:[%s148 + $0x98] sm:$0xff]
  %v169 = vld [vmem:[%s148 + $0xa0] sm:$0xff]
  %v170 = vld [vmem:[%s148 + $0xa8] sm:$0xff]
  %v171 = vld [vmem:[%s148 + $0xb0] sm:$0xff]
  %v172 = vld [vmem:[%s148 + $0xb8] sm:$0xff]
  %v173 = vld [vmem:[%s148 + $0xc0] sm:$0xff]
  %v174 = vld [vmem:[%s148 + $0xc8] sm:$0xff]
  %v175 = vld [vmem:[%s148 + $0xd0] sm:$0xf]
  %v176 = vld [vmem:[%s148 + $0xd8] sm:$0xf]
  %v178 = vsel %vm58, %v175, 0
  %v181 = vsel %vm58, %v176, 0
  %183 = vmatprep.subr.mxu0 %v150
  %184 = vmatpush1.msra.mxu0 %v149
  %185 = vmatprep.subr.mxu0 %v152
  %186 = vmatpush1.msra.mxu0 %v151
  %187 = vmatprep.subr.mxu0 %v154
  %188 = vmatpush1.msra.mxu0 %v153
  %189 = vmatprep.subr.mxu0 %v156
  %190 = vmatpush1.msra.mxu0 %v155
  %191 = vmatprep.subr.mxu0 %v158
  %192 = vmatpush1.msra.mxu0 %v157
  %193 = vmatprep.subr.mxu0 %v160
  %194 = vmatpush1.msra.mxu0 %v159
  %195 = vmatprep.subr.mxu0 %v162
  %196 = vmatpush1.msra.mxu0 %v161
  %197 = vmatprep.subr.mxu0 %v164
  %198 = vmatpush1.msra.mxu0 %v163
  %199 = vmatprep.subr.mxu0 %v166
  %200 = vmatpush1.msra.mxu0 %v165
  %201 = vmatprep.subr.mxu0 %v168
  %202 = vmatpush1.msra.mxu0 %v167
  %203 = vmatprep.subr.mxu0 %v170
  %204 = vmatpush1.msra.mxu0 %v169
  %205 = vmatprep.subr.mxu0 %v172
  %206 = vmatpush1.msra.mxu0 %v171
  %207 = vmatprep.subr.mxu0 %v174
  %208 = vmatpush1.msra.mxu0 %v173
  %209 = vmatprep.subr.mxu0 %v181
  %210 = vmatpush1.msra.mxu0 %v178
  %211 = vmatprep.subr.mxu0 0.0
  %212 = vmatpush1.msra.mxu0 0.0
  %213 = vmatprep.subr.mxu0 0.0
  %214 = vmatpush1.msra.mxu0 0.0
  %215 = vmatprep.subr.mxu0 0.0
  %216 = vmatpush1.msra.mxu0 0.0
  %217 = vmatprep.subr.mxu0 0.0
  %218 = vmatpush1.msra.mxu0 0.0
  %219 = vmatprep.subr.mxu0 0.0
  %220 = vmatpush1.msra.mxu0 0.0
  %221 = vmatprep.subr.mxu0 0.0
  %222 = vmatpush1.msra.mxu0 0.0
  %223 = vmatprep.subr.mxu0 0.0
  %224 = vmatpush1.msra.mxu0 0.0
  %225 = vmatprep.subr.mxu0 0.0
  %226 = vmatpush1.msra.mxu0 0.0
  %227 = vmatprep.subr.mxu0 0.0
  %228 = vmatpush1.msra.mxu0 0.0
  %229 = vmatprep.subr.mxu0 0.0
  %230 = vmatpush1.msra.mxu0 0.0
  %231 = vmatprep.subr.mxu0 0.0
  %232 = vmatpush1.msra.mxu0 0.0
  %233 = vmatprep.subr.mxu0 0.0
  %234 = vmatpush1.msra.mxu0 0.0
  %235 = vmatprep.subr.mxu0 0.0
  %236 = vmatpush1.msra.mxu0 0.0
  %237 = vmatprep.subr.mxu0 0.0
  %238 = vmatpush1.msra.mxu0 0.0
  %239 = vmatprep.subr.mxu0 0.0
  %240 = vmatpush1.msra.mxu0 0.0
  %241 = vmatprep.subr.mxu0 0.0
  %242 = vmatpush1.msra.mxu0 0.0
  %243 = vmatprep.subr.mxu0 0.0
  %244 = vmatpush1.msra.mxu0 0.0
  %245 = vmatprep.subr.mxu0 0.0
  %246 = vmatpush1.msra.mxu0 0.0
  %247 = vmatprep.mubr.f32.mxu0 0.0
  %248 = vmatmul.mubr.f32.gmra.mrb[0].mxu0 %v50
  %v249 = vpop.f32.mrb[0].mxu0
  %v250 = vadd.f32 0.0, %v249
  %v251 = vpop.f32.mrb[0].mxu0
  %v252 = vadd.f32 0.0, %v251
  %253 = vmatprep.mubr.f32.mxu0 0.0
  %254 = vmatmul.mubr.f32.gmra.mrb[0].mxu0 %v53
  %v255 = vpop.f32.mrb[0].mxu0
  %v256 = vadd.f32 0.0, %v255
  %v257 = vpop.f32.mrb[0].mxu0
  %v258 = vadd.f32 0.0, %v257
  %259 = vmatprep.mubr.f32.mxu0 0.0
  %260 = vmatmul.mubr.f32.gmra.mrb[0].mxu0 %v56
  %v261 = vpop.f32.mrb[0].mxu0
  %v262 = vadd.f32 0.0, %v261
  %v263 = vpop.f32.mrb[0].mxu0
  %v264 = vadd.f32 0.0, %v263
  %265 = vdwg.mxu0
  %v266 = vmax.f32 %v132, %v250
  %v267 = vmax.f32 %v134, %v252
  %v268 = vmax.f32 %v138, %v256
  %v269 = vmax.f32 %v140, %v258
  %v270 = vmax.f32 %v144, %v262
  %v271 = vmax.f32 %v146, %v264
  %s272 = scalar_lea.vmem %s0, 448
  %v273 = vld [vmem:[%s272] sm:$0xff]
  %v274 = vld [vmem:[%s272 + $0x8] sm:$0xff]
  %v275 = vld [vmem:[%s272 + $0x10] sm:$0xff]
  %v276 = vld [vmem:[%s272 + $0x18] sm:$0xff]
  %v277 = vld [vmem:[%s272 + $0x20] sm:$0xff]
  %v278 = vld [vmem:[%s272 + $0x28] sm:$0xff]
  %v279 = vld [vmem:[%s272 + $0x30] sm:$0xff]
  %v280 = vld [vmem:[%s272 + $0x38] sm:$0xff]
  %v281 = vld [vmem:[%s272 + $0x40] sm:$0xff]
  %v282 = vld [vmem:[%s272 + $0x48] sm:$0xff]
  %v283 = vld [vmem:[%s272 + $0x50] sm:$0xff]
  %v284 = vld [vmem:[%s272 + $0x58] sm:$0xff]
  %v285 = vld [vmem:[%s272 + $0x60] sm:$0xff]
  %v286 = vld [vmem:[%s272 + $0x68] sm:$0xff]
  %v287 = vld [vmem:[%s272 + $0x70] sm:$0xff]
  %v288 = vld [vmem:[%s272 + $0x78] sm:$0xff]
  %v289 = vld [vmem:[%s272 + $0x80] sm:$0xff]
  %v290 = vld [vmem:[%s272 + $0x88] sm:$0xff]
  %v291 = vld [vmem:[%s272 + $0x90] sm:$0xff]
  %v292 = vld [vmem:[%s272 + $0x98] sm:$0xff]
  %v293 = vld [vmem:[%s272 + $0xa0] sm:$0xff]
  %v294 = vld [vmem:[%s272 + $0xa8] sm:$0xff]
  %v295 = vld [vmem:[%s272 + $0xb0] sm:$0xff]
  %v296 = vld [vmem:[%s272 + $0xb8] sm:$0xff]
  %v297 = vld [vmem:[%s272 + $0xc0] sm:$0xff]
  %v298 = vld [vmem:[%s272 + $0xc8] sm:$0xff]
  %v299 = vld [vmem:[%s272 + $0xd0] sm:$0xf]
  %v300 = vld [vmem:[%s272 + $0xd8] sm:$0xf]
  %v302 = vsel %vm58, %v299, 0
  %v305 = vsel %vm58, %v300, 0
  %307 = vmatprep.subr.mxu0 %v274
  %308 = vmatpush1.msra.mxu0 %v273
  %309 = vmatprep.subr.mxu0 %v276
  %310 = vmatpush1.msra.mxu0 %v275
  %311 = vmatprep.subr.mxu0 %v278
  %312 = vmatpush1.msra.mxu0 %v277
  %313 = vmatprep.subr.mxu0 %v280
  %314 = vmatpush1.msra.mxu0 %v279
  %315 = vmatprep.subr.mxu0 %v282
  %316 = vmatpush1.msra.mxu0 %v281
  %317 = vmatprep.subr.mxu0 %v284
  %318 = vmatpush1.msra.mxu0 %v283
  %319 = vmatprep.subr.mxu0 %v286
  %320 = vmatpush1.msra.mxu0 %v285
  %321 = vmatprep.subr.mxu0 %v288
  %322 = vmatpush1.msra.mxu0 %v287
  %323 = vmatprep.subr.mxu0 %v290
  %324 = vmatpush1.msra.mxu0 %v289
  %325 = vmatprep.subr.mxu0 %v292
  %326 = vmatpush1.msra.mxu0 %v291
  %327 = vmatprep.subr.mxu0 %v294
  %328 = vmatpush1.msra.mxu0 %v293
  %329 = vmatprep.subr.mxu0 %v296
  %330 = vmatpush1.msra.mxu0 %v295
  %331 = vmatprep.subr.mxu0 %v298
  %332 = vmatpush1.msra.mxu0 %v297
  %333 = vmatprep.subr.mxu0 %v305
  %334 = vmatpush1.msra.mxu0 %v302
  %335 = vmatprep.subr.mxu0 0.0
  %336 = vmatpush1.msra.mxu0 0.0
  %337 = vmatprep.subr.mxu0 0.0
  %338 = vmatpush1.msra.mxu0 0.0
  %339 = vmatprep.subr.mxu0 0.0
  %340 = vmatpush1.msra.mxu0 0.0
  %341 = vmatprep.subr.mxu0 0.0
  %342 = vmatpush1.msra.mxu0 0.0
  %343 = vmatprep.subr.mxu0 0.0
  %344 = vmatpush1.msra.mxu0 0.0
  %345 = vmatprep.subr.mxu0 0.0
  %346 = vmatpush1.msra.mxu0 0.0
  %347 = vmatprep.subr.mxu0 0.0
  %348 = vmatpush1.msra.mxu0 0.0
  %349 = vmatprep.subr.mxu0 0.0
  %350 = vmatpush1.msra.mxu0 0.0
  %351 = vmatprep.subr.mxu0 0.0
  %352 = vmatpush1.msra.mxu0 0.0
  %353 = vmatprep.subr.mxu0 0.0
  %354 = vmatpush1.msra.mxu0 0.0
  %355 = vmatprep.subr.mxu0 0.0
  %356 = vmatpush1.msra.mxu0 0.0
  %357 = vmatprep.subr.mxu0 0.0
  %358 = vmatpush1.msra.mxu0 0.0
  %359 = vmatprep.subr.mxu0 0.0
  %360 = vmatpush1.msra.mxu0 0.0
  %361 = vmatprep.subr.mxu0 0.0
  %362 = vmatpush1.msra.mxu0 0.0
  %363 = vmatprep.subr.mxu0 0.0
  %364 = vmatpush1.msra.mxu0 0.0
  %365 = vmatprep.subr.mxu0 0.0
  %366 = vmatpush1.msra.mxu0 0.0
  %367 = vmatprep.subr.mxu0 0.0
  %368 = vmatpush1.msra.mxu0 0.0
  %369 = vmatprep.subr.mxu0 0.0
  %370 = vmatpush1.msra.mxu0 0.0
  %371 = vmatprep.mubr.f32.mxu0 0.0
  %372 = vmatmul.mubr.f32.gmra.mrb[0].mxu0 %v50
  %v373 = vpop.f32.mrb[0].mxu0
  %v374 = vadd.f32 0.0, %v373
  %v375 = vpop.f32.mrb[0].mxu0
  %v376 = vadd.f32 0.0, %v375
  %377 = vmatprep.mubr.f32.mxu0 0.0
  %378 = vmatmul.mubr.f32.gmra.mrb[0].mxu0 %v53
  %v379 = vpop.f32.mrb[0].mxu0
  %v380 = vadd.f32 0.0, %v379
  %v381 = vpop.f32.mrb[0].mxu0
  %v382 = vadd.f32 0.0, %v381
  %383 = vmatprep.mubr.f32.mxu0 0.0
  %384 = vmatmul.mubr.f32.gmra.mrb[0].mxu0 %v56
  %v385 = vpop.f32.mrb[0].mxu0
  %v386 = vadd.f32 0.0, %v385
  %v387 = vpop.f32.mrb[0].mxu0
  %v388 = vadd.f32 0.0, %v387
  %389 = vdwg.mxu0
  %v390 = vmax.f32 %v266, %v374
  %v391 = vmax.f32 %v267, %v376
  %v392 = vmax.f32 %v268, %v380
  %v393 = vmax.f32 %v269, %v382
  %v394 = vmax.f32 %v270, %v386
  %v395 = vmax.f32 %v271, %v388
  %s396 = scalar_lea.vmem %s0, 672
  %v397 = vld [vmem:[%s396] sm:$0xff]
  %v398 = vld [vmem:[%s396 + $0x8] sm:$0xff]
  %v399 = vld [vmem:[%s396 + $0x10] sm:$0xff]
  %v400 = vld [vmem:[%s396 + $0x18] sm:$0xff]
  %v401 = vld [vmem:[%s396 + $0x20] sm:$0xff]
  %v402 = vld [vmem:[%s396 + $0x28] sm:$0xff]
  %v403 = vld [vmem:[%s396 + $0x30] sm:$0xff]
  %v404 = vld [vmem:[%s396 + $0x38] sm:$0xff]
  %v405 = vld [vmem:[%s396 + $0x40] sm:$0xff]
  %v406 = vld [vmem:[%s396 + $0x48] sm:$0xff]
  %v407 = vld [vmem:[%s396 + $0x50] sm:$0xff]
  %v408 = vld [vmem:[%s396 + $0x58] sm:$0xff]
  %v409 = vld [vmem:[%s396 + $0x60] sm:$0xff]
  %v410 = vld [vmem:[%s396 + $0x68] sm:$0xff]
  %v411 = vld [vmem:[%s396 + $0x70] sm:$0xff]
  %v412 = vld [vmem:[%s396 + $0x78] sm:$0xff]
  %v413 = vld [vmem:[%s396 + $0x80] sm:$0xff]
  %v414 = vld [vmem:[%s396 + $0x88] sm:$0xff]
  %v415 = vld [vmem:[%s396 + $0x90] sm:$0xff]
  %v416 = vld [vmem:[%s396 + $0x98] sm:$0xff]
  %v417 = vld [vmem:[%s396 + $0xa0] sm:$0xff]
  %v418 = vld [vmem:[%s396 + $0xa8] sm:$0xff]
  %v419 = vld [vmem:[%s396 + $0xb0] sm:$0xff]
  %v420 = vld [vmem:[%s396 + $0xb8] sm:$0xff]
  %v421 = vld [vmem:[%s396 + $0xc0] sm:$0xff]
  %v422 = vld [vmem:[%s396 + $0xc8] sm:$0xff]
  %v423 = vld [vmem:[%s396 + $0xd0] sm:$0xf]
  %v424 = vld [vmem:[%s396 + $0xd8] sm:$0xf]
  %v426 = vsel %vm58, %v423, 0
  %v429 = vsel %vm58, %v424, 0
  %431 = vmatprep.subr.mxu0 %v398
  %432 = vmatpush1.msra.mxu0 %v397
  %433 = vmatprep.subr.mxu0 %v400
  %434 = vmatpush1.msra.mxu0 %v399
  %435 = vmatprep.subr.mxu0 %v402
  %436 = vmatpush1.msra.mxu0 %v401
  %437 = vmatprep.subr.mxu0 %v404
  %438 = vmatpush1.msra.mxu0 %v403
  %439 = vmatprep.subr.mxu0 %v406
  %440 = vmatpush1.msra.mxu0 %v405
  %441 = vmatprep.subr.mxu0 %v408
  %442 = vmatpush1.msra.mxu0 %v407
  %443 = vmatprep.subr.mxu0 %v410
  %444 = vmatpush1.msra.mxu0 %v409
  %445 = vmatprep.subr.mxu0 %v412
  %446 = vmatpush1.msra.mxu0 %v411
  %447 = vmatprep.subr.mxu0 %v414
  %448 = vmatpush1.msra.mxu0 %v413
  %449 = vmatprep.subr.mxu0 %v416
  %450 = vmatpush1.msra.mxu0 %v415
  %451 = vmatprep.subr.mxu0 %v418
  %452 = vmatpush1.msra.mxu0 %v417
  %453 = vmatprep.subr.mxu0 %v420
  %454 = vmatpush1.msra.mxu0 %v419
  %455 = vmatprep.subr.mxu0 %v422
  %456 = vmatpush1.msra.mxu0 %v421
  %457 = vmatprep.subr.mxu0 %v429
  %458 = vmatpush1.msra.mxu0 %v426
  %459 = vmatprep.subr.mxu0 0.0
  %460 = vmatpush1.msra.mxu0 0.0
  %461 = vmatprep.subr.mxu0 0.0
  %462 = vmatpush1.msra.mxu0 0.0
  %463 = vmatprep.subr.mxu0 0.0
  %464 = vmatpush1.msra.mxu0 0.0
  %465 = vmatprep.subr.mxu0 0.0
  %466 = vmatpush1.msra.mxu0 0.0
  %467 = vmatprep.subr.mxu0 0.0
  %468 = vmatpush1.msra.mxu0 0.0
  %469 = vmatprep.subr.mxu0 0.0
  %470 = vmatpush1.msra.mxu0 0.0
  %471 = vmatprep.subr.mxu0 0.0
  %472 = vmatpush1.msra.mxu0 0.0
  %473 = vmatprep.subr.mxu0 0.0
  %474 = vmatpush1.msra.mxu0 0.0
  %475 = vmatprep.subr.mxu0 0.0
  %476 = vmatpush1.msra.mxu0 0.0
  %477 = vmatprep.subr.mxu0 0.0
  %478 = vmatpush1.msra.mxu0 0.0
  %479 = vmatprep.subr.mxu0 0.0
  %480 = vmatpush1.msra.mxu0 0.0
  %481 = vmatprep.subr.mxu0 0.0
  %482 = vmatpush1.msra.mxu0 0.0
  %483 = vmatprep.subr.mxu0 0.0
  %484 = vmatpush1.msra.mxu0 0.0
  %485 = vmatprep.subr.mxu0 0.0
  %486 = vmatpush1.msra.mxu0 0.0
  %487 = vmatprep.subr.mxu0 0.0
  %488 = vmatpush1.msra.mxu0 0.0
  %489 = vmatprep.subr.mxu0 0.0
  %490 = vmatpush1.msra.mxu0 0.0
  %491 = vmatprep.subr.mxu0 0.0
  %492 = vmatpush1.msra.mxu0 0.0
  %493 = vmatprep.subr.mxu0 0.0
  %494 = vmatpush1.msra.mxu0 0.0
  %495 = vmatprep.mubr.f32.mxu0 0.0
  %496 = vmatmul.mubr.f32.gmra.mrb[0].mxu0 %v50
  %v497 = vpop.f32.mrb[0].mxu0
  %v498 = vadd.f32 0.0, %v497
  %v499 = vpop.f32.mrb[0].mxu0
  %v500 = vadd.f32 0.0, %v499
  %501 = vmatprep.mubr.f32.mxu0 0.0
  %502 = vmatmul.mubr.f32.gmra.mrb[0].mxu0 %v53
  %v503 = vpop.f32.mrb[0].mxu0
  %v504 = vadd.f32 0.0, %v503
  %v505 = vpop.f32.mrb[0].mxu0
  %v506 = vadd.f32 0.0, %v505
  %507 = vmatprep.mubr.f32.mxu0 0.0
  %508 = vmatmul.mubr.f32.gmra.mrb[0].mxu0 %v56
  %v509 = vpop.f32.mrb[0].mxu0
  %v510 = vadd.f32 0.0, %v509
  %v511 = vpop.f32.mrb[0].mxu0
  %v512 = vadd.f32 0.0, %v511
  %513 = vdwg.mxu0
  %v514 = vmax.f32 %v390, %v498
  %v515 = vmax.f32 %v391, %v500
  %v516 = vmax.f32 %v392, %v504
  %v517 = vmax.f32 %v393, %v506
  %v518 = vmax.f32 %v394, %v510
  %v519 = vmax.f32 %v395, %v512
  %v520 = vld [vmem:[%s2] sm:$0xff]
  %v521 = vld [vmem:[%s2 + $0x8] sm:$0xff]
  %v522 = vld [vmem:[%s2 + $0x10] sm:$0xf]
  %524 = vset.pattern.permute.xlu0 0
  %525 = vperm.xlu0 %524, %v520
  %v526 = vpop.permute.xlu0 %525
  %529 = vset.pattern.permute.xlu0 0
  %530 = vperm.xlu0 %529, %v521
  %v531 = vpop.permute.xlu0 %530
  %534 = vset.pattern.permute.xlu0 0
  %535 = vperm.xlu0 %534, %v522
  %v536 = vpop.permute.xlu0 %535
  %v538 = vmul.f32 %v514, %v526
  %v539 = vmul.f32 %v515, %v526
  %v540 = vmul.f32 %v516, %v531
  %v541 = vmul.f32 %v517, %v531
  %v542 = vmul.f32 %v518, %v536
  %v543 = vmul.f32 %v519, %v536
  %v544 = vld [vmem:[%s3] sm:$0xff]
  %v545 = vld [vmem:[%s3 + $0x8] sm:$0xff]
  %v546 = vld [vmem:[%s3 + $0x10] sm:$0xf]
  %548 = vset.pattern.permute.xlu0 0
  %549 = vperm.xlu0 %548, %v544
  %v550 = vpop.permute.xlu0 %549
  %553 = vset.pattern.permute.xlu0 0
  %554 = vperm.xlu0 %553, %v545
  %v555 = vpop.permute.xlu0 %554
  %558 = vset.pattern.permute.xlu0 0
  %559 = vperm.xlu0 %558, %v546
  %v560 = vpop.permute.xlu0 %559
  %v562 = vadd.f32 %v538, %v550
  %v563 = vadd.f32 %v539, %v550
  %v564 = vadd.f32 %v540, %v555
  %v565 = vadd.f32 %v541, %v555
  %v566 = vadd.f32 %v542, %v560
  %v567 = vadd.f32 %v543, %v560
  %v568 = vtanh.pop %v562
  %v569 = vtanh.pop %v563
  %v570 = vtanh.pop %v564
  %v571 = vtanh.pop %v565
  %v572 = vtanh.pop %v566
  %v573 = vtanh.pop %v567
  %574 = vst [vmem:[%s4] sm:$0xff] %v568
  %vm575 = vcmask 588800
  %576 = vst.msk [vmem:[%s4 + $0x8] sm:$0xff] %vm575, %v569
  %577 = vst [vmem:[%s4 + $0x10] sm:$0xff] %v570
  %578 = vst.msk [vmem:[%s4 + $0x18] sm:$0xff] %vm575, %v571
  %579 = vst [vmem:[%s4 + $0x20] sm:$0xf] %v572
  %vm580 = vcmask 584704
  %581 = vst.msk [vmem:[%s4 + $0x28] sm:$0xf] %vm580, %v573
  // Predicated region
  $region18: #{policy_actor_forward.6} parent=0 // pred_check
    _
  $region19: #{policy_actor_forward.6} parent=0 // pred_check_branch
    %583 = sbr.rel (0) target = $region21
  $region20: #{policy_actor_forward.6} parent=0 // pred_region
    _
  $region21: #{policy_actor_forward.6} parent=0 // pred_fallthru
    _
  // Predicated region
  $region22: #{policy_actor_forward.6} parent=0 // pred_check
    _
  $region23: #{policy_actor_forward.6} parent=0 // pred_check_branch
    %585 = sbr.rel (0) target = $region25
  $region24: #{policy_actor_forward.6} parent=0 // pred_region
    _
  $region25: #{policy_actor_forward.6} parent=0 // pred_fallthru
    _

// kernel: policy_actor_forward.7
$region0: #{policy_actor_forward.7}
  #allocation0 [shape = 'u32[]', space=smem, size = 0x4, offset = 0x4, fixed_abs, tag = 'smem constant byte address 0x4 - core index']
  #allocation1 [shape = 'u32[144,128]{1,0:T(1,128)}', space=vmem, size = 0x12000, scoped, tag = 'internal scratch']
  %s0 = inlined_call_operand.vmem [shape: f32[2,2000], index: 0, kind: input, shape index: {}]
  %s1 = inlined_call_operand.vmem [shape: f32[2000,128], index: 1, kind: input, shape index: {}]
  %s2 = inlined_call_operand.vmem [shape: f32[1,128], index: 2, kind: input, shape index: {}]
  %s3 = inlined_call_operand.vmem [shape: f32[128,128], index: 3, kind: input, shape index: {}]
  %s4 = inlined_call_operand.vmem [shape: f32[1,128], index: 4, kind: input, shape index: {}]
  %s5 = inlined_call_operand.hbm [shape: f32[2,128], index: 5, kind: output, shape index: {}]
  %s6 = sld [smem:[#allocation0]]
  $region30: #{policy_actor_forward.7} parent=0
    _
  %s8 = ssub.s32 1, %s6
  %s9 = scalar_select 0, %s8, %s6
  $region1: #{policy_actor_forward.7} parent=0
    #allocation2 [shape = 'u8[1024]{0}', space=vmem, size = 0x400, scoped, tag = 'output window, operand 0, single buffered']
    #allocation3 [shape = 's32[1]{0}', space=sflag, size = 0x4, scoped, tag = 'scoped memory for policy_actor_forward.7']
    %10 = vsyncpa [#allocation3], 0
    // Predicated region
    $region2: #{policy_actor_forward.7} parent=1 // pred_check
      _
    $region3: #{policy_actor_forward.7} parent=1 // pred_check_branch
      %12 = sbr.rel (0) target = $region5
    $region4: #{policy_actor_forward.7} parent=1 // pred_region
      _
    $region5: #{policy_actor_forward.7} parent=1 // pred_fallthru
      _
    // Predicated region
    $region6: #{policy_actor_forward.7} parent=1 // pred_check
      _
    $region7: #{policy_actor_forward.7} parent=1 // pred_check_branch
      %14 = sbr.rel (0) target = $region9
    $region8: #{policy_actor_forward.7} parent=1 // pred_region
      _
    $region9: #{policy_actor_forward.7} parent=1 // pred_fallthru
      _
    // Predicated region
    $region10: #{policy_actor_forward.7} parent=1 // pred_check
      _
    $region11: #{policy_actor_forward.7} parent=1 // pred_check_branch
      %16 = sbr.rel (0) target = $region13
    $region12: #{policy_actor_forward.7} parent=1 // pred_region
      _
    $region13: #{policy_actor_forward.7} parent=1 // pred_fallthru
      _
    // Predicated region
    $region14: #{policy_actor_forward.7} parent=1 // pred_check
      _
    $region15: #{policy_actor_forward.7} parent=1 // pred_check_branch
      %18 = sbr.rel (0) target = $region17
    $region16: #{policy_actor_forward.7} parent=1 // pred_region
      _
    $region17: #{policy_actor_forward.7} parent=1 // pred_fallthru
      _
    // Predicated region
    $region18: #{policy_actor_forward.7} parent=1 // pred_check
      _
    $region19: #{policy_actor_forward.7} parent=1 // pred_check_branch
      %20 = sbr.rel (0) target = $region21
    $region20: #{policy_actor_forward.7} parent=1 // pred_region
      _
    $region21: #{policy_actor_forward.7} parent=1 // pred_fallthru
      _
    %v21 = vld [vmem:[%s0] sm:$0xff]
    %v22 = vld [vmem:[%s0 + $0x8] sm:$0xff]
    %v23 = vld [vmem:[%s0 + $0x10] sm:$0xff]
    %v24 = vld [vmem:[%s0 + $0x18] sm:$0xff]
    %v25 = vld [vmem:[%s1] sm:$0xff]
    %v26 = vld [vmem:[%s1 + $0x8] sm:$0xff]
    %v27 = vld [vmem:[%s1 + $0x10] sm:$0xff]
    %v28 = vld [vmem:[%s1 + $0x18] sm:$0xff]
    %v29 = vld [vmem:[%s1 + $0x20] sm:$0xff]
    %v30 = vld [vmem:[%s1 + $0x28] sm:$0xff]
    %v31 = vld [vmem:[%s1 + $0x30] sm:$0xff]
    %v32 = vld [vmem:[%s1 + $0x38] sm:$0xff]
    %v33 = vld [vmem:[%s1 + $0x40] sm:$0xff]
    %v34 = vld [vmem:[%s1 + $0x48] sm:$0xff]
    %v35 = vld [vmem:[%s1 + $0x50] sm:$0xff]
    %v36 = vld [vmem:[%s1 + $0x58] sm:$0xff]
    %v37 = vld [vmem:[%s1 + $0x60] sm:$0xff]
    %v38 = vld [vmem:[%s1 + $0x68] sm:$0xff]
    %v39 = vld [vmem:[%s1 + $0x70] sm:$0xff]
    %v40 = vld [vmem:[%s1 + $0x78] sm:$0xff]
    %v41 = vld [vmem:[%s1 + $0x80] sm:$0xff]
    %v42 = vld [vmem:[%s1 + $0x88] sm:$0xff]
    %v43 = vld [vmem:[%s1 + $0x90] sm:$0xff]
    %v44 = vld [vmem:[%s1 + $0x98] sm:$0xff]
    %v45 = vld [vmem:[%s1 + $0xa0] sm:$0xff]
    %v46 = vld [vmem:[%s1 + $0xa8] sm:$0xff]
    %v47 = vld [vmem:[%s1 + $0xb0] sm:$0xff]
    %v48 = vld [vmem:[%s1 + $0xb8] sm:$0xff]
    %v49 = vld [vmem:[%s1 + $0xc0] sm:$0xff]
    %v50 = vld [vmem:[%s1 + $0xc8] sm:$0xff]
    %v51 = vld [vmem:[%s1 + $0xd0] sm:$0xff]
    %v52 = vld [vmem:[%s1 + $0xd8] sm:$0xff]
    %v53 = vld [vmem:[%s1 + $0xe0] sm:$0xff]
    %v54 = vld [vmem:[%s1 + $0xe8] sm:$0xff]
    %v55 = vld [vmem:[%s1 + $0xf0] sm:$0xff]
    %v56 = vld [vmem:[%s1 + $0xf8] sm:$0xff]
    %v57 = vld [vmem:[%s1 + $0x100] sm:$0xff]
    %v58 = vld [vmem:[%s1 + $0x108] sm:$0xff]
    %v59 = vld [vmem:[%s1 + $0x110] sm:$0xff]
    %v60 = vld [vmem:[%s1 + $0x118] sm:$0xff]
    %v61 = vld [vmem:[%s1 + $0x120] sm:$0xff]
    %v62 = vld [vmem:[%s1 + $0x128] sm:$0xff]
    %v63 = vld [vmem:[%s1 + $0x130] sm:$0xff]
    %v64 = vld [vmem:[%s1 + $0x138] sm:$0xff]
    %v65 = vld [vmem:[%s1 + $0x140] sm:$0xff]
    %v66 = vld [vmem:[%s1 + $0x148] sm:$0xff]
    %v67 = vld [vmem:[%s1 + $0x150] sm:$0xff]
    %v68 = vld [vmem:[%s1 + $0x158] sm:$0xff]
    %v69 = vld [vmem:[%s1 + $0x160] sm:$0xff]
    %v70 = vld [vmem:[%s1 + $0x168] sm:$0xff]
    %v71 = vld [vmem:[%s1 + $0x170] sm:$0xff]
    %v72 = vld [vmem:[%s1 + $0x178] sm:$0xff]
    %v73 = vld [vmem:[%s1 + $0x180] sm:$0xff]
    %v74 = vld [vmem:[%s1 + $0x188] sm:$0xff]
    %v75 = vld [vmem:[%s1 + $0x190] sm:$0xff]
    %v76 = vld [vmem:[%s1 + $0x198] sm:$0xff]
    %v77 = vld [vmem:[%s1 + $0x1a0] sm:$0xff]
    %v78 = vld [vmem:[%s1 + $0x1a8] sm:$0xff]
    %v79 = vld [vmem:[%s1 + $0x1b0] sm:$0xff]
    %v80 = vld [vmem:[%s1 + $0x1b8] sm:$0xff]
    %v81 = vld [vmem:[%s1 + $0x1c0] sm:$0xff]
    %v82 = vld [vmem:[%s1 + $0x1c8] sm:$0xff]
    %v83 = vld [vmem:[%s1 + $0x1d0] sm:$0xff]
    %v84 = vld [vmem:[%s1 + $0x1d8] sm:$0xff]
    %v85 = vld [vmem:[%s1 + $0x1e0] sm:$0xff]
    %v86 = vld [vmem:[%s1 + $0x1e8] sm:$0xff]
    %v87 = vld [vmem:[%s1 + $0x1f0] sm:$0xff]
    %v88 = vld [vmem:[%s1 + $0x1f8] sm:$0xff]
    %v89 = vld [vmem:[%s1 + $0x200] sm:$0xff]
    %v90 = vld [vmem:[%s1 + $0x208] sm:$0xff]
    %v91 = vld [vmem:[%s1 + $0x210] sm:$0xff]
    %v92 = vld [vmem:[%s1 + $0x218] sm:$0xff]
    %v93 = vld [vmem:[%s1 + $0x220] sm:$0xff]
    %v94 = vld [vmem:[%s1 + $0x228] sm:$0xff]
    %v95 = vld [vmem:[%s1 + $0x230] sm:$0xff]
    %v96 = vld [vmem:[%s1 + $0x238] sm:$0xff]
    %v97 = vld [vmem:[%s1 + $0x240] sm:$0xff]
    %v98 = vld [vmem:[%s1 + $0x248] sm:$0xff]
    %v99 = vld [vmem:[%s1 + $0x250] sm:$0xff]
    %v100 = vld [vmem:[%s1 + $0x258] sm:$0xff]
    %v101 = vld [vmem:[%s1 + $0x260] sm:$0xff]
    %v102 = vld [vmem:[%s1 + $0x268] sm:$0xff]
    %v103 = vld [vmem:[%s1 + $0x270] sm:$0xff]
    %v104 = vld [vmem:[%s1 + $0x278] sm:$0xff]
    %v105 = vld [vmem:[%s1 + $0x280] sm:$0xff]
    %v106 = vld [vmem:[%s1 + $0x288] sm:$0xff]
    %v107 = vld [vmem:[%s1 + $0x290] sm:$0xff]
    %v108 = vld [vmem:[%s1 + $0x298] sm:$0xff]
    %v109 = vld [vmem:[%s1 + $0x2a0] sm:$0xff]
    %v110 = vld [vmem:[%s1 + $0x2a8] sm:$0xff]
    %v111 = vld [vmem:[%s1 + $0x2b0] sm:$0xff]
    %v112 = vld [vmem:[%s1 + $0x2b8] sm:$0xff]
    %v113 = vld [vmem:[%s1 + $0x2c0] sm:$0xff]
    %v114 = vld [vmem:[%s1 + $0x2c8] sm:$0xff]
    %v115 = vld [vmem:[%s1 + $0x2d0] sm:$0xff]
    %v116 = vld [vmem:[%s1 + $0x2d8] sm:$0xff]
    %v117 = vld [vmem:[%s1 + $0x2e0] sm:$0xff]
    %v118 = vld [vmem:[%s1 + $0x2e8] sm:$0xff]
    %v119 = vld [vmem:[%s1 + $0x2f0] sm:$0xff]
    %v120 = vld [vmem:[%s1 + $0x2f8] sm:$0xff]
    %v121 = vld [vmem:[%s1 + $0x300] sm:$0xff]
    %v122 = vld [vmem:[%s1 + $0x308] sm:$0xff]
    %v123 = vld [vmem:[%s1 + $0x310] sm:$0xff]
    %v124 = vld [vmem:[%s1 + $0x318] sm:$0xff]
    %v125 = vld [vmem:[%s1 + $0x320] sm:$0xff]
    %v126 = vld [vmem:[%s1 + $0x328] sm:$0xff]
    %v127 = vld [vmem:[%s1 + $0x330] sm:$0xff]
    %v128 = vld [vmem:[%s1 + $0x338] sm:$0xff]
    %v129 = vld [vmem:[%s1 + $0x340] sm:$0xff]
    %v130 = vld [vmem:[%s1 + $0x348] sm:$0xff]
    %v131 = vld [vmem:[%s1 + $0x350] sm:$0xff]
    %v132 = vld [vmem:[%s1 + $0x358] sm:$0xff]
    %v133 = vld [vmem:[%s1 + $0x360] sm:$0xff]
    %v134 = vld [vmem:[%s1 + $0x368] sm:$0xff]
    %v135 = vld [vmem:[%s1 + $0x370] sm:$0xff]
    %v136 = vld [vmem:[%s1 + $0x378] sm:$0xff]
    %v137 = vld [vmem:[%s1 + $0x380] sm:$0xff]
    %v138 = vld [vmem:[%s1 + $0x388] sm:$0xff]
    %v139 = vld [vmem:[%s1 + $0x390] sm:$0xff]
    %v140 = vld [vmem:[%s1 + $0x398] sm:$0xff]
    %v141 = vld [vmem:[%s1 + $0x3a0] sm:$0xff]
    %v142 = vld [vmem:[%s1 + $0x3a8] sm:$0xff]
    %v143 = vld [vmem:[%s1 + $0x3b0] sm:$0xff]
    %v144 = vld [vmem:[%s1 + $0x3b8] sm:$0xff]
    %v145 = vld [vmem:[%s1 + $0x3c0] sm:$0xff]
    %v146 = vld [vmem:[%s1 + $0x3c8] sm:$0xff]
    %v147 = vld [vmem:[%s1 + $0x3d0] sm:$0xff]
    %v148 = vld [vmem:[%s1 + $0x3d8] sm:$0xff]
    %v149 = vld [vmem:[%s1 + $0x3e0] sm:$0xff]
    %v150 = vld [vmem:[%s1 + $0x3e8] sm:$0xff]
    %v151 = vld [vmem:[%s1 + $0x3f0] sm:$0xff]
    %v152 = vld [vmem:[%s1 + $0x3f8] sm:$0xff]
    %v153 = vld [vmem:[%s1 + $0x400] sm:$0xff]
    %v154 = vld [vmem:[%s1 + $0x408] sm:$0xff]
    %v155 = vld [vmem:[%s1 + $0x410] sm:$0xff]
    %v156 = vld [vmem:[%s1 + $0x418] sm:$0xff]
    %v157 = vld [vmem:[%s1 + $0x420] sm:$0xff]
    %v158 = vld [vmem:[%s1 + $0x428] sm:$0xff]
    %v159 = vld [vmem:[%s1 + $0x430] sm:$0xff]
    %v160 = vld [vmem:[%s1 + $0x438] sm:$0xff]
    %v161 = vld [vmem:[%s1 + $0x440] sm:$0xff]
    %v162 = vld [vmem:[%s1 + $0x448] sm:$0xff]
    %v163 = vld [vmem:[%s1 + $0x450] sm:$0xff]
    %v164 = vld [vmem:[%s1 + $0x458] sm:$0xff]
    %v165 = vld [vmem:[%s1 + $0x460] sm:$0xff]
    %v166 = vld [vmem:[%s1 + $0x468] sm:$0xff]
    %v167 = vld [vmem:[%s1 + $0x470] sm:$0xff]
    %v168 = vld [vmem:[%s1 + $0x478] sm:$0xff]
    %v169 = vld [vmem:[%s1 + $0x480] sm:$0xff]
    %v170 = vld [vmem:[%s1 + $0x488] sm:$0xff]
    %v171 = vld [vmem:[%s1 + $0x490] sm:$0xff]
    %v172 = vld [vmem:[%s1 + $0x498] sm:$0xff]
    %v173 = vld [vmem:[%s1 + $0x4a0] sm:$0xff]
    %v174 = vld [vmem:[%s1 + $0x4a8] sm:$0xff]
    %v175 = vld [vmem:[%s1 + $0x4b0] sm:$0xff]
    %v176 = vld [vmem:[%s1 + $0x4b8] sm:$0xff]
    %v177 = vld [vmem:[%s1 + $0x4c0] sm:$0xff]
    %v178 = vld [vmem:[%s1 + $0x4c8] sm:$0xff]
    %v179 = vld [vmem:[%s1 + $0x4d0] sm:$0xff]
    %v180 = vld [vmem:[%s1 + $0x4d8] sm:$0xff]
    %v181 = vld [vmem:[%s1 + $0x4e0] sm:$0xff]
    %v182 = vld [vmem:[%s1 + $0x4e8] sm:$0xff]
    %v183 = vld [vmem:[%s1 + $0x4f0] sm:$0xff]
    %v184 = vld [vmem:[%s1 + $0x4f8] sm:$0xff]
    %v185 = vld [vmem:[%s1 + $0x500] sm:$0xff]
    %v186 = vld [vmem:[%s1 + $0x508] sm:$0xff]
    %v187 = vld [vmem:[%s1 + $0x510] sm:$0xff]
    %v188 = vld [vmem:[%s1 + $0x518] sm:$0xff]
    %v189 = vld [vmem:[%s1 + $0x520] sm:$0xff]
    %v190 = vld [vmem:[%s1 + $0x528] sm:$0xff]
    %v191 = vld [vmem:[%s1 + $0x530] sm:$0xff]
    %v192 = vld [vmem:[%s1 + $0x538] sm:$0xff]
    %v193 = vld [vmem:[%s1 + $0x540] sm:$0xff]
    %v194 = vld [vmem:[%s1 + $0x548] sm:$0xff]
    %v195 = vld [vmem:[%s1 + $0x550] sm:$0xff]
    %v196 = vld [vmem:[%s1 + $0x558] sm:$0xff]
    %v197 = vld [vmem:[%s1 + $0x560] sm:$0xff]
    %v198 = vld [vmem:[%s1 + $0x568] sm:$0xff]
    %v199 = vld [vmem:[%s1 + $0x570] sm:$0xff]
    %v200 = vld [vmem:[%s1 + $0x578] sm:$0xff]
    %v201 = vld [vmem:[%s1 + $0x580] sm:$0xff]
    %v202 = vld [vmem:[%s1 + $0x588] sm:$0xff]
    %v203 = vld [vmem:[%s1 + $0x590] sm:$0xff]
    %v204 = vld [vmem:[%s1 + $0x598] sm:$0xff]
    %v205 = vld [vmem:[%s1 + $0x5a0] sm:$0xff]
    %v206 = vld [vmem:[%s1 + $0x5a8] sm:$0xff]
    %v207 = vld [vmem:[%s1 + $0x5b0] sm:$0xff]
    %v208 = vld [vmem:[%s1 + $0x5b8] sm:$0xff]
    %v209 = vld [vmem:[%s1 + $0x5c0] sm:$0xff]
    %v210 = vld [vmem:[%s1 + $0x5c8] sm:$0xff]
    %v211 = vld [vmem:[%s1 + $0x5d0] sm:$0xff]
    %v212 = vld [vmem:[%s1 + $0x5d8] sm:$0xff]
    %v213 = vld [vmem:[%s1 + $0x5e0] sm:$0xff]
    %v214 = vld [vmem:[%s1 + $0x5e8] sm:$0xff]
    %v215 = vld [vmem:[%s1 + $0x5f0] sm:$0xff]
    %v216 = vld [vmem:[%s1 + $0x5f8] sm:$0xff]
    %v217 = vld [vmem:[%s1 + $0x600] sm:$0xff]
    %v218 = vld [vmem:[%s1 + $0x608] sm:$0xff]
    %v219 = vld [vmem:[%s1 + $0x610] sm:$0xff]
    %v220 = vld [vmem:[%s1 + $0x618] sm:$0xff]
    %v221 = vld [vmem:[%s1 + $0x620] sm:$0xff]
    %v222 = vld [vmem:[%s1 + $0x628] sm:$0xff]
    %v223 = vld [vmem:[%s1 + $0x630] sm:$0xff]
    %v224 = vld [vmem:[%s1 + $0x638] sm:$0xff]
    %v225 = vld [vmem:[%s1 + $0x640] sm:$0xff]
    %v226 = vld [vmem:[%s1 + $0x648] sm:$0xff]
    %v227 = vld [vmem:[%s1 + $0x650] sm:$0xff]
    %v228 = vld [vmem:[%s1 + $0x658] sm:$0xff]
    %v229 = vld [vmem:[%s1 + $0x660] sm:$0xff]
    %v230 = vld [vmem:[%s1 + $0x668] sm:$0xff]
    %v231 = vld [vmem:[%s1 + $0x670] sm:$0xff]
    %v232 = vld [vmem:[%s1 + $0x678] sm:$0xff]
    %v233 = vld [vmem:[%s1 + $0x680] sm:$0xff]
    %v234 = vld [vmem:[%s1 + $0x688] sm:$0xff]
    %v235 = vld [vmem:[%s1 + $0x690] sm:$0xff]
    %v236 = vld [vmem:[%s1 + $0x698] sm:$0xff]
    %v237 = vld [vmem:[%s1 + $0x6a0] sm:$0xff]
    %v238 = vld [vmem:[%s1 + $0x6a8] sm:$0xff]
    %v239 = vld [vmem:[%s1 + $0x6b0] sm:$0xff]
    %v240 = vld [vmem:[%s1 + $0x6b8] sm:$0xff]
    %v241 = vld [vmem:[%s1 + $0x6c0] sm:$0xff]
    %v242 = vld [vmem:[%s1 + $0x6c8] sm:$0xff]
    %v243 = vld [vmem:[%s1 + $0x6d0] sm:$0xff]
    %v244 = vld [vmem:[%s1 + $0x6d8] sm:$0xff]
    %v245 = vld [vmem:[%s1 + $0x6e0] sm:$0xff]
    %v246 = vld [vmem:[%s1 + $0x6e8] sm:$0xff]
    %v247 = vld [vmem:[%s1 + $0x6f0] sm:$0xff]
    %v248 = vld [vmem:[%s1 + $0x6f8] sm:$0xff]
    %v249 = vld [vmem:[%s1 + $0x700] sm:$0xff]
    %v250 = vld [vmem:[%s1 + $0x708] sm:$0xff]
    %v251 = vld [vmem:[%s1 + $0x710] sm:$0xff]
    %v252 = vld [vmem:[%s1 + $0x718] sm:$0xff]
    %v253 = vld [vmem:[%s1 + $0x720] sm:$0xff]
    %v254 = vld [vmem:[%s1 + $0x728] sm:$0xff]
    %v255 = vld [vmem:[%s1 + $0x730] sm:$0xff]
    %v256 = vld [vmem:[%s1 + $0x738] sm:$0xff]
    %v257 = vld [vmem:[%s1 + $0x740] sm:$0xff]
    %v258 = vld [vmem:[%s1 + $0x748] sm:$0xff]
    %v259 = vld [vmem:[%s1 + $0x750] sm:$0xff]
    %v260 = vld [vmem:[%s1 + $0x758] sm:$0xff]
    %v261 = vld [vmem:[%s1 + $0x760] sm:$0xff]
    %v262 = vld [vmem:[%s1 + $0x768] sm:$0xff]
    %v263 = vld [vmem:[%s1 + $0x770] sm:$0xff]
    %v264 = vld [vmem:[%s1 + $0x778] sm:$0xff]
    %v265 = vld [vmem:[%s1 + $0x780] sm:$0xff]
    %v266 = vld [vmem:[%s1 + $0x788] sm:$0xff]
    %v267 = vld [vmem:[%s1 + $0x790] sm:$0xff]
    %v268 = vld [vmem:[%s1 + $0x798] sm:$0xff]
    %v269 = vld [vmem:[%s1 + $0x7a0] sm:$0xff]
    %v270 = vld [vmem:[%s1 + $0x7a8] sm:$0xff]
    %v271 = vld [vmem:[%s1 + $0x7b0] sm:$0xff]
    %v272 = vld [vmem:[%s1 + $0x7b8] sm:$0xff]
    %v273 = vld [vmem:[%s1 + $0x7c0] sm:$0xff]
    %v274 = vld [vmem:[%s1 + $0x7c8] sm:$0xff]
    %v275 = vld [vmem:[%s2] sm:$0x1]
    %v277 = vlaneseq
    %v278 = vshrl.u32 %v277, 7
    %v279 = vsub.s32 0, %v278
    %v280 = vrot.slane %v275, %v279
    %v286 = vcombine.high %v21, %v21
    %v288 = vunpack.c.l.s4 1983009808
    %v289 = vunpack.c.0.s8 %v288
    %v290 = vlaneseq
    %v291 = vshrl.u32 %v290, 7
    %v292 = vsub.s32 %v289, %v291
    %v293 = vrot.slane %v21, %v292
    %v295 = vunpack.c.l.s4 1983009808
    %v296 = vunpack.c.0.s8 %v295
    %v297 = vlaneseq
    %v298 = vshrl.u32 %v297, 7
    %v299 = vsub.s32 %v296, %v298
    %v300 = vrot.slane %v286, %v299
    %v301 = vcombine.high %v293, %v293
    %v302 = vcombine.high %v300, %v300
    %v303 = vcombine.high %v22, %v22
    %v305 = vunpack.c.l.s4 1983009808
    %v306 = vunpack.c.0.s8 %v305
    %v307 = vlaneseq
    %v308 = vshrl.u32 %v307, 7
    %v309 = vsub.s32 %v306, %v308
    %v310 = vrot.slane %v22, %v309
    %v312 = vunpack.c.l.s4 1983009808
    %v313 = vunpack.c.0.s8 %v312
    %v314 = vlaneseq
    %v315 = vshrl.u32 %v314, 7
    %v316 = vsub.s32 %v313, %v315
    %v317 = vrot.slane %v303, %v316
    %v318 = vcombine.high %v310, %v310
    %v319 = vcombine.high %v317, %v317
    %v320 = vcombine.high %v23, %v23
    %v322 = vunpack.c.l.s4 1983009808
    %v323 = vunpack.c.0.s8 %v322
    %v324 = vlaneseq
    %v325 = vshrl.u32 %v324, 7
    %v326 = vsub.s32 %v323, %v325
    %v327 = vrot.slane %v23, %v326
    %v329 = vunpack.c.l.s4 1983009808
    %v330 = vunpack.c.0.s8 %v329
    %v331 = vlaneseq
    %v332 = vshrl.u32 %v331, 7
    %v333 = vsub.s32 %v330, %v332
    %v334 = vrot.slane %v320, %v333
    %v335 = vcombine.high %v327, %v327
    %v336 = vcombine.high %v334, %v334
    %v337 = vcombine.high %v24, %v24
    %v339 = vunpack.c.l.s4 1983009808
    %v340 = vunpack.c.0.s8 %v339
    %v341 = vlaneseq
    %v342 = vshrl.u32 %v341, 7
    %v343 = vsub.s32 %v340, %v342
    %v344 = vrot.slane %v24, %v343
    %v346 = vunpack.c.l.s4 1983009808
    %v347 = vunpack.c.0.s8 %v346
    %v348 = vlaneseq
    %v349 = vshrl.u32 %v348, 7
    %v350 = vsub.s32 %v347, %v349
    %v351 = vrot.slane %v337, %v350
    %v352 = vcombine.high %v344, %v344
    %v353 = vcombine.high %v351, %v351
    %vm369 = vcmask 654336
    %v370 = vsel %vm369, %v353, 0
    %372 = vmatprep.subr.mxu0 0.0
    %373 = vmatpush1.msra.mxu0 %v25
    %374 = vmatprep.subr.mxu0 0.0
    %375 = vmatpush1.msra.mxu0 %v26
    %376 = vmatprep.subr.mxu0 0.0
    %377 = vmatpush1.msra.mxu0 %v27
    %378 = vmatprep.subr.mxu0 0.0
    %379 = vmatpush1.msra.mxu0 %v28
    %380 = vmatprep.subr.mxu0 0.0
    %381 = vmatpush1.msra.mxu0 %v29
    %382 = vmatprep.subr.mxu0 0.0
    %383 = vmatpush1.msra.mxu0 %v30
    %384 = vmatprep.subr.mxu0 0.0
    %385 = vmatpush1.msra.mxu0 %v31
    %386 = vmatprep.subr.mxu0 0.0
    %387 = vmatpush1.msra.mxu0 %v32
    %388 = vmatprep.subr.mxu0 0.0
    %389 = vmatpush1.msra.mxu0 %v33
    %390 = vmatprep.subr.mxu0 0.0
    %391 = vmatpush1.msra.mxu0 %v34
    %392 = vmatprep.subr.mxu0 0.0
    %393 = vmatpush1.msra.mxu0 %v35
    %394 = vmatprep.subr.mxu0 0.0
    %395 = vmatpush1.msra.mxu0 %v36
    %396 = vmatprep.subr.mxu0 0.0
    %397 = vmatpush1.msra.mxu0 %v37
    %398 = vmatprep.subr.mxu0 0.0
    %399 = vmatpush1.msra.mxu0 %v38
    %400 = vmatprep.subr.mxu0 0.0
    %401 = vmatpush1.msra.mxu0 %v39
    %402 = vmatprep.subr.mxu0 0.0
    %403 = vmatpush1.msra.mxu0 %v40
    %404 = vmatprep.subr.mxu0 0.0
    %405 = vmatpush1.msra.mxu0 %v41
    %406 = vmatprep.subr.mxu0 0.0
    %407 = vmatpush1.msra.mxu0 %v42
    %408 = vmatprep.subr.mxu0 0.0
    %409 = vmatpush1.msra.mxu0 %v43
    %410 = vmatprep.subr.mxu0 0.0
    %411 = vmatpush1.msra.mxu0 %v44
    %412 = vmatprep.subr.mxu0 0.0
    %413 = vmatpush1.msra.mxu0 %v45
    %414 = vmatprep.subr.mxu0 0.0
    %415 = vmatpush1.msra.mxu0 %v46
    %416 = vmatprep.subr.mxu0 0.0
    %417 = vmatpush1.msra.mxu0 %v47
    %418 = vmatprep.subr.mxu0 0.0
    %419 = vmatpush1.msra.mxu0 %v48
    %420 = vmatprep.subr.mxu0 0.0
    %421 = vmatpush1.msra.mxu0 %v49
    %422 = vmatprep.subr.mxu0 0.0
    %423 = vmatpush1.msra.mxu0 %v50
    %424 = vmatprep.subr.mxu0 0.0
    %425 = vmatpush1.msra.mxu0 %v51
    %426 = vmatprep.subr.mxu0 0.0
    %427 = vmatpush1.msra.mxu0 %v52
    %428 = vmatprep.subr.mxu0 0.0
    %429 = vmatpush1.msra.mxu0 %v53
    %430 = vmatprep.subr.mxu0 0.0
    %431 = vmatpush1.msra.mxu0 %v54
    %432 = vmatprep.subr.mxu0 0.0
    %433 = vmatpush1.msra.mxu0 %v55
    %434 = vmatprep.subr.mxu0 0.0
    %435 = vmatpush1.msra.mxu0 %v56
    %436 = vmatprep.mubr.f32.mxu0 %v301
    %437 = vmatmul.mubr.f32.gmra.mrb[0].mxu0 %v293
    %v438 = vpop.f32.mrb[0].mxu0
    %v439 = vadd.f32 %v280, %v438
    %v440 = vpop.f32.mrb[0].mxu0
    %441 = vdwg.mxu0
    %442 = vmatprep.subr.mxu0 0.0
    %443 = vmatpush1.msra.mxu0 %v57
    %444 = vmatprep.subr.mxu0 0.0
    %445 = vmatpush1.msra.mxu0 %v58
    %446 = vmatprep.subr.mxu0 0.0
    %447 = vmatpush1.msra.mxu0 %v59
    %448 = vmatprep.subr.mxu0 0.0
    %449 = vmatpush1.msra.mxu0 %v60
    %450 = vmatprep.subr.mxu0 0.0
    %451 = vmatpush1.msra.mxu0 %v61
    %452 = vmatprep.subr.mxu0 0.0
    %453 = vmatpush1.msra.mxu0 %v62
    %454 = vmatprep.subr.mxu0 0.0
    %455 = vmatpush1.msra.mxu0 %v63
    %456 = vmatprep.subr.mxu0 0.0
    %457 = vmatpush1.msra.mxu0 %v64
    %458 = vmatprep.subr.mxu0 0.0
    %459 = vmatpush1.msra.mxu0 %v65
    %460 = vmatprep.subr.mxu0 0.0
    %461 = vmatpush1.msra.mxu0 %v66
    %462 = vmatprep.subr.mxu0 0.0
    %463 = vmatpush1.msra.mxu0 %v67
    %464 = vmatprep.subr.mxu0 0.0
    %465 = vmatpush1.msra.mxu0 %v68
    %466 = vmatprep.subr.mxu0 0.0
    %467 = vmatpush1.msra.mxu0 %v69
    %468 = vmatprep.subr.mxu0 0.0
    %469 = vmatpush1.msra.mxu0 %v70
    %470 = vmatprep.subr.mxu0 0.0
    %471 = vmatpush1.msra.mxu0 %v71
    %472 = vmatprep.subr.mxu0 0.0
    %473 = vmatpush1.msra.mxu0 %v72
    %474 = vmatprep.subr.mxu0 0.0
    %475 = vmatpush1.msra.mxu0 %v73
    %476 = vmatprep.subr.mxu0 0.0
    %477 = vmatpush1.msra.mxu0 %v74
    %478 = vmatprep.subr.mxu0 0.0
    %479 = vmatpush1.msra.mxu0 %v75
    %480 = vmatprep.subr.mxu0 0.0
    %481 = vmatpush1.msra.mxu0 %v76
    %482 = vmatprep.subr.mxu0 0.0
    %483 = vmatpush1.msra.mxu0 %v77
    %484 = vmatprep.subr.mxu0 0.0
    %485 = vmatpush1.msra.mxu0 %v78
    %486 = vmatprep.subr.mxu0 0.0
    %487 = vmatpush1.msra.mxu0 %v79
    %488 = vmatprep.subr.mxu0 0.0
    %489 = vmatpush1.msra.mxu0 %v80
    %490 = vmatprep.subr.mxu0 0.0
    %491 = vmatpush1.msra.mxu0 %v81
    %492 = vmatprep.subr.mxu0 0.0
    %493 = vmatpush1.msra.mxu0 %v82
    %494 = vmatprep.subr.mxu0 0.0
    %495 = vmatpush1.msra.mxu0 %v83
    %496 = vmatprep.subr.mxu0 0.0
    %497 = vmatpush1.msra.mxu0 %v84
    %498 = vmatprep.subr.mxu0 0.0
    %499 = vmatpush1.msra.mxu0 %v85
    %500 = vmatprep.subr.mxu0 0.0
    %501 = vmatpush1.msra.mxu0 %v86
    %502 = vmatprep.subr.mxu0 0.0
    %503 = vmatpush1.msra.mxu0 %v87
    %504 = vmatprep.subr.mxu0 0.0
    %505 = vmatpush1.msra.mxu0 %v88
    %506 = vmatprep.mubr.f32.mxu0 %v302
    %507 = vmatmul.mubr.f32.gmra.mrb[0].mxu0 %v300
    %v508 = vpop.f32.mrb[0].mxu0
    %v509 = vadd.f32 %v439, %v508
    %v510 = vpop.f32.mrb[0].mxu0
    %511 = vdwg.mxu0
    %512 = vmatprep.subr.mxu0 0.0
    %513 = vmatpush1.msra.mxu0 %v89
    %514 = vmatprep.subr.mxu0 0.0
    %515 = vmatpush1.msra.mxu0 %v90
    %516 = vmatprep.subr.mxu0 0.0
    %517 = vmatpush1.msra.mxu0 %v91
    %518 = vmatprep.subr.mxu0 0.0
    %519 = vmatpush1.msra.mxu0 %v92
    %520 = vmatprep.subr.mxu0 0.0
    %521 = vmatpush1.msra.mxu0 %v93
    %522 = vmatprep.subr.mxu0 0.0
    %523 = vmatpush1.msra.mxu0 %v94
    %524 = vmatprep.subr.mxu0 0.0
    %525 = vmatpush1.msra.mxu0 %v95
    %526 = vmatprep.subr.mxu0 0.0
    %527 = vmatpush1.msra.mxu0 %v96
    %528 = vmatprep.subr.mxu0 0.0
    %529 = vmatpush1.msra.mxu0 %v97
    %530 = vmatprep.subr.mxu0 0.0
    %531 = vmatpush1.msra.mxu0 %v98
    %532 = vmatprep.subr.mxu0 0.0
    %533 = vmatpush1.msra.mxu0 %v99
    %534 = vmatprep.subr.mxu0 0.0
    %535 = vmatpush1.msra.mxu0 %v100
    %536 = vmatprep.subr.mxu0 0.0
    %537 = vmatpush1.msra.mxu0 %v101
    %538 = vmatprep.subr.mxu0 0.0
    %539 = vmatpush1.msra.mxu0 %v102
    %540 = vmatprep.subr.mxu0 0.0
    %541 = vmatpush1.msra.mxu0 %v103
    %542 = vmatprep.subr.mxu0 0.0
    %543 = vmatpush1.msra.mxu0 %v104
    %544 = vmatprep.subr.mxu0 0.0
    %545 = vmatpush1.msra.mxu0 %v105
    %546 = vmatprep.subr.mxu0 0.0
    %547 = vmatpush1.msra.mxu0 %v106
    %548 = vmatprep.subr.mxu0 0.0
    %549 = vmatpush1.msra.mxu0 %v107
    %550 = vmatprep.subr.mxu0 0.0
    %551 = vmatpush1.msra.mxu0 %v108
    %552 = vmatprep.subr.mxu0 0.0
    %553 = vmatpush1.msra.mxu0 %v109
    %554 = vmatprep.subr.mxu0 0.0
    %555 = vmatpush1.msra.mxu0 %v110
    %556 = vmatprep.subr.mxu0 0.0
    %557 = vmatpush1.msra.mxu0 %v111
    %558 = vmatprep.subr.mxu0 0.0
    %559 = vmatpush1.msra.mxu0 %v112
    %560 = vmatprep.subr.mxu0 0.0
    %561 = vmatpush1.msra.mxu0 %v113
    %562 = vmatprep.subr.mxu0 0.0
    %563 = vmatpush1.msra.mxu0 %v114
    %564 = vmatprep.subr.mxu0 0.0
    %565 = vmatpush1.msra.mxu0 %v115
    %566 = vmatprep.subr.mxu0 0.0
    %567 = vmatpush1.msra.mxu0 %v116
    %568 = vmatprep.subr.mxu0 0.0
    %569 = vmatpush1.msra.mxu0 %v117
    %570 = vmatprep.subr.mxu0 0.0
    %571 = vmatpush1.msra.mxu0 %v118
    %572 = vmatprep.subr.mxu0 0.0
    %573 = vmatpush1.msra.mxu0 %v119
    %574 = vmatprep.subr.mxu0 0.0
    %575 = vmatpush1.msra.mxu0 %v120
    %576 = vmatprep.mubr.f32.mxu0 %v318
    %577 = vmatmul.mubr.f32.gmra.mrb[0].mxu0 %v310
    %v578 = vpop.f32.mrb[0].mxu0
    %v579 = vadd.f32 %v509, %v578
    %v580 = vpop.f32.mrb[0].mxu0
    %581 = vdwg.mxu0
    %582 = vmatprep.subr.mxu0 0.0
    %583 = vmatpush1.msra.mxu0 %v121
    %584 = vmatprep.subr.mxu0 0.0
    %585 = vmatpush1.msra.mxu0 %v122
    %586 = vmatprep.subr.mxu0 0.0
    %587 = vmatpush1.msra.mxu0 %v123
    %588 = vmatprep.subr.mxu0 0.0
    %589 = vmatpush1.msra.mxu0 %v124
    %590 = vmatprep.subr.mxu0 0.0
    %591 = vmatpush1.msra.mxu0 %v125
    %592 = vmatprep.subr.mxu0 0.0
    %593 = vmatpush1.msra.mxu0 %v126
    %594 = vmatprep.subr.mxu0 0.0
    %595 = vmatpush1.msra.mxu0 %v127
    %596 = vmatprep.subr.mxu0 0.0
    %597 = vmatpush1.msra.mxu0 %v128
    %598 = vmatprep.subr.mxu0 0.0
    %599 = vmatpush1.msra.mxu0 %v129
    %600 = vmatprep.subr.mxu0 0.0
    %601 = vmatpush1.msra.mxu0 %v130
    %602 = vmatprep.subr.mxu0 0.0
    %603 = vmatpush1.msra.mxu0 %v131
    %604 = vmatprep.subr.mxu0 0.0
    %605 = vmatpush1.msra.mxu0 %v132
    %606 = vmatprep.subr.mxu0 0.0
    %607 = vmatpush1.msra.mxu0 %v133
    %608 = vmatprep.subr.mxu0 0.0
    %609 = vmatpush1.msra.mxu0 %v134
    %610 = vmatprep.subr.mxu0 0.0
    %611 = vmatpush1.msra.mxu0 %v135
    %612 = vmatprep.subr.mxu0 0.0
    %613 = vmatpush1.msra.mxu0 %v136
    %614 = vmatprep.subr.mxu0 0.0
    %615 = vmatpush1.msra.mxu0 %v137
    %616 = vmatprep.subr.mxu0 0.0
    %617 = vmatpush1.msra.mxu0 %v138
    %618 = vmatprep.subr.mxu0 0.0
    %619 = vmatpush1.msra.mxu0 %v139
    %620 = vmatprep.subr.mxu0 0.0
    %621 = vmatpush1.msra.mxu0 %v140
    %622 = vmatprep.subr.mxu0 0.0
    %623 = vmatpush1.msra.mxu0 %v141
    %624 = vmatprep.subr.mxu0 0.0
    %625 = vmatpush1.msra.mxu0 %v142
    %626 = vmatprep.subr.mxu0 0.0
    %627 = vmatpush1.msra.mxu0 %v143
    %628 = vmatprep.subr.mxu0 0.0
    %629 = vmatpush1.msra.mxu0 %v144
    %630 = vmatprep.subr.mxu0 0.0
    %631 = vmatpush1.msra.mxu0 %v145
    %632 = vmatprep.subr.mxu0 0.0
    %633 = vmatpush1.msra.mxu0 %v146
    %634 = vmatprep.subr.mxu0 0.0
    %635 = vmatpush1.msra.mxu0 %v147
    %636 = vmatprep.subr.mxu0 0.0
    %637 = vmatpush1.msra.mxu0 %v148
    %638 = vmatprep.subr.mxu0 0.0
    %639 = vmatpush1.msra.mxu0 %v149
    %640 = vmatprep.subr.mxu0 0.0
    %641 = vmatpush1.msra.mxu0 %v150
    %642 = vmatprep.subr.mxu0 0.0
    %643 = vmatpush1.msra.mxu0 %v151
    %644 = vmatprep.subr.mxu0 0.0
    %645 = vmatpush1.msra.mxu0 %v152
    %646 = vmatprep.mubr.f32.mxu0 %v319
    %647 = vmatmul.mubr.f32.gmra.mrb[0].mxu0 %v317
    %v648 = vpop.f32.mrb[0].mxu0
    %v649 = vadd.f32 %v579, %v648
    %v650 = vpop.f32.mrb[0].mxu0
    %651 = vdwg.mxu0
    %652 = vmatprep.subr.mxu0 0.0
    %653 = vmatpush1.msra.mxu0 %v153
    %654 = vmatprep.subr.mxu0 0.0
    %655 = vmatpush1.msra.mxu0 %v154
    %656 = vmatprep.subr.mxu0 0.0
    %657 = vmatpush1.msra.mxu0 %v155
    %658 = vmatprep.subr.mxu0 0.0
    %659 = vmatpush1.msra.mxu0 %v156
    %660 = vmatprep.subr.mxu0 0.0
    %661 = vmatpush1.msra.mxu0 %v157
    %662 = vmatprep.subr.mxu0 0.0
    %663 = vmatpush1.msra.mxu0 %v158
    %664 = vmatprep.subr.mxu0 0.0
    %665 = vmatpush1.msra.mxu0 %v159
    %666 = vmatprep.subr.mxu0 0.0
    %667 = vmatpush1.msra.mxu0 %v160
    %668 = vmatprep.subr.mxu0 0.0
    %669 = vmatpush1.msra.mxu0 %v161
    %670 = vmatprep.subr.mxu0 0.0
    %671 = vmatpush1.msra.mxu0 %v162
    %672 = vmatprep.subr.mxu0 0.0
    %673 = vmatpush1.msra.mxu0 %v163
    %674 = vmatprep.subr.mxu0 0.0
    %675 = vmatpush1.msra.mxu0 %v164
    %676 = vmatprep.subr.mxu0 0.0
    %677 = vmatpush1.msra.mxu0 %v165
    %678 = vmatprep.subr.mxu0 0.0
    %679 = vmatpush1.msra.mxu0 %v166
    %680 = vmatprep.subr.mxu0 0.0
    %681 = vmatpush1.msra.mxu0 %v167
    %682 = vmatprep.subr.mxu0 0.0
    %683 = vmatpush1.msra.mxu0 %v168
    %684 = vmatprep.subr.mxu0 0.0
    %685 = vmatpush1.msra.mxu0 %v169
    %686 = vmatprep.subr.mxu0 0.0
    %687 = vmatpush1.msra.mxu0 %v170
    %688 = vmatprep.subr.mxu0 0.0
    %689 = vmatpush1.msra.mxu0 %v171
    %690 = vmatprep.subr.mxu0 0.0
    %691 = vmatpush1.msra.mxu0 %v172
    %692 = vmatprep.subr.mxu0 0.0
    %693 = vmatpush1.msra.mxu0 %v173
    %694 = vmatprep.subr.mxu0 0.0
    %695 = vmatpush1.msra.mxu0 %v174
    %696 = vmatprep.subr.mxu0 0.0
    %697 = vmatpush1.msra.mxu0 %v175
    %698 = vmatprep.subr.mxu0 0.0
    %699 = vmatpush1.msra.mxu0 %v176
    %700 = vmatprep.subr.mxu0 0.0
    %701 = vmatpush1.msra.mxu0 %v177
    %702 = vmatprep.subr.mxu0 0.0
    %703 = vmatpush1.msra.mxu0 %v178
    %704 = vmatprep.subr.mxu0 0.0
    %705 = vmatpush1.msra.mxu0 %v179
    %706 = vmatprep.subr.mxu0 0.0
    %707 = vmatpush1.msra.mxu0 %v180
    %708 = vmatprep.subr.mxu0 0.0
    %709 = vmatpush1.msra.mxu0 %v181
    %710 = vmatprep.subr.mxu0 0.0
    %711 = vmatpush1.msra.mxu0 %v182
    %712 = vmatprep.subr.mxu0 0.0
    %713 = vmatpush1.msra.mxu0 %v183
    %714 = vmatprep.subr.mxu0 0.0
    %715 = vmatpush1.msra.mxu0 %v184
    %716 = vmatprep.mubr.f32.mxu0 %v335
    %717 = vmatmul.mubr.f32.gmra.mrb[0].mxu0 %v327
    %v718 = vpop.f32.mrb[0].mxu0
    %v719 = vadd.f32 %v649, %v718
    %v720 = vpop.f32.mrb[0].mxu0
    %721 = vdwg.mxu0
    %722 = vmatprep.subr.mxu0 0.0
    %723 = vmatpush1.msra.mxu0 %v185
    %724 = vmatprep.subr.mxu0 0.0
    %725 = vmatpush1.msra.mxu0 %v186
    %726 = vmatprep.subr.mxu0 0.0
    %727 = vmatpush1.msra.mxu0 %v187
    %728 = vmatprep.subr.mxu0 0.0
    %729 = vmatpush1.msra.mxu0 %v188
    %730 = vmatprep.subr.mxu0 0.0
    %731 = vmatpush1.msra.mxu0 %v189
    %732 = vmatprep.subr.mxu0 0.0
    %733 = vmatpush1.msra.mxu0 %v190
    %734 = vmatprep.subr.mxu0 0.0
    %735 = vmatpush1.msra.mxu0 %v191
    %736 = vmatprep.subr.mxu0 0.0
    %737 = vmatpush1.msra.mxu0 %v192
    %738 = vmatprep.subr.mxu0 0.0
    %739 = vmatpush1.msra.mxu0 %v193
    %740 = vmatprep.subr.mxu0 0.0
    %741 = vmatpush1.msra.mxu0 %v194
    %742 = vmatprep.subr.mxu0 0.0
    %743 = vmatpush1.msra.mxu0 %v195
    %744 = vmatprep.subr.mxu0 0.0
    %745 = vmatpush1.msra.mxu0 %v196
    %746 = vmatprep.subr.mxu0 0.0
    %747 = vmatpush1.msra.mxu0 %v197
    %748 = vmatprep.subr.mxu0 0.0
    %749 = vmatpush1.msra.mxu0 %v198
    %750 = vmatprep.subr.mxu0 0.0
    %751 = vmatpush1.msra.mxu0 %v199
    %752 = vmatprep.subr.mxu0 0.0
    %753 = vmatpush1.msra.mxu0 %v200
    %754 = vmatprep.subr.mxu0 0.0
    %755 = vmatpush1.msra.mxu0 %v201
    %756 = vmatprep.subr.mxu0 0.0
    %757 = vmatpush1.msra.mxu0 %v202
    %758 = vmatprep.subr.mxu0 0.0
    %759 = vmatpush1.msra.mxu0 %v203
    %760 = vmatprep.subr.mxu0 0.0
    %761 = vmatpush1.msra.mxu0 %v204
    %762 = vmatprep.subr.mxu0 0.0
    %763 = vmatpush1.msra.mxu0 %v205
    %764 = vmatprep.subr.mxu0 0.0
    %765 = vmatpush1.msra.mxu0 %v206
    %766 = vmatprep.subr.mxu0 0.0
    %767 = vmatpush1.msra.mxu0 %v207
    %768 = vmatprep.subr.mxu0 0.0
    %769 = vmatpush1.msra.mxu0 %v208
    %770 = vmatprep.subr.mxu0 0.0
    %771 = vmatpush1.msra.mxu0 %v209
    %772 = vmatprep.subr.mxu0 0.0
    %773 = vmatpush1.msra.mxu0 %v210
    %774 = vmatprep.subr.mxu0 0.0
    %775 = vmatpush1.msra.mxu0 %v211
    %776 = vmatprep.subr.mxu0 0.0
    %777 = vmatpush1.msra.mxu0 %v212
    %778 = vmatprep.subr.mxu0 0.0
    %779 = vmatpush1.msra.mxu0 %v213
    %780 = vmatprep.subr.mxu0 0.0
    %781 = vmatpush1.msra.mxu0 %v214
    %782 = vmatprep.subr.mxu0 0.0
    %783 = vmatpush1.msra.mxu0 %v215
    %784 = vmatprep.subr.mxu0 0.0
    %785 = vmatpush1.msra.mxu0 %v216
    %786 = vmatprep.mubr.f32.mxu0 %v336
    %787 = vmatmul.mubr.f32.gmra.mrb[0].mxu0 %v334
    %v788 = vpop.f32.mrb[0].mxu0
    %v789 = vadd.f32 %v719, %v788
    %v790 = vpop.f32.mrb[0].mxu0
    %791 = vdwg.mxu0
    %792 = vmatprep.subr.mxu0 0.0
    %793 = vmatpush1.msra.mxu0 %v217
    %794 = vmatprep.subr.mxu0 0.0
    %795 = vmatpush1.msra.mxu0 %v218
    %796 = vmatprep.subr.mxu0 0.0
    %797 = vmatpush1.msra.mxu0 %v219
    %798 = vmatprep.subr.mxu0 0.0
    %799 = vmatpush1.msra.mxu0 %v220
    %800 = vmatprep.subr.mxu0 0.0
    %801 = vmatpush1.msra.mxu0 %v221
    %802 = vmatprep.subr.mxu0 0.0
    %803 = vmatpush1.msra.mxu0 %v222
    %804 = vmatprep.subr.mxu0 0.0
    %805 = vmatpush1.msra.mxu0 %v223
    %806 = vmatprep.subr.mxu0 0.0
    %807 = vmatpush1.msra.mxu0 %v224
    %808 = vmatprep.subr.mxu0 0.0
    %809 = vmatpush1.msra.mxu0 %v225
    %810 = vmatprep.subr.mxu0 0.0
    %811 = vmatpush1.msra.mxu0 %v226
    %812 = vmatprep.subr.mxu0 0.0
    %813 = vmatpush1.msra.mxu0 %v227
    %814 = vmatprep.subr.mxu0 0.0
    %815 = vmatpush1.msra.mxu0 %v228
    %816 = vmatprep.subr.mxu0 0.0
    %817 = vmatpush1.msra.mxu0 %v229
    %818 = vmatprep.subr.mxu0 0.0
    %819 = vmatpush1.msra.mxu0 %v230
    %820 = vmatprep.subr.mxu0 0.0
    %821 = vmatpush1.msra.mxu0 %v231
    %822 = vmatprep.subr.mxu0 0.0
    %823 = vmatpush1.msra.mxu0 %v232
    %824 = vmatprep.subr.mxu0 0.0
    %825 = vmatpush1.msra.mxu0 %v233
    %826 = vmatprep.subr.mxu0 0.0
    %827 = vmatpush1.msra.mxu0 %v234
    %828 = vmatprep.subr.mxu0 0.0
    %829 = vmatpush1.msra.mxu0 %v235
    %830 = vmatprep.subr.mxu0 0.0
    %831 = vmatpush1.msra.mxu0 %v236
    %832 = vmatprep.subr.mxu0 0.0
    %833 = vmatpush1.msra.mxu0 %v237
    %834 = vmatprep.subr.mxu0 0.0
    %835 = vmatpush1.msra.mxu0 %v238
    %836 = vmatprep.subr.mxu0 0.0
    %837 = vmatpush1.msra.mxu0 %v239
    %838 = vmatprep.subr.mxu0 0.0
    %839 = vmatpush1.msra.mxu0 %v240
    %840 = vmatprep.subr.mxu0 0.0
    %841 = vmatpush1.msra.mxu0 %v241
    %842 = vmatprep.subr.mxu0 0.0
    %843 = vmatpush1.msra.mxu0 %v242
    %844 = vmatprep.subr.mxu0 0.0
    %845 = vmatpush1.msra.mxu0 %v243
    %846 = vmatprep.subr.mxu0 0.0
    %847 = vmatpush1.msra.mxu0 %v244
    %848 = vmatprep.subr.mxu0 0.0
    %849 = vmatpush1.msra.mxu0 %v245
    %850 = vmatprep.subr.mxu0 0.0
    %851 = vmatpush1.msra.mxu0 %v246
    %852 = vmatprep.subr.mxu0 0.0
    %853 = vmatpush1.msra.mxu0 %v247
    %854 = vmatprep.subr.mxu0 0.0
    %855 = vmatpush1.msra.mxu0 %v248
    %856 = vmatprep.mubr.f32.mxu0 %v352
    %857 = vmatmul.mubr.f32.gmra.mrb[0].mxu0 %v344
    %v858 = vpop.f32.mrb[0].mxu0
    %v859 = vadd.f32 %v789, %v858
    %v860 = vpop.f32.mrb[0].mxu0
    %861 = vdwg.mxu0
    %862 = vmatprep.subr.mxu0 0.0
    %863 = vmatpush1.msra.mxu0 %v249
    %864 = vmatprep.subr.mxu0 0.0
    %865 = vmatpush1.msra.mxu0 %v250
    %866 = vmatprep.subr.mxu0 0.0
    %867 = vmatpush1.msra.mxu0 %v251
    %868 = vmatprep.subr.mxu0 0.0
    %869 = vmatpush1.msra.mxu0 %v252
    %870 = vmatprep.subr.mxu0 0.0
    %871 = vmatpush1.msra.mxu0 %v253
    %872 = vmatprep.subr.mxu0 0.0
    %873 = vmatpush1.msra.mxu0 %v254
    %874 = vmatprep.subr.mxu0 0.0
    %875 = vmatpush1.msra.mxu0 %v255
    %876 = vmatprep.subr.mxu0 0.0
    %877 = vmatpush1.msra.mxu0 %v256
    %878 = vmatprep.subr.mxu0 0.0
    %879 = vmatpush1.msra.mxu0 %v257
    %880 = vmatprep.subr.mxu0 0.0
    %881 = vmatpush1.msra.mxu0 %v258
    %882 = vmatprep.subr.mxu0 0.0
    %883 = vmatpush1.msra.mxu0 %v259
    %884 = vmatprep.subr.mxu0 0.0
    %885 = vmatpush1.msra.mxu0 %v260
    %886 = vmatprep.subr.mxu0 0.0
    %887 = vmatpush1.msra.mxu0 %v261
    %888 = vmatprep.subr.mxu0 0.0
    %889 = vmatpush1.msra.mxu0 %v262
    %890 = vmatprep.subr.mxu0 0.0
    %891 = vmatpush1.msra.mxu0 %v263
    %892 = vmatprep.subr.mxu0 0.0
    %893 = vmatpush1.msra.mxu0 %v264
    %894 = vmatprep.subr.mxu0 0.0
    %895 = vmatpush1.msra.mxu0 %v265
    %896 = vmatprep.subr.mxu0 0.0
    %897 = vmatpush1.msra.mxu0 %v266
    %898 = vmatprep.subr.mxu0 0.0
    %899 = vmatpush1.msra.mxu0 %v267
    %900 = vmatprep.subr.mxu0 0.0
    %901 = vmatpush1.msra.mxu0 %v268
    %902 = vmatprep.subr.mxu0 0.0
    %903 = vmatpush1.msra.mxu0 %v269
    %904 = vmatprep.subr.mxu0 0.0
    %905 = vmatpush1.msra.mxu0 %v270
    %906 = vmatprep.subr.mxu0 0.0
    %907 = vmatpush1.msra.mxu0 %v271
    %908 = vmatprep.subr.mxu0 0.0
    %909 = vmatpush1.msra.mxu0 %v272
    %910 = vmatprep.subr.mxu0 0.0
    %911 = vmatpush1.msra.mxu0 %v273
    %912 = vmatprep.subr.mxu0 0.0
    %913 = vmatpush1.msra.mxu0 %v274
    %914 = vmatprep.subr.mxu0 0.0
    %915 = vmatpush1.msra.mxu0 0.0
    %916 = vmatprep.subr.mxu0 0.0
    %917 = vmatpush1.msra.mxu0 0.0
    %918 = vmatprep.subr.mxu0 0.0
    %919 = vmatpush1.msra.mxu0 0.0
    %920 = vmatprep.subr.mxu0 0.0
    %921 = vmatpush1.msra.mxu0 0.0
    %922 = vmatprep.subr.mxu0 0.0
    %923 = vmatpush1.msra.mxu0 0.0
    %924 = vmatprep.subr.mxu0 0.0
    %925 = vmatpush1.msra.mxu0 0.0
    %926 = vmatprep.mubr.f32.mxu0 %v370
    %927 = vmatmul.mubr.f32.gmra.mrb[0].mxu0 %v351
    %v928 = vpop.f32.mrb[0].mxu0
    %v929 = vadd.f32 %v859, %v928
    %v930 = vpop.f32.mrb[0].mxu0
    %931 = vdwg.mxu0
    %v932 = vtanh.pop %v929
    %v933 = vld [vmem:[%s3] sm:$0xff]
    %v934 = vld [vmem:[%s3 + $0x8] sm:$0xff]
    %v935 = vld [vmem:[%s3 + $0x10] sm:$0xff]
    %v936 = vld [vmem:[%s3 + $0x18] sm:$0xff]
    %v937 = vld [vmem:[%s3 + $0x20] sm:$0xff]
    %v938 = vld [vmem:[%s3 + $0x28] sm:$0xff]
    %v939 = vld [vmem:[%s3 + $0x30] sm:$0xff]
    %v940 = vld [vmem:[%s3 + $0x38] sm:$0xff]
    %v941 = vld [vmem:[%s3 + $0x40] sm:$0xff]
    %v942 = vld [vmem:[%s3 + $0x48] sm:$0xff]
    %v943 = vld [vmem:[%s3 + $0x50] sm:$0xff]
    %v944 = vld [vmem:[%s3 + $0x58] sm:$0xff]
    %v945 = vld [vmem:[%s3 + $0x60] sm:$0xff]
    %v946 = vld [vmem:[%s3 + $0x68] sm:$0xff]
    %v947 = vld [vmem:[%s3 + $0x70] sm:$0xff]
    %v948 = vld [vmem:[%s3 + $0x78] sm:$0xff]
    %v949 = vld [vmem:[%s4] sm:$0x1]
    %v951 = vlaneseq
    %v952 = vshrl.u32 %v951, 7
    %v953 = vsub.s32 0, %v952
    %v954 = vrot.slane %v949, %v953
    %956 = vmatprep.subr.mxu0 0.0
    %957 = vmatpush1.msra.mxu0 %v933
    %958 = vmatprep.subr.mxu0 0.0
    %959 = vmatpush1.msra.mxu0 %v934
    %960 = vmatprep.subr.mxu0 0.0
    %961 = vmatpush1.msra.mxu0 %v935
    %962 = vmatprep.subr.mxu0 0.0
    %963 = vmatpush1.msra.mxu0 %v936
    %964 = vmatprep.subr.mxu0 0.0
    %965 = vmatpush1.msra.mxu0 %v937
    %966 = vmatprep.subr.mxu0 0.0
    %967 = vmatpush1.msra.mxu0 %v938
    %968 = vmatprep.subr.mxu0 0.0
    %969 = vmatpush1.msra.mxu0 %v939
    %970 = vmatprep.subr.mxu0 0.0
    %971 = vmatpush1.msra.mxu0 %v940
    %972 = vmatprep.subr.mxu0 0.0
    %973 = vmatpush1.msra.mxu0 %v941
    %974 = vmatprep.subr.mxu0 0.0
    %975 = vmatpush1.msra.mxu0 %v942
    %976 = vmatprep.subr.mxu0 0.0
    %977 = vmatpush1.msra.mxu0 %v943
    %978 = vmatprep.subr.mxu0 0.0
    %979 = vmatpush1.msra.mxu0 %v944
    %980 = vmatprep.subr.mxu0 0.0
    %981 = vmatpush1.msra.mxu0 %v945
    %982 = vmatprep.subr.mxu0 0.0
    %983 = vmatpush1.msra.mxu0 %v946
    %984 = vmatprep.subr.mxu0 0.0
    %985 = vmatpush1.msra.mxu0 %v947
    %986 = vmatprep.subr.mxu0 0.0
    %987 = vmatpush1.msra.mxu0 %v948
    %988 = vmatprep.subr.mxu0 0.0
    %989 = vmatpush1.msra.mxu0 0.0
    %990 = vmatprep.subr.mxu0 0.0
    %991 = vmatpush1.msra.mxu0 0.0
    %992 = vmatprep.subr.mxu0 0.0
    %993 = vmatpush1.msra.mxu0 0.0
    %994 = vmatprep.subr.mxu0 0.0
    %995 = vmatpush1.msra.mxu0 0.0
    %996 = vmatprep.subr.mxu0 0.0
    %997 = vmatpush1.msra.mxu0 0.0
    %998 = vmatprep.subr.mxu0 0.0
    %999 = vmatpush1.msra.mxu0 0.0
    %1000 = vmatprep.subr.mxu0 0.0
    %1001 = vmatpush1.msra.mxu0 0.0
    %1002 = vmatprep.subr.mxu0 0.0
    %1003 = vmatpush1.msra.mxu0 0.0
    %1004 = vmatprep.subr.mxu0 0.0
    %1005 = vmatpush1.msra.mxu0 0.0
    %1006 = vmatprep.subr.mxu0 0.0
    %1007 = vmatpush1.msra.mxu0 0.0
    %1008 = vmatprep.subr.mxu0 0.0
    %1009 = vmatpush1.msra.mxu0 0.0
    %1010 = vmatprep.subr.mxu0 0.0
    %1011 = vmatpush1.msra.mxu0 0.0
    %1012 = vmatprep.subr.mxu0 0.0
    %1013 = vmatpush1.msra.mxu0 0.0
    %1014 = vmatprep.subr.mxu0 0.0
    %1015 = vmatpush1.msra.mxu0 0.0
    %1016 = vmatprep.subr.mxu0 0.0
    %1017 = vmatpush1.msra.mxu0 0.0
    %1018 = vmatprep.subr.mxu0 0.0
    %1019 = vmatpush1.msra.mxu0 0.0
    %1020 = vmatprep.mubr.f32.mxu0 0.0
    %1021 = vmatmul.mubr.f32.gmra.mrb[0].mxu0 %v932
    %v1022 = vpop.f32.mrb[0].mxu0
    %v1023 = vadd.f32 %v954, %v1022
    %v1024 = vpop.f32.mrb[0].mxu0
    %1025 = vdwg.mxu0
    %v1026 = vxor.u32 %v1023, 2147483648
    %v1027 = vmul.f32 %v1026, 1.442695
    %v1028 = vpow.pop %v1027
    %v1029 = vadd.f32 %v1028, 1.0
    %v1030 = vrcp.pop %v1029
    %v1031 = vmul.f32 1.0, %v1030
    %1032 = vst [vmem:[#allocation2] sm:$0x3] %v1031
    // Predicated region
    $region22: #{policy_actor_forward.7} parent=1 // pred_check
      _
    $region23: #{policy_actor_forward.7} parent=1 // pred_check_branch
      %1034 = sbr.rel (0) target = $region25
    $region24: #{policy_actor_forward.7} parent=1 // pred_region
      %s1036 = ssub.s32 32, 32
      %1037 = vsyncadd [#allocation3], %s1036
      %s1039 = sshll.u32 [#allocation2], 4
      %s1040 = int_to_ptr.vmem [resolvable:$true] %s1039
      %1042 = dma.vmem_to_hbm [thread:$0]  %s1040, 32, %s5, [#allocation3]
    $region25: #{policy_actor_forward.7} parent=1 // pred_fallthru
      _
    // Predicated region
    $region26: #{policy_actor_forward.7} parent=1 // pred_check
      _
    $region27: #{policy_actor_forward.7} parent=1 // pred_check_branch
      %1044 = sbr.rel (0) target = $region29
    $region28: #{policy_actor_forward.7} parent=1 // pred_region
      %1045 = dma.done [#allocation3], 32
    $region29: #{policy_actor_forward.7} parent=1 // pred_fallthru
      _
    %1046 = vsyncpa [#allocation3], 1

</llo_original>
